<compile_context>
chip_gen: v6e
topology: v6e:2x2x1
jax: 0.10.0
libtpu: 0.0.40
codegen_flags: <defaults>
</compile_context>

<pallas_src>
import functools

import jax
import jax.numpy as jnp
from jax.experimental import pallas as pl
from jax.experimental.pallas import tpu as pltpu

VMEM = pltpu.MemorySpace.VMEM

LANE = 128        # lane width (pad feature dims to this)
BATCH_TILE = 128  # target batch tile (shrinks to B_pad for small batches)


def _round_up(x, m):
    return ((x + m - 1) // m) * m


def _vmem_limit_bytes():
    # 75% of this generation's physical VMEM (96 MiB on v5e/v6e, 48 MiB on v7x).
    try:
        cap = getattr(pltpu.get_tpu_info(), "vmem_capacity_bytes", None)
        if not cap:
            cap = 128 * 1024 * 1024
    except Exception:
        cap = 128 * 1024 * 1024
    return int(cap * 3 // 4)


# ------------------------------------------------------------------ encoder --
def _enc_kernel(pooled_ref, enc_w_ref, enc_b_ref, gamma_ref, beta_ref, out_ref):
    # enc_w is the offline-precomposed (resnet_stub @ enc_linear) weight.
    x = jnp.dot(pooled_ref[...].astype(jnp.bfloat16), enc_w_ref[...],
                preferred_element_type=jnp.float32) + enc_b_ref[...]
    # BatchNorm1d, training mode: batch mean / biased batch variance.
    # This kernel sees exactly the logical B rows, so stats are exact.
    mean = jnp.mean(x, axis=0, keepdims=True)
    var = jnp.mean((x - mean) ** 2, axis=0, keepdims=True)
    xhat = (x - mean) * jax.lax.rsqrt(var + 1e-5)
    out_ref[...] = (xhat * gamma_ref[...] + beta_ref[...]).astype(out_ref.dtype)


def encoder_head(pooled, enc_w, enc_b, gamma, beta):
    B = pooled.shape[0]
    E_pad = enc_w.shape[1]
    return pl.pallas_call(
        _enc_kernel,
        out_shape=jax.ShapeDtypeStruct((B, E_pad), jnp.bfloat16),
        in_specs=[pl.BlockSpec(memory_space=VMEM)] * 5,
        out_specs=pl.BlockSpec(memory_space=VMEM),
    )(pooled, enc_w, enc_b, gamma, beta)


# ---------------------------------------------------- fused decoder kernel --
def _fused_dec_kernel(len_ref, x_ref, wih0_ref, wihr_ref, whh_ref, b_ref,
                      clsw_ref, clsb_ref, out_ref,
                      gx_sc, seq_a, seq_b, h_sc, c_sc,
                      *, num_layers, hidden_p, prefix_n, time_unroll):
    T, tb, e_pad = x_ref.shape
    H = hidden_p
    lens = len_ref[...]                                  # (tb, 1) int32
    seq_bufs = (seq_a, seq_b)                            # VMEM ping-pong

    for l in range(num_layers):
        # Hoisted input projection: one big (T*tb, Din) @ (Din, 4H) MXU matmul,
        # off the serial critical path of the recurrence.  gx stored bf16.
        if l == 0:
            xin = x_ref[...].reshape(T * tb, e_pad)
            w_in = wih0_ref[...]
        else:
            xin = seq_bufs[(l - 1) % 2][...].reshape(T * tb, H)
            w_in = wihr_ref[l - 1]
        gx_sc[...] = jnp.dot(xin, w_in, preferred_element_type=jnp.float32
                             ).astype(jnp.bfloat16)

        whh = whh_ref[l]                                 # (H, 4H) bf16 (static)
        bias = b_ref[l]                                  # (1, 4H) f32  (static)
        out_seq = seq_bufs[l % 2]

        h_sc[...] = jnp.zeros_like(h_sc)
        c_sc[...] = jnp.zeros_like(c_sc)

        def step(t, carry, _out_seq=out_seq, _whh=whh, _bias=bias):
            h_old = h_sc[...]
            c_old = c_sc[...]
            row = pl.multiple_of(t * tb, tb)
            gates = (gx_sc[pl.ds(row, tb), :].astype(jnp.float32) + _bias
                     + jnp.dot(h_old.astype(jnp.bfloat16), _whh,
                               preferred_element_type=jnp.float32))  # (tb,4H) f32
            # gate layout [i | f | o | g]: one sigmoid over a contiguous 3H
            # block (EUP via approx reciprocal), one tanh over the last H.
            sig = pl.reciprocal(1.0 + jnp.exp(-gates[:, :3 * H]), approx=True)
            i = sig[:, 0:H]
            f = sig[:, H:2 * H]
            o = sig[:, 2 * H:3 * H]
            g = jnp.tanh(gates[:, 3 * H:4 * H])
            c_new = f * c_old + i * g
            h_new = o * jnp.tanh(c_new)
            # pack_padded_sequence semantics: finished sequences freeze state
            # and emit zeros in the padded output.
            mask = lens > t                              # (tb, 1) bool
            h_sc[...] = jnp.where(mask, h_new, h_old)
            c_sc[...] = jnp.where(mask, c_new, c_old)
            _out_seq[t] = (h_new * mask.astype(jnp.float32)).astype(jnp.bfloat16)
            return carry

        jax.lax.fori_loop(0, T, step, 0, unroll=time_unroll)

    # ---- classifier head, fused: logits = cat(chunks) @ W == sum_k chunk@W_k.
    last_seq = seq_bufs[(num_layers - 1) % 2]
    logits = jnp.dot(h_sc[...].astype(jnp.bfloat16), clsw_ref[prefix_n + 1],
                     preferred_element_type=jnp.float32)      # hn[-1] chunk
    for k in range(prefix_n + 1):                             # static, tiny
        logits = logits + jnp.dot(last_seq[k], clsw_ref[k],
                                  preferred_element_type=jnp.float32)
    logits = logits + clsb_ref[...]                           # padded lanes -1e30
    m = jnp.max(logits, axis=1, keepdims=True)
    z = logits - m
    lse = jnp.log(jnp.sum(jnp.exp(z), axis=1, keepdims=True))
    out_ref[...] = z - lse                                    # log_softmax(dim=1)


def fused_decoder(lens, x, params, *, num_layers, prefix_n, tb):
    T, B_pad, E_pad = x.shape
    H_pad = params["w_hh"].shape[1]
    A_pad = params["cls_w"].shape[2]
    assert B_pad % tb == 0
    # Guard the full time-loop unroll (vreg pressure at realistic T / tb).
    time_unroll = True if T <= 12 else 4
    kern = functools.partial(_fused_dec_kernel, num_layers=num_layers,
                             hidden_p=H_pad, prefix_n=prefix_n,
                             time_unroll=time_unroll)
    return pl.pallas_call(
        kern,
        out_shape=jax.ShapeDtypeStruct((B_pad, A_pad), jnp.float32),
        grid=(B_pad // tb,),
        in_specs=[
            pl.BlockSpec((tb, 1), lambda bi: (bi, 0)),              # lengths
            pl.BlockSpec((T, tb, E_pad), lambda bi: (0, bi, 0)),    # layer-0 x
            pl.BlockSpec(memory_space=VMEM),                        # W_ih layer 0
            pl.BlockSpec(memory_space=VMEM),                        # W_ih layers 1+
            pl.BlockSpec(memory_space=VMEM),                        # W_hh (stacked)
            pl.BlockSpec(memory_space=VMEM),                        # bias (stacked)
            pl.BlockSpec(memory_space=VMEM),                        # cls W (K,H,A)
            pl.BlockSpec(memory_space=VMEM),                        # cls bias
        ],
        out_specs=pl.BlockSpec((tb, A_pad), lambda bi: (bi, 0)),    # log-probs
        scratch_shapes=[
            pltpu.VMEM((T * tb, 4 * H_pad), jnp.bfloat16),  # hoisted gates_x (bf16)
            pltpu.VMEM((T, tb, H_pad), jnp.bfloat16),       # seq ping
            pltpu.VMEM((T, tb, H_pad), jnp.bfloat16),       # seq pong
            pltpu.VMEM((tb, H_pad), jnp.float32),           # h state (f32)
            pltpu.VMEM((tb, H_pad), jnp.float32),           # c state (f32)
        ],
        compiler_params=pltpu.CompilerParams(
            dimension_semantics=("parallel",),              # 2 TCs on v7x
            vmem_limit_bytes=_vmem_limit_bytes()),
    )(lens, x, params["w_ih0"], params["w_ih_rest"], params["w_hh"],
      params["b"], params["cls_w"], params["cls_b"])


# ------------------------------------------------------------------- params --
def init_params(key, *, in_ch, resnet_feat, embed, hidden, vocab, ans_vocab,
                num_layers, prefix_n):
    """Logical (PyTorch-layout, f32) parameters."""
    ks = jax.random.split(key, 3 * num_layers + 8)
    s = 0.1
    p = {}
    p["resnet_stub_w"] = s * jax.random.normal(ks[0], (in_ch, resnet_feat), jnp.float32)
    p["enc_w"] = s * jax.random.normal(ks[1], (resnet_feat, embed), jnp.float32)
    p["enc_b"] = s * jax.random.normal(ks[2], (embed,), jnp.float32)
    p["bn_gamma"] = jnp.ones((embed,), jnp.float32)
    p["bn_beta"] = jnp.zeros((embed,), jnp.float32)
    p["embed"] = s * jax.random.normal(ks[3], (vocab, embed), jnp.float32)
    w_ih, w_hh, bias = [], [], []
    for l in range(num_layers):
        din = embed if l == 0 else hidden
        w_ih.append(s * jax.random.normal(ks[4 + 3 * l], (din, 4 * hidden), jnp.float32))
        w_hh.append(s * jax.random.normal(ks[5 + 3 * l], (hidden, 4 * hidden), jnp.float32))
        bias.append(s * jax.random.normal(ks[6 + 3 * l], (4 * hidden,), jnp.float32))
    p["w_ih"], p["w_hh"], p["b"] = w_ih, w_hh, bias
    K = prefix_n + 2     # matches forward's concat (see NOTE at top)
    p["cls_w"] = s * jax.random.normal(ks[4 + 3 * num_layers], (K * hidden, ans_vocab), jnp.float32)
    p["cls_b"] = s * jax.random.normal(ks[5 + 3 * num_layers], (ans_vocab,), jnp.float32)
    return p


def _prep_gate_mat(w, H, H_pad, din_pad):
    # w: (din, 4H) in PyTorch gate order [i,f,g,o]; return (din_pad, 4*H_pad)
    # reordered to [i,f,o,g] with zero-padded lanes/rows (padding is inert:
    # padded gates get 0 pre-activation -> c_pad/h_pad stay 0).
    din = w.shape[0]
    blocks = [w[:, k * H:(k + 1) * H] for k in (0, 1, 3, 2)]
    blocks = [jnp.pad(blk, ((0, din_pad - din), (0, H_pad - H))) for blk in blocks]
    return jnp.concatenate(blocks, axis=1)


def _prep_gate_bias(b, H, H_pad):
    blocks = [b[k * H:(k + 1) * H] for k in (0, 1, 3, 2)]
    blocks = [jnp.pad(x, (0, H_pad - H)) for x in blocks]
    return jnp.concatenate(blocks)[None, :]      # (1, 4*H_pad) f32


def prepare_params(p, *, embed, hidden, ans_vocab, num_layers, prefix_n):
    """Pad to lane-aligned shapes, permute gates, cast matmul weights to bf16."""
    E_pad = _round_up(embed, LANE)
    H_pad = _round_up(hidden, LANE)
    A_pad = _round_up(ans_vocab, LANE)
    q = {}
    # Precompose frozen resnet-stub projection with the encoder Linear (free offline).
    comb = p["resnet_stub_w"] @ p["enc_w"]                     # (in_ch, embed) f32
    q["enc_w"] = jnp.pad(comb, ((0, 0), (0, E_pad - embed))).astype(jnp.bfloat16)
    q["enc_b"] = jnp.pad(p["enc_b"], (0, E_pad - embed))[None, :]
    q["bn_gamma"] = jnp.pad(p["bn_gamma"], (0, E_pad - embed))[None, :]
    q["bn_beta"] = jnp.pad(p["bn_beta"], (0, E_pad - embed))[None, :]
    q["embed"] = jnp.pad(p["embed"], ((0, 0), (0, E_pad - embed))).astype(jnp.bfloat16)

    q["w_ih0"] = _prep_gate_mat(p["w_ih"][0], hidden, H_pad, E_pad).astype(jnp.bfloat16)
    if num_layers > 1:
        q["w_ih_rest"] = jnp.stack(
            [_prep_gate_mat(p["w_ih"][l], hidden, H_pad, H_pad)
             for l in range(1, num_layers)]).astype(jnp.bfloat16)
    else:
        q["w_ih_rest"] = jnp.zeros((1, H_pad, 4 * H_pad), jnp.bfloat16)  # unused
    q["w_hh"] = jnp.stack(
        [_prep_gate_mat(p["w_hh"][l], hidden, H_pad, H_pad)
         for l in range(num_layers)]).astype(jnp.bfloat16)
    q["b"] = jnp.stack(
        [_prep_gate_bias(p["b"][l], hidden, H_pad) for l in range(num_layers)])

    K = prefix_n + 2
    w = p["cls_w"].reshape(K, hidden, ans_vocab)            # row block k == chunk k
    w = jnp.pad(w, ((0, 0), (0, H_pad - hidden), (0, A_pad - ans_vocab)))
    q["cls_w"] = w.astype(jnp.bfloat16)                     # (K, H_pad, A_pad)
    # Padded answer lanes get a very negative bias so they vanish in log_softmax.
    # Keep this f32 (would break in bf16).
    q["cls_b"] = jnp.pad(p["cls_b"], (0, A_pad - ans_vocab),
                         constant_values=-1e30)[None, :]     # (1, A_pad) f32
    return q


# ------------------------------------------------------------------ forward --
def encdec_forward(params, images, questions, lengths, *, num_layers,
                   ans_vocab, prefix_n=1, batch_tile=BATCH_TILE):
    B = images.shape[0]
    tb = min(batch_tile, _round_up(B, 8))
    B_pad = _round_up(B, tb)

    # TODO(synk): frozen pretrained resnet152 backbone has no clean Pallas
    # equivalent; replaced by a global average pool + fixed projection (the
    # projection is precomposed into the encoder Linear weight offline).
    pooled = jnp.mean(images, axis=(2, 3))                         # (B, C) f32

    # Enc: (precomposed) Linear + BatchNorm1d in one Pallas kernel.
    feat = encoder_head(pooled, params["enc_w"], params["enc_b"],
                        params["bn_gamma"], params["bn_beta"])     # (B, E_pad) bf16

    # TODO(synk): embedding-row gather stays in XLA (in-kernel scalar-prefetch
    # row gather would remove this HBM round trip); rows are gathered directly
    # into time-major layout so no separate (B,T,E)->(T,B,E) activation
    # transpose is materialized.
    emb_t = jnp.take(params["embed"], questions.T, axis=0)         # (T_q, B, E_pad) bf16
    x = jnp.concatenate([feat[None, :, :], emb_t], axis=0)         # (T, B, E_pad)
    x = jnp.pad(x, ((0, 0), (0, B_pad - B), (0, 0)))               # pad batch rows

    # Padded batch rows get length 0 -> their state stays zero forever.
    lens = jnp.pad(lengths.astype(jnp.int32), (0, B_pad - B)).reshape(B_pad, 1)

    # Fused multi-layer LSTM + classifier: one kernel, one HBM writeback.
    logp = fused_decoder(lens, x, params, num_layers=num_layers,
                         prefix_n=prefix_n, tb=tb)                 # (B_pad, A_pad)
    return logp[:B, :ans_vocab]


# ------------------------------------------------------- pure-JAX reference --
def reference_forward(raw, images, questions, lengths, *, hidden, num_layers,
                      prefix_n):
    B = images.shape[0]
    pooled = jnp.mean(images, axis=(2, 3))
    x = (pooled @ raw["resnet_stub_w"]) @ raw["enc_w"] + raw["enc_b"]
    mean = jnp.mean(x, axis=0, keepdims=True)
    var = jnp.mean((x - mean) ** 2, axis=0, keepdims=True)
    feat = (x - mean) / jnp.sqrt(var + 1e-5) * raw["bn_gamma"] + raw["bn_beta"]

    emb = raw["embed"][questions]                                  # (B, T_q, E)
    seq = jnp.concatenate([feat[:, None, :], emb], axis=1)         # (B, T, E)
    lens = lengths.astype(jnp.int32)
    H = hidden

    def lstm_layer_ref(x_btd, w_ih, w_hh, b):
        h = jnp.zeros((B, H), jnp.float32)
        c = jnp.zeros((B, H), jnp.float32)
        outs = []
        for t in range(x_btd.shape[1]):
            gates = x_btd[:, t, :] @ w_ih + h @ w_hh + b           # [i,f,g,o]
            i = jax.nn.sigmoid(gates[:, 0:H])
            f = jax.nn.sigmoid(gates[:, H:2 * H])
            g = jnp.tanh(gates[:, 2 * H:3 * H])
            o = jax.nn.sigmoid(gates[:, 3 * H:4 * H])
            c_new = f * c + i * g
            h_new = o * jnp.tanh(c_new)
            mask = (lens > t)[:, None]
            h = jnp.where(mask, h_new, h)
            c = jnp.where(mask, c_new, c)
            outs.append(jnp.where(mask, h_new, 0.0))
        return jnp.stack(outs, axis=1), h

    xcur = seq
    hn = None
    for l in range(num_layers):
        xcur, hn = lstm_layer_ref(xcur, raw["w_ih"][l], raw["w_hh"][l], raw["b"][l])
    chunks = [xcur[:, t, :] for t in range(prefix_n + 1)] + [hn]
    logits = jnp.concatenate(chunks, axis=1) @ raw["cls_w"] + raw["cls_b"]
    return jax.nn.log_softmax(logits, axis=1)


if __name__ == "__main__":
    B, C, HS, WS = 4, 3, 16, 16
    T_q = 8
    embed_size, hidden_size = 32, 32
    vocab_size, ans_vocab_size = 50, 24
    num_layers, prefix_n = 2, 1
    resnet_feat_dim = 64     # stand-in for resnet152's 2048-d pooled features

    key = jax.random.PRNGKey(0)
    k_img, k_q, k_p = jax.random.split(key, 3)
    images = jax.random.normal(k_img, (B, C, HS, WS), jnp.float32)
    questions = jax.random.randint(k_q, (B, T_q), 0, vocab_size, jnp.int32)
    # lengths include the prepended image feature; sorted descending as required
    # by pack_padded_sequence(enforce_sorted=True).
    lengths = jnp.array([T_q + 1, T_q, 6, 4], dtype=jnp.int32)

    raw = init_params(k_p, in_ch=C, resnet_feat=resnet_feat_dim,
                      embed=embed_size, hidden=hidden_size, vocab=vocab_size,
                      ans_vocab=ans_vocab_size, num_layers=num_layers,
                      prefix_n=prefix_n)
    params = prepare_params(raw, embed=embed_size, hidden=hidden_size,
                            ans_vocab=ans_vocab_size, num_layers=num_layers,
                            prefix_n=prefix_n)

    fwd = jax.jit(functools.partial(encdec_forward, num_layers=num_layers,
                                    ans_vocab=ans_vocab_size,
                                    prefix_n=prefix_n))
    out = jax.block_until_ready(fwd(params, images, questions, lengths))
    assert out.shape == (B, ans_vocab_size)
    assert bool(jnp.all(jnp.isfinite(out)))

    # Validate the bf16 / approx-sigmoid kernel against an exact f32 reference.
    ref = reference_forward(raw, images, questions, lengths, hidden=hidden_size,
                            num_layers=num_layers, prefix_n=prefix_n)
    max_diff = float(jnp.max(jnp.abs(out - ref)))
    assert max_diff < 8e-2, f"max |kernel - ref| = {max_diff}"
    print("KERNEL_OK")
</pallas_src>

<mosaic_0001>
module attributes {stable_mosaic.version = 11 : i64} {
  func.func @_enc_kernel(%arg0: memref<4x3xf32, #tpu.memory_space<vmem>>, %arg1: memref<3x128xbf16, #tpu.memory_space<vmem>>, %arg2: memref<1x128xf32, #tpu.memory_space<vmem>>, %arg3: memref<1x128xf32, #tpu.memory_space<vmem>>, %arg4: memref<1x128xf32, #tpu.memory_space<vmem>>, %arg5: memref<4x128xbf16, #tpu.memory_space<vmem>>) attributes {dimension_semantics = [], scalar_prefetch = 0 : i64, scratch_operands = 0 : i64, tpu.core_type = #tpu.core_type<tc>} {
    %c0 = arith.constant 0 : index
    %c0_0 = arith.constant 0 : index
    %0 = vector.load %arg0[%c0, %c0_0] : memref<4x3xf32, #tpu.memory_space<vmem>>, vector<4x3xf32>
    %1 = arith.truncf %0 : vector<4x3xf32> to vector<4x3xbf16>
    %c0_1 = arith.constant 0 : index
    %c0_2 = arith.constant 0 : index
    %2 = vector.load %arg1[%c0_1, %c0_2] : memref<3x128xbf16, #tpu.memory_space<vmem>>, vector<3x128xbf16>
    %cst = arith.constant dense<0.000000e+00> : vector<4x128xf32>
    %3 = tpu.matmul %1, %2, %cst {dimension_numbers = #tpu.dot_dimension_numbers<[1], [0], [0], [1], [0, 0, 1, 1], [], []>} : vector<4x3xbf16>, vector<3x128xbf16>, vector<4x128xf32> -> vector<4x128xf32>
    %c0_3 = arith.constant 0 : index
    %c0_4 = arith.constant 0 : index
    %4 = vector.load %arg2[%c0_3, %c0_4] : memref<1x128xf32, #tpu.memory_space<vmem>>, vector<1x128xf32>
    %5 = vector.broadcast %4 : vector<1x128xf32> to vector<4x128xf32>
    %6 = arith.addf %3, %5 : vector<4x128xf32>
    %cst_5 = arith.constant dense<0.000000e+00> : vector<128xf32>
    %7 = vector.multi_reduction <add>, %6, %cst_5 [0] : vector<4x128xf32> to vector<128xf32>
    %8 = vector.shape_cast %7 : vector<128xf32> to vector<1x128xf32>
    %cst_6 = arith.constant 4.000000e+00 : f32
    %9 = vector.broadcast %cst_6 : f32 to vector<1x128xf32>
    %10 = arith.divf %8, %9 : vector<1x128xf32>
    %11 = vector.broadcast %10 : vector<1x128xf32> to vector<4x128xf32>
    %12 = arith.subf %6, %11 : vector<4x128xf32>
    %13 = arith.mulf %12, %12 : vector<4x128xf32>
    %cst_7 = arith.constant dense<0.000000e+00> : vector<128xf32>
    %14 = vector.multi_reduction <add>, %13, %cst_7 [0] : vector<4x128xf32> to vector<128xf32>
    %15 = vector.shape_cast %14 : vector<128xf32> to vector<1x128xf32>
    %cst_8 = arith.constant 4.000000e+00 : f32
    %16 = vector.broadcast %cst_8 : f32 to vector<1x128xf32>
    %17 = arith.divf %15, %16 : vector<1x128xf32>
    %18 = vector.broadcast %10 : vector<1x128xf32> to vector<4x128xf32>
    %19 = arith.subf %6, %18 : vector<4x128xf32>
    %cst_9 = arith.constant 9.99999974E-6 : f32
    %20 = vector.broadcast %cst_9 : f32 to vector<1x128xf32>
    %21 = arith.addf %17, %20 : vector<1x128xf32>
    %22 = math.rsqrt %21 : vector<1x128xf32>
    %23 = vector.broadcast %22 : vector<1x128xf32> to vector<4x128xf32>
    %24 = arith.mulf %19, %23 : vector<4x128xf32>
    %c0_10 = arith.constant 0 : index
    %c0_11 = arith.constant 0 : index
    %25 = vector.load %arg3[%c0_10, %c0_11] : memref<1x128xf32, #tpu.memory_space<vmem>>, vector<1x128xf32>
    %26 = vector.broadcast %25 : vector<1x128xf32> to vector<4x128xf32>
    %27 = arith.mulf %24, %26 : vector<4x128xf32>
    %c0_12 = arith.constant 0 : index
    %c0_13 = arith.constant 0 : index
    %28 = vector.load %arg4[%c0_12, %c0_13] : memref<1x128xf32, #tpu.memory_space<vmem>>, vector<1x128xf32>
    %29 = vector.broadcast %28 : vector<1x128xf32> to vector<4x128xf32>
    %30 = arith.addf %27, %29 : vector<4x128xf32>
    %31 = arith.truncf %30 : vector<4x128xf32> to vector<4x128xbf16>
    %c0_14 = arith.constant 0 : index
    %c0_15 = arith.constant 0 : index
    %32 = vector.load %arg5[%c0_14, %c0_15] : memref<4x128xbf16, #tpu.memory_space<vmem>>, vector<4x128xbf16>
    tpu.vector_store %arg5[%c0_14, %c0_15], %31 {strides = array<i32>} : memref<4x128xbf16, #tpu.memory_space<vmem>>, vector<4x128xbf16>,
    return
  }
}

module attributes {stable_mosaic.version = 11 : i64} {
  func.func @_fused_dec_kernel(%arg0: i32, %arg1: memref<8x1xi32, #tpu.memory_space<vmem>>, %arg2: memref<9x8x128xbf16, #tpu.memory_space<vmem>>, %arg3: memref<128x512xbf16, #tpu.memory_space<vmem>>, %arg4: memref<1x128x512xbf16, #tpu.memory_space<vmem>>, %arg5: memref<2x128x512xbf16, #tpu.memory_space<vmem>>, %arg6: memref<2x1x512xf32, #tpu.memory_space<vmem>>, %arg7: memref<3x128x128xbf16, #tpu.memory_space<vmem>>, %arg8: memref<1x128xf32, #tpu.memory_space<vmem>>, %arg9: memref<8x128xf32, #tpu.memory_space<vmem>>, %arg10: memref<72x512xbf16, #tpu.memory_space<vmem>>, %arg11: memref<9x8x128xbf16, #tpu.memory_space<vmem>>, %arg12: memref<9x8x128xbf16, #tpu.memory_space<vmem>>, %arg13: memref<8x128xf32, #tpu.memory_space<vmem>>, %arg14: memref<8x128xf32, #tpu.memory_space<vmem>>) attributes {dimension_semantics = [#tpu.dimension_semantics<parallel>], iteration_bounds = array<i64: 1>, scalar_prefetch = 0 : i64, scratch_operands = 5 : i64, tpu.core_type = #tpu.core_type<tc>, window_params = [{transform_indices = @transform_0, window_bounds = array<i64: 8, 1>}, {transform_indices = @transform_1, window_bounds = array<i64: 9, 8, 128>}, {pipeline_mode = #tpu.pipeline_mode<synchronous>, transform_indices = @transform_2, window_bounds = array<i64: 128, 512>}, {pipeline_mode = #tpu.pipeline_mode<synchronous>, transform_indices = @transform_3, window_bounds = array<i64: 1, 128, 512>}, {pipeline_mode = #tpu.pipeline_mode<synchronous>, transform_indices = @transform_4, window_bounds = array<i64: 2, 128, 512>}, {pipeline_mode = #tpu.pipeline_mode<synchronous>, transform_indices = @transform_5, window_bounds = array<i64: 2, 1, 512>}, {pipeline_mode = #tpu.pipeline_mode<synchronous>, transform_indices = @transform_6, window_bounds = array<i64: 3, 128, 128>}, {pipeline_mode = #tpu.pipeline_mode<synchronous>, transform_indices = @transform_7, window_bounds = array<i64: 1, 128>}, {transform_indices = @transform_8, window_bounds = array<i64: 8, 128>}]} {
    %c0 = arith.constant 0 : index
    %c0_0 = arith.constant 0 : index
    %0 = vector.load %arg1[%c0, %c0_0] : memref<8x1xi32, #tpu.memory_space<vmem>>, vector<8x1xi32>
    %c0_1 = arith.constant 0 : index
    %c0_2 = arith.constant 0 : index
    %c0_3 = arith.constant 0 : index
    %1 = vector.load %arg2[%c0_1, %c0_2, %c0_3] : memref<9x8x128xbf16, #tpu.memory_space<vmem>>, vector<9x8x128xbf16>
    %2 = vector.shape_cast %1 : vector<9x8x128xbf16> to vector<72x128xbf16>
    %c0_4 = arith.constant 0 : index
    %c0_5 = arith.constant 0 : index
    %3 = vector.load %arg3[%c0_4, %c0_5] : memref<128x512xbf16, #tpu.memory_space<vmem>>, vector<128x512xbf16>
    %cst = arith.constant dense<0.000000e+00> : vector<72x512xf32>
    %4 = tpu.matmul %2, %3, %cst {dimension_numbers = #tpu.dot_dimension_numbers<[1], [0], [0], [1], [0, 0, 1, 1], [], []>} : vector<72x128xbf16>, vector<128x512xbf16>, vector<72x512xf32> -> vector<72x512xf32>
    %5 = arith.truncf %4 : vector<72x512xf32> to vector<72x512xbf16>
    %c0_6 = arith.constant 0 : index
    %c0_7 = arith.constant 0 : index
    %6 = vector.load %arg10[%c0_6, %c0_7] : memref<72x512xbf16, #tpu.memory_space<vmem>>, vector<72x512xbf16>
    tpu.vector_store %arg10[%c0_6, %c0_7], %5 {strides = array<i32>} : memref<72x512xbf16, #tpu.memory_space<vmem>>, vector<72x512xbf16>,
    %c0_8 = arith.constant 0 : index
    %c0_9 = arith.constant 0 : index
    %c0_10 = arith.constant 0 : index
    %7 = vector.load %arg5[%c0_8, %c0_9, %c0_10] : memref<2x128x512xbf16, #tpu.memory_space<vmem>>, vector<1x128x512xbf16>
    %8 = vector.shape_cast %7 : vector<1x128x512xbf16> to vector<128x512xbf16>
    %c0_11 = arith.constant 0 : index
    %c0_12 = arith.constant 0 : index
    %c0_13 = arith.constant 0 : index
    %9 = vector.load %arg6[%c0_11, %c0_12, %c0_13] : memref<2x1x512xf32, #tpu.memory_space<vmem>>, vector<1x1x512xf32>
    %10 = vector.shape_cast %9 : vector<1x1x512xf32> to vector<1x512xf32>
    %cst_14 = arith.constant 0.000000e+00 : f32
    %11 = vector.broadcast %cst_14 : f32 to vector<8x128xf32>
    %c0_15 = arith.constant 0 : index
    %c0_16 = arith.constant 0 : index
    %12 = vector.load %arg13[%c0_15, %c0_16] : memref<8x128xf32, #tpu.memory_space<vmem>>, vector<8x128xf32>
    tpu.vector_store %arg13[%c0_15, %c0_16], %11 {strides = array<i32>} : memref<8x128xf32, #tpu.memory_space<vmem>>, vector<8x128xf32>,
    %cst_17 = arith.constant 0.000000e+00 : f32
    %13 = vector.broadcast %cst_17 : f32 to vector<8x128xf32>
    %c0_18 = arith.constant 0 : index
    %c0_19 = arith.constant 0 : index
    %14 = vector.load %arg14[%c0_18, %c0_19] : memref<8x128xf32, #tpu.memory_space<vmem>>, vector<8x128xf32>
    tpu.vector_store %arg14[%c0_18, %c0_19], %13 {strides = array<i32>} : memref<8x128xf32, #tpu.memory_space<vmem>>, vector<8x128xf32>,
    %c0_i32 = arith.constant 0 : i32
    %c0_20 = arith.constant 0 : index
    %c0_21 = arith.constant 0 : index
    %15 = vector.load %arg13[%c0_20, %c0_21] : memref<8x128xf32, #tpu.memory_space<vmem>>, vector<8x128xf32>
    %c0_22 = arith.constant 0 : index
    %c0_23 = arith.constant 0 : index
    %16 = vector.load %arg14[%c0_22, %c0_23] : memref<8x128xf32, #tpu.memory_space<vmem>>, vector<8x128xf32>
    %c8_i32 = arith.constant 8 : i32
    %17 = arith.muli %c0_i32, %c8_i32 : i32
    %18 = tpu.assume_multiple %17, 8 : i32
    %19 = arith.index_cast %18 : i32 to index
    %c0_24 = arith.constant 0 : index
    %20 = vector.load %arg10[%19, %c0_24] : memref<72x512xbf16, #tpu.memory_space<vmem>>, vector<8x512xbf16>
    %21 = arith.extf %20 : vector<8x512xbf16> to vector<8x512xf32>
    %22 = vector.broadcast %10 : vector<1x512xf32> to vector<8x512xf32>
    %23 = arith.addf %21, %22 : vector<8x512xf32>
    %24 = arith.truncf %15 : vector<8x128xf32> to vector<8x128xbf16>
    %cst_25 = arith.constant dense<0.000000e+00> : vector<8x512xf32>
    %25 = tpu.matmul %24, %8, %cst_25 {dimension_numbers = #tpu.dot_dimension_numbers<[1], [0], [0], [1], [0, 0, 1, 1], [], []>} : vector<8x128xbf16>, vector<128x512xbf16>, vector<8x512xf32> -> vector<8x512xf32>
    %26 = arith.addf %23, %25 : vector<8x512xf32>
    %27 = vector.extract_strided_slice %26 {offsets = [0, 0], sizes = [8, 384], strides = [1, 1]} : vector<8x512xf32> to vector<8x384xf32>
    %cst_26 = arith.constant 0.000000e+00 : f32
    %28 = vector.broadcast %cst_26 : f32 to vector<8x384xf32>
    %29 = arith.subf %28, %27 : vector<8x384xf32>
    %30 = math.exp %29 : vector<8x384xf32>
    %cst_27 = arith.constant 1.000000e+00 : f32
    %31 = vector.broadcast %cst_27 : f32 to vector<8x384xf32>
    %32 = arith.addf %31, %30 : vector<8x384xf32>
    %33 = tpu.reciprocal %32 {approx = true} : vector<8x384xf32> -> vector<8x384xf32>
    %34 = vector.extract_strided_slice %33 {offsets = [0, 0], sizes = [8, 128], strides = [1, 1]} : vector<8x384xf32> to vector<8x128xf32>
    %35 = vector.extract_strided_slice %33 {offsets = [0, 128], sizes = [8, 128], strides = [1, 1]} : vector<8x384xf32> to vector<8x128xf32>
    %36 = vector.extract_strided_slice %33 {offsets = [0, 256], sizes = [8, 128], strides = [1, 1]} : vector<8x384xf32> to vector<8x128xf32>
    %37 = vector.extract_strided_slice %26 {offsets = [0, 384], sizes = [8, 128], strides = [1, 1]} : vector<8x512xf32> to vector<8x128xf32>
    %38 = math.tanh %37 : vector<8x128xf32>
    %39 = arith.mulf %35, %16 : vector<8x128xf32>
    %40 = arith.mulf %34, %38 : vector<8x128xf32>
    %41 = arith.addf %39, %40 : vector<8x128xf32>
    %42 = math.tanh %41 : vector<8x128xf32>
    %43 = arith.mulf %36, %42 : vector<8x128xf32>
    %44 = vector.broadcast %c0_i32 : i32 to vector<8x1xi32>
    %45 = arith.cmpi sgt, %0, %44 : vector<8x1xi32>
    %46 = vector.shape_cast %45 : vector<8x1xi1> to vector<8x1xi1>
    %47 = vector.broadcast %46 : vector<8x1xi1> to vector<8x128xi1>
    %48 = arith.select %47, %43, %15 : vector<8x128xi1>, vector<8x128xf32>
    %c0_28 = arith.constant 0 : index
    %c0_29 = arith.constant 0 : index
    %49 = vector.load %arg13[%c0_28, %c0_29] : memref<8x128xf32, #tpu.memory_space<vmem>>, vector<8x128xf32>
    tpu.vector_store %arg13[%c0_28, %c0_29], %48 {strides = array<i32>} : memref<8x128xf32, #tpu.memory_space<vmem>>, vector<8x128xf32>,
    %50 = vector.shape_cast %45 : vector<8x1xi1> to vector<8x1xi1>
    %51 = vector.broadcast %50 : vector<8x1xi1> to vector<8x128xi1>
    %52 = arith.select %51, %41, %16 : vector<8x128xi1>, vector<8x128xf32>
    %c0_30 = arith.constant 0 : index
    %c0_31 = arith.constant 0 : index
    %53 = vector.load %arg14[%c0_30, %c0_31] : memref<8x128xf32, #tpu.memory_space<vmem>>, vector<8x128xf32>
    tpu.vector_store %arg14[%c0_30, %c0_31], %52 {strides = array<i32>} : memref<8x128xf32, #tpu.memory_space<vmem>>, vector<8x128xf32>,
    %54 = arith.extui %45 : vector<8x1xi1> to vector<8x1xi32>
    %55 = arith.sitofp %54 : vector<8x1xi32> to vector<8x1xf32>
    %56 = vector.broadcast %55 : vector<8x1xf32> to vector<8x128xf32>
    %57 = arith.mulf %43, %56 : vector<8x128xf32>
    %58 = arith.truncf %57 : vector<8x128xf32> to vector<8x128xbf16>
    %59 = arith.index_cast %c0_i32 : i32 to index
    %c0_32 = arith.constant 0 : index
    %c0_33 = arith.constant 0 : index
    %60 = vector.load %arg11[%59, %c0_32, %c0_33] : memref<9x8x128xbf16, #tpu.memory_space<vmem>>, vector<1x8x128xbf16>
    %61 = vector.shape_cast %60 : vector<1x8x128xbf16> to vector<8x128xbf16>
    %62 = vector.shape_cast %58 : vector<8x128xbf16> to vector<1x8x128xbf16>
    tpu.vector_store %arg11[%59, %c0_32, %c0_33], %62 {strides = array<i32>} : memref<9x8x128xbf16, #tpu.memory_space<vmem>>, vector<1x8x128xbf16>,
    %c1_i32 = arith.constant 1 : i32
    %c0_34 = arith.constant 0 : index
    %c0_35 = arith.constant 0 : index
    %63 = vector.load %arg13[%c0_34, %c0_35] : memref<8x128xf32, #tpu.memory_space<vmem>>, vector<8x128xf32>
    %c0_36 = arith.constant 0 : index
    %c0_37 = arith.constant 0 : index
    %64 = vector.load %arg14[%c0_36, %c0_37] : memref<8x128xf32, #tpu.memory_space<vmem>>, vector<8x128xf32>
    %c8_i32_38 = arith.constant 8 : i32
    %65 = arith.muli %c1_i32, %c8_i32_38 : i32
    %66 = tpu.assume_multiple %65, 8 : i32
    %67 = arith.index_cast %66 : i32 to index
    %c0_39 = arith.constant 0 : index
    %68 = vector.load %arg10[%67, %c0_39] : memref<72x512xbf16, #tpu.memory_space<vmem>>, vector<8x512xbf16>
    %69 = arith.extf %68 : vector<8x512xbf16> to vector<8x512xf32>
    %70 = vector.broadcast %10 : vector<1x512xf32> to vector<8x512xf32>
    %71 = arith.addf %69, %70 : vector<8x512xf32>
    %72 = arith.truncf %63 : vector<8x128xf32> to vector<8x128xbf16>
    %cst_40 = arith.constant dense<0.000000e+00> : vector<8x512xf32>
    %73 = tpu.matmul %72, %8, %cst_40 {dimension_numbers = #tpu.dot_dimension_numbers<[1], [0], [0], [1], [0, 0, 1, 1], [], []>} : vector<8x128xbf16>, vector<128x512xbf16>, vector<8x512xf32> -> vector<8x512xf32>
    %74 = arith.addf %71, %73 : vector<8x512xf32>
    %75 = vector.extract_strided_slice %74 {offsets = [0, 0], sizes = [8, 384], strides = [1, 1]} : vector<8x512xf32> to vector<8x384xf32>
    %cst_41 = arith.constant 0.000000e+00 : f32
    %76 = vector.broadcast %cst_41 : f32 to vector<8x384xf32>
    %77 = arith.subf %76, %75 : vector<8x384xf32>
    %78 = math.exp %77 : vector<8x384xf32>
    %cst_42 = arith.constant 1.000000e+00 : f32
    %79 = vector.broadcast %cst_42 : f32 to vector<8x384xf32>
    %80 = arith.addf %79, %78 : vector<8x384xf32>
    %81 = tpu.reciprocal %80 {approx = true} : vector<8x384xf32> -> vector<8x384xf32>
    %82 = vector.extract_strided_slice %81 {offsets = [0, 0], sizes = [8, 128], strides = [1, 1]} : vector<8x384xf32> to vector<8x128xf32>
    %83 = vector.extract_strided_slice %81 {offsets = [0, 128], sizes = [8, 128], strides = [1, 1]} : vector<8x384xf32> to vector<8x128xf32>
    %84 = vector.extract_strided_slice %81 {offsets = [0, 256], sizes = [8, 128], strides = [1, 1]} : vector<8x384xf32> to vector<8x128xf32>
    %85 = vector.extract_strided_slice %74 {offsets = [0, 384], sizes = [8, 128], strides = [1, 1]} : vector<8x512xf32> to vector<8x128xf32>
    %86 = math.tanh %85 : vector<8x128xf32>
    %87 = arith.mulf %83, %64 : vector<8x128xf32>
    %88 = arith.mulf %82, %86 : vector<8x128xf32>
    %89 = arith.addf %87, %88 : vector<8x128xf32>
    %90 = math.tanh %89 : vector<8x128xf32>
    %91 = arith.mulf %84, %90 : vector<8x128xf32>
    %92 = vector.broadcast %c1_i32 : i32 to vector<8x1xi32>
    %93 = arith.cmpi sgt, %0, %92 : vector<8x1xi32>
    %94 = vector.shape_cast %93 : vector<8x1xi1> to vector<8x1xi1>
    %95 = vector.broadcast %94 : vector<8x1xi1> to vector<8x128xi1>
    %96 = arith.select %95, %91, %63 : vector<8x128xi1>, vector<8x128xf32>
    %c0_43 = arith.constant 0 : index
    %c0_44 = arith.constant 0 : index
    %97 = vector.load %arg13[%c0_43, %c0_44] : memref<8x128xf32, #tpu.memory_space<vmem>>, vector<8x128xf32>
    tpu.vector_store %arg13[%c0_43, %c0_44], %96 {strides = array<i32>} : memref<8x128xf32, #tpu.memory_space<vmem>>, vector<8x128xf32>,
    %98 = vector.shape_cast %93 : vector<8x1xi1> to vector<8x1xi1>
    %99 = vector.broadcast %98 : vector<8x1xi1> to vector<8x128xi1>
    %100 = arith.select %99, %89, %64 : vector<8x128xi1>, vector<8x128xf32>
    %c0_45 = arith.constant 0 : index
    %c0_46 = arith.constant 0 : index
    %101 = vector.load %arg14[%c0_45, %c0_46] : memref<8x128xf32, #tpu.memory_space<vmem>>, vector<8x128xf32>
    tpu.vector_store %arg14[%c0_45, %c0_46], %100 {strides = array<i32>} : memref<8x128xf32, #tpu.memory_space<vmem>>, vector<8x128xf32>,
    %102 = arith.extui %93 : vector<8x1xi1> to vector<8x1xi32>
    %103 = arith.sitofp %102 : vector<8x1xi32> to vector<8x1xf32>
    %104 = vector.broadcast %103 : vector<8x1xf32> to vector<8x128xf32>
    %105 = arith.mulf %91, %104 : vector<8x128xf32>
    %106 = arith.truncf %105 : vector<8x128xf32> to vector<8x128xbf16>
    %107 = arith.index_cast %c1_i32 : i32 to index
    %c0_47 = arith.constant 0 : index
    %c0_48 = arith.constant 0 : index
    %108 = vector.load %arg11[%107, %c0_47, %c0_48] : memref<9x8x128xbf16, #tpu.memory_space<vmem>>, vector<1x8x128xbf16>
    %109 = vector.shape_cast %108 : vector<1x8x128xbf16> to vector<8x128xbf16>
    %110 = vector.shape_cast %106 : vector<8x128xbf16> to vector<1x8x128xbf16>
    tpu.vector_store %arg11[%107, %c0_47, %c0_48], %110 {strides = array<i32>} : memref<9x8x128xbf16, #tpu.memory_space<vmem>>, vector<1x8x128xbf16>,
    %c2_i32 = arith.constant 2 : i32
    %c0_49 = arith.constant 0 : index
    %c0_50 = arith.constant 0 : index
    %111 = vector.load %arg13[%c0_49, %c0_50] : memref<8x128xf32, #tpu.memory_space<vmem>>, vector<8x128xf32>
    %c0_51 = arith.constant 0 : index
    %c0_52 = arith.constant 0 : index
    %112 = vector.load %arg14[%c0_51, %c0_52] : memref<8x128xf32, #tpu.memory_space<vmem>>, vector<8x128xf32>
    %c8_i32_53 = arith.constant 8 : i32
    %113 = arith.muli %c2_i32, %c8_i32_53 : i32
    %114 = tpu.assume_multiple %113, 8 : i32
    %115 = arith.index_cast %114 : i32 to index
    %c0_54 = arith.constant 0 : index
    %116 = vector.load %arg10[%115, %c0_54] : memref<72x512xbf16, #tpu.memory_space<vmem>>, vector<8x512xbf16>
    %117 = arith.extf %116 : vector<8x512xbf16> to vector<8x512xf32>
    %118 = vector.broadcast %10 : vector<1x512xf32> to vector<8x512xf32>
    %119 = arith.addf %117, %118 : vector<8x512xf32>
    %120 = arith.truncf %111 : vector<8x128xf32> to vector<8x128xbf16>
    %cst_55 = arith.constant dense<0.000000e+00> : vector<8x512xf32>
    %121 = tpu.matmul %120, %8, %cst_55 {dimension_numbers = #tpu.dot_dimension_numbers<[1], [0], [0], [1], [0, 0, 1, 1], [], []>} : vector<8x128xbf16>, vector<128x512xbf16>, vector<8x512xf32> -> vector<8x512xf32>
    %122 = arith.addf %119, %121 : vector<8x512xf32>
    %123 = vector.extract_strided_slice %122 {offsets = [0, 0], sizes = [8, 384], strides = [1, 1]} : vector<8x512xf32> to vector<8x384xf32>
    %cst_56 = arith.constant 0.000000e+00 : f32
    %124 = vector.broadcast %cst_56 : f32 to vector<8x384xf32>
    %125 = arith.subf %124, %123 : vector<8x384xf32>
    %126 = math.exp %125 : vector<8x384xf32>
    %cst_57 = arith.constant 1.000000e+00 : f32
    %127 = vector.broadcast %cst_57 : f32 to vector<8x384xf32>
    %128 = arith.addf %127, %126 : vector<8x384xf32>
    %129 = tpu.reciprocal %128 {approx = true} : vector<8x384xf32> -> vector<8x384xf32>
    %130 = vector.extract_strided_slice %129 {offsets = [0, 0], sizes = [8, 128], strides = [1, 1]} : vector<8x384xf32> to vector<8x128xf32>
    %131 = vector.extract_strided_slice %129 {offsets = [0, 128], sizes = [8, 128], strides = [1, 1]} : vector<8x384xf32> to vector<8x128xf32>
    %132 = vector.extract_strided_slice %129 {offsets = [0, 256], sizes = [8, 128], strides = [1, 1]} : vector<8x384xf32> to vector<8x128xf32>
    %133 = vector.extract_strided_slice %122 {offsets = [0, 384], sizes = [8, 128], strides = [1, 1]} : vector<8x512xf32> to vector<8x128xf32>
    %134 = math.tanh %133 : vector<8x128xf32>
    %135 = arith.mulf %131, %112 : vector<8x128xf32>
    %136 = arith.mulf %130, %134 : vector<8x128xf32>
    %137 = arith.addf %135, %136 : vector<8x128xf32>
    %138 = math.tanh %137 : vector<8x128xf32>
    %139 = arith.mulf %132, %138 : vector<8x128xf32>
    %140 = vector.broadcast %c2_i32 : i32 to vector<8x1xi32>
    %141 = arith.cmpi sgt, %0, %140 : vector<8x1xi32>
    %142 = vector.shape_cast %141 : vector<8x1xi1> to vector<8x1xi1>
    %143 = vector.broadcast %142 : vector<8x1xi1> to vector<8x128xi1>
    %144 = arith.select %143, %139, %111 : vector<8x128xi1>, vector<8x128xf32>
    %c0_58 = arith.constant 0 : index
    %c0_59 = arith.constant 0 : index
    %145 = vector.load %arg13[%c0_58, %c0_59] : memref<8x128xf32, #tpu.memory_space<vmem>>, vector<8x128xf32>
    tpu.vector_store %arg13[%c0_58, %c0_59], %144 {strides = array<i32>} : memref<8x128xf32, #tpu.memory_space<vmem>>, vector<8x128xf32>,
    %146 = vector.shape_cast %141 : vector<8x1xi1> to vector<8x1xi1>
    %147 = vector.broadcast %146 : vector<8x1xi1> to vector<8x128xi1>
    %148 = arith.select %147, %137, %112 : vector<8x128xi1>, vector<8x128xf32>
    %c0_60 = arith.constant 0 : index
    %c0_61 = arith.constant 0 : index
    %149 = vector.load %arg14[%c0_60, %c0_61] : memref<8x128xf32, #tpu.memory_space<vmem>>, vector<8x128xf32>
    tpu.vector_store %arg14[%c0_60, %c0_61], %148 {strides = array<i32>} : memref<8x128xf32, #tpu.memory_space<vmem>>, vector<8x128xf32>,
    %150 = arith.extui %141 : vector<8x1xi1> to vector<8x1xi32>
    %151 = arith.sitofp %150 : vector<8x1xi32> to vector<8x1xf32>
    %152 = vector.broadcast %151 : vector<8x1xf32> to vector<8x128xf32>
    %153 = arith.mulf %139, %152 : vector<8x128xf32>
    %154 = arith.truncf %153 : vector<8x128xf32> to vector<8x128xbf16>
    %155 = arith.index_cast %c2_i32 : i32 to index
    %c0_62 = arith.constant 0 : index
    %c0_63 = arith.constant 0 : index
    %156 = vector.load %arg11[%155, %c0_62, %c0_63] : memref<9x8x128xbf16, #tpu.memory_space<vmem>>, vector<1x8x128xbf16>
    %157 = vector.shape_cast %156 : vector<1x8x128xbf16> to vector<8x128xbf16>
    %158 = vector.shape_cast %154 : vector<8x128xbf16> to vector<1x8x128xbf16>
    tpu.vector_store %arg11[%155, %c0_62, %c0_63], %158 {strides = array<i32>} : memref<9x8x128xbf16, #tpu.memory_space<vmem>>, vector<1x8x128xbf16>,
    %c3_i32 = arith.constant 3 : i32
    %c0_64 = arith.constant 0 : index
    %c0_65 = arith.constant 0 : index
    %159 = vector.load %arg13[%c0_64, %c0_65] : memref<8x128xf32, #tpu.memory_space<vmem>>, vector<8x128xf32>
    %c0_66 = arith.constant 0 : index
    %c0_67 = arith.constant 0 : index
    %160 = vector.load %arg14[%c0_66, %c0_67] : memref<8x128xf32, #tpu.memory_space<vmem>>, vector<8x128xf32>
    %c8_i32_68 = arith.constant 8 : i32
    %161 = arith.muli %c3_i32, %c8_i32_68 : i32
    %162 = tpu.assume_multiple %161, 8 : i32
    %163 = arith.index_cast %162 : i32 to index
    %c0_69 = arith.constant 0 : index
    %164 = vector.load %arg10[%163, %c0_69] : memref<72x512xbf16, #tpu.memory_space<vmem>>, vector<8x512xbf16>
    %165 = arith.extf %164 : vector<8x512xbf16> to vector<8x512xf32>
    %166 = vector.broadcast %10 : vector<1x512xf32> to vector<8x512xf32>
    %167 = arith.addf %165, %166 : vector<8x512xf32>
    %168 = arith.truncf %159 : vector<8x128xf32> to vector<8x128xbf16>
    %cst_70 = arith.constant dense<0.000000e+00> : vector<8x512xf32>
    %169 = tpu.matmul %168, %8, %cst_70 {dimension_numbers = #tpu.dot_dimension_numbers<[1], [0], [0], [1], [0, 0, 1, 1], [], []>} : vector<8x128xbf16>, vector<128x512xbf16>, vector<8x512xf32> -> vector<8x512xf32>
    %170 = arith.addf %167, %169 : vector<8x512xf32>
    %171 = vector.extract_strided_slice %170 {offsets = [0, 0], sizes = [8, 384], strides = [1, 1]} : vector<8x512xf32> to vector<8x384xf32>
    %cst_71 = arith.constant 0.000000e+00 : f32
    %172 = vector.broadcast %cst_71 : f32 to vector<8x384xf32>
    %173 = arith.subf %172, %171 : vector<8x384xf32>
    %174 = math.exp %173 : vector<8x384xf32>
    %cst_72 = arith.constant 1.000000e+00 : f32
    %175 = vector.broadcast %cst_72 : f32 to vector<8x384xf32>
    %176 = arith.addf %175, %174 : vector<8x384xf32>
    %177 = tpu.reciprocal %176 {approx = true} : vector<8x384xf32> -> vector<8x384xf32>
    %178 = vector.extract_strided_slice %177 {offsets = [0, 0], sizes = [8, 128], strides = [1, 1]} : vector<8x384xf32> to vector<8x128xf32>
    %179 = vector.extract_strided_slice %177 {offsets = [0, 128], sizes = [8, 128], strides = [1, 1]} : vector<8x384xf32> to vector<8x128xf32>
    %180 = vector.extract_strided_slice %177 {offsets = [0, 256], sizes = [8, 128], strides = [1, 1]} : vector<8x384xf32> to vector<8x128xf32>
    %181 = vector.extract_strided_slice %170 {offsets = [0, 384], sizes = [8, 128], strides = [1, 1]} : vector<8x512xf32> to vector<8x128xf32>
    %182 = math.tanh %181 : vector<8x128xf32>
    %183 = arith.mulf %179, %160 : vector<8x128xf32>
    %184 = arith.mulf %178, %182 : vector<8x128xf32>
    %185 = arith.addf %183, %184 : vector<8x128xf32>
    %186 = math.tanh %185 : vector<8x128xf32>
    %187 = arith.mulf %180, %186 : vector<8x128xf32>
    %188 = vector.broadcast %c3_i32 : i32 to vector<8x1xi32>
    %189 = arith.cmpi sgt, %0, %188 : vector<8x1xi32>
    %190 = vector.shape_cast %189 : vector<8x1xi1> to vector<8x1xi1>
    %191 = vector.broadcast %190 : vector<8x1xi1> to vector<8x128xi1>
    %192 = arith.select %191, %187, %159 : vector<8x128xi1>, vector<8x128xf32>
    %c0_73 = arith.constant 0 : index
    %c0_74 = arith.constant 0 : index
    %193 = vector.load %arg13[%c0_73, %c0_74] : memref<8x128xf32, #tpu.memory_space<vmem>>, vector<8x128xf32>
    tpu.vector_store %arg13[%c0_73, %c0_74], %192 {strides = array<i32>} : memref<8x128xf32, #tpu.memory_space<vmem>>, vector<8x128xf32>,
    %194 = vector.shape_cast %189 : vector<8x1xi1> to vector<8x1xi1>
    %195 = vector.broadcast %194 : vector<8x1xi1> to vector<8x128xi1>
    %196 = arith.select %195, %185, %160 : vector<8x128xi1>, vector<8x128xf32>
    %c0_75 = arith.constant 0 : index
    %c0_76 = arith.constant 0 : index
    %197 = vector.load %arg14[%c0_75, %c0_76] : memref<8x128xf32, #tpu.memory_space<vmem>>, vector<8x128xf32>
    tpu.vector_store %arg14[%c0_75, %c0_76], %196 {strides = array<i32>} : memref<8x128xf32, #tpu.memory_space<vmem>>, vector<8x128xf32>,
    %198 = arith.extui %189 : vector<8x1xi1> to vector<8x1xi32>
    %199 = arith.sitofp %198 : vector<8x1xi32> to vector<8x1xf32>
    %200 = vector.broadcast %199 : vector<8x1xf32> to vector<8x128xf32>
    %201 = arith.mulf %187, %200 : vector<8x128xf32>
    %202 = arith.truncf %201 : vector<8x128xf32> to vector<8x128xbf16>
    %203 = arith.index_cast %c3_i32 : i32 to index
    %c0_77 = arith.constant 0 : index
    %c0_78 = arith.constant 0 : index
    %204 = vector.load %arg11[%203, %c0_77, %c0_78] : memref<9x8x128xbf16, #tpu.memory_space<vmem>>, vector<1x8x128xbf16>
    %205 = vector.shape_cast %204 : vector<1x8x128xbf16> to vector<8x128xbf16>
    %206 = vector.shape_cast %202 : vector<8x128xbf16> to vector<1x8x128xbf16>
    tpu.vector_store %arg11[%203, %c0_77, %c0_78], %206 {strides = array<i32>} : memref<9x8x128xbf16, #tpu.memory_space<vmem>>, vector<1x8x128xbf16>,
    %c4_i32 = arith.constant 4 : i32
    %c0_79 = arith.constant 0 : index
    %c0_80 = arith.constant 0 : index
    %207 = vector.load %arg13[%c0_79, %c0_80] : memref<8x128xf32, #tpu.memory_space<vmem>>, vector<8x128xf32>
    %c0_81 = arith.constant 0 : index
    %c0_82 = arith.constant 0 : index
    %208 = vector.load %arg14[%c0_81, %c0_82] : memref<8x128xf32, #tpu.memory_space<vmem>>, vector<8x128xf32>
    %c8_i32_83 = arith.constant 8 : i32
    %209 = arith.muli %c4_i32, %c8_i32_83 : i32
    %210 = tpu.assume_multiple %209, 8 : i32
    %211 = arith.index_cast %210 : i32 to index
    %c0_84 = arith.constant 0 : index
    %212 = vector.load %arg10[%211, %c0_84] : memref<72x512xbf16, #tpu.memory_space<vmem>>, vector<8x512xbf16>
    %213 = arith.extf %212 : vector<8x512xbf16> to vector<8x512xf32>
    %214 = vector.broadcast %10 : vector<1x512xf32> to vector<8x512xf32>
    %215 = arith.addf %213, %214 : vector<8x512xf32>
    %216 = arith.truncf %207 : vector<8x128xf32> to vector<8x128xbf16>
    %cst_85 = arith.constant dense<0.000000e+00> : vector<8x512xf32>
    %217 = tpu.matmul %216, %8, %cst_85 {dimension_numbers = #tpu.dot_dimension_numbers<[1], [0], [0], [1], [0, 0, 1, 1], [], []>} : vector<8x128xbf16>, vector<128x512xbf16>, vector<8x512xf32> -> vector<8x512xf32>
    %218 = arith.addf %215, %217 : vector<8x512xf32>
    %219 = vector.extract_strided_slice %218 {offsets = [0, 0], sizes = [8, 384], strides = [1, 1]} : vector<8x512xf32> to vector<8x384xf32>
    %cst_86 = arith.constant 0.000000e+00 : f32
    %220 = vector.broadcast %cst_86 : f32 to vector<8x384xf32>
    %221 = arith.subf %220, %219 : vector<8x384xf32>
    %222 = math.exp %221 : vector<8x384xf32>
    %cst_87 = arith.constant 1.000000e+00 : f32
    %223 = vector.broadcast %cst_87 : f32 to vector<8x384xf32>
    %224 = arith.addf %223, %222 : vector<8x384xf32>
    %225 = tpu.reciprocal %224 {approx = true} : vector<8x384xf32> -> vector<8x384xf32>
    %226 = vector.extract_strided_slice %225 {offsets = [0, 0], sizes = [8, 128], strides = [1, 1]} : vector<8x384xf32> to vector<8x128xf32>
    %227 = vector.extract_strided_slice %225 {offsets = [0, 128], sizes = [8, 128], strides = [1, 1]} : vector<8x384xf32> to vector<8x128xf32>
    %228 = vector.extract_strided_slice %225 {offsets = [0, 256], sizes = [8, 128], strides = [1, 1]} : vector<8x384xf32> to vector<8x128xf32>
    %229 = vector.extract_strided_slice %218 {offsets = [0, 384], sizes = [8, 128], strides = [1, 1]} : vector<8x512xf32> to vector<8x128xf32>
    %230 = math.tanh %229 : vector<8x128xf32>
    %231 = arith.mulf %227, %208 : vector<8x128xf32>
    %232 = arith.mulf %226, %230 : vector<8x128xf32>
    %233 = arith.addf %231, %232 : vector<8x128xf32>
    %234 = math.tanh %233 : vector<8x128xf32>
    %235 = arith.mulf %228, %234 : vector<8x128xf32>
    %236 = vector.broadcast %c4_i32 : i32 to vector<8x1xi32>
    %237 = arith.cmpi sgt, %0, %236 : vector<8x1xi32>
    %238 = vector.shape_cast %237 : vector<8x1xi1> to vector<8x1xi1>
    %239 = vector.broadcast %238 : vector<8x1xi1> to vector<8x128xi1>
    %240 = arith.select %239, %235, %207 : vector<8x128xi1>, vector<8x128xf32>
    %c0_88 = arith.constant 0 : index
    %c0_89 = arith.constant 0 : index
    %241 = vector.load %arg13[%c0_88, %c0_89] : memref<8x128xf32, #tpu.memory_space<vmem>>, vector<8x128xf32>
    tpu.vector_store %arg13[%c0_88, %c0_89], %240 {strides = array<i32>} : memref<8x128xf32, #tpu.memory_space<vmem>>, vector<8x128xf32>,
    %242 = vector.shape_cast %237 : vector<8x1xi1> to vector<8x1xi1>
    %243 = vector.broadcast %242 : vector<8x1xi1> to vector<8x128xi1>
    %244 = arith.select %243, %233, %208 : vector<8x128xi1>, vector<8x128xf32>
    %c0_90 = arith.constant 0 : index
    %c0_91 = arith.constant 0 : index
    %245 = vector.load %arg14[%c0_90, %c0_91] : memref<8x128xf32, #tpu.memory_space<vmem>>, vector<8x128xf32>
    tpu.vector_store %arg14[%c0_90, %c0_91], %244 {strides = array<i32>} : memref<8x128xf32, #tpu.memory_space<vmem>>, vector<8x128xf32>,
    %246 = arith.extui %237 : vector<8x1xi1> to vector<8x1xi32>
    %247 = arith.sitofp %246 : vector<8x1xi32> to vector<8x1xf32>
    %248 = vector.broadcast %247 : vector<8x1xf32> to vector<8x128xf32>
    %249 = arith.mulf %235, %248 : vector<8x128xf32>
    %250 = arith.truncf %249 : vector<8x128xf32> to vector<8x128xbf16>
    %251 = arith.index_cast %c4_i32 : i32 to index
    %c0_92 = arith.constant 0 : index
    %c0_93 = arith.constant 0 : index
    %252 = vector.load %arg11[%251, %c0_92, %c0_93] : memref<9x8x128xbf16, #tpu.memory_space<vmem>>, vector<1x8x128xbf16>
    %253 = vector.shape_cast %252 : vector<1x8x128xbf16> to vector<8x128xbf16>
    %254 = vector.shape_cast %250 : vector<8x128xbf16> to vector<1x8x128xbf16>
    tpu.vector_store %arg11[%251, %c0_92, %c0_93], %254 {strides = array<i32>} : memref<9x8x128xbf16, #tpu.memory_space<vmem>>, vector<1x8x128xbf16>,
    %c5_i32 = arith.constant 5 : i32
    %c0_94 = arith.constant 0 : index
    %c0_95 = arith.constant 0 : index
    %255 = vector.load %arg13[%c0_94, %c0_95] : memref<8x128xf32, #tpu.memory_space<vmem>>, vector<8x128xf32>
    %c0_96 = arith.constant 0 : index
    %c0_97 = arith.constant 0 : index
    %256 = vector.load %arg14[%c0_96, %c0_97] : memref<8x128xf32, #tpu.memory_space<vmem>>, vector<8x128xf32>
    %c8_i32_98 = arith.constant 8 : i32
    %257 = arith.muli %c5_i32, %c8_i32_98 : i32
    %258 = tpu.assume_multiple %257, 8 : i32
    %259 = arith.index_cast %258 : i32 to index
    %c0_99 = arith.constant 0 : index
    %260 = vector.load %arg10[%259, %c0_99] : memref<72x512xbf16, #tpu.memory_space<vmem>>, vector<8x512xbf16>
    %261 = arith.extf %260 : vector<8x512xbf16> to vector<8x512xf32>
    %262 = vector.broadcast %10 : vector<1x512xf32> to vector<8x512xf32>
    %263 = arith.addf %261, %262 : vector<8x512xf32>
    %264 = arith.truncf %255 : vector<8x128xf32> to vector<8x128xbf16>
    %cst_100 = arith.constant dense<0.000000e+00> : vector<8x512xf32>
    %265 = tpu.matmul %264, %8, %cst_100 {dimension_numbers = #tpu.dot_dimension_numbers<[1], [0], [0], [1], [0, 0, 1, 1], [], []>} : vector<8x128xbf16>, vector<128x512xbf16>, vector<8x512xf32> -> vector<8x512xf32>
    %266 = arith.addf %263, %265 : vector<8x512xf32>
    %267 = vector.extract_strided_slice %266 {offsets = [0, 0], sizes = [8, 384], strides = [1, 1]} : vector<8x512xf32> to vector<8x384xf32>
    %cst_101 = arith.constant 0.000000e+00 : f32
    %268 = vector.broadcast %cst_101 : f32 to vector<8x384xf32>
    %269 = arith.subf %268, %267 : vector<8x384xf32>
    %270 = math.exp %269 : vector<8x384xf32>
    %cst_102 = arith.constant 1.000000e+00 : f32
    %271 = vector.broadcast %cst_102 : f32 to vector<8x384xf32>
    %272 = arith.addf %271, %270 : vector<8x384xf32>
    %273 = tpu.reciprocal %272 {approx = true} : vector<8x384xf32> -> vector<8x384xf32>
    %274 = vector.extract_strided_slice %273 {offsets = [0, 0], sizes = [8, 128], strides = [1, 1]} : vector<8x384xf32> to vector<8x128xf32>
    %275 = vector.extract_strided_slice %273 {offsets = [0, 128], sizes = [8, 128], strides = [1, 1]} : vector<8x384xf32> to vector<8x128xf32>
    %276 = vector.extract_strided_slice %273 {offsets = [0, 256], sizes = [8, 128], strides = [1, 1]} : vector<8x384xf32> to vector<8x128xf32>
    %277 = vector.extract_strided_slice %266 {offsets = [0, 384], sizes = [8, 128], strides = [1, 1]} : vector<8x512xf32> to vector<8x128xf32>
    %278 = math.tanh %277 : vector<8x128xf32>
    %279 = arith.mulf %275, %256 : vector<8x128xf32>
    %280 = arith.mulf %274, %278 : vector<8x128xf32>
    %281 = arith.addf %279, %280 : vector<8x128xf32>
    %282 = math.tanh %281 : vector<8x128xf32>
    %283 = arith.mulf %276, %282 : vector<8x128xf32>
    %284 = vector.broadcast %c5_i32 : i32 to vector<8x1xi32>
    %285 = arith.cmpi sgt, %0, %284 : vector<8x1xi32>
    %286 = vector.shape_cast %285 : vector<8x1xi1> to vector<8x1xi1>
    %287 = vector.broadcast %286 : vector<8x1xi1> to vector<8x128xi1>
    %288 = arith.select %287, %283, %255 : vector<8x128xi1>, vector<8x128xf32>
    %c0_103 = arith.constant 0 : index
    %c0_104 = arith.constant 0 : index
    %289 = vector.load %arg13[%c0_103, %c0_104] : memref<8x128xf32, #tpu.memory_space<vmem>>, vector<8x128xf32>
    tpu.vector_store %arg13[%c0_103, %c0_104], %288 {strides = array<i32>} : memref<8x128xf32, #tpu.memory_space<vmem>>, vector<8x128xf32>,
    %290 = vector.shape_cast %285 : vector<8x1xi1> to vector<8x1xi1>
    %291 = vector.broadcast %290 : vector<8x1xi1> to vector<8x128xi1>
    %292 = arith.select %291, %281, %256 : vector<8x128xi1>, vector<8x128xf32>
    %c0_105 = arith.constant 0 : index
    %c0_106 = arith.constant 0 : index
    %293 = vector.load %arg14[%c0_105, %c0_106] : memref<8x128xf32, #tpu.memory_space<vmem>>, vector<8x128xf32>
    tpu.vector_store %arg14[%c0_105, %c0_106], %292 {strides = array<i32>} : memref<8x128xf32, #tpu.memory_space<vmem>>, vector<8x128xf32>,
    %294 = arith.extui %285 : vector<8x1xi1> to vector<8x1xi32>
    %295 = arith.sitofp %294 : vector<8x1xi32> to vector<8x1xf32>
    %296 = vector.broadcast %295 : vector<8x1xf32> to vector<8x128xf32>
    %297 = arith.mulf %283, %296 : vector<8x128xf32>
    %298 = arith.truncf %297 : vector<8x128xf32> to vector<8x128xbf16>
    %299 = arith.index_cast %c5_i32 : i32 to index
    %c0_107 = arith.constant 0 : index
    %c0_108 = arith.constant 0 : index
    %300 = vector.load %arg11[%299, %c0_107, %c0_108] : memref<9x8x128xbf16, #tpu.memory_space<vmem>>, vector<1x8x128xbf16>
    %301 = vector.shape_cast %300 : vector<1x8x128xbf16> to vector<8x128xbf16>
    %302 = vector.shape_cast %298 : vector<8x128xbf16> to vector<1x8x128xbf16>
    tpu.vector_store %arg11[%299, %c0_107, %c0_108], %302 {strides = array<i32>} : memref<9x8x128xbf16, #tpu.memory_space<vmem>>, vector<1x8x128xbf16>,
    %c6_i32 = arith.constant 6 : i32
    %c0_109 = arith.constant 0 : index
    %c0_110 = arith.constant 0 : index
    %303 = vector.load %arg13[%c0_109, %c0_110] : memref<8x128xf32, #tpu.memory_space<vmem>>, vector<8x128xf32>
    %c0_111 = arith.constant 0 : index
    %c0_112 = arith.constant 0 : index
    %304 = vector.load %arg14[%c0_111, %c0_112] : memref<8x128xf32, #tpu.memory_space<vmem>>, vector<8x128xf32>
    %c8_i32_113 = arith.constant 8 : i32
    %305 = arith.muli %c6_i32, %c8_i32_113 : i32
    %306 = tpu.assume_multiple %305, 8 : i32
    %307 = arith.index_cast %306 : i32 to index
    %c0_114 = arith.constant 0 : index
    %308 = vector.load %arg10[%307, %c0_114] : memref<72x512xbf16, #tpu.memory_space<vmem>>, vector<8x512xbf16>
    %309 = arith.extf %308 : vector<8x512xbf16> to vector<8x512xf32>
    %310 = vector.broadcast %10 : vector<1x512xf32> to vector<8x512xf32>
    %311 = arith.addf %309, %310 : vector<8x512xf32>
    %312 = arith.truncf %303 : vector<8x128xf32> to vector<8x128xbf16>
    %cst_115 = arith.constant dense<0.000000e+00> : vector<8x512xf32>
    %313 = tpu.matmul %312, %8, %cst_115 {dimension_numbers = #tpu.dot_dimension_numbers<[1], [0], [0], [1], [0, 0, 1, 1], [], []>} : vector<8x128xbf16>, vector<128x512xbf16>, vector<8x512xf32> -> vector<8x512xf32>
    %314 = arith.addf %311, %313 : vector<8x512xf32>
    %315 = vector.extract_strided_slice %314 {offsets = [0, 0], sizes = [8, 384], strides = [1, 1]} : vector<8x512xf32> to vector<8x384xf32>
    %cst_116 = arith.constant 0.000000e+00 : f32
    %316 = vector.broadcast %cst_116 : f32 to vector<8x384xf32>
    %317 = arith.subf %316, %315 : vector<8x384xf32>
    %318 = math.exp %317 : vector<8x384xf32>
    %cst_117 = arith.constant 1.000000e+00 : f32
    %319 = vector.broadcast %cst_117 : f32 to vector<8x384xf32>
    %320 = arith.addf %319, %318 : vector<8x384xf32>
    %321 = tpu.reciprocal %320 {approx = true} : vector<8x384xf32> -> vector<8x384xf32>
    %322 = vector.extract_strided_slice %321 {offsets = [0, 0], sizes = [8, 128], strides = [1, 1]} : vector<8x384xf32> to vector<8x128xf32>
    %323 = vector.extract_strided_slice %321 {offsets = [0, 128], sizes = [8, 128], strides = [1, 1]} : vector<8x384xf32> to vector<8x128xf32>
    %324 = vector.extract_strided_slice %321 {offsets = [0, 256], sizes = [8, 128], strides = [1, 1]} : vector<8x384xf32> to vector<8x128xf32>
    %325 = vector.extract_strided_slice %314 {offsets = [0, 384], sizes = [8, 128], strides = [1, 1]} : vector<8x512xf32> to vector<8x128xf32>
    %326 = math.tanh %325 : vector<8x128xf32>
    %327 = arith.mulf %323, %304 : vector<8x128xf32>
    %328 = arith.mulf %322, %326 : vector<8x128xf32>
    %329 = arith.addf %327, %328 : vector<8x128xf32>
    %330 = math.tanh %329 : vector<8x128xf32>
    %331 = arith.mulf %324, %330 : vector<8x128xf32>
    %332 = vector.broadcast %c6_i32 : i32 to vector<8x1xi32>
    %333 = arith.cmpi sgt, %0, %332 : vector<8x1xi32>
    %334 = vector.shape_cast %333 : vector<8x1xi1> to vector<8x1xi1>
    %335 = vector.broadcast %334 : vector<8x1xi1> to vector<8x128xi1>
    %336 = arith.select %335, %331, %303 : vector<8x128xi1>, vector<8x128xf32>
    %c0_118 = arith.constant 0 : index
    %c0_119 = arith.constant 0 : index
    %337 = vector.load %arg13[%c0_118, %c0_119] : memref<8x128xf32, #tpu.memory_space<vmem>>, vector<8x128xf32>
    tpu.vector_store %arg13[%c0_118, %c0_119], %336 {strides = array<i32>} : memref<8x128xf32, #tpu.memory_space<vmem>>, vector<8x128xf32>,
    %338 = vector.shape_cast %333 : vector<8x1xi1> to vector<8x1xi1>
    %339 = vector.broadcast %338 : vector<8x1xi1> to vector<8x128xi1>
    %340 = arith.select %339, %329, %304 : vector<8x128xi1>, vector<8x128xf32>
    %c0_120 = arith.constant 0 : index
    %c0_121 = arith.constant 0 : index
    %341 = vector.load %arg14[%c0_120, %c0_121] : memref<8x128xf32, #tpu.memory_space<vmem>>, vector<8x128xf32>
    tpu.vector_store %arg14[%c0_120, %c0_121], %340 {strides = array<i32>} : memref<8x128xf32, #tpu.memory_space<vmem>>, vector<8x128xf32>,
    %342 = arith.extui %333 : vector<8x1xi1> to vector<8x1xi32>
    %343 = arith.sitofp %342 : vector<8x1xi32> to vector<8x1xf32>
    %344 = vector.broadcast %343 : vector<8x1xf32> to vector<8x128xf32>
    %345 = arith.mulf %331, %344 : vector<8x128xf32>
    %346 = arith.truncf %345 : vector<8x128xf32> to vector<8x128xbf16>
    %347 = arith.index_cast %c6_i32 : i32 to index
    %c0_122 = arith.constant 0 : index
    %c0_123 = arith.constant 0 : index
    %348 = vector.load %arg11[%347, %c0_122, %c0_123] : memref<9x8x128xbf16, #tpu.memory_space<vmem>>, vector<1x8x128xbf16>
    %349 = vector.shape_cast %348 : vector<1x8x128xbf16> to vector<8x128xbf16>
    %350 = vector.shape_cast %346 : vector<8x128xbf16> to vector<1x8x128xbf16>
    tpu.vector_store %arg11[%347, %c0_122, %c0_123], %350 {strides = array<i32>} : memref<9x8x128xbf16, #tpu.memory_space<vmem>>, vector<1x8x128xbf16>,
    %c7_i32 = arith.constant 7 : i32
    %c0_124 = arith.constant 0 : index
    %c0_125 = arith.constant 0 : index
    %351 = vector.load %arg13[%c0_124, %c0_125] : memref<8x128xf32, #tpu.memory_space<vmem>>, vector<8x128xf32>
    %c0_126 = arith.constant 0 : index
    %c0_127 = arith.constant 0 : index
    %352 = vector.load %arg14[%c0_126, %c0_127] : memref<8x128xf32, #tpu.memory_space<vmem>>, vector<8x128xf32>
    %c8_i32_128 = arith.constant 8 : i32
    %353 = arith.muli %c7_i32, %c8_i32_128 : i32
    %354 = tpu.assume_multiple %353, 8 : i32
    %355 = arith.index_cast %354 : i32 to index
    %c0_129 = arith.constant 0 : index
    %356 = vector.load %arg10[%355, %c0_129] : memref<72x512xbf16, #tpu.memory_space<vmem>>, vector<8x512xbf16>
    %357 = arith.extf %356 : vector<8x512xbf16> to vector<8x512xf32>
    %358 = vector.broadcast %10 : vector<1x512xf32> to vector<8x512xf32>
    %359 = arith.addf %357, %358 : vector<8x512xf32>
    %360 = arith.truncf %351 : vector<8x128xf32> to vector<8x128xbf16>
    %cst_130 = arith.constant dense<0.000000e+00> : vector<8x512xf32>
    %361 = tpu.matmul %360, %8, %cst_130 {dimension_numbers = #tpu.dot_dimension_numbers<[1], [0], [0], [1], [0, 0, 1, 1], [], []>} : vector<8x128xbf16>, vector<128x512xbf16>, vector<8x512xf32> -> vector<8x512xf32>
    %362 = arith.addf %359, %361 : vector<8x512xf32>
    %363 = vector.extract_strided_slice %362 {offsets = [0, 0], sizes = [8, 384], strides = [1, 1]} : vector<8x512xf32> to vector<8x384xf32>
    %cst_131 = arith.constant 0.000000e+00 : f32
    %364 = vector.broadcast %cst_131 : f32 to vector<8x384xf32>
    %365 = arith.subf %364, %363 : vector<8x384xf32>
    %366 = math.exp %365 : vector<8x384xf32>
    %cst_132 = arith.constant 1.000000e+00 : f32
    %367 = vector.broadcast %cst_132 : f32 to vector<8x384xf32>
    %368 = arith.addf %367, %366 : vector<8x384xf32>
    %369 = tpu.reciprocal %368 {approx = true} : vector<8x384xf32> -> vector<8x384xf32>
    %370 = vector.extract_strided_slice %369 {offsets = [0, 0], sizes = [8, 128], strides = [1, 1]} : vector<8x384xf32> to vector<8x128xf32>
    %371 = vector.extract_strided_slice %369 {offsets = [0, 128], sizes = [8, 128], strides = [1, 1]} : vector<8x384xf32> to vector<8x128xf32>
    %372 = vector.extract_strided_slice %369 {offsets = [0, 256], sizes = [8, 128], strides = [1, 1]} : vector<8x384xf32> to vector<8x128xf32>
    %373 = vector.extract_strided_slice %362 {offsets = [0, 384], sizes = [8, 128], strides = [1, 1]} : vector<8x512xf32> to vector<8x128xf32>
    %374 = math.tanh %373 : vector<8x128xf32>
    %375 = arith.mulf %371, %352 : vector<8x128xf32>
    %376 = arith.mulf %370, %374 : vector<8x128xf32>
    %377 = arith.addf %375, %376 : vector<8x128xf32>
    %378 = math.tanh %377 : vector<8x128xf32>
    %379 = arith.mulf %372, %378 : vector<8x128xf32>
    %380 = vector.broadcast %c7_i32 : i32 to vector<8x1xi32>
    %381 = arith.cmpi sgt, %0, %380 : vector<8x1xi32>
    %382 = vector.shape_cast %381 : vector<8x1xi1> to vector<8x1xi1>
    %383 = vector.broadcast %382 : vector<8x1xi1> to vector<8x128xi1>
    %384 = arith.select %383, %379, %351 : vector<8x128xi1>, vector<8x128xf32>
    %c0_133 = arith.constant 0 : index
    %c0_134 = arith.constant 0 : index
    %385 = vector.load %arg13[%c0_133, %c0_134] : memref<8x128xf32, #tpu.memory_space<vmem>>, vector<8x128xf32>
    tpu.vector_store %arg13[%c0_133, %c0_134], %384 {strides = array<i32>} : memref<8x128xf32, #tpu.memory_space<vmem>>, vector<8x128xf32>,
    %386 = vector.shape_cast %381 : vector<8x1xi1> to vector<8x1xi1>
    %387 = vector.broadcast %386 : vector<8x1xi1> to vector<8x128xi1>
    %388 = arith.select %387, %377, %352 : vector<8x128xi1>, vector<8x128xf32>
    %c0_135 = arith.constant 0 : index
    %c0_136 = arith.constant 0 : index
    %389 = vector.load %arg14[%c0_135, %c0_136] : memref<8x128xf32, #tpu.memory_space<vmem>>, vector<8x128xf32>
    tpu.vector_store %arg14[%c0_135, %c0_136], %388 {strides = array<i32>} : memref<8x128xf32, #tpu.memory_space<vmem>>, vector<8x128xf32>,
    %390 = arith.extui %381 : vector<8x1xi1> to vector<8x1xi32>
    %391 = arith.sitofp %390 : vector<8x1xi32> to vector<8x1xf32>
    %392 = vector.broadcast %391 : vector<8x1xf32> to vector<8x128xf32>
    %393 = arith.mulf %379, %392 : vector<8x128xf32>
    %394 = arith.truncf %393 : vector<8x128xf32> to vector<8x128xbf16>
    %395 = arith.index_cast %c7_i32 : i32 to index
    %c0_137 = arith.constant 0 : index
    %c0_138 = arith.constant 0 : index
    %396 = vector.load %arg11[%395, %c0_137, %c0_138] : memref<9x8x128xbf16, #tpu.memory_space<vmem>>, vector<1x8x128xbf16>
    %397 = vector.shape_cast %396 : vector<1x8x128xbf16> to vector<8x128xbf16>
    %398 = vector.shape_cast %394 : vector<8x128xbf16> to vector<1x8x128xbf16>
    tpu.vector_store %arg11[%395, %c0_137, %c0_138], %398 {strides = array<i32>} : memref<9x8x128xbf16, #tpu.memory_space<vmem>>, vector<1x8x128xbf16>,
    %c8_i32_139 = arith.constant 8 : i32
    %c0_140 = arith.constant 0 : index
    %c0_141 = arith.constant 0 : index
    %399 = vector.load %arg13[%c0_140, %c0_141] : memref<8x128xf32, #tpu.memory_space<vmem>>, vector<8x128xf32>
    %c0_142 = arith.constant 0 : index
    %c0_143 = arith.constant 0 : index
    %400 = vector.load %arg14[%c0_142, %c0_143] : memref<8x128xf32, #tpu.memory_space<vmem>>, vector<8x128xf32>
    %c8_i32_144 = arith.constant 8 : i32
    %401 = arith.muli %c8_i32_139, %c8_i32_144 : i32
    %402 = tpu.assume_multiple %401, 8 : i32
    %403 = arith.index_cast %402 : i32 to index
    %c0_145 = arith.constant 0 : index
    %404 = vector.load %arg10[%403, %c0_145] : memref<72x512xbf16, #tpu.memory_space<vmem>>, vector<8x512xbf16>
    %405 = arith.extf %404 : vector<8x512xbf16> to vector<8x512xf32>
    %406 = vector.broadcast %10 : vector<1x512xf32> to vector<8x512xf32>
    %407 = arith.addf %405, %406 : vector<8x512xf32>
    %408 = arith.truncf %399 : vector<8x128xf32> to vector<8x128xbf16>
    %cst_146 = arith.constant dense<0.000000e+00> : vector<8x512xf32>
    %409 = tpu.matmul %408, %8, %cst_146 {dimension_numbers = #tpu.dot_dimension_numbers<[1], [0], [0], [1], [0, 0, 1, 1], [], []>} : vector<8x128xbf16>, vector<128x512xbf16>, vector<8x512xf32> -> vector<8x512xf32>
    %410 = arith.addf %407, %409 : vector<8x512xf32>
    %411 = vector.extract_strided_slice %410 {offsets = [0, 0], sizes = [8, 384], strides = [1, 1]} : vector<8x512xf32> to vector<8x384xf32>
    %cst_147 = arith.constant 0.000000e+00 : f32
    %412 = vector.broadcast %cst_147 : f32 to vector<8x384xf32>
    %413 = arith.subf %412, %411 : vector<8x384xf32>
    %414 = math.exp %413 : vector<8x384xf32>
    %cst_148 = arith.constant 1.000000e+00 : f32
    %415 = vector.broadcast %cst_148 : f32 to vector<8x384xf32>
    %416 = arith.addf %415, %414 : vector<8x384xf32>
    %417 = tpu.reciprocal %416 {approx = true} : vector<8x384xf32> -> vector<8x384xf32>
    %418 = vector.extract_strided_slice %417 {offsets = [0, 0], sizes = [8, 128], strides = [1, 1]} : vector<8x384xf32> to vector<8x128xf32>
    %419 = vector.extract_strided_slice %417 {offsets = [0, 128], sizes = [8, 128], strides = [1, 1]} : vector<8x384xf32> to vector<8x128xf32>
    %420 = vector.extract_strided_slice %417 {offsets = [0, 256], sizes = [8, 128], strides = [1, 1]} : vector<8x384xf32> to vector<8x128xf32>
    %421 = vector.extract_strided_slice %410 {offsets = [0, 384], sizes = [8, 128], strides = [1, 1]} : vector<8x512xf32> to vector<8x128xf32>
    %422 = math.tanh %421 : vector<8x128xf32>
    %423 = arith.mulf %419, %400 : vector<8x128xf32>
    %424 = arith.mulf %418, %422 : vector<8x128xf32>
    %425 = arith.addf %423, %424 : vector<8x128xf32>
    %426 = math.tanh %425 : vector<8x128xf32>
    %427 = arith.mulf %420, %426 : vector<8x128xf32>
    %428 = vector.broadcast %c8_i32_139 : i32 to vector<8x1xi32>
    %429 = arith.cmpi sgt, %0, %428 : vector<8x1xi32>
    %430 = vector.shape_cast %429 : vector<8x1xi1> to vector<8x1xi1>
    %431 = vector.broadcast %430 : vector<8x1xi1> to vector<8x128xi1>
    %432 = arith.select %431, %427, %399 : vector<8x128xi1>, vector<8x128xf32>
    %c0_149 = arith.constant 0 : index
    %c0_150 = arith.constant 0 : index
    %433 = vector.load %arg13[%c0_149, %c0_150] : memref<8x128xf32, #tpu.memory_space<vmem>>, vector<8x128xf32>
    tpu.vector_store %arg13[%c0_149, %c0_150], %432 {strides = array<i32>} : memref<8x128xf32, #tpu.memory_space<vmem>>, vector<8x128xf32>,
    %434 = vector.shape_cast %429 : vector<8x1xi1> to vector<8x1xi1>
    %435 = vector.broadcast %434 : vector<8x1xi1> to vector<8x128xi1>
    %436 = arith.select %435, %425, %400 : vector<8x128xi1>, vector<8x128xf32>
    %c0_151 = arith.constant 0 : index
    %c0_152 = arith.constant 0 : index
    %437 = vector.load %arg14[%c0_151, %c0_152] : memref<8x128xf32, #tpu.memory_space<vmem>>, vector<8x128xf32>
    tpu.vector_store %arg14[%c0_151, %c0_152], %436 {strides = array<i32>} : memref<8x128xf32, #tpu.memory_space<vmem>>, vector<8x128xf32>,
    %438 = arith.extui %429 : vector<8x1xi1> to vector<8x1xi32>
    %439 = arith.sitofp %438 : vector<8x1xi32> to vector<8x1xf32>
    %440 = vector.broadcast %439 : vector<8x1xf32> to vector<8x128xf32>
    %441 = arith.mulf %427, %440 : vector<8x128xf32>
    %442 = arith.truncf %441 : vector<8x128xf32> to vector<8x128xbf16>
    %443 = arith.index_cast %c8_i32_139 : i32 to index
    %c0_153 = arith.constant 0 : index
    %c0_154 = arith.constant 0 : index
    %444 = vector.load %arg11[%443, %c0_153, %c0_154] : memref<9x8x128xbf16, #tpu.memory_space<vmem>>, vector<1x8x128xbf16>
    %445 = vector.shape_cast %444 : vector<1x8x128xbf16> to vector<8x128xbf16>
    %446 = vector.shape_cast %442 : vector<8x128xbf16> to vector<1x8x128xbf16>
    tpu.vector_store %arg11[%443, %c0_153, %c0_154], %446 {strides = array<i32>} : memref<9x8x128xbf16, #tpu.memory_space<vmem>>, vector<1x8x128xbf16>,
    %c9_i32 = arith.constant 9 : i32
    %c0_155 = arith.constant 0 : index
    %c0_156 = arith.constant 0 : index
    %c0_157 = arith.constant 0 : index
    %447 = vector.load %arg11[%c0_155, %c0_156, %c0_157] : memref<9x8x128xbf16, #tpu.memory_space<vmem>>, vector<9x8x128xbf16>
    %448 = vector.shape_cast %447 : vector<9x8x128xbf16> to vector<72x128xbf16>
    %c0_158 = arith.constant 0 : index
    %c0_159 = arith.constant 0 : index
    %c0_160 = arith.constant 0 : index
    %449 = vector.load %arg4[%c0_158, %c0_159, %c0_160] : memref<1x128x512xbf16, #tpu.memory_space<vmem>>, vector<1x128x512xbf16>
    %450 = vector.shape_cast %449 : vector<1x128x512xbf16> to vector<128x512xbf16>
    %cst_161 = arith.constant dense<0.000000e+00> : vector<72x512xf32>
    %451 = tpu.matmul %448, %450, %cst_161 {dimension_numbers = #tpu.dot_dimension_numbers<[1], [0], [0], [1], [0, 0, 1, 1], [], []>} : vector<72x128xbf16>, vector<128x512xbf16>, vector<72x512xf32> -> vector<72x512xf32>
    %452 = arith.truncf %451 : vector<72x512xf32> to vector<72x512xbf16>
    %c0_162 = arith.constant 0 : index
    %c0_163 = arith.constant 0 : index
    %453 = vector.load %arg10[%c0_162, %c0_163] : memref<72x512xbf16, #tpu.memory_space<vmem>>, vector<72x512xbf16>
    tpu.vector_store %arg10[%c0_162, %c0_163], %452 {strides = array<i32>} : memref<72x512xbf16, #tpu.memory_space<vmem>>, vector<72x512xbf16>,
    %c1 = arith.constant 1 : index
    %c0_164 = arith.constant 0 : index
    %c0_165 = arith.constant 0 : index
    %454 = vector.load %arg5[%c1, %c0_164, %c0_165] : memref<2x128x512xbf16, #tpu.memory_space<vmem>>, vector<1x128x512xbf16>
    %455 = vector.shape_cast %454 : vector<1x128x512xbf16> to vector<128x512xbf16>
    %c1_166 = arith.constant 1 : index
    %c0_167 = arith.constant 0 : index
    %c0_168 = arith.constant 0 : index
    %456 = vector.load %arg6[%c1_166, %c0_167, %c0_168] : memref<2x1x512xf32, #tpu.memory_space<vmem>>, vector<1x1x512xf32>
    %457 = vector.shape_cast %456 : vector<1x1x512xf32> to vector<1x512xf32>
    %cst_169 = arith.constant 0.000000e+00 : f32
    %458 = vector.broadcast %cst_169 : f32 to vector<8x128xf32>
    %c0_170 = arith.constant 0 : index
    %c0_171 = arith.constant 0 : index
    %459 = vector.load %arg13[%c0_170, %c0_171] : memref<8x128xf32, #tpu.memory_space<vmem>>, vector<8x128xf32>
    tpu.vector_store %arg13[%c0_170, %c0_171], %458 {strides = array<i32>} : memref<8x128xf32, #tpu.memory_space<vmem>>, vector<8x128xf32>,
    %cst_172 = arith.constant 0.000000e+00 : f32
    %460 = vector.broadcast %cst_172 : f32 to vector<8x128xf32>
    %c0_173 = arith.constant 0 : index
    %c0_174 = arith.constant 0 : index
    %461 = vector.load %arg14[%c0_173, %c0_174] : memref<8x128xf32, #tpu.memory_space<vmem>>, vector<8x128xf32>
    tpu.vector_store %arg14[%c0_173, %c0_174], %460 {strides = array<i32>} : memref<8x128xf32, #tpu.memory_space<vmem>>, vector<8x128xf32>,
    %c0_i32_175 = arith.constant 0 : i32
    %c0_176 = arith.constant 0 : index
    %c0_177 = arith.constant 0 : index
    %462 = vector.load %arg13[%c0_176, %c0_177] : memref<8x128xf32, #tpu.memory_space<vmem>>, vector<8x128xf32>
    %c0_178 = arith.constant 0 : index
    %c0_179 = arith.constant 0 : index
    %463 = vector.load %arg14[%c0_178, %c0_179] : memref<8x128xf32, #tpu.memory_space<vmem>>, vector<8x128xf32>
    %c8_i32_180 = arith.constant 8 : i32
    %464 = arith.muli %c0_i32_175, %c8_i32_180 : i32
    %465 = tpu.assume_multiple %464, 8 : i32
    %466 = arith.index_cast %465 : i32 to index
    %c0_181 = arith.constant 0 : index
    %467 = vector.load %arg10[%466, %c0_181] : memref<72x512xbf16, #tpu.memory_space<vmem>>, vector<8x512xbf16>
    %468 = arith.extf %467 : vector<8x512xbf16> to vector<8x512xf32>
    %469 = vector.broadcast %457 : vector<1x512xf32> to vector<8x512xf32>
    %470 = arith.addf %468, %469 : vector<8x512xf32>
    %471 = arith.truncf %462 : vector<8x128xf32> to vector<8x128xbf16>
    %cst_182 = arith.constant dense<0.000000e+00> : vector<8x512xf32>
    %472 = tpu.matmul %471, %455, %cst_182 {dimension_numbers = #tpu.dot_dimension_numbers<[1], [0], [0], [1], [0, 0, 1, 1], [], []>} : vector<8x128xbf16>, vector<128x512xbf16>, vector<8x512xf32> -> vector<8x512xf32>
    %473 = arith.addf %470, %472 : vector<8x512xf32>
    %474 = vector.extract_strided_slice %473 {offsets = [0, 0], sizes = [8, 384], strides = [1, 1]} : vector<8x512xf32> to vector<8x384xf32>
    %cst_183 = arith.constant 0.000000e+00 : f32
    %475 = vector.broadcast %cst_183 : f32 to vector<8x384xf32>
    %476 = arith.subf %475, %474 : vector<8x384xf32>
    %477 = math.exp %476 : vector<8x384xf32>
    %cst_184 = arith.constant 1.000000e+00 : f32
    %478 = vector.broadcast %cst_184 : f32 to vector<8x384xf32>
    %479 = arith.addf %478, %477 : vector<8x384xf32>
    %480 = tpu.reciprocal %479 {approx = true} : vector<8x384xf32> -> vector<8x384xf32>
    %481 = vector.extract_strided_slice %480 {offsets = [0, 0], sizes = [8, 128], strides = [1, 1]} : vector<8x384xf32> to vector<8x128xf32>
    %482 = vector.extract_strided_slice %480 {offsets = [0, 128], sizes = [8, 128], strides = [1, 1]} : vector<8x384xf32> to vector<8x128xf32>
    %483 = vector.extract_strided_slice %480 {offsets = [0, 256], sizes = [8, 128], strides = [1, 1]} : vector<8x384xf32> to vector<8x128xf32>
    %484 = vector.extract_strided_slice %473 {offsets = [0, 384], sizes = [8, 128], strides = [1, 1]} : vector<8x512xf32> to vector<8x128xf32>
    %485 = math.tanh %484 : vector<8x128xf32>
    %486 = arith.mulf %482, %463 : vector<8x128xf32>
    %487 = arith.mulf %481, %485 : vector<8x128xf32>
    %488 = arith.addf %486, %487 : vector<8x128xf32>
    %489 = math.tanh %488 : vector<8x128xf32>
    %490 = arith.mulf %483, %489 : vector<8x128xf32>
    %491 = vector.broadcast %c0_i32_175 : i32 to vector<8x1xi32>
    %492 = arith.cmpi sgt, %0, %491 : vector<8x1xi32>
    %493 = vector.shape_cast %492 : vector<8x1xi1> to vector<8x1xi1>
    %494 = vector.broadcast %493 : vector<8x1xi1> to vector<8x128xi1>
    %495 = arith.select %494, %490, %462 : vector<8x128xi1>, vector<8x128xf32>
    %c0_185 = arith.constant 0 : index
    %c0_186 = arith.constant 0 : index
    %496 = vector.load %arg13[%c0_185, %c0_186] : memref<8x128xf32, #tpu.memory_space<vmem>>, vector<8x128xf32>
    tpu.vector_store %arg13[%c0_185, %c0_186], %495 {strides = array<i32>} : memref<8x128xf32, #tpu.memory_space<vmem>>, vector<8x128xf32>,
    %497 = vector.shape_cast %492 : vector<8x1xi1> to vector<8x1xi1>
    %498 = vector.broadcast %497 : vector<8x1xi1> to vector<8x128xi1>
    %499 = arith.select %498, %488, %463 : vector<8x128xi1>, vector<8x128xf32>
    %c0_187 = arith.constant 0 : index
    %c0_188 = arith.constant 0 : index
    %500 = vector.load %arg14[%c0_187, %c0_188] : memref<8x128xf32, #tpu.memory_space<vmem>>, vector<8x128xf32>
    tpu.vector_store %arg14[%c0_187, %c0_188], %499 {strides = array<i32>} : memref<8x128xf32, #tpu.memory_space<vmem>>, vector<8x128xf32>,
    %501 = arith.extui %492 : vector<8x1xi1> to vector<8x1xi32>
    %502 = arith.sitofp %501 : vector<8x1xi32> to vector<8x1xf32>
    %503 = vector.broadcast %502 : vector<8x1xf32> to vector<8x128xf32>
    %504 = arith.mulf %490, %503 : vector<8x128xf32>
    %505 = arith.truncf %504 : vector<8x128xf32> to vector<8x128xbf16>
    %506 = arith.index_cast %c0_i32_175 : i32 to index
    %c0_189 = arith.constant 0 : index
    %c0_190 = arith.constant 0 : index
    %507 = vector.load %arg12[%506, %c0_189, %c0_190] : memref<9x8x128xbf16, #tpu.memory_space<vmem>>, vector<1x8x128xbf16>
    %508 = vector.shape_cast %507 : vector<1x8x128xbf16> to vector<8x128xbf16>
    %509 = vector.shape_cast %505 : vector<8x128xbf16> to vector<1x8x128xbf16>
    tpu.vector_store %arg12[%506, %c0_189, %c0_190], %509 {strides = array<i32>} : memref<9x8x128xbf16, #tpu.memory_space<vmem>>, vector<1x8x128xbf16>,
    %c1_i32_191 = arith.constant 1 : i32
    %c0_192 = arith.constant 0 : index
    %c0_193 = arith.constant 0 : index
    %510 = vector.load %arg13[%c0_192, %c0_193] : memref<8x128xf32, #tpu.memory_space<vmem>>, vector<8x128xf32>
    %c0_194 = arith.constant 0 : index
    %c0_195 = arith.constant 0 : index
    %511 = vector.load %arg14[%c0_194, %c0_195] : memref<8x128xf32, #tpu.memory_space<vmem>>, vector<8x128xf32>
    %c8_i32_196 = arith.constant 8 : i32
    %512 = arith.muli %c1_i32_191, %c8_i32_196 : i32
    %513 = tpu.assume_multiple %512, 8 : i32
    %514 = arith.index_cast %513 : i32 to index
    %c0_197 = arith.constant 0 : index
    %515 = vector.load %arg10[%514, %c0_197] : memref<72x512xbf16, #tpu.memory_space<vmem>>, vector<8x512xbf16>
    %516 = arith.extf %515 : vector<8x512xbf16> to vector<8x512xf32>
    %517 = vector.broadcast %457 : vector<1x512xf32> to vector<8x512xf32>
    %518 = arith.addf %516, %517 : vector<8x512xf32>
    %519 = arith.truncf %510 : vector<8x128xf32> to vector<8x128xbf16>
    %cst_198 = arith.constant dense<0.000000e+00> : vector<8x512xf32>
    %520 = tpu.matmul %519, %455, %cst_198 {dimension_numbers = #tpu.dot_dimension_numbers<[1], [0], [0], [1], [0, 0, 1, 1], [], []>} : vector<8x128xbf16>, vector<128x512xbf16>, vector<8x512xf32> -> vector<8x512xf32>
    %521 = arith.addf %518, %520 : vector<8x512xf32>
    %522 = vector.extract_strided_slice %521 {offsets = [0, 0], sizes = [8, 384], strides = [1, 1]} : vector<8x512xf32> to vector<8x384xf32>
    %cst_199 = arith.constant 0.000000e+00 : f32
    %523 = vector.broadcast %cst_199 : f32 to vector<8x384xf32>
    %524 = arith.subf %523, %522 : vector<8x384xf32>
    %525 = math.exp %524 : vector<8x384xf32>
    %cst_200 = arith.constant 1.000000e+00 : f32
    %526 = vector.broadcast %cst_200 : f32 to vector<8x384xf32>
    %527 = arith.addf %526, %525 : vector<8x384xf32>
    %528 = tpu.reciprocal %527 {approx = true} : vector<8x384xf32> -> vector<8x384xf32>
    %529 = vector.extract_strided_slice %528 {offsets = [0, 0], sizes = [8, 128], strides = [1, 1]} : vector<8x384xf32> to vector<8x128xf32>
    %530 = vector.extract_strided_slice %528 {offsets = [0, 128], sizes = [8, 128], strides = [1, 1]} : vector<8x384xf32> to vector<8x128xf32>
    %531 = vector.extract_strided_slice %528 {offsets = [0, 256], sizes = [8, 128], strides = [1, 1]} : vector<8x384xf32> to vector<8x128xf32>
    %532 = vector.extract_strided_slice %521 {offsets = [0, 384], sizes = [8, 128], strides = [1, 1]} : vector<8x512xf32> to vector<8x128xf32>
    %533 = math.tanh %532 : vector<8x128xf32>
    %534 = arith.mulf %530, %511 : vector<8x128xf32>
    %535 = arith.mulf %529, %533 : vector<8x128xf32>
    %536 = arith.addf %534, %535 : vector<8x128xf32>
    %537 = math.tanh %536 : vector<8x128xf32>
    %538 = arith.mulf %531, %537 : vector<8x128xf32>
    %539 = vector.broadcast %c1_i32_191 : i32 to vector<8x1xi32>
    %540 = arith.cmpi sgt, %0, %539 : vector<8x1xi32>
    %541 = vector.shape_cast %540 : vector<8x1xi1> to vector<8x1xi1>
    %542 = vector.broadcast %541 : vector<8x1xi1> to vector<8x128xi1>
    %543 = arith.select %542, %538, %510 : vector<8x128xi1>, vector<8x128xf32>
    %c0_201 = arith.constant 0 : index
    %c0_202 = arith.constant 0 : index
    %544 = vector.load %arg13[%c0_201, %c0_202] : memref<8x128xf32, #tpu.memory_space<vmem>>, vector<8x128xf32>
    tpu.vector_store %arg13[%c0_201, %c0_202], %543 {strides = array<i32>} : memref<8x128xf32, #tpu.memory_space<vmem>>, vector<8x128xf32>,
    %545 = vector.shape_cast %540 : vector<8x1xi1> to vector<8x1xi1>
    %546 = vector.broadcast %545 : vector<8x1xi1> to vector<8x128xi1>
    %547 = arith.select %546, %536, %511 : vector<8x128xi1>, vector<8x128xf32>
    %c0_203 = arith.constant 0 : index
    %c0_204 = arith.constant 0 : index
    %548 = vector.load %arg14[%c0_203, %c0_204] : memref<8x128xf32, #tpu.memory_space<vmem>>, vector<8x128xf32>
    tpu.vector_store %arg14[%c0_203, %c0_204], %547 {strides = array<i32>} : memref<8x128xf32, #tpu.memory_space<vmem>>, vector<8x128xf32>,
    %549 = arith.extui %540 : vector<8x1xi1> to vector<8x1xi32>
    %550 = arith.sitofp %549 : vector<8x1xi32> to vector<8x1xf32>
    %551 = vector.broadcast %550 : vector<8x1xf32> to vector<8x128xf32>
    %552 = arith.mulf %538, %551 : vector<8x128xf32>
    %553 = arith.truncf %552 : vector<8x128xf32> to vector<8x128xbf16>
    %554 = arith.index_cast %c1_i32_191 : i32 to index
    %c0_205 = arith.constant 0 : index
    %c0_206 = arith.constant 0 : index
    %555 = vector.load %arg12[%554, %c0_205, %c0_206] : memref<9x8x128xbf16, #tpu.memory_space<vmem>>, vector<1x8x128xbf16>
    %556 = vector.shape_cast %555 : vector<1x8x128xbf16> to vector<8x128xbf16>
    %557 = vector.shape_cast %553 : vector<8x128xbf16> to vector<1x8x128xbf16>
    tpu.vector_store %arg12[%554, %c0_205, %c0_206], %557 {strides = array<i32>} : memref<9x8x128xbf16, #tpu.memory_space<vmem>>, vector<1x8x128xbf16>,
    %c2_i32_207 = arith.constant 2 : i32
    %c0_208 = arith.constant 0 : index
    %c0_209 = arith.constant 0 : index
    %558 = vector.load %arg13[%c0_208, %c0_209] : memref<8x128xf32, #tpu.memory_space<vmem>>, vector<8x128xf32>
    %c0_210 = arith.constant 0 : index
    %c0_211 = arith.constant 0 : index
    %559 = vector.load %arg14[%c0_210, %c0_211] : memref<8x128xf32, #tpu.memory_space<vmem>>, vector<8x128xf32>
    %c8_i32_212 = arith.constant 8 : i32
    %560 = arith.muli %c2_i32_207, %c8_i32_212 : i32
    %561 = tpu.assume_multiple %560, 8 : i32
    %562 = arith.index_cast %561 : i32 to index
    %c0_213 = arith.constant 0 : index
    %563 = vector.load %arg10[%562, %c0_213] : memref<72x512xbf16, #tpu.memory_space<vmem>>, vector<8x512xbf16>
    %564 = arith.extf %563 : vector<8x512xbf16> to vector<8x512xf32>
    %565 = vector.broadcast %457 : vector<1x512xf32> to vector<8x512xf32>
    %566 = arith.addf %564, %565 : vector<8x512xf32>
    %567 = arith.truncf %558 : vector<8x128xf32> to vector<8x128xbf16>
    %cst_214 = arith.constant dense<0.000000e+00> : vector<8x512xf32>
    %568 = tpu.matmul %567, %455, %cst_214 {dimension_numbers = #tpu.dot_dimension_numbers<[1], [0], [0], [1], [0, 0, 1, 1], [], []>} : vector<8x128xbf16>, vector<128x512xbf16>, vector<8x512xf32> -> vector<8x512xf32>
    %569 = arith.addf %566, %568 : vector<8x512xf32>
    %570 = vector.extract_strided_slice %569 {offsets = [0, 0], sizes = [8, 384], strides = [1, 1]} : vector<8x512xf32> to vector<8x384xf32>
    %cst_215 = arith.constant 0.000000e+00 : f32
    %571 = vector.broadcast %cst_215 : f32 to vector<8x384xf32>
    %572 = arith.subf %571, %570 : vector<8x384xf32>
    %573 = math.exp %572 : vector<8x384xf32>
    %cst_216 = arith.constant 1.000000e+00 : f32
    %574 = vector.broadcast %cst_216 : f32 to vector<8x384xf32>
    %575 = arith.addf %574, %573 : vector<8x384xf32>
    %576 = tpu.reciprocal %575 {approx = true} : vector<8x384xf32> -> vector<8x384xf32>
    %577 = vector.extract_strided_slice %576 {offsets = [0, 0], sizes = [8, 128], strides = [1, 1]} : vector<8x384xf32> to vector<8x128xf32>
    %578 = vector.extract_strided_slice %576 {offsets = [0, 128], sizes = [8, 128], strides = [1, 1]} : vector<8x384xf32> to vector<8x128xf32>
    %579 = vector.extract_strided_slice %576 {offsets = [0, 256], sizes = [8, 128], strides = [1, 1]} : vector<8x384xf32> to vector<8x128xf32>
    %580 = vector.extract_strided_slice %569 {offsets = [0, 384], sizes = [8, 128], strides = [1, 1]} : vector<8x512xf32> to vector<8x128xf32>
    %581 = math.tanh %580 : vector<8x128xf32>
    %582 = arith.mulf %578, %559 : vector<8x128xf32>
    %583 = arith.mulf %577, %581 : vector<8x128xf32>
    %584 = arith.addf %582, %583 : vector<8x128xf32>
    %585 = math.tanh %584 : vector<8x128xf32>
    %586 = arith.mulf %579, %585 : vector<8x128xf32>
    %587 = vector.broadcast %c2_i32_207 : i32 to vector<8x1xi32>
    %588 = arith.cmpi sgt, %0, %587 : vector<8x1xi32>
    %589 = vector.shape_cast %588 : vector<8x1xi1> to vector<8x1xi1>
    %590 = vector.broadcast %589 : vector<8x1xi1> to vector<8x128xi1>
    %591 = arith.select %590, %586, %558 : vector<8x128xi1>, vector<8x128xf32>
    %c0_217 = arith.constant 0 : index
    %c0_218 = arith.constant 0 : index
    %592 = vector.load %arg13[%c0_217, %c0_218] : memref<8x128xf32, #tpu.memory_space<vmem>>, vector<8x128xf32>
    tpu.vector_store %arg13[%c0_217, %c0_218], %591 {strides = array<i32>} : memref<8x128xf32, #tpu.memory_space<vmem>>, vector<8x128xf32>,
    %593 = vector.shape_cast %588 : vector<8x1xi1> to vector<8x1xi1>
    %594 = vector.broadcast %593 : vector<8x1xi1> to vector<8x128xi1>
    %595 = arith.select %594, %584, %559 : vector<8x128xi1>, vector<8x128xf32>
    %c0_219 = arith.constant 0 : index
    %c0_220 = arith.constant 0 : index
    %596 = vector.load %arg14[%c0_219, %c0_220] : memref<8x128xf32, #tpu.memory_space<vmem>>, vector<8x128xf32>
    tpu.vector_store %arg14[%c0_219, %c0_220], %595 {strides = array<i32>} : memref<8x128xf32, #tpu.memory_space<vmem>>, vector<8x128xf32>,
    %597 = arith.extui %588 : vector<8x1xi1> to vector<8x1xi32>
    %598 = arith.sitofp %597 : vector<8x1xi32> to vector<8x1xf32>
    %599 = vector.broadcast %598 : vector<8x1xf32> to vector<8x128xf32>
    %600 = arith.mulf %586, %599 : vector<8x128xf32>
    %601 = arith.truncf %600 : vector<8x128xf32> to vector<8x128xbf16>
    %602 = arith.index_cast %c2_i32_207 : i32 to index
    %c0_221 = arith.constant 0 : index
    %c0_222 = arith.constant 0 : index
    %603 = vector.load %arg12[%602, %c0_221, %c0_222] : memref<9x8x128xbf16, #tpu.memory_space<vmem>>, vector<1x8x128xbf16>
    %604 = vector.shape_cast %603 : vector<1x8x128xbf16> to vector<8x128xbf16>
    %605 = vector.shape_cast %601 : vector<8x128xbf16> to vector<1x8x128xbf16>
    tpu.vector_store %arg12[%602, %c0_221, %c0_222], %605 {strides = array<i32>} : memref<9x8x128xbf16, #tpu.memory_space<vmem>>, vector<1x8x128xbf16>,
    %c3_i32_223 = arith.constant 3 : i32
    %c0_224 = arith.constant 0 : index
    %c0_225 = arith.constant 0 : index
    %606 = vector.load %arg13[%c0_224, %c0_225] : memref<8x128xf32, #tpu.memory_space<vmem>>, vector<8x128xf32>
    %c0_226 = arith.constant 0 : index
    %c0_227 = arith.constant 0 : index
    %607 = vector.load %arg14[%c0_226, %c0_227] : memref<8x128xf32, #tpu.memory_space<vmem>>, vector<8x128xf32>
    %c8_i32_228 = arith.constant 8 : i32
    %608 = arith.muli %c3_i32_223, %c8_i32_228 : i32
    %609 = tpu.assume_multiple %608, 8 : i32
    %610 = arith.index_cast %609 : i32 to index
    %c0_229 = arith.constant 0 : index
    %611 = vector.load %arg10[%610, %c0_229] : memref<72x512xbf16, #tpu.memory_space<vmem>>, vector<8x512xbf16>
    %612 = arith.extf %611 : vector<8x512xbf16> to vector<8x512xf32>
    %613 = vector.broadcast %457 : vector<1x512xf32> to vector<8x512xf32>
    %614 = arith.addf %612, %613 : vector<8x512xf32>
    %615 = arith.truncf %606 : vector<8x128xf32> to vector<8x128xbf16>
    %cst_230 = arith.constant dense<0.000000e+00> : vector<8x512xf32>
    %616 = tpu.matmul %615, %455, %cst_230 {dimension_numbers = #tpu.dot_dimension_numbers<[1], [0], [0], [1], [0, 0, 1, 1], [], []>} : vector<8x128xbf16>, vector<128x512xbf16>, vector<8x512xf32> -> vector<8x512xf32>
    %617 = arith.addf %614, %616 : vector<8x512xf32>
    %618 = vector.extract_strided_slice %617 {offsets = [0, 0], sizes = [8, 384], strides = [1, 1]} : vector<8x512xf32> to vector<8x384xf32>
    %cst_231 = arith.constant 0.000000e+00 : f32
    %619 = vector.broadcast %cst_231 : f32 to vector<8x384xf32>
    %620 = arith.subf %619, %618 : vector<8x384xf32>
    %621 = math.exp %620 : vector<8x384xf32>
    %cst_232 = arith.constant 1.000000e+00 : f32
    %622 = vector.broadcast %cst_232 : f32 to vector<8x384xf32>
    %623 = arith.addf %622, %621 : vector<8x384xf32>
    %624 = tpu.reciprocal %623 {approx = true} : vector<8x384xf32> -> vector<8x384xf32>
    %625 = vector.extract_strided_slice %624 {offsets = [0, 0], sizes = [8, 128], strides = [1, 1]} : vector<8x384xf32> to vector<8x128xf32>
    %626 = vector.extract_strided_slice %624 {offsets = [0, 128], sizes = [8, 128], strides = [1, 1]} : vector<8x384xf32> to vector<8x128xf32>
    %627 = vector.extract_strided_slice %624 {offsets = [0, 256], sizes = [8, 128], strides = [1, 1]} : vector<8x384xf32> to vector<8x128xf32>
    %628 = vector.extract_strided_slice %617 {offsets = [0, 384], sizes = [8, 128], strides = [1, 1]} : vector<8x512xf32> to vector<8x128xf32>
    %629 = math.tanh %628 : vector<8x128xf32>
    %630 = arith.mulf %626, %607 : vector<8x128xf32>
    %631 = arith.mulf %625, %629 : vector<8x128xf32>
    %632 = arith.addf %630, %631 : vector<8x128xf32>
    %633 = math.tanh %632 : vector<8x128xf32>
    %634 = arith.mulf %627, %633 : vector<8x128xf32>
    %635 = vector.broadcast %c3_i32_223 : i32 to vector<8x1xi32>
    %636 = arith.cmpi sgt, %0, %635 : vector<8x1xi32>
    %637 = vector.shape_cast %636 : vector<8x1xi1> to vector<8x1xi1>
    %638 = vector.broadcast %637 : vector<8x1xi1> to vector<8x128xi1>
    %639 = arith.select %638, %634, %606 : vector<8x128xi1>, vector<8x128xf32>
    %c0_233 = arith.constant 0 : index
    %c0_234 = arith.constant 0 : index
    %640 = vector.load %arg13[%c0_233, %c0_234] : memref<8x128xf32, #tpu.memory_space<vmem>>, vector<8x128xf32>
    tpu.vector_store %arg13[%c0_233, %c0_234], %639 {strides = array<i32>} : memref<8x128xf32, #tpu.memory_space<vmem>>, vector<8x128xf32>,
    %641 = vector.shape_cast %636 : vector<8x1xi1> to vector<8x1xi1>
    %642 = vector.broadcast %641 : vector<8x1xi1> to vector<8x128xi1>
    %643 = arith.select %642, %632, %607 : vector<8x128xi1>, vector<8x128xf32>
    %c0_235 = arith.constant 0 : index
    %c0_236 = arith.constant 0 : index
    %644 = vector.load %arg14[%c0_235, %c0_236] : memref<8x128xf32, #tpu.memory_space<vmem>>, vector<8x128xf32>
    tpu.vector_store %arg14[%c0_235, %c0_236], %643 {strides = array<i32>} : memref<8x128xf32, #tpu.memory_space<vmem>>, vector<8x128xf32>,
    %645 = arith.extui %636 : vector<8x1xi1> to vector<8x1xi32>
    %646 = arith.sitofp %645 : vector<8x1xi32> to vector<8x1xf32>
    %647 = vector.broadcast %646 : vector<8x1xf32> to vector<8x128xf32>
    %648 = arith.mulf %634, %647 : vector<8x128xf32>
    %649 = arith.truncf %648 : vector<8x128xf32> to vector<8x128xbf16>
    %650 = arith.index_cast %c3_i32_223 : i32 to index
    %c0_237 = arith.constant 0 : index
    %c0_238 = arith.constant 0 : index
    %651 = vector.load %arg12[%650, %c0_237, %c0_238] : memref<9x8x128xbf16, #tpu.memory_space<vmem>>, vector<1x8x128xbf16>
    %652 = vector.shape_cast %651 : vector<1x8x128xbf16> to vector<8x128xbf16>
    %653 = vector.shape_cast %649 : vector<8x128xbf16> to vector<1x8x128xbf16>
    tpu.vector_store %arg12[%650, %c0_237, %c0_238], %653 {strides = array<i32>} : memref<9x8x128xbf16, #tpu.memory_space<vmem>>, vector<1x8x128xbf16>,
    %c4_i32_239 = arith.constant 4 : i32
    %c0_240 = arith.constant 0 : index
    %c0_241 = arith.constant 0 : index
    %654 = vector.load %arg13[%c0_240, %c0_241] : memref<8x128xf32, #tpu.memory_space<vmem>>, vector<8x128xf32>
    %c0_242 = arith.constant 0 : index
    %c0_243 = arith.constant 0 : index
    %655 = vector.load %arg14[%c0_242, %c0_243] : memref<8x128xf32, #tpu.memory_space<vmem>>, vector<8x128xf32>
    %c8_i32_244 = arith.constant 8 : i32
    %656 = arith.muli %c4_i32_239, %c8_i32_244 : i32
    %657 = tpu.assume_multiple %656, 8 : i32
    %658 = arith.index_cast %657 : i32 to index
    %c0_245 = arith.constant 0 : index
    %659 = vector.load %arg10[%658, %c0_245] : memref<72x512xbf16, #tpu.memory_space<vmem>>, vector<8x512xbf16>
    %660 = arith.extf %659 : vector<8x512xbf16> to vector<8x512xf32>
    %661 = vector.broadcast %457 : vector<1x512xf32> to vector<8x512xf32>
    %662 = arith.addf %660, %661 : vector<8x512xf32>
    %663 = arith.truncf %654 : vector<8x128xf32> to vector<8x128xbf16>
    %cst_246 = arith.constant dense<0.000000e+00> : vector<8x512xf32>
    %664 = tpu.matmul %663, %455, %cst_246 {dimension_numbers = #tpu.dot_dimension_numbers<[1], [0], [0], [1], [0, 0, 1, 1], [], []>} : vector<8x128xbf16>, vector<128x512xbf16>, vector<8x512xf32> -> vector<8x512xf32>
    %665 = arith.addf %662, %664 : vector<8x512xf32>
    %666 = vector.extract_strided_slice %665 {offsets = [0, 0], sizes = [8, 384], strides = [1, 1]} : vector<8x512xf32> to vector<8x384xf32>
    %cst_247 = arith.constant 0.000000e+00 : f32
    %667 = vector.broadcast %cst_247 : f32 to vector<8x384xf32>
    %668 = arith.subf %667, %666 : vector<8x384xf32>
    %669 = math.exp %668 : vector<8x384xf32>
    %cst_248 = arith.constant 1.000000e+00 : f32
    %670 = vector.broadcast %cst_248 : f32 to vector<8x384xf32>
    %671 = arith.addf %670, %669 : vector<8x384xf32>
    %672 = tpu.reciprocal %671 {approx = true} : vector<8x384xf32> -> vector<8x384xf32>
    %673 = vector.extract_strided_slice %672 {offsets = [0, 0], sizes = [8, 128], strides = [1, 1]} : vector<8x384xf32> to vector<8x128xf32>
    %674 = vector.extract_strided_slice %672 {offsets = [0, 128], sizes = [8, 128], strides = [1, 1]} : vector<8x384xf32> to vector<8x128xf32>
    %675 = vector.extract_strided_slice %672 {offsets = [0, 256], sizes = [8, 128], strides = [1, 1]} : vector<8x384xf32> to vector<8x128xf32>
    %676 = vector.extract_strided_slice %665 {offsets = [0, 384], sizes = [8, 128], strides = [1, 1]} : vector<8x512xf32> to vector<8x128xf32>
    %677 = math.tanh %676 : vector<8x128xf32>
    %678 = arith.mulf %674, %655 : vector<8x128xf32>
    %679 = arith.mulf %673, %677 : vector<8x128xf32>
    %680 = arith.addf %678, %679 : vector<8x128xf32>
    %681 = math.tanh %680 : vector<8x128xf32>
    %682 = arith.mulf %675, %681 : vector<8x128xf32>
    %683 = vector.broadcast %c4_i32_239 : i32 to vector<8x1xi32>
    %684 = arith.cmpi sgt, %0, %683 : vector<8x1xi32>
    %685 = vector.shape_cast %684 : vector<8x1xi1> to vector<8x1xi1>
    %686 = vector.broadcast %685 : vector<8x1xi1> to vector<8x128xi1>
    %687 = arith.select %686, %682, %654 : vector<8x128xi1>, vector<8x128xf32>
    %c0_249 = arith.constant 0 : index
    %c0_250 = arith.constant 0 : index
    %688 = vector.load %arg13[%c0_249, %c0_250] : memref<8x128xf32, #tpu.memory_space<vmem>>, vector<8x128xf32>
    tpu.vector_store %arg13[%c0_249, %c0_250], %687 {strides = array<i32>} : memref<8x128xf32, #tpu.memory_space<vmem>>, vector<8x128xf32>,
    %689 = vector.shape_cast %684 : vector<8x1xi1> to vector<8x1xi1>
    %690 = vector.broadcast %689 : vector<8x1xi1> to vector<8x128xi1>
    %691 = arith.select %690, %680, %655 : vector<8x128xi1>, vector<8x128xf32>
    %c0_251 = arith.constant 0 : index
    %c0_252 = arith.constant 0 : index
    %692 = vector.load %arg14[%c0_251, %c0_252] : memref<8x128xf32, #tpu.memory_space<vmem>>, vector<8x128xf32>
    tpu.vector_store %arg14[%c0_251, %c0_252], %691 {strides = array<i32>} : memref<8x128xf32, #tpu.memory_space<vmem>>, vector<8x128xf32>,
    %693 = arith.extui %684 : vector<8x1xi1> to vector<8x1xi32>
    %694 = arith.sitofp %693 : vector<8x1xi32> to vector<8x1xf32>
    %695 = vector.broadcast %694 : vector<8x1xf32> to vector<8x128xf32>
    %696 = arith.mulf %682, %695 : vector<8x128xf32>
    %697 = arith.truncf %696 : vector<8x128xf32> to vector<8x128xbf16>
    %698 = arith.index_cast %c4_i32_239 : i32 to index
    %c0_253 = arith.constant 0 : index
    %c0_254 = arith.constant 0 : index
    %699 = vector.load %arg12[%698, %c0_253, %c0_254] : memref<9x8x128xbf16, #tpu.memory_space<vmem>>, vector<1x8x128xbf16>
    %700 = vector.shape_cast %699 : vector<1x8x128xbf16> to vector<8x128xbf16>
    %701 = vector.shape_cast %697 : vector<8x128xbf16> to vector<1x8x128xbf16>
    tpu.vector_store %arg12[%698, %c0_253, %c0_254], %701 {strides = array<i32>} : memref<9x8x128xbf16, #tpu.memory_space<vmem>>, vector<1x8x128xbf16>,
    %c5_i32_255 = arith.constant 5 : i32
    %c0_256 = arith.constant 0 : index
    %c0_257 = arith.constant 0 : index
    %702 = vector.load %arg13[%c0_256, %c0_257] : memref<8x128xf32, #tpu.memory_space<vmem>>, vector<8x128xf32>
    %c0_258 = arith.constant 0 : index
    %c0_259 = arith.constant 0 : index
    %703 = vector.load %arg14[%c0_258, %c0_259] : memref<8x128xf32, #tpu.memory_space<vmem>>, vector<8x128xf32>
    %c8_i32_260 = arith.constant 8 : i32
    %704 = arith.muli %c5_i32_255, %c8_i32_260 : i32
    %705 = tpu.assume_multiple %704, 8 : i32
    %706 = arith.index_cast %705 : i32 to index
    %c0_261 = arith.constant 0 : index
    %707 = vector.load %arg10[%706, %c0_261] : memref<72x512xbf16, #tpu.memory_space<vmem>>, vector<8x512xbf16>
    %708 = arith.extf %707 : vector<8x512xbf16> to vector<8x512xf32>
    %709 = vector.broadcast %457 : vector<1x512xf32> to vector<8x512xf32>
    %710 = arith.addf %708, %709 : vector<8x512xf32>
    %711 = arith.truncf %702 : vector<8x128xf32> to vector<8x128xbf16>
    %cst_262 = arith.constant dense<0.000000e+00> : vector<8x512xf32>
    %712 = tpu.matmul %711, %455, %cst_262 {dimension_numbers = #tpu.dot_dimension_numbers<[1], [0], [0], [1], [0, 0, 1, 1], [], []>} : vector<8x128xbf16>, vector<128x512xbf16>, vector<8x512xf32> -> vector<8x512xf32>
    %713 = arith.addf %710, %712 : vector<8x512xf32>
    %714 = vector.extract_strided_slice %713 {offsets = [0, 0], sizes = [8, 384], strides = [1, 1]} : vector<8x512xf32> to vector<8x384xf32>
    %cst_263 = arith.constant 0.000000e+00 : f32
    %715 = vector.broadcast %cst_263 : f32 to vector<8x384xf32>
    %716 = arith.subf %715, %714 : vector<8x384xf32>
    %717 = math.exp %716 : vector<8x384xf32>
    %cst_264 = arith.constant 1.000000e+00 : f32
    %718 = vector.broadcast %cst_264 : f32 to vector<8x384xf32>
    %719 = arith.addf %718, %717 : vector<8x384xf32>
    %720 = tpu.reciprocal %719 {approx = true} : vector<8x384xf32> -> vector<8x384xf32>
    %721 = vector.extract_strided_slice %720 {offsets = [0, 0], sizes = [8, 128], strides = [1, 1]} : vector<8x384xf32> to vector<8x128xf32>
    %722 = vector.extract_strided_slice %720 {offsets = [0, 128], sizes = [8, 128], strides = [1, 1]} : vector<8x384xf32> to vector<8x128xf32>
    %723 = vector.extract_strided_slice %720 {offsets = [0, 256], sizes = [8, 128], strides = [1, 1]} : vector<8x384xf32> to vector<8x128xf32>
    %724 = vector.extract_strided_slice %713 {offsets = [0, 384], sizes = [8, 128], strides = [1, 1]} : vector<8x512xf32> to vector<8x128xf32>
    %725 = math.tanh %724 : vector<8x128xf32>
    %726 = arith.mulf %722, %703 : vector<8x128xf32>
    %727 = arith.mulf %721, %725 : vector<8x128xf32>
    %728 = arith.addf %726, %727 : vector<8x128xf32>
    %729 = math.tanh %728 : vector<8x128xf32>
    %730 = arith.mulf %723, %729 : vector<8x128xf32>
    %731 = vector.broadcast %c5_i32_255 : i32 to vector<8x1xi32>
    %732 = arith.cmpi sgt, %0, %731 : vector<8x1xi32>
    %733 = vector.shape_cast %732 : vector<8x1xi1> to vector<8x1xi1>
    %734 = vector.broadcast %733 : vector<8x1xi1> to vector<8x128xi1>
    %735 = arith.select %734, %730, %702 : vector<8x128xi1>, vector<8x128xf32>
    %c0_265 = arith.constant 0 : index
    %c0_266 = arith.constant 0 : index
    %736 = vector.load %arg13[%c0_265, %c0_266] : memref<8x128xf32, #tpu.memory_space<vmem>>, vector<8x128xf32>
    tpu.vector_store %arg13[%c0_265, %c0_266], %735 {strides = array<i32>} : memref<8x128xf32, #tpu.memory_space<vmem>>, vector<8x128xf32>,
    %737 = vector.shape_cast %732 : vector<8x1xi1> to vector<8x1xi1>
    %738 = vector.broadcast %737 : vector<8x1xi1> to vector<8x128xi1>
    %739 = arith.select %738, %728, %703 : vector<8x128xi1>, vector<8x128xf32>
    %c0_267 = arith.constant 0 : index
    %c0_268 = arith.constant 0 : index
    %740 = vector.load %arg14[%c0_267, %c0_268] : memref<8x128xf32, #tpu.memory_space<vmem>>, vector<8x128xf32>
    tpu.vector_store %arg14[%c0_267, %c0_268], %739 {strides = array<i32>} : memref<8x128xf32, #tpu.memory_space<vmem>>, vector<8x128xf32>,
    %741 = arith.extui %732 : vector<8x1xi1> to vector<8x1xi32>
    %742 = arith.sitofp %741 : vector<8x1xi32> to vector<8x1xf32>
    %743 = vector.broadcast %742 : vector<8x1xf32> to vector<8x128xf32>
    %744 = arith.mulf %730, %743 : vector<8x128xf32>
    %745 = arith.truncf %744 : vector<8x128xf32> to vector<8x128xbf16>
    %746 = arith.index_cast %c5_i32_255 : i32 to index
    %c0_269 = arith.constant 0 : index
    %c0_270 = arith.constant 0 : index
    %747 = vector.load %arg12[%746, %c0_269, %c0_270] : memref<9x8x128xbf16, #tpu.memory_space<vmem>>, vector<1x8x128xbf16>
    %748 = vector.shape_cast %747 : vector<1x8x128xbf16> to vector<8x128xbf16>
    %749 = vector.shape_cast %745 : vector<8x128xbf16> to vector<1x8x128xbf16>
    tpu.vector_store %arg12[%746, %c0_269, %c0_270], %749 {strides = array<i32>} : memref<9x8x128xbf16, #tpu.memory_space<vmem>>, vector<1x8x128xbf16>,
    %c6_i32_271 = arith.constant 6 : i32
    %c0_272 = arith.constant 0 : index
    %c0_273 = arith.constant 0 : index
    %750 = vector.load %arg13[%c0_272, %c0_273] : memref<8x128xf32, #tpu.memory_space<vmem>>, vector<8x128xf32>
    %c0_274 = arith.constant 0 : index
    %c0_275 = arith.constant 0 : index
    %751 = vector.load %arg14[%c0_274, %c0_275] : memref<8x128xf32, #tpu.memory_space<vmem>>, vector<8x128xf32>
    %c8_i32_276 = arith.constant 8 : i32
    %752 = arith.muli %c6_i32_271, %c8_i32_276 : i32
    %753 = tpu.assume_multiple %752, 8 : i32
    %754 = arith.index_cast %753 : i32 to index
    %c0_277 = arith.constant 0 : index
    %755 = vector.load %arg10[%754, %c0_277] : memref<72x512xbf16, #tpu.memory_space<vmem>>, vector<8x512xbf16>
    %756 = arith.extf %755 : vector<8x512xbf16> to vector<8x512xf32>
    %757 = vector.broadcast %457 : vector<1x512xf32> to vector<8x512xf32>
    %758 = arith.addf %756, %757 : vector<8x512xf32>
    %759 = arith.truncf %750 : vector<8x128xf32> to vector<8x128xbf16>
    %cst_278 = arith.constant dense<0.000000e+00> : vector<8x512xf32>
    %760 = tpu.matmul %759, %455, %cst_278 {dimension_numbers = #tpu.dot_dimension_numbers<[1], [0], [0], [1], [0, 0, 1, 1], [], []>} : vector<8x128xbf16>, vector<128x512xbf16>, vector<8x512xf32> -> vector<8x512xf32>
    %761 = arith.addf %758, %760 : vector<8x512xf32>
    %762 = vector.extract_strided_slice %761 {offsets = [0, 0], sizes = [8, 384], strides = [1, 1]} : vector<8x512xf32> to vector<8x384xf32>
    %cst_279 = arith.constant 0.000000e+00 : f32
    %763 = vector.broadcast %cst_279 : f32 to vector<8x384xf32>
    %764 = arith.subf %763, %762 : vector<8x384xf32>
    %765 = math.exp %764 : vector<8x384xf32>
    %cst_280 = arith.constant 1.000000e+00 : f32
    %766 = vector.broadcast %cst_280 : f32 to vector<8x384xf32>
    %767 = arith.addf %766, %765 : vector<8x384xf32>
    %768 = tpu.reciprocal %767 {approx = true} : vector<8x384xf32> -> vector<8x384xf32>
    %769 = vector.extract_strided_slice %768 {offsets = [0, 0], sizes = [8, 128], strides = [1, 1]} : vector<8x384xf32> to vector<8x128xf32>
    %770 = vector.extract_strided_slice %768 {offsets = [0, 128], sizes = [8, 128], strides = [1, 1]} : vector<8x384xf32> to vector<8x128xf32>
    %771 = vector.extract_strided_slice %768 {offsets = [0, 256], sizes = [8, 128], strides = [1, 1]} : vector<8x384xf32> to vector<8x128xf32>
    %772 = vector.extract_strided_slice %761 {offsets = [0, 384], sizes = [8, 128], strides = [1, 1]} : vector<8x512xf32> to vector<8x128xf32>
    %773 = math.tanh %772 : vector<8x128xf32>
    %774 = arith.mulf %770, %751 : vector<8x128xf32>
    %775 = arith.mulf %769, %773 : vector<8x128xf32>
    %776 = arith.addf %774, %775 : vector<8x128xf32>
    %777 = math.tanh %776 : vector<8x128xf32>
    %778 = arith.mulf %771, %777 : vector<8x128xf32>
    %779 = vector.broadcast %c6_i32_271 : i32 to vector<8x1xi32>
    %780 = arith.cmpi sgt, %0, %779 : vector<8x1xi32>
    %781 = vector.shape_cast %780 : vector<8x1xi1> to vector<8x1xi1>
    %782 = vector.broadcast %781 : vector<8x1xi1> to vector<8x128xi1>
    %783 = arith.select %782, %778, %750 : vector<8x128xi1>, vector<8x128xf32>
    %c0_281 = arith.constant 0 : index
    %c0_282 = arith.constant 0 : index
    %784 = vector.load %arg13[%c0_281, %c0_282] : memref<8x128xf32, #tpu.memory_space<vmem>>, vector<8x128xf32>
    tpu.vector_store %arg13[%c0_281, %c0_282], %783 {strides = array<i32>} : memref<8x128xf32, #tpu.memory_space<vmem>>, vector<8x128xf32>,
    %785 = vector.shape_cast %780 : vector<8x1xi1> to vector<8x1xi1>
    %786 = vector.broadcast %785 : vector<8x1xi1> to vector<8x128xi1>
    %787 = arith.select %786, %776, %751 : vector<8x128xi1>, vector<8x128xf32>
    %c0_283 = arith.constant 0 : index
    %c0_284 = arith.constant 0 : index
    %788 = vector.load %arg14[%c0_283, %c0_284] : memref<8x128xf32, #tpu.memory_space<vmem>>, vector<8x128xf32>
    tpu.vector_store %arg14[%c0_283, %c0_284], %787 {strides = array<i32>} : memref<8x128xf32, #tpu.memory_space<vmem>>, vector<8x128xf32>,
    %789 = arith.extui %780 : vector<8x1xi1> to vector<8x1xi32>
    %790 = arith.sitofp %789 : vector<8x1xi32> to vector<8x1xf32>
    %791 = vector.broadcast %790 : vector<8x1xf32> to vector<8x128xf32>
    %792 = arith.mulf %778, %791 : vector<8x128xf32>
    %793 = arith.truncf %792 : vector<8x128xf32> to vector<8x128xbf16>
    %794 = arith.index_cast %c6_i32_271 : i32 to index
    %c0_285 = arith.constant 0 : index
    %c0_286 = arith.constant 0 : index
    %795 = vector.load %arg12[%794, %c0_285, %c0_286] : memref<9x8x128xbf16, #tpu.memory_space<vmem>>, vector<1x8x128xbf16>
    %796 = vector.shape_cast %795 : vector<1x8x128xbf16> to vector<8x128xbf16>
    %797 = vector.shape_cast %793 : vector<8x128xbf16> to vector<1x8x128xbf16>
    tpu.vector_store %arg12[%794, %c0_285, %c0_286], %797 {strides = array<i32>} : memref<9x8x128xbf16, #tpu.memory_space<vmem>>, vector<1x8x128xbf16>,
    %c7_i32_287 = arith.constant 7 : i32
    %c0_288 = arith.constant 0 : index
    %c0_289 = arith.constant 0 : index
    %798 = vector.load %arg13[%c0_288, %c0_289] : memref<8x128xf32, #tpu.memory_space<vmem>>, vector<8x128xf32>
    %c0_290 = arith.constant 0 : index
    %c0_291 = arith.constant 0 : index
    %799 = vector.load %arg14[%c0_290, %c0_291] : memref<8x128xf32, #tpu.memory_space<vmem>>, vector<8x128xf32>
    %c8_i32_292 = arith.constant 8 : i32
    %800 = arith.muli %c7_i32_287, %c8_i32_292 : i32
    %801 = tpu.assume_multiple %800, 8 : i32
    %802 = arith.index_cast %801 : i32 to index
    %c0_293 = arith.constant 0 : index
    %803 = vector.load %arg10[%802, %c0_293] : memref<72x512xbf16, #tpu.memory_space<vmem>>, vector<8x512xbf16>
    %804 = arith.extf %803 : vector<8x512xbf16> to vector<8x512xf32>
    %805 = vector.broadcast %457 : vector<1x512xf32> to vector<8x512xf32>
    %806 = arith.addf %804, %805 : vector<8x512xf32>
    %807 = arith.truncf %798 : vector<8x128xf32> to vector<8x128xbf16>
    %cst_294 = arith.constant dense<0.000000e+00> : vector<8x512xf32>
    %808 = tpu.matmul %807, %455, %cst_294 {dimension_numbers = #tpu.dot_dimension_numbers<[1], [0], [0], [1], [0, 0, 1, 1], [], []>} : vector<8x128xbf16>, vector<128x512xbf16>, vector<8x512xf32> -> vector<8x512xf32>
    %809 = arith.addf %806, %808 : vector<8x512xf32>
    %810 = vector.extract_strided_slice %809 {offsets = [0, 0], sizes = [8, 384], strides = [1, 1]} : vector<8x512xf32> to vector<8x384xf32>
    %cst_295 = arith.constant 0.000000e+00 : f32
    %811 = vector.broadcast %cst_295 : f32 to vector<8x384xf32>
    %812 = arith.subf %811, %810 : vector<8x384xf32>
    %813 = math.exp %812 : vector<8x384xf32>
    %cst_296 = arith.constant 1.000000e+00 : f32
    %814 = vector.broadcast %cst_296 : f32 to vector<8x384xf32>
    %815 = arith.addf %814, %813 : vector<8x384xf32>
    %816 = tpu.reciprocal %815 {approx = true} : vector<8x384xf32> -> vector<8x384xf32>
    %817 = vector.extract_strided_slice %816 {offsets = [0, 0], sizes = [8, 128], strides = [1, 1]} : vector<8x384xf32> to vector<8x128xf32>
    %818 = vector.extract_strided_slice %816 {offsets = [0, 128], sizes = [8, 128], strides = [1, 1]} : vector<8x384xf32> to vector<8x128xf32>
    %819 = vector.extract_strided_slice %816 {offsets = [0, 256], sizes = [8, 128], strides = [1, 1]} : vector<8x384xf32> to vector<8x128xf32>
    %820 = vector.extract_strided_slice %809 {offsets = [0, 384], sizes = [8, 128], strides = [1, 1]} : vector<8x512xf32> to vector<8x128xf32>
    %821 = math.tanh %820 : vector<8x128xf32>
    %822 = arith.mulf %818, %799 : vector<8x128xf32>
    %823 = arith.mulf %817, %821 : vector<8x128xf32>
    %824 = arith.addf %822, %823 : vector<8x128xf32>
    %825 = math.tanh %824 : vector<8x128xf32>
    %826 = arith.mulf %819, %825 : vector<8x128xf32>
    %827 = vector.broadcast %c7_i32_287 : i32 to vector<8x1xi32>
    %828 = arith.cmpi sgt, %0, %827 : vector<8x1xi32>
    %829 = vector.shape_cast %828 : vector<8x1xi1> to vector<8x1xi1>
    %830 = vector.broadcast %829 : vector<8x1xi1> to vector<8x128xi1>
    %831 = arith.select %830, %826, %798 : vector<8x128xi1>, vector<8x128xf32>
    %c0_297 = arith.constant 0 : index
    %c0_298 = arith.constant 0 : index
    %832 = vector.load %arg13[%c0_297, %c0_298] : memref<8x128xf32, #tpu.memory_space<vmem>>, vector<8x128xf32>
    tpu.vector_store %arg13[%c0_297, %c0_298], %831 {strides = array<i32>} : memref<8x128xf32, #tpu.memory_space<vmem>>, vector<8x128xf32>,
    %833 = vector.shape_cast %828 : vector<8x1xi1> to vector<8x1xi1>
    %834 = vector.broadcast %833 : vector<8x1xi1> to vector<8x128xi1>
    %835 = arith.select %834, %824, %799 : vector<8x128xi1>, vector<8x128xf32>
    %c0_299 = arith.constant 0 : index
    %c0_300 = arith.constant 0 : index
    %836 = vector.load %arg14[%c0_299, %c0_300] : memref<8x128xf32, #tpu.memory_space<vmem>>, vector<8x128xf32>
    tpu.vector_store %arg14[%c0_299, %c0_300], %835 {strides = array<i32>} : memref<8x128xf32, #tpu.memory_space<vmem>>, vector<8x128xf32>,
    %837 = arith.extui %828 : vector<8x1xi1> to vector<8x1xi32>
    %838 = arith.sitofp %837 : vector<8x1xi32> to vector<8x1xf32>
    %839 = vector.broadcast %838 : vector<8x1xf32> to vector<8x128xf32>
    %840 = arith.mulf %826, %839 : vector<8x128xf32>
    %841 = arith.truncf %840 : vector<8x128xf32> to vector<8x128xbf16>
    %842 = arith.index_cast %c7_i32_287 : i32 to index
    %c0_301 = arith.constant 0 : index
    %c0_302 = arith.constant 0 : index
    %843 = vector.load %arg12[%842, %c0_301, %c0_302] : memref<9x8x128xbf16, #tpu.memory_space<vmem>>, vector<1x8x128xbf16>
    %844 = vector.shape_cast %843 : vector<1x8x128xbf16> to vector<8x128xbf16>
    %845 = vector.shape_cast %841 : vector<8x128xbf16> to vector<1x8x128xbf16>
    tpu.vector_store %arg12[%842, %c0_301, %c0_302], %845 {strides = array<i32>} : memref<9x8x128xbf16, #tpu.memory_space<vmem>>, vector<1x8x128xbf16>,
    %c8_i32_303 = arith.constant 8 : i32
    %c0_304 = arith.constant 0 : index
    %c0_305 = arith.constant 0 : index
    %846 = vector.load %arg13[%c0_304, %c0_305] : memref<8x128xf32, #tpu.memory_space<vmem>>, vector<8x128xf32>
    %c0_306 = arith.constant 0 : index
    %c0_307 = arith.constant 0 : index
    %847 = vector.load %arg14[%c0_306, %c0_307] : memref<8x128xf32, #tpu.memory_space<vmem>>, vector<8x128xf32>
    %c8_i32_308 = arith.constant 8 : i32
    %848 = arith.muli %c8_i32_303, %c8_i32_308 : i32
    %849 = tpu.assume_multiple %848, 8 : i32
    %850 = arith.index_cast %849 : i32 to index
    %c0_309 = arith.constant 0 : index
    %851 = vector.load %arg10[%850, %c0_309] : memref<72x512xbf16, #tpu.memory_space<vmem>>, vector<8x512xbf16>
    %852 = arith.extf %851 : vector<8x512xbf16> to vector<8x512xf32>
    %853 = vector.broadcast %457 : vector<1x512xf32> to vector<8x512xf32>
    %854 = arith.addf %852, %853 : vector<8x512xf32>
    %855 = arith.truncf %846 : vector<8x128xf32> to vector<8x128xbf16>
    %cst_310 = arith.constant dense<0.000000e+00> : vector<8x512xf32>
    %856 = tpu.matmul %855, %455, %cst_310 {dimension_numbers = #tpu.dot_dimension_numbers<[1], [0], [0], [1], [0, 0, 1, 1], [], []>} : vector<8x128xbf16>, vector<128x512xbf16>, vector<8x512xf32> -> vector<8x512xf32>
    %857 = arith.addf %854, %856 : vector<8x512xf32>
    %858 = vector.extract_strided_slice %857 {offsets = [0, 0], sizes = [8, 384], strides = [1, 1]} : vector<8x512xf32> to vector<8x384xf32>
    %cst_311 = arith.constant 0.000000e+00 : f32
    %859 = vector.broadcast %cst_311 : f32 to vector<8x384xf32>
    %860 = arith.subf %859, %858 : vector<8x384xf32>
    %861 = math.exp %860 : vector<8x384xf32>
    %cst_312 = arith.constant 1.000000e+00 : f32
    %862 = vector.broadcast %cst_312 : f32 to vector<8x384xf32>
    %863 = arith.addf %862, %861 : vector<8x384xf32>
    %864 = tpu.reciprocal %863 {approx = true} : vector<8x384xf32> -> vector<8x384xf32>
    %865 = vector.extract_strided_slice %864 {offsets = [0, 0], sizes = [8, 128], strides = [1, 1]} : vector<8x384xf32> to vector<8x128xf32>
    %866 = vector.extract_strided_slice %864 {offsets = [0, 128], sizes = [8, 128], strides = [1, 1]} : vector<8x384xf32> to vector<8x128xf32>
    %867 = vector.extract_strided_slice %864 {offsets = [0, 256], sizes = [8, 128], strides = [1, 1]} : vector<8x384xf32> to vector<8x128xf32>
    %868 = vector.extract_strided_slice %857 {offsets = [0, 384], sizes = [8, 128], strides = [1, 1]} : vector<8x512xf32> to vector<8x128xf32>
    %869 = math.tanh %868 : vector<8x128xf32>
    %870 = arith.mulf %866, %847 : vector<8x128xf32>
    %871 = arith.mulf %865, %869 : vector<8x128xf32>
    %872 = arith.addf %870, %871 : vector<8x128xf32>
    %873 = math.tanh %872 : vector<8x128xf32>
    %874 = arith.mulf %867, %873 : vector<8x128xf32>
    %875 = vector.broadcast %c8_i32_303 : i32 to vector<8x1xi32>
    %876 = arith.cmpi sgt, %0, %875 : vector<8x1xi32>
    %877 = vector.shape_cast %876 : vector<8x1xi1> to vector<8x1xi1>
    %878 = vector.broadcast %877 : vector<8x1xi1> to vector<8x128xi1>
    %879 = arith.select %878, %874, %846 : vector<8x128xi1>, vector<8x128xf32>
    %c0_313 = arith.constant 0 : index
    %c0_314 = arith.constant 0 : index
    %880 = vector.load %arg13[%c0_313, %c0_314] : memref<8x128xf32, #tpu.memory_space<vmem>>, vector<8x128xf32>
    tpu.vector_store %arg13[%c0_313, %c0_314], %879 {strides = array<i32>} : memref<8x128xf32, #tpu.memory_space<vmem>>, vector<8x128xf32>,
    %881 = vector.shape_cast %876 : vector<8x1xi1> to vector<8x1xi1>
    %882 = vector.broadcast %881 : vector<8x1xi1> to vector<8x128xi1>
    %883 = arith.select %882, %872, %847 : vector<8x128xi1>, vector<8x128xf32>
    %c0_315 = arith.constant 0 : index
    %c0_316 = arith.constant 0 : index
    %884 = vector.load %arg14[%c0_315, %c0_316] : memref<8x128xf32, #tpu.memory_space<vmem>>, vector<8x128xf32>
    tpu.vector_store %arg14[%c0_315, %c0_316], %883 {strides = array<i32>} : memref<8x128xf32, #tpu.memory_space<vmem>>, vector<8x128xf32>,
    %885 = arith.extui %876 : vector<8x1xi1> to vector<8x1xi32>
    %886 = arith.sitofp %885 : vector<8x1xi32> to vector<8x1xf32>
    %887 = vector.broadcast %886 : vector<8x1xf32> to vector<8x128xf32>
    %888 = arith.mulf %874, %887 : vector<8x128xf32>
    %889 = arith.truncf %888 : vector<8x128xf32> to vector<8x128xbf16>
    %890 = arith.index_cast %c8_i32_303 : i32 to index
    %c0_317 = arith.constant 0 : index
    %c0_318 = arith.constant 0 : index
    %891 = vector.load %arg12[%890, %c0_317, %c0_318] : memref<9x8x128xbf16, #tpu.memory_space<vmem>>, vector<1x8x128xbf16>
    %892 = vector.shape_cast %891 : vector<1x8x128xbf16> to vector<8x128xbf16>
    %893 = vector.shape_cast %889 : vector<8x128xbf16> to vector<1x8x128xbf16>
    tpu.vector_store %arg12[%890, %c0_317, %c0_318], %893 {strides = array<i32>} : memref<9x8x128xbf16, #tpu.memory_space<vmem>>, vector<1x8x128xbf16>,
    %c9_i32_319 = arith.constant 9 : i32
    %c0_320 = arith.constant 0 : index
    %c0_321 = arith.constant 0 : index
    %894 = vector.load %arg13[%c0_320, %c0_321] : memref<8x128xf32, #tpu.memory_space<vmem>>, vector<8x128xf32>
    %895 = arith.truncf %894 : vector<8x128xf32> to vector<8x128xbf16>
    %c2 = arith.constant 2 : index
    %c0_322 = arith.constant 0 : index
    %c0_323 = arith.constant 0 : index
    %896 = vector.load %arg7[%c2, %c0_322, %c0_323] : memref<3x128x128xbf16, #tpu.memory_space<vmem>>, vector<1x128x128xbf16>
    %897 = vector.shape_cast %896 : vector<1x128x128xbf16> to vector<128x128xbf16>
    %cst_324 = arith.constant dense<0.000000e+00> : vector<8x128xf32>
    %898 = tpu.matmul %895, %897, %cst_324 {dimension_numbers = #tpu.dot_dimension_numbers<[1], [0], [0], [1], [0, 0, 1, 1], [], []>} : vector<8x128xbf16>, vector<128x128xbf16>, vector<8x128xf32> -> vector<8x128xf32>
    %c0_325 = arith.constant 0 : index
    %c0_326 = arith.constant 0 : index
    %c0_327 = arith.constant 0 : index
    %899 = vector.load %arg12[%c0_325, %c0_326, %c0_327] : memref<9x8x128xbf16, #tpu.memory_space<vmem>>, vector<1x8x128xbf16>
    %900 = vector.shape_cast %899 : vector<1x8x128xbf16> to vector<8x128xbf16>
    %c0_328 = arith.constant 0 : index
    %c0_329 = arith.constant 0 : index
    %c0_330 = arith.constant 0 : index
    %901 = vector.load %arg7[%c0_328, %c0_329, %c0_330] : memref<3x128x128xbf16, #tpu.memory_space<vmem>>, vector<1x128x128xbf16>
    %902 = vector.shape_cast %901 : vector<1x128x128xbf16> to vector<128x128xbf16>
    %cst_331 = arith.constant dense<0.000000e+00> : vector<8x128xf32>
    %903 = tpu.matmul %900, %902, %cst_331 {dimension_numbers = #tpu.dot_dimension_numbers<[1], [0], [0], [1], [0, 0, 1, 1], [], []>} : vector<8x128xbf16>, vector<128x128xbf16>, vector<8x128xf32> -> vector<8x128xf32>
    %904 = arith.addf %898, %903 : vector<8x128xf32>
    %c1_332 = arith.constant 1 : index
    %c0_333 = arith.constant 0 : index
    %c0_334 = arith.constant 0 : index
    %905 = vector.load %arg12[%c1_332, %c0_333, %c0_334] : memref<9x8x128xbf16, #tpu.memory_space<vmem>>, vector<1x8x128xbf16>
    %906 = vector.shape_cast %905 : vector<1x8x128xbf16> to vector<8x128xbf16>
    %c1_335 = arith.constant 1 : index
    %c0_336 = arith.constant 0 : index
    %c0_337 = arith.constant 0 : index
    %907 = vector.load %arg7[%c1_335, %c0_336, %c0_337] : memref<3x128x128xbf16, #tpu.memory_space<vmem>>, vector<1x128x128xbf16>
    %908 = vector.shape_cast %907 : vector<1x128x128xbf16> to vector<128x128xbf16>
    %cst_338 = arith.constant dense<0.000000e+00> : vector<8x128xf32>
    %909 = tpu.matmul %906, %908, %cst_338 {dimension_numbers = #tpu.dot_dimension_numbers<[1], [0], [0], [1], [0, 0, 1, 1], [], []>} : vector<8x128xbf16>, vector<128x128xbf16>, vector<8x128xf32> -> vector<8x128xf32>
    %910 = arith.addf %904, %909 : vector<8x128xf32>
    %c0_339 = arith.constant 0 : index
    %c0_340 = arith.constant 0 : index
    %911 = vector.load %arg8[%c0_339, %c0_340] : memref<1x128xf32, #tpu.memory_space<vmem>>, vector<1x128xf32>
    %912 = vector.broadcast %911 : vector<1x128xf32> to vector<8x128xf32>
    %913 = arith.addf %910, %912 : vector<8x128xf32>
    %cst_341 = arith.constant dense<0xFF800000> : vector<8xf32>
    %914 = vector.multi_reduction <maximumf>, %913, %cst_341 [1] : vector<8x128xf32> to vector<8xf32>
    %915 = vector.shape_cast %914 : vector<8xf32> to vector<8x1xf32>
    %916 = vector.broadcast %915 : vector<8x1xf32> to vector<8x128xf32>
    %917 = arith.subf %913, %916 : vector<8x128xf32>
    %918 = math.exp %917 : vector<8x128xf32>
    %cst_342 = arith.constant dense<0.000000e+00> : vector<8xf32>
    %919 = vector.multi_reduction <add>, %918, %cst_342 [1] : vector<8x128xf32> to vector<8xf32>
    %920 = vector.shape_cast %919 : vector<8xf32> to vector<8x1xf32>
    %921 = math.log %920 : vector<8x1xf32>
    %922 = vector.broadcast %921 : vector<8x1xf32> to vector<8x128xf32>
    %923 = arith.subf %917, %922 : vector<8x128xf32>
    %c0_343 = arith.constant 0 : index
    %c0_344 = arith.constant 0 : index
    %924 = vector.load %arg9[%c0_343, %c0_344] : memref<8x128xf32, #tpu.memory_space<vmem>>, vector<8x128xf32>
    tpu.vector_store %arg9[%c0_343, %c0_344], %923 {strides = array<i32>} : memref<8x128xf32, #tpu.memory_space<vmem>>, vector<8x128xf32>,
    return
  }
  func.func @transform_0(%arg0: i32) -> (i32, i32) {
    %c0_i32 = arith.constant 0 : i32
    %c0_i32_0 = arith.constant 0 : i32
    return %arg0, %c0_i32 : i32, i32
  }
  func.func @transform_1(%arg0: i32) -> (i32, i32, i32) {
    %c0_i32 = arith.constant 0 : i32
    %c0_i32_0 = arith.constant 0 : i32
    %c0_i32_1 = arith.constant 0 : i32
    return %c0_i32, %arg0, %c0_i32_0 : i32, i32, i32
  }
  func.func @transform_2(%arg0: i32) -> (i32, i32) {
    %c0_i32 = arith.constant 0 : i32
    %c0_i32_0 = arith.constant 0 : i32
    %c0_i32_1 = arith.constant 0 : i32
    return %c0_i32, %c0_i32_0 : i32, i32
  }
  func.func @transform_3(%arg0: i32) -> (i32, i32, i32) {
    %c0_i32 = arith.constant 0 : i32
    %c0_i32_0 = arith.constant 0 : i32
    %c0_i32_1 = arith.constant 0 : i32
    %c0_i32_2 = arith.constant 0 : i32
    return %c0_i32, %c0_i32_0, %c0_i32_1 : i32, i32, i32
  }
  func.func @transform_4(%arg0: i32) -> (i32, i32, i32) {
    %c0_i32 = arith.constant 0 : i32
    %c0_i32_0 = arith.constant 0 : i32
    %c0_i32_1 = arith.constant 0 : i32
    %c0_i32_2 = arith.constant 0 : i32
    return %c0_i32, %c0_i32_0, %c0_i32_1 : i32, i32, i32
  }
  func.func @transform_5(%arg0: i32) -> (i32, i32, i32) {
    %c0_i32 = arith.constant 0 : i32
    %c0_i32_0 = arith.constant 0 : i32
    %c0_i32_1 = arith.constant 0 : i32
    %c0_i32_2 = arith.constant 0 : i32
    return %c0_i32, %c0_i32_0, %c0_i32_1 : i32, i32, i32
  }
  func.func @transform_6(%arg0: i32) -> (i32, i32, i32) {
    %c0_i32 = arith.constant 0 : i32
    %c0_i32_0 = arith.constant 0 : i32
    %c0_i32_1 = arith.constant 0 : i32
    %c0_i32_2 = arith.constant 0 : i32
    return %c0_i32, %c0_i32_0, %c0_i32_1 : i32, i32, i32
  }
  func.func @transform_7(%arg0: i32) -> (i32, i32) {
    %c0_i32 = arith.constant 0 : i32
    %c0_i32_0 = arith.constant 0 : i32
    %c0_i32_1 = arith.constant 0 : i32
    return %c0_i32, %c0_i32_0 : i32, i32
  }
  func.func @transform_8(%arg0: i32) -> (i32, i32) {
    %c0_i32 = arith.constant 0 : i32
    %c0_i32_0 = arith.constant 0 : i32
    return %arg0, %c0_i32 : i32, i32
  }
}

</mosaic_0001>

<llo_original>
// kernel: encdec_forward.2
$region0: #{encdec_forward.2}
  #allocation0 [shape = 'u32[]', space=smem, size = 0x4, offset = 0x4, fixed_abs, tag = 'smem constant byte address 0x4 - core index']
  #allocation1 [shape = 'u32[144,128]{1,0:T(1,128)}', space=vmem, size = 0x12000, scoped, tag = 'internal scratch']
  %s0 = inlined_call_operand.vmem [shape: f32[4,3], index: 0, kind: input, shape index: {}]
  %s1 = inlined_call_operand.vmem [shape: bf16[3,128], index: 1, kind: input, shape index: {}]
  %s2 = inlined_call_operand.vmem [shape: f32[1,128], index: 2, kind: input, shape index: {}]
  %s3 = inlined_call_operand.vmem [shape: f32[1,128], index: 3, kind: input, shape index: {}]
  %s4 = inlined_call_operand.vmem [shape: f32[1,128], index: 4, kind: input, shape index: {}]
  %s5 = inlined_call_operand.vmem [shape: bf16[4,128], index: 5, kind: output, shape index: {}]
  %s6 = sld [smem:[#allocation0]]
  $region30: #{encdec_forward.2} parent=0
    _
  %s8 = ssub.s32 1, %s6
  %s9 = scalar_select 0, %s8, %s6
  // Predicated region
  $region2: #{encdec_forward.2} parent=0 // pred_check
    _
  $region3: #{encdec_forward.2} parent=0 // pred_check_branch
    %11 = sbr.rel (0) target = $region5
  $region4: #{encdec_forward.2} parent=0 // pred_region
    _
  $region5: #{encdec_forward.2} parent=0 // pred_fallthru
    _
  // Predicated region
  $region6: #{encdec_forward.2} parent=0 // pred_check
    _
  $region7: #{encdec_forward.2} parent=0 // pred_check_branch
    %13 = sbr.rel (0) target = $region9
  $region8: #{encdec_forward.2} parent=0 // pred_region
    _
  $region9: #{encdec_forward.2} parent=0 // pred_fallthru
    _
  // Predicated region
  $region10: #{encdec_forward.2} parent=0 // pred_check
    _
  $region11: #{encdec_forward.2} parent=0 // pred_check_branch
    %15 = sbr.rel (0) target = $region13
  $region12: #{encdec_forward.2} parent=0 // pred_region
    _
  $region13: #{encdec_forward.2} parent=0 // pred_fallthru
    _
  // Predicated region
  $region14: #{encdec_forward.2} parent=0 // pred_check
    _
  $region15: #{encdec_forward.2} parent=0 // pred_check_branch
    %17 = sbr.rel (0) target = $region17
  $region16: #{encdec_forward.2} parent=0 // pred_region
    _
  $region17: #{encdec_forward.2} parent=0 // pred_fallthru
    _
  // Predicated region
  $region18: #{encdec_forward.2} parent=0 // pred_check
    _
  $region19: #{encdec_forward.2} parent=0 // pred_check_branch
    %19 = sbr.rel (0) target = $region21
  $region20: #{encdec_forward.2} parent=0 // pred_region
    _
  $region21: #{encdec_forward.2} parent=0 // pred_fallthru
    _
  %v21 = vld [vmem:[%s0] sm:$0xf]
  %v22 = vpack.c.bf16 %v21, %v21
  %v23 = vld [vmem:[%s1] sm:$0x3]
  %v24 = vld [vmem:[%s2] sm:$0x1]
  %v26 = vlaneseq
  %v27 = vshrl.u32 %v26, 7
  %v28 = vsub.s32 0, %v27
  %v29 = vrot.slane %v24, %v28
  %vm31 = vcmask 23552
  %v33 = vsel %vm31, %v22, 0
  %vm35 = vcmask 1040384
  %vm36 = vcmask 1041408
  %v37 = vsel %vm35, 4294967295, 65535
  %v38 = vsel %vm36, %v37, 0
  %v40 = vand.u32 %v23, %v38
  %42 = vmatprep.subr.bf16.mxu0 0
  %43 = vmatpush1.bf16.msra.mxu0 0
  %44 = vmatprep.subr.bf16.mxu0 0
  %45 = vmatpush1.bf16.msra.mxu0 0
  %46 = vmatprep.subr.bf16.mxu0 0
  %47 = vmatpush1.bf16.msra.mxu0 0
  %48 = vmatprep.subr.bf16.mxu0 0
  %49 = vmatpush1.bf16.msra.mxu0 0
  %50 = vmatprep.subr.bf16.mxu0 0
  %51 = vmatpush1.bf16.msra.mxu0 0
  %52 = vmatprep.subr.bf16.mxu0 0
  %53 = vmatpush1.bf16.msra.mxu0 0
  %54 = vmatprep.subr.bf16.mxu0 0
  %55 = vmatpush1.bf16.msra.mxu0 0
  %56 = vmatprep.subr.bf16.mxu0 0
  %57 = vmatpush1.bf16.msra.mxu0 %v40
  %58 = vmatprep.subr.bf16.mxu0 0
  %59 = vmatpush2.bf16.msra.mxu0 0
  %60 = vmatprep.subr.bf16.mxu0 0
  %61 = vmatpush2.bf16.msra.mxu0 0
  %62 = vmatprep.subr.bf16.mxu0 0
  %63 = vmatpush2.bf16.msra.mxu0 0
  %64 = vmatprep.subr.bf16.mxu0 0
  %65 = vmatpush2.bf16.msra.mxu0 0
  %66 = vmatprep.subr.bf16.mxu0 0
  %67 = vmatpush2.bf16.msra.mxu0 0
  %68 = vmatprep.subr.bf16.mxu0 0
  %69 = vmatpush2.bf16.msra.mxu0 0
  %70 = vmatprep.subr.bf16.mxu0 0
  %71 = vmatpush2.bf16.msra.mxu0 0
  %72 = vmatprep.subr.bf16.mxu0 0
  %73 = vmatpush2.bf16.msra.mxu0 0
  %74 = vmatprep.mubr.bf16.mxu0 0
  %75 = vmatmul.mubr.bf16.gmra.mxu0 %v33
  %v76 = vpop.f32.mrf.mxu0
  %v77 = vadd.f32 %v29, %v76
  %v78 = vpop.f32.mrf.mxu0
  %v79 = vpop.f32.mrf.mxu0
  %v80 = vpop.f32.mrf.mxu0
  %81 = vdwg.mxu0
  %vm82 = vcmask 1043456
  %v83 = vsel %vm82, %v77, 0.0
  %v84 = vrot.slane %v83, 4
  %v85 = vadd.f32 %v83, %v84
  %v86 = vrot.slane %v85, 2
  %v87 = vadd.f32 %v85, %v86
  %v88 = vrot.slane %v87, 1
  %v89 = vadd.f32 %v87, %v88
  %v90 = vrcp.pop 4.0
  %v91 = vmul.f32 %v89, %v90
  %v92 = vsub.f32 %v77, %v91
  %v93 = vmul.f32 %v92, %v92
  %v94 = vsel %vm82, %v93, 0.0
  %v95 = vrot.slane %v94, 4
  %v96 = vadd.f32 %v94, %v95
  %v97 = vrot.slane %v96, 2
  %v98 = vadd.f32 %v96, %v97
  %v99 = vrot.slane %v98, 1
  %v100 = vadd.f32 %v98, %v99
  %v101 = vmul.f32 %v100, %v90
  %v102 = vadd.f32 %v101, 1e-05
  %v103 = vrsqrt.pop %v102
  %v104 = vmul.f32 %v92, %v103
  %v105 = vld [vmem:[%s3] sm:$0x1]
  %v107 = vlaneseq
  %v108 = vshrl.u32 %v107, 7
  %v109 = vsub.s32 0, %v108
  %v110 = vrot.slane %v105, %v109
  %v112 = vmul.f32 %v104, %v110
  %v113 = vld [vmem:[%s4] sm:$0x1]
  %v115 = vlaneseq
  %v116 = vshrl.u32 %v115, 7
  %v117 = vsub.s32 0, %v116
  %v118 = vrot.slane %v113, %v117
  %v120 = vadd.f32 %v112, %v118
  %v121 = vpack.c.bf16 %v120, %v120
  %122 = vst [vmem:[%s5] sm:$0x3] %v121
  // Predicated region
  $region22: #{encdec_forward.2} parent=0 // pred_check
    _
  $region23: #{encdec_forward.2} parent=0 // pred_check_branch
    %124 = sbr.rel (0) target = $region25
  $region24: #{encdec_forward.2} parent=0 // pred_region
    _
  $region25: #{encdec_forward.2} parent=0 // pred_fallthru
    _
  // Predicated region
  $region26: #{encdec_forward.2} parent=0 // pred_check
    _
  $region27: #{encdec_forward.2} parent=0 // pred_check_branch
    %126 = sbr.rel (0) target = $region29
  $region28: #{encdec_forward.2} parent=0 // pred_region
    _
  $region29: #{encdec_forward.2} parent=0 // pred_fallthru
    _

// kernel: encdec_forward.3
$region0: #{encdec_forward.3}
  #allocation0 [shape = 'u32[]', space=smem, size = 0x4, offset = 0x4, fixed_abs, tag = 'smem constant byte address 0x4 - core index']
  #allocation1 [shape = 'u32[144,128]{1,0:T(1,128)}', space=vmem, size = 0x12000, scoped, tag = 'internal scratch']
  #allocation2 [shape = 'bf16[72,512]{1,0:T(8,128)(2,1)}', space=vmem, size = 0x12000, scoped, tag = 'scratch operand']
  #allocation3 [shape = 'bf16[9,8,128]{2,1,0:T(8,128)(2,1)}', space=vmem, size = 0x4800, scoped, tag = 'scratch operand']
  #allocation4 [shape = 'bf16[9,8,128]{2,1,0:T(8,128)(2,1)}', space=vmem, size = 0x4800, scoped, tag = 'scratch operand']
  #allocation5 [shape = 'f32[8,128]{1,0:T(8,128)}', space=vmem, size = 0x1000, scoped, tag = 'scratch operand']
  #allocation6 [shape = 'f32[8,128]{1,0:T(8,128)}', space=vmem, size = 0x1000, scoped, tag = 'scratch operand']
  %s0 = inlined_call_operand.vmem [shape: s32[8,1], index: 0, kind: input, shape index: {}]
  %s1 = inlined_call_operand.vmem [shape: bf16[9,8,128], index: 1, kind: input, shape index: {}]
  %s2 = inlined_call_operand.hbm [shape: bf16[128,512], index: 2, kind: input, shape index: {}]
  %s3 = inlined_call_operand.hbm [shape: bf16[1,128,512], index: 3, kind: input, shape index: {}]
  %s4 = inlined_call_operand.vmem [shape: bf16[2,128,512], index: 4, kind: input, shape index: {}]
  %s5 = inlined_call_operand.hbm [shape: f32[2,1,512], index: 5, kind: input, shape index: {}]
  %s6 = inlined_call_operand.hbm [shape: bf16[3,128,128], index: 6, kind: input, shape index: {}]
  %s7 = inlined_call_operand.vmem [shape: f32[1,128], index: 7, kind: input, shape index: {}]
  %s8 = inlined_call_operand.vmem [shape: f32[8,128], index: 8, kind: output, shape index: {}]
  %s9 = sld [smem:[#allocation0]]
  $region58: #{encdec_forward.3} parent=0
    _
  %s11 = ssub.s32 1, %s9
  %s12 = scalar_select 0, %s11, %s9
  $region1: #{encdec_forward.3} parent=0
    #allocation7 [shape = 'u8[131072]{0}', space=vmem, size = 0x20000, scoped, tag = 'input window, operand 2, single buffered']
    #allocation8 [shape = 's32[1]{0}', space=sflag, size = 0x4, scoped, tag = 'scoped memory for encdec_forward.3']
    #allocation9 [shape = 'u8[131072]{0}', space=vmem, size = 0x20000, scoped, tag = 'input window, operand 3, single buffered']
    #allocation10 [shape = 's32[1]{0}', space=sflag, size = 0x4, scoped, tag = 'scoped memory for encdec_forward.3']
    #allocation11 [shape = 'u8[4096]{0}', space=vmem, size = 0x1000, scoped, tag = 'input window, operand 5, single buffered']
    #allocation12 [shape = 'u8[98304]{0}', space=vmem, size = 0x18000, scoped, tag = 'input window, operand 6, single buffered']
    #allocation13 [shape = 's32[1]{0}', space=sflag, size = 0x4, scoped, tag = 'scoped memory for encdec_forward.3']
    %13 = vsyncpa [#allocation8], 0
    %14 = vsyncpa [#allocation10], 0
    %15 = vsyncpa [#allocation13], 0
    // Predicated region
    $region2: #{encdec_forward.3} parent=1 // pred_check
      _
    $region3: #{encdec_forward.3} parent=1 // pred_check_branch
      %17 = sbr.rel (0) target = $region5
    $region4: #{encdec_forward.3} parent=1 // pred_region
      _
    $region5: #{encdec_forward.3} parent=1 // pred_fallthru
      _
    // Predicated region
    $region6: #{encdec_forward.3} parent=1 // pred_check
      _
    $region7: #{encdec_forward.3} parent=1 // pred_check_branch
      %19 = sbr.rel (0) target = $region9
    $region8: #{encdec_forward.3} parent=1 // pred_region
      _
    $region9: #{encdec_forward.3} parent=1 // pred_fallthru
      _
    // Predicated region
    $region10: #{encdec_forward.3} parent=1 // pred_check
      _
    $region11: #{encdec_forward.3} parent=1 // pred_check_branch
      %21 = sbr.rel (0) target = $region13
    $region12: #{encdec_forward.3} parent=1 // pred_region
      %s23 = ssub.s32 4096, 4096
      %24 = vsyncadd [#allocation8], %s23
      %s25 = sshll.u32 [#allocation7], 4
      %s26 = int_to_ptr.vmem [resolvable:$true] %s25
      %31 = dma.hbm_to_vmem [thread:$0]  %s2, 4096, %s26, [#allocation8], 256, 256, 16
    $region13: #{encdec_forward.3} parent=1 // pred_fallthru
      _
    // Predicated region
    $region14: #{encdec_forward.3} parent=1 // pred_check
      _
    $region15: #{encdec_forward.3} parent=1 // pred_check_branch
      %33 = sbr.rel (0) target = $region17
    $region16: #{encdec_forward.3} parent=1 // pred_region
      %s35 = ssub.s32 4096, 4096
      %36 = vsyncadd [#allocation10], %s35
      %s37 = sshll.u32 [#allocation9], 4
      %s38 = int_to_ptr.vmem [resolvable:$true] %s37
      %43 = dma.hbm_to_vmem [thread:$0]  %s3, 4096, %s38, [#allocation10], 256, 256, 16
    $region17: #{encdec_forward.3} parent=1 // pred_fallthru
      _
    // Predicated region
    $region18: #{encdec_forward.3} parent=1 // pred_check
      _
    $region19: #{encdec_forward.3} parent=1 // pred_check_branch
      %45 = sbr.rel (0) target = $region21
    $region20: #{encdec_forward.3} parent=1 // pred_region
      _
    $region21: #{encdec_forward.3} parent=1 // pred_fallthru
      _
    // Predicated region
    $region22: #{encdec_forward.3} parent=1 // pred_check
      _
    $region23: #{encdec_forward.3} parent=1 // pred_check_branch
      %47 = sbr.rel (0) target = $region25
    $region24: #{encdec_forward.3} parent=1 // pred_region
      %s49 = ssub.s32 128, 128
      %50 = vsyncadd [#allocation10], %s49
      %s51 = sshll.u32 [#allocation11], 4
      %s52 = int_to_ptr.vmem [resolvable:$true] %s51
      %57 = dma.hbm_to_vmem [thread:$0]  %s5, 128, %s52, [#allocation10], 64, 64, 4
    $region25: #{encdec_forward.3} parent=1 // pred_fallthru
      _
    // Predicated region
    $region26: #{encdec_forward.3} parent=1 // pred_check
      _
    $region27: #{encdec_forward.3} parent=1 // pred_check_branch
      %59 = sbr.rel (0) target = $region29
    $region28: #{encdec_forward.3} parent=1 // pred_region
      %s61 = ssub.s32 3072, 3072
      %62 = vsyncadd [#allocation13], %s61
      %s63 = sshll.u32 [#allocation12], 4
      %s64 = int_to_ptr.vmem [resolvable:$true] %s63
      %69 = dma.hbm_to_vmem [thread:$0]  %s6, 3072, %s64, [#allocation13], 64, 64, 4
    $region29: #{encdec_forward.3} parent=1 // pred_fallthru
      _
    // Predicated region
    $region30: #{encdec_forward.3} parent=1 // pred_check
      _
    $region31: #{encdec_forward.3} parent=1 // pred_check_branch
      %71 = sbr.rel (0) target = $region33
    $region32: #{encdec_forward.3} parent=1 // pred_region
      _
    $region33: #{encdec_forward.3} parent=1 // pred_fallthru
      _
    // Predicated region
    $region34: #{encdec_forward.3} parent=1 // pred_check
      _
    $region35: #{encdec_forward.3} parent=1 // pred_check_branch
      %73 = sbr.rel (0) target = $region37
    $region36: #{encdec_forward.3} parent=1 // pred_region
      %74 = dma.done [#allocation8], 4096
    $region37: #{encdec_forward.3} parent=1 // pred_fallthru
      _
    // Predicated region
    $region38: #{encdec_forward.3} parent=1 // pred_check
      _
    $region39: #{encdec_forward.3} parent=1 // pred_check_branch
      %76 = sbr.rel (0) target = $region41
    $region40: #{encdec_forward.3} parent=1 // pred_region
      %77 = dma.done [#allocation10], 4096
    $region41: #{encdec_forward.3} parent=1 // pred_fallthru
      _
    // Predicated region
    $region42: #{encdec_forward.3} parent=1 // pred_check
      _
    $region43: #{encdec_forward.3} parent=1 // pred_check_branch
      %79 = sbr.rel (0) target = $region45
    $region44: #{encdec_forward.3} parent=1 // pred_region
      %80 = dma.done [#allocation10], 128
    $region45: #{encdec_forward.3} parent=1 // pred_fallthru
      _
    // Predicated region
    $region46: #{encdec_forward.3} parent=1 // pred_check
      _
    $region47: #{encdec_forward.3} parent=1 // pred_check_branch
      %82 = sbr.rel (0) target = $region49
    $region48: #{encdec_forward.3} parent=1 // pred_region
      %83 = dma.done [#allocation13], 3072
    $region49: #{encdec_forward.3} parent=1 // pred_fallthru
      _
    %v85 = vld [vmem:[%s0] sm:$0xff]
    %v86 = vld [vmem:[%s1] sm:$0xf]
    %v87 = vld [vmem:[%s1 + $0x4] sm:$0xf]
    %v88 = vld [vmem:[%s1 + $0x8] sm:$0xf]
    %v89 = vld [vmem:[%s1 + $0xc] sm:$0xf]
    %v90 = vld [vmem:[%s1 + $0x10] sm:$0xf]
    %v91 = vld [vmem:[%s1 + $0x14] sm:$0xf]
    %v92 = vld [vmem:[%s1 + $0x18] sm:$0xf]
    %v93 = vld [vmem:[%s1 + $0x1c] sm:$0xf]
    %v94 = vld [vmem:[%s1 + $0x20] sm:$0xf]
    %v95 = vld [vmem:[#allocation7] sm:$0xff]
    %v96 = vld [vmem:[#allocation7 + $0x8] sm:$0xff]
    %v97 = vld [vmem:[#allocation7 + $0x10] sm:$0xff]
    %v98 = vld [vmem:[#allocation7 + $0x18] sm:$0xff]
    %v99 = vld [vmem:[#allocation7 + $0x20] sm:$0xff]
    %v100 = vld [vmem:[#allocation7 + $0x28] sm:$0xff]
    %v101 = vld [vmem:[#allocation7 + $0x30] sm:$0xff]
    %v102 = vld [vmem:[#allocation7 + $0x38] sm:$0xff]
    %v103 = vld [vmem:[#allocation7 + $0x40] sm:$0xff]
    %v104 = vld [vmem:[#allocation7 + $0x48] sm:$0xff]
    %v105 = vld [vmem:[#allocation7 + $0x50] sm:$0xff]
    %v106 = vld [vmem:[#allocation7 + $0x58] sm:$0xff]
    %v107 = vld [vmem:[#allocation7 + $0x60] sm:$0xff]
    %v108 = vld [vmem:[#allocation7 + $0x68] sm:$0xff]
    %v109 = vld [vmem:[#allocation7 + $0x70] sm:$0xff]
    %v110 = vld [vmem:[#allocation7 + $0x78] sm:$0xff]
    %v111 = vld [vmem:[#allocation7 + $0x80] sm:$0xff]
    %v112 = vld [vmem:[#allocation7 + $0x88] sm:$0xff]
    %v113 = vld [vmem:[#allocation7 + $0x90] sm:$0xff]
    %v114 = vld [vmem:[#allocation7 + $0x98] sm:$0xff]
    %v115 = vld [vmem:[#allocation7 + $0xa0] sm:$0xff]
    %v116 = vld [vmem:[#allocation7 + $0xa8] sm:$0xff]
    %v117 = vld [vmem:[#allocation7 + $0xb0] sm:$0xff]
    %v118 = vld [vmem:[#allocation7 + $0xb8] sm:$0xff]
    %v119 = vld [vmem:[#allocation7 + $0xc0] sm:$0xff]
    %v120 = vld [vmem:[#allocation7 + $0xc8] sm:$0xff]
    %v121 = vld [vmem:[#allocation7 + $0xd0] sm:$0xff]
    %v122 = vld [vmem:[#allocation7 + $0xd8] sm:$0xff]
    %v123 = vld [vmem:[#allocation7 + $0xe0] sm:$0xff]
    %v124 = vld [vmem:[#allocation7 + $0xe8] sm:$0xff]
    %v125 = vld [vmem:[#allocation7 + $0xf0] sm:$0xff]
    %v126 = vld [vmem:[#allocation7 + $0xf8] sm:$0xff]
    %v136 = vunpack.c.l.b16 %v86
    %v137 = vunpack.c.l.b16 %v87
    %v138 = vunpack.c.l.b16 %v88
    %v139 = vunpack.c.l.b16 %v89
    %v140 = vunpack.c.l.b16 %v90
    %v141 = vunpack.c.l.b16 %v91
    %v142 = vunpack.c.l.b16 %v92
    %v143 = vunpack.c.l.b16 %v93
    %v144 = vunpack.c.l.b16 %v94
    %v145 = vpack.c.b16 %v137, %v136
    %v146 = vpack.c.b16 %v139, %v138
    %v147 = vpack.c.b16 %v141, %v140
    %v148 = vpack.c.b16 %v143, %v142
    %v149 = vpack.c.b16 %v144, %v144
    %v187 = vunpack.c.l.b16 %v95
    %v188 = vunpack.c.h.b16 %v95
    %v189 = vunpack.c.l.b16 %v96
    %v190 = vunpack.c.h.b16 %v96
    %v191 = vunpack.c.l.b16 %v97
    %v192 = vunpack.c.h.b16 %v97
    %v193 = vunpack.c.l.b16 %v98
    %v194 = vunpack.c.h.b16 %v98
    %v195 = vunpack.c.l.b16 %v99
    %v196 = vunpack.c.h.b16 %v99
    %v197 = vunpack.c.l.b16 %v100
    %v198 = vunpack.c.h.b16 %v100
    %v199 = vunpack.c.l.b16 %v101
    %v200 = vunpack.c.h.b16 %v101
    %v201 = vunpack.c.l.b16 %v102
    %v202 = vunpack.c.h.b16 %v102
    %v203 = vunpack.c.l.b16 %v103
    %v204 = vunpack.c.h.b16 %v103
    %v205 = vunpack.c.l.b16 %v104
    %v206 = vunpack.c.h.b16 %v104
    %v207 = vunpack.c.l.b16 %v105
    %v208 = vunpack.c.h.b16 %v105
    %v209 = vunpack.c.l.b16 %v106
    %v210 = vunpack.c.h.b16 %v106
    %v211 = vunpack.c.l.b16 %v107
    %v212 = vunpack.c.h.b16 %v107
    %v213 = vunpack.c.l.b16 %v108
    %v214 = vunpack.c.h.b16 %v108
    %v215 = vunpack.c.l.b16 %v109
    %v216 = vunpack.c.h.b16 %v109
    %v217 = vunpack.c.l.b16 %v110
    %v218 = vunpack.c.h.b16 %v110
    %v219 = vunpack.c.l.b16 %v111
    %v220 = vunpack.c.h.b16 %v111
    %v221 = vunpack.c.l.b16 %v112
    %v222 = vunpack.c.h.b16 %v112
    %v223 = vunpack.c.l.b16 %v113
    %v224 = vunpack.c.h.b16 %v113
    %v225 = vunpack.c.l.b16 %v114
    %v226 = vunpack.c.h.b16 %v114
    %v227 = vunpack.c.l.b16 %v115
    %v228 = vunpack.c.h.b16 %v115
    %v229 = vunpack.c.l.b16 %v116
    %v230 = vunpack.c.h.b16 %v116
    %v231 = vunpack.c.l.b16 %v117
    %v232 = vunpack.c.h.b16 %v117
    %v233 = vunpack.c.l.b16 %v118
    %v234 = vunpack.c.h.b16 %v118
    %v235 = vunpack.c.l.b16 %v119
    %v236 = vunpack.c.h.b16 %v119
    %v237 = vunpack.c.l.b16 %v120
    %v238 = vunpack.c.h.b16 %v120
    %v239 = vunpack.c.l.b16 %v121
    %v240 = vunpack.c.h.b16 %v121
    %v241 = vunpack.c.l.b16 %v122
    %v242 = vunpack.c.h.b16 %v122
    %v243 = vunpack.c.l.b16 %v123
    %v244 = vunpack.c.h.b16 %v123
    %v245 = vunpack.c.l.b16 %v124
    %v246 = vunpack.c.h.b16 %v124
    %v247 = vunpack.c.l.b16 %v125
    %v248 = vunpack.c.h.b16 %v125
    %v249 = vunpack.c.l.b16 %v126
    %v250 = vunpack.c.h.b16 %v126
    %v251 = vpack.c.b16 %v191, %v187
    %v252 = vpack.c.b16 %v192, %v188
    %v253 = vpack.c.b16 %v193, %v189
    %v254 = vpack.c.b16 %v194, %v190
    %v255 = vpack.c.b16 %v199, %v195
    %v256 = vpack.c.b16 %v200, %v196
    %v257 = vpack.c.b16 %v201, %v197
    %v258 = vpack.c.b16 %v202, %v198
    %v259 = vpack.c.b16 %v207, %v203
    %v260 = vpack.c.b16 %v208, %v204
    %v261 = vpack.c.b16 %v209, %v205
    %v262 = vpack.c.b16 %v210, %v206
    %v263 = vpack.c.b16 %v215, %v211
    %v264 = vpack.c.b16 %v216, %v212
    %v265 = vpack.c.b16 %v217, %v213
    %v266 = vpack.c.b16 %v218, %v214
    %v267 = vpack.c.b16 %v223, %v219
    %v268 = vpack.c.b16 %v224, %v220
    %v269 = vpack.c.b16 %v225, %v221
    %v270 = vpack.c.b16 %v226, %v222
    %v271 = vpack.c.b16 %v231, %v227
    %v272 = vpack.c.b16 %v232, %v228
    %v273 = vpack.c.b16 %v233, %v229
    %v274 = vpack.c.b16 %v234, %v230
    %v275 = vpack.c.b16 %v239, %v235
    %v276 = vpack.c.b16 %v240, %v236
    %v277 = vpack.c.b16 %v241, %v237
    %v278 = vpack.c.b16 %v242, %v238
    %v279 = vpack.c.b16 %v247, %v243
    %v280 = vpack.c.b16 %v248, %v244
    %v281 = vpack.c.b16 %v249, %v245
    %v282 = vpack.c.b16 %v250, %v246
    %315 = vmatprep.subr.bf16.mxu0 %v280
    %316 = vmatpush1.bf16.msra.mxu0 %v279
    %317 = vmatprep.subr.bf16.mxu0 %v276
    %318 = vmatpush1.bf16.msra.mxu0 %v275
    %319 = vmatprep.subr.bf16.mxu0 %v272
    %320 = vmatpush1.bf16.msra.mxu0 %v271
    %321 = vmatprep.subr.bf16.mxu0 %v268
    %322 = vmatpush1.bf16.msra.mxu0 %v267
    %323 = vmatprep.subr.bf16.mxu0 %v264
    %324 = vmatpush1.bf16.msra.mxu0 %v263
    %325 = vmatprep.subr.bf16.mxu0 %v260
    %326 = vmatpush1.bf16.msra.mxu0 %v259
    %327 = vmatprep.subr.bf16.mxu0 %v256
    %328 = vmatpush1.bf16.msra.mxu0 %v255
    %329 = vmatprep.subr.bf16.mxu0 %v252
    %330 = vmatpush1.bf16.msra.mxu0 %v251
    %331 = vmatprep.subr.bf16.mxu0 0
    %332 = vmatpush2.bf16.msra.mxu0 0
    %333 = vmatprep.subr.bf16.mxu0 0
    %334 = vmatpush2.bf16.msra.mxu0 0
    %335 = vmatprep.subr.bf16.mxu0 0
    %336 = vmatpush2.bf16.msra.mxu0 0
    %337 = vmatprep.subr.bf16.mxu0 0
    %338 = vmatpush2.bf16.msra.mxu0 0
    %339 = vmatprep.subr.bf16.mxu0 0
    %340 = vmatpush2.bf16.msra.mxu0 0
    %341 = vmatprep.subr.bf16.mxu0 0
    %342 = vmatpush2.bf16.msra.mxu0 0
    %343 = vmatprep.subr.bf16.mxu0 0
    %344 = vmatpush2.bf16.msra.mxu0 0
    %345 = vmatprep.subr.bf16.mxu0 0
    %346 = vmatpush2.bf16.msra.mxu0 0
    %347 = vmatprep.mubr.bf16.mxu0 0
    %348 = vmatmul.mubr.bf16.gmra.mxu0 %v145
    %v349 = vpop.f32.mrf.mxu0
    %v350 = vadd.f32 0.0, %v349
    %v351 = vpop.f32.mrf.mxu0
    %v352 = vadd.f32 0.0, %v351
    %v353 = vpop.f32.mrf.mxu0
    %v354 = vadd.f32 0.0, %v353
    %v355 = vpop.f32.mrf.mxu0
    %v356 = vadd.f32 0.0, %v355
    %357 = vmatprep.mubr.bf16.mxu0 0
    %358 = vmatmul.mubr.bf16.gmra.mxu0 %v146
    %v359 = vpop.f32.mrf.mxu0
    %v360 = vadd.f32 0.0, %v359
    %v361 = vpop.f32.mrf.mxu0
    %v362 = vadd.f32 0.0, %v361
    %v363 = vpop.f32.mrf.mxu0
    %v364 = vadd.f32 0.0, %v363
    %v365 = vpop.f32.mrf.mxu0
    %v366 = vadd.f32 0.0, %v365
    %367 = vmatprep.mubr.bf16.mxu0 0
    %368 = vmatmul.mubr.bf16.gmra.mxu0 %v147
    %v369 = vpop.f32.mrf.mxu0
    %v370 = vadd.f32 0.0, %v369
    %v371 = vpop.f32.mrf.mxu0
    %v372 = vadd.f32 0.0, %v371
    %v373 = vpop.f32.mrf.mxu0
    %v374 = vadd.f32 0.0, %v373
    %v375 = vpop.f32.mrf.mxu0
    %v376 = vadd.f32 0.0, %v375
    %377 = vmatprep.mubr.bf16.mxu0 0
    %378 = vmatmul.mubr.bf16.gmra.mxu0 %v148
    %v379 = vpop.f32.mrf.mxu0
    %v380 = vadd.f32 0.0, %v379
    %v381 = vpop.f32.mrf.mxu0
    %v382 = vadd.f32 0.0, %v381
    %v383 = vpop.f32.mrf.mxu0
    %v384 = vadd.f32 0.0, %v383
    %v385 = vpop.f32.mrf.mxu0
    %v386 = vadd.f32 0.0, %v385
    %387 = vmatprep.mubr.bf16.mxu0 0
    %388 = vmatmul.mubr.bf16.gmra.mxu0 %v149
    %v389 = vpop.f32.mrf.mxu0
    %v390 = vadd.f32 0.0, %v389
    %v391 = vpop.f32.mrf.mxu0
    %v392 = vadd.f32 0.0, %v391
    %v393 = vpop.f32.mrf.mxu0
    %v394 = vpop.f32.mrf.mxu0
    %395 = vdwg.mxu0
    %396 = vmatprep.subr.bf16.mxu0 %v282
    %397 = vmatpush1.bf16.msra.mxu0 %v281
    %398 = vmatprep.subr.bf16.mxu0 %v278
    %399 = vmatpush1.bf16.msra.mxu0 %v277
    %400 = vmatprep.subr.bf16.mxu0 %v274
    %401 = vmatpush1.bf16.msra.mxu0 %v273
    %402 = vmatprep.subr.bf16.mxu0 %v270
    %403 = vmatpush1.bf16.msra.mxu0 %v269
    %404 = vmatprep.subr.bf16.mxu0 %v266
    %405 = vmatpush1.bf16.msra.mxu0 %v265
    %406 = vmatprep.subr.bf16.mxu0 %v262
    %407 = vmatpush1.bf16.msra.mxu0 %v261
    %408 = vmatprep.subr.bf16.mxu0 %v258
    %409 = vmatpush1.bf16.msra.mxu0 %v257
    %410 = vmatprep.subr.bf16.mxu0 %v254
    %411 = vmatpush1.bf16.msra.mxu0 %v253
    %412 = vmatprep.subr.bf16.mxu0 0
    %413 = vmatpush2.bf16.msra.mxu0 0
    %414 = vmatprep.subr.bf16.mxu0 0
    %415 = vmatpush2.bf16.msra.mxu0 0
    %416 = vmatprep.subr.bf16.mxu0 0
    %417 = vmatpush2.bf16.msra.mxu0 0
    %418 = vmatprep.subr.bf16.mxu0 0
    %419 = vmatpush2.bf16.msra.mxu0 0
    %420 = vmatprep.subr.bf16.mxu0 0
    %421 = vmatpush2.bf16.msra.mxu0 0
    %422 = vmatprep.subr.bf16.mxu0 0
    %423 = vmatpush2.bf16.msra.mxu0 0
    %424 = vmatprep.subr.bf16.mxu0 0
    %425 = vmatpush2.bf16.msra.mxu0 0
    %426 = vmatprep.subr.bf16.mxu0 0
    %427 = vmatpush2.bf16.msra.mxu0 0
    %428 = vmatprep.mubr.bf16.mxu0 0
    %429 = vmatmul.mubr.bf16.gmra.mxu0 %v145
    %v430 = vpop.f32.mrf.mxu0
    %v431 = vadd.f32 0.0, %v430
    %v432 = vpop.f32.mrf.mxu0
    %v433 = vadd.f32 0.0, %v432
    %v434 = vpop.f32.mrf.mxu0
    %v435 = vadd.f32 0.0, %v434
    %v436 = vpop.f32.mrf.mxu0
    %v437 = vadd.f32 0.0, %v436
    %438 = vmatprep.mubr.bf16.mxu0 0
    %439 = vmatmul.mubr.bf16.gmra.mxu0 %v146
    %v440 = vpop.f32.mrf.mxu0
    %v441 = vadd.f32 0.0, %v440
    %v442 = vpop.f32.mrf.mxu0
    %v443 = vadd.f32 0.0, %v442
    %v444 = vpop.f32.mrf.mxu0
    %v445 = vadd.f32 0.0, %v444
    %v446 = vpop.f32.mrf.mxu0
    %v447 = vadd.f32 0.0, %v446
    %448 = vmatprep.mubr.bf16.mxu0 0
    %449 = vmatmul.mubr.bf16.gmra.mxu0 %v147
    %v450 = vpop.f32.mrf.mxu0
    %v451 = vadd.f32 0.0, %v450
    %v452 = vpop.f32.mrf.mxu0
    %v453 = vadd.f32 0.0, %v452
    %v454 = vpop.f32.mrf.mxu0
    %v455 = vadd.f32 0.0, %v454
    %v456 = vpop.f32.mrf.mxu0
    %v457 = vadd.f32 0.0, %v456
    %458 = vmatprep.mubr.bf16.mxu0 0
    %459 = vmatmul.mubr.bf16.gmra.mxu0 %v148
    %v460 = vpop.f32.mrf.mxu0
    %v461 = vadd.f32 0.0, %v460
    %v462 = vpop.f32.mrf.mxu0
    %v463 = vadd.f32 0.0, %v462
    %v464 = vpop.f32.mrf.mxu0
    %v465 = vadd.f32 0.0, %v464
    %v466 = vpop.f32.mrf.mxu0
    %v467 = vadd.f32 0.0, %v466
    %468 = vmatprep.mubr.bf16.mxu0 0
    %469 = vmatmul.mubr.bf16.gmra.mxu0 %v149
    %v470 = vpop.f32.mrf.mxu0
    %v471 = vadd.f32 0.0, %v470
    %v472 = vpop.f32.mrf.mxu0
    %v473 = vadd.f32 0.0, %v472
    %v474 = vpop.f32.mrf.mxu0
    %v475 = vpop.f32.mrf.mxu0
    %476 = vdwg.mxu0
    %v477 = vpack.c.bf16 %v354, %v350
    %v478 = vpack.c.bf16 %v356, %v352
    %v479 = vpack.c.bf16 %v435, %v431
    %v480 = vpack.c.bf16 %v437, %v433
    %v481 = vpack.c.bf16 %v364, %v360
    %v482 = vpack.c.bf16 %v366, %v362
    %v483 = vpack.c.bf16 %v445, %v441
    %v484 = vpack.c.bf16 %v447, %v443
    %v485 = vpack.c.bf16 %v374, %v370
    %v486 = vpack.c.bf16 %v376, %v372
    %v487 = vpack.c.bf16 %v455, %v451
    %v488 = vpack.c.bf16 %v457, %v453
    %v489 = vpack.c.bf16 %v384, %v380
    %v490 = vpack.c.bf16 %v386, %v382
    %v491 = vpack.c.bf16 %v465, %v461
    %v492 = vpack.c.bf16 %v467, %v463
    %v493 = vpack.c.bf16 %v390, %v390
    %v494 = vpack.c.bf16 %v392, %v392
    %v495 = vpack.c.bf16 %v471, %v471
    %v496 = vpack.c.bf16 %v473, %v473
    %v517 = vunpack.c.l.b16 %v477
    %v518 = vunpack.c.l.b16 %v478
    %v519 = vunpack.c.l.b16 %v479
    %v520 = vunpack.c.l.b16 %v480
    %v521 = vunpack.c.h.b16 %v477
    %v522 = vunpack.c.h.b16 %v478
    %v523 = vunpack.c.h.b16 %v479
    %v524 = vunpack.c.h.b16 %v480
    %v525 = vunpack.c.l.b16 %v481
    %v526 = vunpack.c.l.b16 %v482
    %v527 = vunpack.c.l.b16 %v483
    %v528 = vunpack.c.l.b16 %v484
    %v529 = vunpack.c.h.b16 %v481
    %v530 = vunpack.c.h.b16 %v482
    %v531 = vunpack.c.h.b16 %v483
    %v532 = vunpack.c.h.b16 %v484
    %v533 = vunpack.c.l.b16 %v485
    %v534 = vunpack.c.l.b16 %v486
    %v535 = vunpack.c.l.b16 %v487
    %v536 = vunpack.c.l.b16 %v488
    %v537 = vunpack.c.h.b16 %v485
    %v538 = vunpack.c.h.b16 %v486
    %v539 = vunpack.c.h.b16 %v487
    %v540 = vunpack.c.h.b16 %v488
    %v541 = vunpack.c.l.b16 %v489
    %v542 = vunpack.c.l.b16 %v490
    %v543 = vunpack.c.l.b16 %v491
    %v544 = vunpack.c.l.b16 %v492
    %v545 = vunpack.c.h.b16 %v489
    %v546 = vunpack.c.h.b16 %v490
    %v547 = vunpack.c.h.b16 %v491
    %v548 = vunpack.c.h.b16 %v492
    %v549 = vunpack.c.l.b16 %v493
    %v550 = vunpack.c.l.b16 %v494
    %v551 = vunpack.c.l.b16 %v495
    %v552 = vunpack.c.l.b16 %v496
    %v553 = vpack.c.b16 %v518, %v517
    %v554 = vpack.c.b16 %v520, %v519
    %v555 = vpack.c.b16 %v522, %v521
    %v556 = vpack.c.b16 %v524, %v523
    %v557 = vpack.c.b16 %v526, %v525
    %v558 = vpack.c.b16 %v528, %v527
    %v559 = vpack.c.b16 %v530, %v529
    %v560 = vpack.c.b16 %v532, %v531
    %v561 = vpack.c.b16 %v534, %v533
    %v562 = vpack.c.b16 %v536, %v535
    %v563 = vpack.c.b16 %v538, %v537
    %v564 = vpack.c.b16 %v540, %v539
    %v565 = vpack.c.b16 %v542, %v541
    %v566 = vpack.c.b16 %v544, %v543
    %v567 = vpack.c.b16 %v546, %v545
    %v568 = vpack.c.b16 %v548, %v547
    %v569 = vpack.c.b16 %v550, %v549
    %v570 = vpack.c.b16 %v552, %v551
    %589 = vst [vmem:[#allocation2] sm:$0xff] %v553
    %590 = vst [vmem:[#allocation2 + $0x8] sm:$0xff] %v554
    %591 = vst [vmem:[#allocation2 + $0x10] sm:$0xff] %v555
    %592 = vst [vmem:[#allocation2 + $0x18] sm:$0xff] %v556
    %593 = vst [vmem:[#allocation2 + $0x20] sm:$0xff] %v557
    %594 = vst [vmem:[#allocation2 + $0x28] sm:$0xff] %v558
    %595 = vst [vmem:[#allocation2 + $0x30] sm:$0xff] %v559
    %596 = vst [vmem:[#allocation2 + $0x38] sm:$0xff] %v560
    %597 = vst [vmem:[#allocation2 + $0x40] sm:$0xff] %v561
    %598 = vst [vmem:[#allocation2 + $0x48] sm:$0xff] %v562
    %599 = vst [vmem:[#allocation2 + $0x50] sm:$0xff] %v563
    %600 = vst [vmem:[#allocation2 + $0x58] sm:$0xff] %v564
    %601 = vst [vmem:[#allocation2 + $0x60] sm:$0xff] %v565
    %602 = vst [vmem:[#allocation2 + $0x68] sm:$0xff] %v566
    %603 = vst [vmem:[#allocation2 + $0x70] sm:$0xff] %v567
    %604 = vst [vmem:[#allocation2 + $0x78] sm:$0xff] %v568
    %605 = vst [vmem:[#allocation2 + $0x80] sm:$0xff] %v569
    %606 = vst [vmem:[#allocation2 + $0x88] sm:$0xff] %v570
    %v607 = vld [vmem:[%s4] sm:$0xff]
    %v608 = vld [vmem:[%s4 + $0x8] sm:$0xff]
    %v609 = vld [vmem:[%s4 + $0x10] sm:$0xff]
    %v610 = vld [vmem:[%s4 + $0x18] sm:$0xff]
    %v611 = vld [vmem:[%s4 + $0x20] sm:$0xff]
    %v612 = vld [vmem:[%s4 + $0x28] sm:$0xff]
    %v613 = vld [vmem:[%s4 + $0x30] sm:$0xff]
    %v614 = vld [vmem:[%s4 + $0x38] sm:$0xff]
    %v615 = vld [vmem:[%s4 + $0x40] sm:$0xff]
    %v616 = vld [vmem:[%s4 + $0x48] sm:$0xff]
    %v617 = vld [vmem:[%s4 + $0x50] sm:$0xff]
    %v618 = vld [vmem:[%s4 + $0x58] sm:$0xff]
    %v619 = vld [vmem:[%s4 + $0x60] sm:$0xff]
    %v620 = vld [vmem:[%s4 + $0x68] sm:$0xff]
    %v621 = vld [vmem:[%s4 + $0x70] sm:$0xff]
    %v622 = vld [vmem:[%s4 + $0x78] sm:$0xff]
    %v623 = vld [vmem:[%s4 + $0x80] sm:$0xff]
    %v624 = vld [vmem:[%s4 + $0x88] sm:$0xff]
    %v625 = vld [vmem:[%s4 + $0x90] sm:$0xff]
    %v626 = vld [vmem:[%s4 + $0x98] sm:$0xff]
    %v627 = vld [vmem:[%s4 + $0xa0] sm:$0xff]
    %v628 = vld [vmem:[%s4 + $0xa8] sm:$0xff]
    %v629 = vld [vmem:[%s4 + $0xb0] sm:$0xff]
    %v630 = vld [vmem:[%s4 + $0xb8] sm:$0xff]
    %v631 = vld [vmem:[%s4 + $0xc0] sm:$0xff]
    %v632 = vld [vmem:[%s4 + $0xc8] sm:$0xff]
    %v633 = vld [vmem:[%s4 + $0xd0] sm:$0xff]
    %v634 = vld [vmem:[%s4 + $0xd8] sm:$0xff]
    %v635 = vld [vmem:[%s4 + $0xe0] sm:$0xff]
    %v636 = vld [vmem:[%s4 + $0xe8] sm:$0xff]
    %v637 = vld [vmem:[%s4 + $0xf0] sm:$0xff]
    %v638 = vld [vmem:[%s4 + $0xf8] sm:$0xff]
    %v639 = vld [vmem:[#allocation11] sm:$0xf]
    %640 = vst [vmem:[#allocation5] sm:$0xff] 0.0
    %641 = vst [vmem:[#allocation6] sm:$0xff] 0.0
    %v642 = vld [vmem:[#allocation5] sm:$0xff]
    %v643 = vld [vmem:[#allocation6] sm:$0xff]
    %s644 = smul.u32 0, 4
    %s645 = smul.addr %s644, 4
    %s646 = scalar_lea.vmem [#allocation2], %s645
    %v647 = vld [vmem:[%s646] sm:$0xff]
    %v648 = vld [vmem:[%s646 + $0x8] sm:$0xff]
    %v649 = vunpack.c.l.bf16 %v647
    %v650 = vunpack.c.h.bf16 %v647
    %v651 = vunpack.c.l.bf16 %v648
    %v652 = vunpack.c.h.bf16 %v648
    %v654 = vlaneseq
    %v655 = vshrl.u32 %v654, 7
    %v656 = vsub.s32 0, %v655
    %v657 = vrot.slane %v639, %v656
    %v658 = vlaneseq
    %v659 = vshrl.u32 %v658, 7
    %v660 = vsub.s32 1, %v659
    %v661 = vrot.slane %v639, %v660
    %v662 = vlaneseq
    %v663 = vshrl.u32 %v662, 7
    %v664 = vsub.s32 2, %v663
    %v665 = vrot.slane %v639, %v664
    %v666 = vlaneseq
    %v667 = vshrl.u32 %v666, 7
    %v668 = vsub.s32 3, %v667
    %v669 = vrot.slane %v639, %v668
    %v674 = vadd.f32 %v649, %v657
    %v675 = vadd.f32 %v650, %v661
    %v676 = vadd.f32 %v651, %v665
    %v677 = vadd.f32 %v652, %v669
    %v678 = vpack.c.bf16 %v642, %v642
    %v711 = vunpack.c.l.b16 %v607
    %v712 = vunpack.c.h.b16 %v607
    %v713 = vunpack.c.l.b16 %v608
    %v714 = vunpack.c.h.b16 %v608
    %v715 = vunpack.c.l.b16 %v609
    %v716 = vunpack.c.h.b16 %v609
    %v717 = vunpack.c.l.b16 %v610
    %v718 = vunpack.c.h.b16 %v610
    %v719 = vunpack.c.l.b16 %v611
    %v720 = vunpack.c.h.b16 %v611
    %v721 = vunpack.c.l.b16 %v612
    %v722 = vunpack.c.h.b16 %v612
    %v723 = vunpack.c.l.b16 %v613
    %v724 = vunpack.c.h.b16 %v613
    %v725 = vunpack.c.l.b16 %v614
    %v726 = vunpack.c.h.b16 %v614
    %v727 = vunpack.c.l.b16 %v615
    %v728 = vunpack.c.h.b16 %v615
    %v729 = vunpack.c.l.b16 %v616
    %v730 = vunpack.c.h.b16 %v616
    %v731 = vunpack.c.l.b16 %v617
    %v732 = vunpack.c.h.b16 %v617
    %v733 = vunpack.c.l.b16 %v618
    %v734 = vunpack.c.h.b16 %v618
    %v735 = vunpack.c.l.b16 %v619
    %v736 = vunpack.c.h.b16 %v619
    %v737 = vunpack.c.l.b16 %v620
    %v738 = vunpack.c.h.b16 %v620
    %v739 = vunpack.c.l.b16 %v621
    %v740 = vunpack.c.h.b16 %v621
    %v741 = vunpack.c.l.b16 %v622
    %v742 = vunpack.c.h.b16 %v622
    %v743 = vunpack.c.l.b16 %v623
    %v744 = vunpack.c.h.b16 %v623
    %v745 = vunpack.c.l.b16 %v624
    %v746 = vunpack.c.h.b16 %v624
    %v747 = vunpack.c.l.b16 %v625
    %v748 = vunpack.c.h.b16 %v625
    %v749 = vunpack.c.l.b16 %v626
    %v750 = vunpack.c.h.b16 %v626
    %v751 = vunpack.c.l.b16 %v627
    %v752 = vunpack.c.h.b16 %v627
    %v753 = vunpack.c.l.b16 %v628
    %v754 = vunpack.c.h.b16 %v628
    %v755 = vunpack.c.l.b16 %v629
    %v756 = vunpack.c.h.b16 %v629
    %v757 = vunpack.c.l.b16 %v630
    %v758 = vunpack.c.h.b16 %v630
    %v759 = vunpack.c.l.b16 %v631
    %v760 = vunpack.c.h.b16 %v631
    %v761 = vunpack.c.l.b16 %v632
    %v762 = vunpack.c.h.b16 %v632
    %v763 = vunpack.c.l.b16 %v633
    %v764 = vunpack.c.h.b16 %v633
    %v765 = vunpack.c.l.b16 %v634
    %v766 = vunpack.c.h.b16 %v634
    %v767 = vunpack.c.l.b16 %v635
    %v768 = vunpack.c.h.b16 %v635
    %v769 = vunpack.c.l.b16 %v636
    %v770 = vunpack.c.h.b16 %v636
    %v771 = vunpack.c.l.b16 %v637
    %v772 = vunpack.c.h.b16 %v637
    %v773 = vunpack.c.l.b16 %v638
    %v774 = vunpack.c.h.b16 %v638
    %v775 = vpack.c.b16 %v715, %v711
    %v776 = vpack.c.b16 %v716, %v712
    %v777 = vpack.c.b16 %v717, %v713
    %v778 = vpack.c.b16 %v718, %v714
    %v779 = vpack.c.b16 %v723, %v719
    %v780 = vpack.c.b16 %v724, %v720
    %v781 = vpack.c.b16 %v725, %v721
    %v782 = vpack.c.b16 %v726, %v722
    %v783 = vpack.c.b16 %v731, %v727
    %v784 = vpack.c.b16 %v732, %v728
    %v785 = vpack.c.b16 %v733, %v729
    %v786 = vpack.c.b16 %v734, %v730
    %v787 = vpack.c.b16 %v739, %v735
    %v788 = vpack.c.b16 %v740, %v736
    %v789 = vpack.c.b16 %v741, %v737
    %v790 = vpack.c.b16 %v742, %v738
    %v791 = vpack.c.b16 %v747, %v743
    %v792 = vpack.c.b16 %v748, %v744
    %v793 = vpack.c.b16 %v749, %v745
    %v794 = vpack.c.b16 %v750, %v746
    %v795 = vpack.c.b16 %v755, %v751
    %v796 = vpack.c.b16 %v756, %v752
    %v797 = vpack.c.b16 %v757, %v753
    %v798 = vpack.c.b16 %v758, %v754
    %v799 = vpack.c.b16 %v763, %v759
    %v800 = vpack.c.b16 %v764, %v760
    %v801 = vpack.c.b16 %v765, %v761
    %v802 = vpack.c.b16 %v766, %v762
    %v803 = vpack.c.b16 %v771, %v767
    %v804 = vpack.c.b16 %v772, %v768
    %v805 = vpack.c.b16 %v773, %v769
    %v806 = vpack.c.b16 %v774, %v770
    %839 = vmatprep.subr.bf16.mxu0 %v804
    %840 = vmatpush1.bf16.msra.mxu0 %v803
    %841 = vmatprep.subr.bf16.mxu0 %v800
    %842 = vmatpush1.bf16.msra.mxu0 %v799
    %843 = vmatprep.subr.bf16.mxu0 %v796
    %844 = vmatpush1.bf16.msra.mxu0 %v795
    %845 = vmatprep.subr.bf16.mxu0 %v792
    %846 = vmatpush1.bf16.msra.mxu0 %v791
    %847 = vmatprep.subr.bf16.mxu0 %v788
    %848 = vmatpush1.bf16.msra.mxu0 %v787
    %849 = vmatprep.subr.bf16.mxu0 %v784
    %850 = vmatpush1.bf16.msra.mxu0 %v783
    %851 = vmatprep.subr.bf16.mxu0 %v780
    %852 = vmatpush1.bf16.msra.mxu0 %v779
    %853 = vmatprep.subr.bf16.mxu0 %v776
    %854 = vmatpush1.bf16.msra.mxu0 %v775
    %855 = vmatprep.subr.bf16.mxu0 0
    %856 = vmatpush2.bf16.msra.mxu0 0
    %857 = vmatprep.subr.bf16.mxu0 0
    %858 = vmatpush2.bf16.msra.mxu0 0
    %859 = vmatprep.subr.bf16.mxu0 0
    %860 = vmatpush2.bf16.msra.mxu0 0
    %861 = vmatprep.subr.bf16.mxu0 0
    %862 = vmatpush2.bf16.msra.mxu0 0
    %863 = vmatprep.subr.bf16.mxu0 0
    %864 = vmatpush2.bf16.msra.mxu0 0
    %865 = vmatprep.subr.bf16.mxu0 0
    %866 = vmatpush2.bf16.msra.mxu0 0
    %867 = vmatprep.subr.bf16.mxu0 0
    %868 = vmatpush2.bf16.msra.mxu0 0
    %869 = vmatprep.subr.bf16.mxu0 0
    %870 = vmatpush2.bf16.msra.mxu0 0
    %871 = vmatprep.mubr.bf16.mxu0 0
    %872 = vmatmul.mubr.bf16.gmra.mxu0 %v678
    %v873 = vpop.f32.mrf.mxu0
    %v874 = vadd.f32 0.0, %v873
    %v875 = vpop.f32.mrf.mxu0
    %v876 = vadd.f32 0.0, %v875
    %v877 = vpop.f32.mrf.mxu0
    %v878 = vpop.f32.mrf.mxu0
    %879 = vdwg.mxu0
    %880 = vmatprep.subr.bf16.mxu0 %v806
    %881 = vmatpush1.bf16.msra.mxu0 %v805
    %882 = vmatprep.subr.bf16.mxu0 %v802
    %883 = vmatpush1.bf16.msra.mxu0 %v801
    %884 = vmatprep.subr.bf16.mxu0 %v798
    %885 = vmatpush1.bf16.msra.mxu0 %v797
    %886 = vmatprep.subr.bf16.mxu0 %v794
    %887 = vmatpush1.bf16.msra.mxu0 %v793
    %888 = vmatprep.subr.bf16.mxu0 %v790
    %889 = vmatpush1.bf16.msra.mxu0 %v789
    %890 = vmatprep.subr.bf16.mxu0 %v786
    %891 = vmatpush1.bf16.msra.mxu0 %v785
    %892 = vmatprep.subr.bf16.mxu0 %v782
    %893 = vmatpush1.bf16.msra.mxu0 %v781
    %894 = vmatprep.subr.bf16.mxu0 %v778
    %895 = vmatpush1.bf16.msra.mxu0 %v777
    %896 = vmatprep.subr.bf16.mxu0 0
    %897 = vmatpush2.bf16.msra.mxu0 0
    %898 = vmatprep.subr.bf16.mxu0 0
    %899 = vmatpush2.bf16.msra.mxu0 0
    %900 = vmatprep.subr.bf16.mxu0 0
    %901 = vmatpush2.bf16.msra.mxu0 0
    %902 = vmatprep.subr.bf16.mxu0 0
    %903 = vmatpush2.bf16.msra.mxu0 0
    %904 = vmatprep.subr.bf16.mxu0 0
    %905 = vmatpush2.bf16.msra.mxu0 0
    %906 = vmatprep.subr.bf16.mxu0 0
    %907 = vmatpush2.bf16.msra.mxu0 0
    %908 = vmatprep.subr.bf16.mxu0 0
    %909 = vmatpush2.bf16.msra.mxu0 0
    %910 = vmatprep.subr.bf16.mxu0 0
    %911 = vmatpush2.bf16.msra.mxu0 0
    %912 = vmatprep.mubr.bf16.mxu0 0
    %913 = vmatmul.mubr.bf16.gmra.mxu0 %v678
    %v914 = vpop.f32.mrf.mxu0
    %v915 = vadd.f32 0.0, %v914
    %v916 = vpop.f32.mrf.mxu0
    %v917 = vadd.f32 0.0, %v916
    %v918 = vpop.f32.mrf.mxu0
    %v919 = vpop.f32.mrf.mxu0
    %920 = vdwg.mxu0
    %v921 = vadd.f32 %v674, %v874
    %v922 = vadd.f32 %v675, %v876
    %v923 = vadd.f32 %v676, %v915
    %v924 = vadd.f32 %v677, %v917
    %v925 = vsub.f32 0.0, %v921
    %v926 = vsub.f32 0.0, %v922
    %v927 = vsub.f32 0.0, %v923
    %v928 = vmul.f32 %v925, 1.442695
    %v929 = vpow.pop %v928
    %v930 = vmul.f32 %v926, 1.442695
    %v931 = vpow.pop %v930
    %v932 = vmul.f32 %v927, 1.442695
    %v933 = vpow.pop %v932
    %v934 = vadd.f32 %v929, 1.0
    %v935 = vadd.f32 %v931, 1.0
    %v936 = vadd.f32 %v933, 1.0
    %v937 = vrcp.pop %v934
    %v938 = vrcp.pop %v935
    %v939 = vrcp.pop %v936
    %v940 = vtanh.pop %v924
    %v941 = vmul.f32 %v938, %v643
    %v942 = vmul.f32 %v937, %v940
    %v943 = vadd.f32 %v941, %v942
    %v944 = vtanh.pop %v943
    %v945 = vmul.f32 %v939, %v944
    %vm946 = vcmp.gt.s32.totalorder %v85, 0
    %v947 = vsel %vm946, 1, 0
    %948 = vset.pattern.permute.xlu0 0
    %949 = vperm.xlu0 %948, %v947
    %v950 = vpop.permute.xlu0 %949
    %vm951 = vcmp.eq.s32.totalorder %v950, 1
    %v952 = vsel %vm951, %v945, %v642
    %953 = vst [vmem:[#allocation5] sm:$0xff] %v952
    %v954 = vsel %vm951, %v943, %v643
    %955 = vst [vmem:[#allocation6] sm:$0xff] %v954
    %v956 = vcvt.s32.f32 %v947
    %958 = vset.pattern.permute.xlu0 0
    %959 = vperm.xlu0 %958, %v956
    %v960 = vpop.permute.xlu0 %959
    %v962 = vmul.f32 %v945, %v960
    %v963 = vpack.c.bf16 %v962, %v962
    %964 = vst [vmem:[#allocation3] sm:$0xf] %v963
    %v965 = vld [vmem:[#allocation5] sm:$0xff]
    %v966 = vld [vmem:[#allocation6] sm:$0xff]
    %s967 = smul.u32 1, 4
    %s968 = smul.addr %s967, 4
    %s969 = scalar_lea.vmem [#allocation2], %s968
    %v970 = vld [vmem:[%s969] sm:$0xff]
    %v971 = vld [vmem:[%s969 + $0x8] sm:$0xff]
    %v972 = vunpack.c.l.bf16 %v970
    %v973 = vunpack.c.h.bf16 %v970
    %v974 = vunpack.c.l.bf16 %v971
    %v975 = vunpack.c.h.bf16 %v971
    %v976 = vadd.f32 %v972, %v657
    %v977 = vadd.f32 %v973, %v661
    %v978 = vadd.f32 %v974, %v665
    %v979 = vadd.f32 %v975, %v669
    %v980 = vpack.c.bf16 %v965, %v965
    %981 = vmatprep.subr.bf16.mxu0 %v804
    %982 = vmatpush1.bf16.msra.mxu0 %v803
    %983 = vmatprep.subr.bf16.mxu0 %v800
    %984 = vmatpush1.bf16.msra.mxu0 %v799
    %985 = vmatprep.subr.bf16.mxu0 %v796
    %986 = vmatpush1.bf16.msra.mxu0 %v795
    %987 = vmatprep.subr.bf16.mxu0 %v792
    %988 = vmatpush1.bf16.msra.mxu0 %v791
    %989 = vmatprep.subr.bf16.mxu0 %v788
    %990 = vmatpush1.bf16.msra.mxu0 %v787
    %991 = vmatprep.subr.bf16.mxu0 %v784
    %992 = vmatpush1.bf16.msra.mxu0 %v783
    %993 = vmatprep.subr.bf16.mxu0 %v780
    %994 = vmatpush1.bf16.msra.mxu0 %v779
    %995 = vmatprep.subr.bf16.mxu0 %v776
    %996 = vmatpush1.bf16.msra.mxu0 %v775
    %997 = vmatprep.subr.bf16.mxu0 0
    %998 = vmatpush2.bf16.msra.mxu0 0
    %999 = vmatprep.subr.bf16.mxu0 0
    %1000 = vmatpush2.bf16.msra.mxu0 0
    %1001 = vmatprep.subr.bf16.mxu0 0
    %1002 = vmatpush2.bf16.msra.mxu0 0
    %1003 = vmatprep.subr.bf16.mxu0 0
    %1004 = vmatpush2.bf16.msra.mxu0 0
    %1005 = vmatprep.subr.bf16.mxu0 0
    %1006 = vmatpush2.bf16.msra.mxu0 0
    %1007 = vmatprep.subr.bf16.mxu0 0
    %1008 = vmatpush2.bf16.msra.mxu0 0
    %1009 = vmatprep.subr.bf16.mxu0 0
    %1010 = vmatpush2.bf16.msra.mxu0 0
    %1011 = vmatprep.subr.bf16.mxu0 0
    %1012 = vmatpush2.bf16.msra.mxu0 0
    %1013 = vmatprep.mubr.bf16.mxu0 0
    %1014 = vmatmul.mubr.bf16.gmra.mxu0 %v980
    %v1015 = vpop.f32.mrf.mxu0
    %v1016 = vadd.f32 0.0, %v1015
    %v1017 = vpop.f32.mrf.mxu0
    %v1018 = vadd.f32 0.0, %v1017
    %v1019 = vpop.f32.mrf.mxu0
    %v1020 = vpop.f32.mrf.mxu0
    %1021 = vdwg.mxu0
    %1022 = vmatprep.subr.bf16.mxu0 %v806
    %1023 = vmatpush1.bf16.msra.mxu0 %v805
    %1024 = vmatprep.subr.bf16.mxu0 %v802
    %1025 = vmatpush1.bf16.msra.mxu0 %v801
    %1026 = vmatprep.subr.bf16.mxu0 %v798
    %1027 = vmatpush1.bf16.msra.mxu0 %v797
    %1028 = vmatprep.subr.bf16.mxu0 %v794
    %1029 = vmatpush1.bf16.msra.mxu0 %v793
    %1030 = vmatprep.subr.bf16.mxu0 %v790
    %1031 = vmatpush1.bf16.msra.mxu0 %v789
    %1032 = vmatprep.subr.bf16.mxu0 %v786
    %1033 = vmatpush1.bf16.msra.mxu0 %v785
    %1034 = vmatprep.subr.bf16.mxu0 %v782
    %1035 = vmatpush1.bf16.msra.mxu0 %v781
    %1036 = vmatprep.subr.bf16.mxu0 %v778
    %1037 = vmatpush1.bf16.msra.mxu0 %v777
    %1038 = vmatprep.subr.bf16.mxu0 0
    %1039 = vmatpush2.bf16.msra.mxu0 0
    %1040 = vmatprep.subr.bf16.mxu0 0
    %1041 = vmatpush2.bf16.msra.mxu0 0
    %1042 = vmatprep.subr.bf16.mxu0 0
    %1043 = vmatpush2.bf16.msra.mxu0 0
    %1044 = vmatprep.subr.bf16.mxu0 0
    %1045 = vmatpush2.bf16.msra.mxu0 0
    %1046 = vmatprep.subr.bf16.mxu0 0
    %1047 = vmatpush2.bf16.msra.mxu0 0
    %1048 = vmatprep.subr.bf16.mxu0 0
    %1049 = vmatpush2.bf16.msra.mxu0 0
    %1050 = vmatprep.subr.bf16.mxu0 0
    %1051 = vmatpush2.bf16.msra.mxu0 0
    %1052 = vmatprep.subr.bf16.mxu0 0
    %1053 = vmatpush2.bf16.msra.mxu0 0
    %1054 = vmatprep.mubr.bf16.mxu0 0
    %1055 = vmatmul.mubr.bf16.gmra.mxu0 %v980
    %v1056 = vpop.f32.mrf.mxu0
    %v1057 = vadd.f32 0.0, %v1056
    %v1058 = vpop.f32.mrf.mxu0
    %v1059 = vadd.f32 0.0, %v1058
    %v1060 = vpop.f32.mrf.mxu0
    %v1061 = vpop.f32.mrf.mxu0
    %1062 = vdwg.mxu0
    %v1063 = vadd.f32 %v976, %v1016
    %v1064 = vadd.f32 %v977, %v1018
    %v1065 = vadd.f32 %v978, %v1057
    %v1066 = vadd.f32 %v979, %v1059
    %v1067 = vsub.f32 0.0, %v1063
    %v1068 = vsub.f32 0.0, %v1064
    %v1069 = vsub.f32 0.0, %v1065
    %v1070 = vmul.f32 %v1067, 1.442695
    %v1071 = vpow.pop %v1070
    %v1072 = vmul.f32 %v1068, 1.442695
    %v1073 = vpow.pop %v1072
    %v1074 = vmul.f32 %v1069, 1.442695
    %v1075 = vpow.pop %v1074
    %v1076 = vadd.f32 %v1071, 1.0
    %v1077 = vadd.f32 %v1073, 1.0
    %v1078 = vadd.f32 %v1075, 1.0
    %v1079 = vrcp.pop %v1076
    %v1080 = vrcp.pop %v1077
    %v1081 = vrcp.pop %v1078
    %v1082 = vtanh.pop %v1066
    %v1083 = vmul.f32 %v1080, %v966
    %v1084 = vmul.f32 %v1079, %v1082
    %v1085 = vadd.f32 %v1083, %v1084
    %v1086 = vtanh.pop %v1085
    %v1087 = vmul.f32 %v1081, %v1086
    %vm1088 = vcmp.gt.s32.totalorder %v85, 1
    %v1089 = vsel %vm1088, 1, 0
    %1090 = vset.pattern.permute.xlu0 0
    %1091 = vperm.xlu0 %1090, %v1089
    %v1092 = vpop.permute.xlu0 %1091
    %vm1093 = vcmp.eq.s32.totalorder %v1092, 1
    %v1094 = vsel %vm1093, %v1087, %v965
    %1095 = vst [vmem:[#allocation5] sm:$0xff] %v1094
    %v1096 = vsel %vm1093, %v1085, %v966
    %1097 = vst [vmem:[#allocation6] sm:$0xff] %v1096
    %v1098 = vcvt.s32.f32 %v1089
    %1100 = vset.pattern.permute.xlu0 0
    %1101 = vperm.xlu0 %1100, %v1098
    %v1102 = vpop.permute.xlu0 %1101
    %v1104 = vmul.f32 %v1087, %v1102
    %v1105 = vpack.c.bf16 %v1104, %v1104
    %s1106 = scalar_lea.vmem [#allocation3], 4
    %1107 = vst [vmem:[%s1106] sm:$0xf] %v1105
    %v1108 = vld [vmem:[#allocation5] sm:$0xff]
    %v1109 = vld [vmem:[#allocation6] sm:$0xff]
    %s1110 = smul.u32 2, 4
    %s1111 = smul.addr %s1110, 4
    %s1112 = scalar_lea.vmem [#allocation2], %s1111
    %v1113 = vld [vmem:[%s1112] sm:$0xff]
    %v1114 = vld [vmem:[%s1112 + $0x8] sm:$0xff]
    %v1115 = vunpack.c.l.bf16 %v1113
    %v1116 = vunpack.c.h.bf16 %v1113
    %v1117 = vunpack.c.l.bf16 %v1114
    %v1118 = vunpack.c.h.bf16 %v1114
    %v1119 = vadd.f32 %v1115, %v657
    %v1120 = vadd.f32 %v1116, %v661
    %v1121 = vadd.f32 %v1117, %v665
    %v1122 = vadd.f32 %v1118, %v669
    %v1123 = vpack.c.bf16 %v1108, %v1108
    %1124 = vmatprep.subr.bf16.mxu0 %v804
    %1125 = vmatpush1.bf16.msra.mxu0 %v803
    %1126 = vmatprep.subr.bf16.mxu0 %v800
    %1127 = vmatpush1.bf16.msra.mxu0 %v799
    %1128 = vmatprep.subr.bf16.mxu0 %v796
    %1129 = vmatpush1.bf16.msra.mxu0 %v795
    %1130 = vmatprep.subr.bf16.mxu0 %v792
    %1131 = vmatpush1.bf16.msra.mxu0 %v791
    %1132 = vmatprep.subr.bf16.mxu0 %v788
    %1133 = vmatpush1.bf16.msra.mxu0 %v787
    %1134 = vmatprep.subr.bf16.mxu0 %v784
    %1135 = vmatpush1.bf16.msra.mxu0 %v783
    %1136 = vmatprep.subr.bf16.mxu0 %v780
    %1137 = vmatpush1.bf16.msra.mxu0 %v779
    %1138 = vmatprep.subr.bf16.mxu0 %v776
    %1139 = vmatpush1.bf16.msra.mxu0 %v775
    %1140 = vmatprep.subr.bf16.mxu0 0
    %1141 = vmatpush2.bf16.msra.mxu0 0
    %1142 = vmatprep.subr.bf16.mxu0 0
    %1143 = vmatpush2.bf16.msra.mxu0 0
    %1144 = vmatprep.subr.bf16.mxu0 0
    %1145 = vmatpush2.bf16.msra.mxu0 0
    %1146 = vmatprep.subr.bf16.mxu0 0
    %1147 = vmatpush2.bf16.msra.mxu0 0
    %1148 = vmatprep.subr.bf16.mxu0 0
    %1149 = vmatpush2.bf16.msra.mxu0 0
    %1150 = vmatprep.subr.bf16.mxu0 0
    %1151 = vmatpush2.bf16.msra.mxu0 0
    %1152 = vmatprep.subr.bf16.mxu0 0
    %1153 = vmatpush2.bf16.msra.mxu0 0
    %1154 = vmatprep.subr.bf16.mxu0 0
    %1155 = vmatpush2.bf16.msra.mxu0 0
    %1156 = vmatprep.mubr.bf16.mxu0 0
    %1157 = vmatmul.mubr.bf16.gmra.mxu0 %v1123
    %v1158 = vpop.f32.mrf.mxu0
    %v1159 = vadd.f32 0.0, %v1158
    %v1160 = vpop.f32.mrf.mxu0
    %v1161 = vadd.f32 0.0, %v1160
    %v1162 = vpop.f32.mrf.mxu0
    %v1163 = vpop.f32.mrf.mxu0
    %1164 = vdwg.mxu0
    %1165 = vmatprep.subr.bf16.mxu0 %v806
    %1166 = vmatpush1.bf16.msra.mxu0 %v805
    %1167 = vmatprep.subr.bf16.mxu0 %v802
    %1168 = vmatpush1.bf16.msra.mxu0 %v801
    %1169 = vmatprep.subr.bf16.mxu0 %v798
    %1170 = vmatpush1.bf16.msra.mxu0 %v797
    %1171 = vmatprep.subr.bf16.mxu0 %v794
    %1172 = vmatpush1.bf16.msra.mxu0 %v793
    %1173 = vmatprep.subr.bf16.mxu0 %v790
    %1174 = vmatpush1.bf16.msra.mxu0 %v789
    %1175 = vmatprep.subr.bf16.mxu0 %v786
    %1176 = vmatpush1.bf16.msra.mxu0 %v785
    %1177 = vmatprep.subr.bf16.mxu0 %v782
    %1178 = vmatpush1.bf16.msra.mxu0 %v781
    %1179 = vmatprep.subr.bf16.mxu0 %v778
    %1180 = vmatpush1.bf16.msra.mxu0 %v777
    %1181 = vmatprep.subr.bf16.mxu0 0
    %1182 = vmatpush2.bf16.msra.mxu0 0
    %1183 = vmatprep.subr.bf16.mxu0 0
    %1184 = vmatpush2.bf16.msra.mxu0 0
    %1185 = vmatprep.subr.bf16.mxu0 0
    %1186 = vmatpush2.bf16.msra.mxu0 0
    %1187 = vmatprep.subr.bf16.mxu0 0
    %1188 = vmatpush2.bf16.msra.mxu0 0
    %1189 = vmatprep.subr.bf16.mxu0 0
    %1190 = vmatpush2.bf16.msra.mxu0 0
    %1191 = vmatprep.subr.bf16.mxu0 0
    %1192 = vmatpush2.bf16.msra.mxu0 0
    %1193 = vmatprep.subr.bf16.mxu0 0
    %1194 = vmatpush2.bf16.msra.mxu0 0
    %1195 = vmatprep.subr.bf16.mxu0 0
    %1196 = vmatpush2.bf16.msra.mxu0 0
    %1197 = vmatprep.mubr.bf16.mxu0 0
    %1198 = vmatmul.mubr.bf16.gmra.mxu0 %v1123
    %v1199 = vpop.f32.mrf.mxu0
    %v1200 = vadd.f32 0.0, %v1199
    %v1201 = vpop.f32.mrf.mxu0
    %v1202 = vadd.f32 0.0, %v1201
    %v1203 = vpop.f32.mrf.mxu0
    %v1204 = vpop.f32.mrf.mxu0
    %1205 = vdwg.mxu0
    %v1206 = vadd.f32 %v1119, %v1159
    %v1207 = vadd.f32 %v1120, %v1161
    %v1208 = vadd.f32 %v1121, %v1200
    %v1209 = vadd.f32 %v1122, %v1202
    %v1210 = vsub.f32 0.0, %v1206
    %v1211 = vsub.f32 0.0, %v1207
    %v1212 = vsub.f32 0.0, %v1208
    %v1213 = vmul.f32 %v1210, 1.442695
    %v1214 = vpow.pop %v1213
    %v1215 = vmul.f32 %v1211, 1.442695
    %v1216 = vpow.pop %v1215
    %v1217 = vmul.f32 %v1212, 1.442695
    %v1218 = vpow.pop %v1217
    %v1219 = vadd.f32 %v1214, 1.0
    %v1220 = vadd.f32 %v1216, 1.0
    %v1221 = vadd.f32 %v1218, 1.0
    %v1222 = vrcp.pop %v1219
    %v1223 = vrcp.pop %v1220
    %v1224 = vrcp.pop %v1221
    %v1225 = vtanh.pop %v1209
    %v1226 = vmul.f32 %v1223, %v1109
    %v1227 = vmul.f32 %v1222, %v1225
    %v1228 = vadd.f32 %v1226, %v1227
    %v1229 = vtanh.pop %v1228
    %v1230 = vmul.f32 %v1224, %v1229
    %vm1231 = vcmp.gt.s32.totalorder %v85, 2
    %v1232 = vsel %vm1231, 1, 0
    %1233 = vset.pattern.permute.xlu0 0
    %1234 = vperm.xlu0 %1233, %v1232
    %v1235 = vpop.permute.xlu0 %1234
    %vm1236 = vcmp.eq.s32.totalorder %v1235, 1
    %v1237 = vsel %vm1236, %v1230, %v1108
    %1238 = vst [vmem:[#allocation5] sm:$0xff] %v1237
    %v1239 = vsel %vm1236, %v1228, %v1109
    %1240 = vst [vmem:[#allocation6] sm:$0xff] %v1239
    %v1241 = vcvt.s32.f32 %v1232
    %1243 = vset.pattern.permute.xlu0 0
    %1244 = vperm.xlu0 %1243, %v1241
    %v1245 = vpop.permute.xlu0 %1244
    %v1247 = vmul.f32 %v1230, %v1245
    %v1248 = vpack.c.bf16 %v1247, %v1247
    %s1249 = scalar_lea.vmem [#allocation3], 8
    %1250 = vst [vmem:[%s1249] sm:$0xf] %v1248
    %v1251 = vld [vmem:[#allocation5] sm:$0xff]
    %v1252 = vld [vmem:[#allocation6] sm:$0xff]
    %s1253 = smul.u32 3, 4
    %s1254 = smul.addr %s1253, 4
    %s1255 = scalar_lea.vmem [#allocation2], %s1254
    %v1256 = vld [vmem:[%s1255] sm:$0xff]
    %v1257 = vld [vmem:[%s1255 + $0x8] sm:$0xff]
    %v1258 = vunpack.c.l.bf16 %v1256
    %v1259 = vunpack.c.h.bf16 %v1256
    %v1260 = vunpack.c.l.bf16 %v1257
    %v1261 = vunpack.c.h.bf16 %v1257
    %v1262 = vadd.f32 %v1258, %v657
    %v1263 = vadd.f32 %v1259, %v661
    %v1264 = vadd.f32 %v1260, %v665
    %v1265 = vadd.f32 %v1261, %v669
    %v1266 = vpack.c.bf16 %v1251, %v1251
    %1267 = vmatprep.subr.bf16.mxu0 %v804
    %1268 = vmatpush1.bf16.msra.mxu0 %v803
    %1269 = vmatprep.subr.bf16.mxu0 %v800
    %1270 = vmatpush1.bf16.msra.mxu0 %v799
    %1271 = vmatprep.subr.bf16.mxu0 %v796
    %1272 = vmatpush1.bf16.msra.mxu0 %v795
    %1273 = vmatprep.subr.bf16.mxu0 %v792
    %1274 = vmatpush1.bf16.msra.mxu0 %v791
    %1275 = vmatprep.subr.bf16.mxu0 %v788
    %1276 = vmatpush1.bf16.msra.mxu0 %v787
    %1277 = vmatprep.subr.bf16.mxu0 %v784
    %1278 = vmatpush1.bf16.msra.mxu0 %v783
    %1279 = vmatprep.subr.bf16.mxu0 %v780
    %1280 = vmatpush1.bf16.msra.mxu0 %v779
    %1281 = vmatprep.subr.bf16.mxu0 %v776
    %1282 = vmatpush1.bf16.msra.mxu0 %v775
    %1283 = vmatprep.subr.bf16.mxu0 0
    %1284 = vmatpush2.bf16.msra.mxu0 0
    %1285 = vmatprep.subr.bf16.mxu0 0
    %1286 = vmatpush2.bf16.msra.mxu0 0
    %1287 = vmatprep.subr.bf16.mxu0 0
    %1288 = vmatpush2.bf16.msra.mxu0 0
    %1289 = vmatprep.subr.bf16.mxu0 0
    %1290 = vmatpush2.bf16.msra.mxu0 0
    %1291 = vmatprep.subr.bf16.mxu0 0
    %1292 = vmatpush2.bf16.msra.mxu0 0
    %1293 = vmatprep.subr.bf16.mxu0 0
    %1294 = vmatpush2.bf16.msra.mxu0 0
    %1295 = vmatprep.subr.bf16.mxu0 0
    %1296 = vmatpush2.bf16.msra.mxu0 0
    %1297 = vmatprep.subr.bf16.mxu0 0
    %1298 = vmatpush2.bf16.msra.mxu0 0
    %1299 = vmatprep.mubr.bf16.mxu0 0
    %1300 = vmatmul.mubr.bf16.gmra.mxu0 %v1266
    %v1301 = vpop.f32.mrf.mxu0
    %v1302 = vadd.f32 0.0, %v1301
    %v1303 = vpop.f32.mrf.mxu0
    %v1304 = vadd.f32 0.0, %v1303
    %v1305 = vpop.f32.mrf.mxu0
    %v1306 = vpop.f32.mrf.mxu0
    %1307 = vdwg.mxu0
    %1308 = vmatprep.subr.bf16.mxu0 %v806
    %1309 = vmatpush1.bf16.msra.mxu0 %v805
    %1310 = vmatprep.subr.bf16.mxu0 %v802
    %1311 = vmatpush1.bf16.msra.mxu0 %v801
    %1312 = vmatprep.subr.bf16.mxu0 %v798
    %1313 = vmatpush1.bf16.msra.mxu0 %v797
    %1314 = vmatprep.subr.bf16.mxu0 %v794
    %1315 = vmatpush1.bf16.msra.mxu0 %v793
    %1316 = vmatprep.subr.bf16.mxu0 %v790
    %1317 = vmatpush1.bf16.msra.mxu0 %v789
    %1318 = vmatprep.subr.bf16.mxu0 %v786
    %1319 = vmatpush1.bf16.msra.mxu0 %v785
    %1320 = vmatprep.subr.bf16.mxu0 %v782
    %1321 = vmatpush1.bf16.msra.mxu0 %v781
    %1322 = vmatprep.subr.bf16.mxu0 %v778
    %1323 = vmatpush1.bf16.msra.mxu0 %v777
    %1324 = vmatprep.subr.bf16.mxu0 0
    %1325 = vmatpush2.bf16.msra.mxu0 0
    %1326 = vmatprep.subr.bf16.mxu0 0
    %1327 = vmatpush2.bf16.msra.mxu0 0
    %1328 = vmatprep.subr.bf16.mxu0 0
    %1329 = vmatpush2.bf16.msra.mxu0 0
    %1330 = vmatprep.subr.bf16.mxu0 0
    %1331 = vmatpush2.bf16.msra.mxu0 0
    %1332 = vmatprep.subr.bf16.mxu0 0
    %1333 = vmatpush2.bf16.msra.mxu0 0
    %1334 = vmatprep.subr.bf16.mxu0 0
    %1335 = vmatpush2.bf16.msra.mxu0 0
    %1336 = vmatprep.subr.bf16.mxu0 0
    %1337 = vmatpush2.bf16.msra.mxu0 0
    %1338 = vmatprep.subr.bf16.mxu0 0
    %1339 = vmatpush2.bf16.msra.mxu0 0
    %1340 = vmatprep.mubr.bf16.mxu0 0
    %1341 = vmatmul.mubr.bf16.gmra.mxu0 %v1266
    %v1342 = vpop.f32.mrf.mxu0
    %v1343 = vadd.f32 0.0, %v1342
    %v1344 = vpop.f32.mrf.mxu0
    %v1345 = vadd.f32 0.0, %v1344
    %v1346 = vpop.f32.mrf.mxu0
    %v1347 = vpop.f32.mrf.mxu0
    %1348 = vdwg.mxu0
    %v1349 = vadd.f32 %v1262, %v1302
    %v1350 = vadd.f32 %v1263, %v1304
    %v1351 = vadd.f32 %v1264, %v1343
    %v1352 = vadd.f32 %v1265, %v1345
    %v1353 = vsub.f32 0.0, %v1349
    %v1354 = vsub.f32 0.0, %v1350
    %v1355 = vsub.f32 0.0, %v1351
    %v1356 = vmul.f32 %v1353, 1.442695
    %v1357 = vpow.pop %v1356
    %v1358 = vmul.f32 %v1354, 1.442695
    %v1359 = vpow.pop %v1358
    %v1360 = vmul.f32 %v1355, 1.442695
    %v1361 = vpow.pop %v1360
    %v1362 = vadd.f32 %v1357, 1.0
    %v1363 = vadd.f32 %v1359, 1.0
    %v1364 = vadd.f32 %v1361, 1.0
    %v1365 = vrcp.pop %v1362
    %v1366 = vrcp.pop %v1363
    %v1367 = vrcp.pop %v1364
    %v1368 = vtanh.pop %v1352
    %v1369 = vmul.f32 %v1366, %v1252
    %v1370 = vmul.f32 %v1365, %v1368
    %v1371 = vadd.f32 %v1369, %v1370
    %v1372 = vtanh.pop %v1371
    %v1373 = vmul.f32 %v1367, %v1372
    %vm1374 = vcmp.gt.s32.totalorder %v85, 3
    %v1375 = vsel %vm1374, 1, 0
    %1376 = vset.pattern.permute.xlu0 0
    %1377 = vperm.xlu0 %1376, %v1375
    %v1378 = vpop.permute.xlu0 %1377
    %vm1379 = vcmp.eq.s32.totalorder %v1378, 1
    %v1380 = vsel %vm1379, %v1373, %v1251
    %1381 = vst [vmem:[#allocation5] sm:$0xff] %v1380
    %v1382 = vsel %vm1379, %v1371, %v1252
    %1383 = vst [vmem:[#allocation6] sm:$0xff] %v1382
    %v1384 = vcvt.s32.f32 %v1375
    %1386 = vset.pattern.permute.xlu0 0
    %1387 = vperm.xlu0 %1386, %v1384
    %v1388 = vpop.permute.xlu0 %1387
    %v1390 = vmul.f32 %v1373, %v1388
    %v1391 = vpack.c.bf16 %v1390, %v1390
    %s1392 = scalar_lea.vmem [#allocation3], 12
    %1393 = vst [vmem:[%s1392] sm:$0xf] %v1391
    %v1394 = vld [vmem:[#allocation5] sm:$0xff]
    %v1395 = vld [vmem:[#allocation6] sm:$0xff]
    %s1396 = smul.u32 4, 4
    %s1397 = smul.addr %s1396, 4
    %s1398 = scalar_lea.vmem [#allocation2], %s1397
    %v1399 = vld [vmem:[%s1398] sm:$0xff]
    %v1400 = vld [vmem:[%s1398 + $0x8] sm:$0xff]
    %v1401 = vunpack.c.l.bf16 %v1399
    %v1402 = vunpack.c.h.bf16 %v1399
    %v1403 = vunpack.c.l.bf16 %v1400
    %v1404 = vunpack.c.h.bf16 %v1400
    %v1405 = vadd.f32 %v1401, %v657
    %v1406 = vadd.f32 %v1402, %v661
    %v1407 = vadd.f32 %v1403, %v665
    %v1408 = vadd.f32 %v1404, %v669
    %v1409 = vpack.c.bf16 %v1394, %v1394
    %1410 = vmatprep.subr.bf16.mxu0 %v804
    %1411 = vmatpush1.bf16.msra.mxu0 %v803
    %1412 = vmatprep.subr.bf16.mxu0 %v800
    %1413 = vmatpush1.bf16.msra.mxu0 %v799
    %1414 = vmatprep.subr.bf16.mxu0 %v796
    %1415 = vmatpush1.bf16.msra.mxu0 %v795
    %1416 = vmatprep.subr.bf16.mxu0 %v792
    %1417 = vmatpush1.bf16.msra.mxu0 %v791
    %1418 = vmatprep.subr.bf16.mxu0 %v788
    %1419 = vmatpush1.bf16.msra.mxu0 %v787
    %1420 = vmatprep.subr.bf16.mxu0 %v784
    %1421 = vmatpush1.bf16.msra.mxu0 %v783
    %1422 = vmatprep.subr.bf16.mxu0 %v780
    %1423 = vmatpush1.bf16.msra.mxu0 %v779
    %1424 = vmatprep.subr.bf16.mxu0 %v776
    %1425 = vmatpush1.bf16.msra.mxu0 %v775
    %1426 = vmatprep.subr.bf16.mxu0 0
    %1427 = vmatpush2.bf16.msra.mxu0 0
    %1428 = vmatprep.subr.bf16.mxu0 0
    %1429 = vmatpush2.bf16.msra.mxu0 0
    %1430 = vmatprep.subr.bf16.mxu0 0
    %1431 = vmatpush2.bf16.msra.mxu0 0
    %1432 = vmatprep.subr.bf16.mxu0 0
    %1433 = vmatpush2.bf16.msra.mxu0 0
    %1434 = vmatprep.subr.bf16.mxu0 0
    %1435 = vmatpush2.bf16.msra.mxu0 0
    %1436 = vmatprep.subr.bf16.mxu0 0
    %1437 = vmatpush2.bf16.msra.mxu0 0
    %1438 = vmatprep.subr.bf16.mxu0 0
    %1439 = vmatpush2.bf16.msra.mxu0 0
    %1440 = vmatprep.subr.bf16.mxu0 0
    %1441 = vmatpush2.bf16.msra.mxu0 0
    %1442 = vmatprep.mubr.bf16.mxu0 0
    %1443 = vmatmul.mubr.bf16.gmra.mxu0 %v1409
    %v1444 = vpop.f32.mrf.mxu0
    %v1445 = vadd.f32 0.0, %v1444
    %v1446 = vpop.f32.mrf.mxu0
    %v1447 = vadd.f32 0.0, %v1446
    %v1448 = vpop.f32.mrf.mxu0
    %v1449 = vpop.f32.mrf.mxu0
    %1450 = vdwg.mxu0
    %1451 = vmatprep.subr.bf16.mxu0 %v806
    %1452 = vmatpush1.bf16.msra.mxu0 %v805
    %1453 = vmatprep.subr.bf16.mxu0 %v802
    %1454 = vmatpush1.bf16.msra.mxu0 %v801
    %1455 = vmatprep.subr.bf16.mxu0 %v798
    %1456 = vmatpush1.bf16.msra.mxu0 %v797
    %1457 = vmatprep.subr.bf16.mxu0 %v794
    %1458 = vmatpush1.bf16.msra.mxu0 %v793
    %1459 = vmatprep.subr.bf16.mxu0 %v790
    %1460 = vmatpush1.bf16.msra.mxu0 %v789
    %1461 = vmatprep.subr.bf16.mxu0 %v786
    %1462 = vmatpush1.bf16.msra.mxu0 %v785
    %1463 = vmatprep.subr.bf16.mxu0 %v782
    %1464 = vmatpush1.bf16.msra.mxu0 %v781
    %1465 = vmatprep.subr.bf16.mxu0 %v778
    %1466 = vmatpush1.bf16.msra.mxu0 %v777
    %1467 = vmatprep.subr.bf16.mxu0 0
    %1468 = vmatpush2.bf16.msra.mxu0 0
    %1469 = vmatprep.subr.bf16.mxu0 0
    %1470 = vmatpush2.bf16.msra.mxu0 0
    %1471 = vmatprep.subr.bf16.mxu0 0
    %1472 = vmatpush2.bf16.msra.mxu0 0
    %1473 = vmatprep.subr.bf16.mxu0 0
    %1474 = vmatpush2.bf16.msra.mxu0 0
    %1475 = vmatprep.subr.bf16.mxu0 0
    %1476 = vmatpush2.bf16.msra.mxu0 0
    %1477 = vmatprep.subr.bf16.mxu0 0
    %1478 = vmatpush2.bf16.msra.mxu0 0
    %1479 = vmatprep.subr.bf16.mxu0 0
    %1480 = vmatpush2.bf16.msra.mxu0 0
    %1481 = vmatprep.subr.bf16.mxu0 0
    %1482 = vmatpush2.bf16.msra.mxu0 0
    %1483 = vmatprep.mubr.bf16.mxu0 0
    %1484 = vmatmul.mubr.bf16.gmra.mxu0 %v1409
    %v1485 = vpop.f32.mrf.mxu0
    %v1486 = vadd.f32 0.0, %v1485
    %v1487 = vpop.f32.mrf.mxu0
    %v1488 = vadd.f32 0.0, %v1487
    %v1489 = vpop.f32.mrf.mxu0
    %v1490 = vpop.f32.mrf.mxu0
    %1491 = vdwg.mxu0
    %v1492 = vadd.f32 %v1405, %v1445
    %v1493 = vadd.f32 %v1406, %v1447
    %v1494 = vadd.f32 %v1407, %v1486
    %v1495 = vadd.f32 %v1408, %v1488
    %v1496 = vsub.f32 0.0, %v1492
    %v1497 = vsub.f32 0.0, %v1493
    %v1498 = vsub.f32 0.0, %v1494
    %v1499 = vmul.f32 %v1496, 1.442695
    %v1500 = vpow.pop %v1499
    %v1501 = vmul.f32 %v1497, 1.442695
    %v1502 = vpow.pop %v1501
    %v1503 = vmul.f32 %v1498, 1.442695
    %v1504 = vpow.pop %v1503
    %v1505 = vadd.f32 %v1500, 1.0
    %v1506 = vadd.f32 %v1502, 1.0
    %v1507 = vadd.f32 %v1504, 1.0
    %v1508 = vrcp.pop %v1505
    %v1509 = vrcp.pop %v1506
    %v1510 = vrcp.pop %v1507
    %v1511 = vtanh.pop %v1495
    %v1512 = vmul.f32 %v1509, %v1395
    %v1513 = vmul.f32 %v1508, %v1511
    %v1514 = vadd.f32 %v1512, %v1513
    %v1515 = vtanh.pop %v1514
    %v1516 = vmul.f32 %v1510, %v1515
    %vm1517 = vcmp.gt.s32.totalorder %v85, 4
    %v1518 = vsel %vm1517, 1, 0
    %1519 = vset.pattern.permute.xlu0 0
    %1520 = vperm.xlu0 %1519, %v1518
    %v1521 = vpop.permute.xlu0 %1520
    %vm1522 = vcmp.eq.s32.totalorder %v1521, 1
    %v1523 = vsel %vm1522, %v1516, %v1394
    %1524 = vst [vmem:[#allocation5] sm:$0xff] %v1523
    %v1525 = vsel %vm1522, %v1514, %v1395
    %1526 = vst [vmem:[#allocation6] sm:$0xff] %v1525
    %v1527 = vcvt.s32.f32 %v1518
    %1529 = vset.pattern.permute.xlu0 0
    %1530 = vperm.xlu0 %1529, %v1527
    %v1531 = vpop.permute.xlu0 %1530
    %v1533 = vmul.f32 %v1516, %v1531
    %v1534 = vpack.c.bf16 %v1533, %v1533
    %s1535 = scalar_lea.vmem [#allocation3], 16
    %1536 = vst [vmem:[%s1535] sm:$0xf] %v1534
    %v1537 = vld [vmem:[#allocation5] sm:$0xff]
    %v1538 = vld [vmem:[#allocation6] sm:$0xff]
    %s1539 = smul.u32 5, 4
    %s1540 = smul.addr %s1539, 4
    %s1541 = scalar_lea.vmem [#allocation2], %s1540
    %v1542 = vld [vmem:[%s1541] sm:$0xff]
    %v1543 = vld [vmem:[%s1541 + $0x8] sm:$0xff]
    %v1544 = vunpack.c.l.bf16 %v1542
    %v1545 = vunpack.c.h.bf16 %v1542
    %v1546 = vunpack.c.l.bf16 %v1543
    %v1547 = vunpack.c.h.bf16 %v1543
    %v1548 = vadd.f32 %v1544, %v657
    %v1549 = vadd.f32 %v1545, %v661
    %v1550 = vadd.f32 %v1546, %v665
    %v1551 = vadd.f32 %v1547, %v669
    %v1552 = vpack.c.bf16 %v1537, %v1537
    %1553 = vmatprep.subr.bf16.mxu0 %v804
    %1554 = vmatpush1.bf16.msra.mxu0 %v803
    %1555 = vmatprep.subr.bf16.mxu0 %v800
    %1556 = vmatpush1.bf16.msra.mxu0 %v799
    %1557 = vmatprep.subr.bf16.mxu0 %v796
    %1558 = vmatpush1.bf16.msra.mxu0 %v795
    %1559 = vmatprep.subr.bf16.mxu0 %v792
    %1560 = vmatpush1.bf16.msra.mxu0 %v791
    %1561 = vmatprep.subr.bf16.mxu0 %v788
    %1562 = vmatpush1.bf16.msra.mxu0 %v787
    %1563 = vmatprep.subr.bf16.mxu0 %v784
    %1564 = vmatpush1.bf16.msra.mxu0 %v783
    %1565 = vmatprep.subr.bf16.mxu0 %v780
    %1566 = vmatpush1.bf16.msra.mxu0 %v779
    %1567 = vmatprep.subr.bf16.mxu0 %v776
    %1568 = vmatpush1.bf16.msra.mxu0 %v775
    %1569 = vmatprep.subr.bf16.mxu0 0
    %1570 = vmatpush2.bf16.msra.mxu0 0
    %1571 = vmatprep.subr.bf16.mxu0 0
    %1572 = vmatpush2.bf16.msra.mxu0 0
    %1573 = vmatprep.subr.bf16.mxu0 0
    %1574 = vmatpush2.bf16.msra.mxu0 0
    %1575 = vmatprep.subr.bf16.mxu0 0
    %1576 = vmatpush2.bf16.msra.mxu0 0
    %1577 = vmatprep.subr.bf16.mxu0 0
    %1578 = vmatpush2.bf16.msra.mxu0 0
    %1579 = vmatprep.subr.bf16.mxu0 0
    %1580 = vmatpush2.bf16.msra.mxu0 0
    %1581 = vmatprep.subr.bf16.mxu0 0
    %1582 = vmatpush2.bf16.msra.mxu0 0
    %1583 = vmatprep.subr.bf16.mxu0 0
    %1584 = vmatpush2.bf16.msra.mxu0 0
    %1585 = vmatprep.mubr.bf16.mxu0 0
    %1586 = vmatmul.mubr.bf16.gmra.mxu0 %v1552
    %v1587 = vpop.f32.mrf.mxu0
    %v1588 = vadd.f32 0.0, %v1587
    %v1589 = vpop.f32.mrf.mxu0
    %v1590 = vadd.f32 0.0, %v1589
    %v1591 = vpop.f32.mrf.mxu0
    %v1592 = vpop.f32.mrf.mxu0
    %1593 = vdwg.mxu0
    %1594 = vmatprep.subr.bf16.mxu0 %v806
    %1595 = vmatpush1.bf16.msra.mxu0 %v805
    %1596 = vmatprep.subr.bf16.mxu0 %v802
    %1597 = vmatpush1.bf16.msra.mxu0 %v801
    %1598 = vmatprep.subr.bf16.mxu0 %v798
    %1599 = vmatpush1.bf16.msra.mxu0 %v797
    %1600 = vmatprep.subr.bf16.mxu0 %v794
    %1601 = vmatpush1.bf16.msra.mxu0 %v793
    %1602 = vmatprep.subr.bf16.mxu0 %v790
    %1603 = vmatpush1.bf16.msra.mxu0 %v789
    %1604 = vmatprep.subr.bf16.mxu0 %v786
    %1605 = vmatpush1.bf16.msra.mxu0 %v785
    %1606 = vmatprep.subr.bf16.mxu0 %v782
    %1607 = vmatpush1.bf16.msra.mxu0 %v781
    %1608 = vmatprep.subr.bf16.mxu0 %v778
    %1609 = vmatpush1.bf16.msra.mxu0 %v777
    %1610 = vmatprep.subr.bf16.mxu0 0
    %1611 = vmatpush2.bf16.msra.mxu0 0
    %1612 = vmatprep.subr.bf16.mxu0 0
    %1613 = vmatpush2.bf16.msra.mxu0 0
    %1614 = vmatprep.subr.bf16.mxu0 0
    %1615 = vmatpush2.bf16.msra.mxu0 0
    %1616 = vmatprep.subr.bf16.mxu0 0
    %1617 = vmatpush2.bf16.msra.mxu0 0
    %1618 = vmatprep.subr.bf16.mxu0 0
    %1619 = vmatpush2.bf16.msra.mxu0 0
    %1620 = vmatprep.subr.bf16.mxu0 0
    %1621 = vmatpush2.bf16.msra.mxu0 0
    %1622 = vmatprep.subr.bf16.mxu0 0
    %1623 = vmatpush2.bf16.msra.mxu0 0
    %1624 = vmatprep.subr.bf16.mxu0 0
    %1625 = vmatpush2.bf16.msra.mxu0 0
    %1626 = vmatprep.mubr.bf16.mxu0 0
    %1627 = vmatmul.mubr.bf16.gmra.mxu0 %v1552
    %v1628 = vpop.f32.mrf.mxu0
    %v1629 = vadd.f32 0.0, %v1628
    %v1630 = vpop.f32.mrf.mxu0
    %v1631 = vadd.f32 0.0, %v1630
    %v1632 = vpop.f32.mrf.mxu0
    %v1633 = vpop.f32.mrf.mxu0
    %1634 = vdwg.mxu0
    %v1635 = vadd.f32 %v1548, %v1588
    %v1636 = vadd.f32 %v1549, %v1590
    %v1637 = vadd.f32 %v1550, %v1629
    %v1638 = vadd.f32 %v1551, %v1631
    %v1639 = vsub.f32 0.0, %v1635
    %v1640 = vsub.f32 0.0, %v1636
    %v1641 = vsub.f32 0.0, %v1637
    %v1642 = vmul.f32 %v1639, 1.442695
    %v1643 = vpow.pop %v1642
    %v1644 = vmul.f32 %v1640, 1.442695
    %v1645 = vpow.pop %v1644
    %v1646 = vmul.f32 %v1641, 1.442695
    %v1647 = vpow.pop %v1646
    %v1648 = vadd.f32 %v1643, 1.0
    %v1649 = vadd.f32 %v1645, 1.0
    %v1650 = vadd.f32 %v1647, 1.0
    %v1651 = vrcp.pop %v1648
    %v1652 = vrcp.pop %v1649
    %v1653 = vrcp.pop %v1650
    %v1654 = vtanh.pop %v1638
    %v1655 = vmul.f32 %v1652, %v1538
    %v1656 = vmul.f32 %v1651, %v1654
    %v1657 = vadd.f32 %v1655, %v1656
    %v1658 = vtanh.pop %v1657
    %v1659 = vmul.f32 %v1653, %v1658
    %vm1660 = vcmp.gt.s32.totalorder %v85, 5
    %v1661 = vsel %vm1660, 1, 0
    %1662 = vset.pattern.permute.xlu0 0
    %1663 = vperm.xlu0 %1662, %v1661
    %v1664 = vpop.permute.xlu0 %1663
    %vm1665 = vcmp.eq.s32.totalorder %v1664, 1
    %v1666 = vsel %vm1665, %v1659, %v1537
    %1667 = vst [vmem:[#allocation5] sm:$0xff] %v1666
    %v1668 = vsel %vm1665, %v1657, %v1538
    %1669 = vst [vmem:[#allocation6] sm:$0xff] %v1668
    %v1670 = vcvt.s32.f32 %v1661
    %1672 = vset.pattern.permute.xlu0 0
    %1673 = vperm.xlu0 %1672, %v1670
    %v1674 = vpop.permute.xlu0 %1673
    %v1676 = vmul.f32 %v1659, %v1674
    %v1677 = vpack.c.bf16 %v1676, %v1676
    %s1678 = scalar_lea.vmem [#allocation3], 20
    %1679 = vst [vmem:[%s1678] sm:$0xf] %v1677
    %v1680 = vld [vmem:[#allocation5] sm:$0xff]
    %v1681 = vld [vmem:[#allocation6] sm:$0xff]
    %s1682 = smul.u32 6, 4
    %s1683 = smul.addr %s1682, 4
    %s1684 = scalar_lea.vmem [#allocation2], %s1683
    %v1685 = vld [vmem:[%s1684] sm:$0xff]
    %v1686 = vld [vmem:[%s1684 + $0x8] sm:$0xff]
    %v1687 = vunpack.c.l.bf16 %v1685
    %v1688 = vunpack.c.h.bf16 %v1685
    %v1689 = vunpack.c.l.bf16 %v1686
    %v1690 = vunpack.c.h.bf16 %v1686
    %v1691 = vadd.f32 %v1687, %v657
    %v1692 = vadd.f32 %v1688, %v661
    %v1693 = vadd.f32 %v1689, %v665
    %v1694 = vadd.f32 %v1690, %v669
    %v1695 = vpack.c.bf16 %v1680, %v1680
    %1696 = vmatprep.subr.bf16.mxu0 %v804
    %1697 = vmatpush1.bf16.msra.mxu0 %v803
    %1698 = vmatprep.subr.bf16.mxu0 %v800
    %1699 = vmatpush1.bf16.msra.mxu0 %v799
    %1700 = vmatprep.subr.bf16.mxu0 %v796
    %1701 = vmatpush1.bf16.msra.mxu0 %v795
    %1702 = vmatprep.subr.bf16.mxu0 %v792
    %1703 = vmatpush1.bf16.msra.mxu0 %v791
    %1704 = vmatprep.subr.bf16.mxu0 %v788
    %1705 = vmatpush1.bf16.msra.mxu0 %v787
    %1706 = vmatprep.subr.bf16.mxu0 %v784
    %1707 = vmatpush1.bf16.msra.mxu0 %v783
    %1708 = vmatprep.subr.bf16.mxu0 %v780
    %1709 = vmatpush1.bf16.msra.mxu0 %v779
    %1710 = vmatprep.subr.bf16.mxu0 %v776
    %1711 = vmatpush1.bf16.msra.mxu0 %v775
    %1712 = vmatprep.subr.bf16.mxu0 0
    %1713 = vmatpush2.bf16.msra.mxu0 0
    %1714 = vmatprep.subr.bf16.mxu0 0
    %1715 = vmatpush2.bf16.msra.mxu0 0
    %1716 = vmatprep.subr.bf16.mxu0 0
    %1717 = vmatpush2.bf16.msra.mxu0 0
    %1718 = vmatprep.subr.bf16.mxu0 0
    %1719 = vmatpush2.bf16.msra.mxu0 0
    %1720 = vmatprep.subr.bf16.mxu0 0
    %1721 = vmatpush2.bf16.msra.mxu0 0
    %1722 = vmatprep.subr.bf16.mxu0 0
    %1723 = vmatpush2.bf16.msra.mxu0 0
    %1724 = vmatprep.subr.bf16.mxu0 0
    %1725 = vmatpush2.bf16.msra.mxu0 0
    %1726 = vmatprep.subr.bf16.mxu0 0
    %1727 = vmatpush2.bf16.msra.mxu0 0
    %1728 = vmatprep.mubr.bf16.mxu0 0
    %1729 = vmatmul.mubr.bf16.gmra.mxu0 %v1695
    %v1730 = vpop.f32.mrf.mxu0
    %v1731 = vadd.f32 0.0, %v1730
    %v1732 = vpop.f32.mrf.mxu0
    %v1733 = vadd.f32 0.0, %v1732
    %v1734 = vpop.f32.mrf.mxu0
    %v1735 = vpop.f32.mrf.mxu0
    %1736 = vdwg.mxu0
    %1737 = vmatprep.subr.bf16.mxu0 %v806
    %1738 = vmatpush1.bf16.msra.mxu0 %v805
    %1739 = vmatprep.subr.bf16.mxu0 %v802
    %1740 = vmatpush1.bf16.msra.mxu0 %v801
    %1741 = vmatprep.subr.bf16.mxu0 %v798
    %1742 = vmatpush1.bf16.msra.mxu0 %v797
    %1743 = vmatprep.subr.bf16.mxu0 %v794
    %1744 = vmatpush1.bf16.msra.mxu0 %v793
    %1745 = vmatprep.subr.bf16.mxu0 %v790
    %1746 = vmatpush1.bf16.msra.mxu0 %v789
    %1747 = vmatprep.subr.bf16.mxu0 %v786
    %1748 = vmatpush1.bf16.msra.mxu0 %v785
    %1749 = vmatprep.subr.bf16.mxu0 %v782
    %1750 = vmatpush1.bf16.msra.mxu0 %v781
    %1751 = vmatprep.subr.bf16.mxu0 %v778
    %1752 = vmatpush1.bf16.msra.mxu0 %v777
    %1753 = vmatprep.subr.bf16.mxu0 0
    %1754 = vmatpush2.bf16.msra.mxu0 0
    %1755 = vmatprep.subr.bf16.mxu0 0
    %1756 = vmatpush2.bf16.msra.mxu0 0
    %1757 = vmatprep.subr.bf16.mxu0 0
    %1758 = vmatpush2.bf16.msra.mxu0 0
    %1759 = vmatprep.subr.bf16.mxu0 0
    %1760 = vmatpush2.bf16.msra.mxu0 0
    %1761 = vmatprep.subr.bf16.mxu0 0
    %1762 = vmatpush2.bf16.msra.mxu0 0
    %1763 = vmatprep.subr.bf16.mxu0 0
    %1764 = vmatpush2.bf16.msra.mxu0 0
    %1765 = vmatprep.subr.bf16.mxu0 0
    %1766 = vmatpush2.bf16.msra.mxu0 0
    %1767 = vmatprep.subr.bf16.mxu0 0
    %1768 = vmatpush2.bf16.msra.mxu0 0
    %1769 = vmatprep.mubr.bf16.mxu0 0
    %1770 = vmatmul.mubr.bf16.gmra.mxu0 %v1695
    %v1771 = vpop.f32.mrf.mxu0
    %v1772 = vadd.f32 0.0, %v1771
    %v1773 = vpop.f32.mrf.mxu0
    %v1774 = vadd.f32 0.0, %v1773
    %v1775 = vpop.f32.mrf.mxu0
    %v1776 = vpop.f32.mrf.mxu0
    %1777 = vdwg.mxu0
    %v1778 = vadd.f32 %v1691, %v1731
    %v1779 = vadd.f32 %v1692, %v1733
    %v1780 = vadd.f32 %v1693, %v1772
    %v1781 = vadd.f32 %v1694, %v1774
    %v1782 = vsub.f32 0.0, %v1778
    %v1783 = vsub.f32 0.0, %v1779
    %v1784 = vsub.f32 0.0, %v1780
    %v1785 = vmul.f32 %v1782, 1.442695
    %v1786 = vpow.pop %v1785
    %v1787 = vmul.f32 %v1783, 1.442695
    %v1788 = vpow.pop %v1787
    %v1789 = vmul.f32 %v1784, 1.442695
    %v1790 = vpow.pop %v1789
    %v1791 = vadd.f32 %v1786, 1.0
    %v1792 = vadd.f32 %v1788, 1.0
    %v1793 = vadd.f32 %v1790, 1.0
    %v1794 = vrcp.pop %v1791
    %v1795 = vrcp.pop %v1792
    %v1796 = vrcp.pop %v1793
    %v1797 = vtanh.pop %v1781
    %v1798 = vmul.f32 %v1795, %v1681
    %v1799 = vmul.f32 %v1794, %v1797
    %v1800 = vadd.f32 %v1798, %v1799
    %v1801 = vtanh.pop %v1800
    %v1802 = vmul.f32 %v1796, %v1801
    %vm1803 = vcmp.gt.s32.totalorder %v85, 6
    %v1804 = vsel %vm1803, 1, 0
    %1805 = vset.pattern.permute.xlu0 0
    %1806 = vperm.xlu0 %1805, %v1804
    %v1807 = vpop.permute.xlu0 %1806
    %vm1808 = vcmp.eq.s32.totalorder %v1807, 1
    %v1809 = vsel %vm1808, %v1802, %v1680
    %1810 = vst [vmem:[#allocation5] sm:$0xff] %v1809
    %v1811 = vsel %vm1808, %v1800, %v1681
    %1812 = vst [vmem:[#allocation6] sm:$0xff] %v1811
    %v1813 = vcvt.s32.f32 %v1804
    %1815 = vset.pattern.permute.xlu0 0
    %1816 = vperm.xlu0 %1815, %v1813
    %v1817 = vpop.permute.xlu0 %1816
    %v1819 = vmul.f32 %v1802, %v1817
    %v1820 = vpack.c.bf16 %v1819, %v1819
    %s1821 = scalar_lea.vmem [#allocation3], 24
    %1822 = vst [vmem:[%s1821] sm:$0xf] %v1820
    %v1823 = vld [vmem:[#allocation5] sm:$0xff]
    %v1824 = vld [vmem:[#allocation6] sm:$0xff]
    %s1825 = smul.u32 7, 4
    %s1826 = smul.addr %s1825, 4
    %s1827 = scalar_lea.vmem [#allocation2], %s1826
    %v1828 = vld [vmem:[%s1827] sm:$0xff]
    %v1829 = vld [vmem:[%s1827 + $0x8] sm:$0xff]
    %v1830 = vunpack.c.l.bf16 %v1828
    %v1831 = vunpack.c.h.bf16 %v1828
    %v1832 = vunpack.c.l.bf16 %v1829
    %v1833 = vunpack.c.h.bf16 %v1829
    %v1834 = vadd.f32 %v1830, %v657
    %v1835 = vadd.f32 %v1831, %v661
    %v1836 = vadd.f32 %v1832, %v665
    %v1837 = vadd.f32 %v1833, %v669
    %v1838 = vpack.c.bf16 %v1823, %v1823
    %1839 = vmatprep.subr.bf16.mxu0 %v804
    %1840 = vmatpush1.bf16.msra.mxu0 %v803
    %1841 = vmatprep.subr.bf16.mxu0 %v800
    %1842 = vmatpush1.bf16.msra.mxu0 %v799
    %1843 = vmatprep.subr.bf16.mxu0 %v796
    %1844 = vmatpush1.bf16.msra.mxu0 %v795
    %1845 = vmatprep.subr.bf16.mxu0 %v792
    %1846 = vmatpush1.bf16.msra.mxu0 %v791
    %1847 = vmatprep.subr.bf16.mxu0 %v788
    %1848 = vmatpush1.bf16.msra.mxu0 %v787
    %1849 = vmatprep.subr.bf16.mxu0 %v784
    %1850 = vmatpush1.bf16.msra.mxu0 %v783
    %1851 = vmatprep.subr.bf16.mxu0 %v780
    %1852 = vmatpush1.bf16.msra.mxu0 %v779
    %1853 = vmatprep.subr.bf16.mxu0 %v776
    %1854 = vmatpush1.bf16.msra.mxu0 %v775
    %1855 = vmatprep.subr.bf16.mxu0 0
    %1856 = vmatpush2.bf16.msra.mxu0 0
    %1857 = vmatprep.subr.bf16.mxu0 0
    %1858 = vmatpush2.bf16.msra.mxu0 0
    %1859 = vmatprep.subr.bf16.mxu0 0
    %1860 = vmatpush2.bf16.msra.mxu0 0
    %1861 = vmatprep.subr.bf16.mxu0 0
    %1862 = vmatpush2.bf16.msra.mxu0 0
    %1863 = vmatprep.subr.bf16.mxu0 0
    %1864 = vmatpush2.bf16.msra.mxu0 0
    %1865 = vmatprep.subr.bf16.mxu0 0
    %1866 = vmatpush2.bf16.msra.mxu0 0
    %1867 = vmatprep.subr.bf16.mxu0 0
    %1868 = vmatpush2.bf16.msra.mxu0 0
    %1869 = vmatprep.subr.bf16.mxu0 0
    %1870 = vmatpush2.bf16.msra.mxu0 0
    %1871 = vmatprep.mubr.bf16.mxu0 0
    %1872 = vmatmul.mubr.bf16.gmra.mxu0 %v1838
    %v1873 = vpop.f32.mrf.mxu0
    %v1874 = vadd.f32 0.0, %v1873
    %v1875 = vpop.f32.mrf.mxu0
    %v1876 = vadd.f32 0.0, %v1875
    %v1877 = vpop.f32.mrf.mxu0
    %v1878 = vpop.f32.mrf.mxu0
    %1879 = vdwg.mxu0
    %1880 = vmatprep.subr.bf16.mxu0 %v806
    %1881 = vmatpush1.bf16.msra.mxu0 %v805
    %1882 = vmatprep.subr.bf16.mxu0 %v802
    %1883 = vmatpush1.bf16.msra.mxu0 %v801
    %1884 = vmatprep.subr.bf16.mxu0 %v798
    %1885 = vmatpush1.bf16.msra.mxu0 %v797
    %1886 = vmatprep.subr.bf16.mxu0 %v794
    %1887 = vmatpush1.bf16.msra.mxu0 %v793
    %1888 = vmatprep.subr.bf16.mxu0 %v790
    %1889 = vmatpush1.bf16.msra.mxu0 %v789
    %1890 = vmatprep.subr.bf16.mxu0 %v786
    %1891 = vmatpush1.bf16.msra.mxu0 %v785
    %1892 = vmatprep.subr.bf16.mxu0 %v782
    %1893 = vmatpush1.bf16.msra.mxu0 %v781
    %1894 = vmatprep.subr.bf16.mxu0 %v778
    %1895 = vmatpush1.bf16.msra.mxu0 %v777
    %1896 = vmatprep.subr.bf16.mxu0 0
    %1897 = vmatpush2.bf16.msra.mxu0 0
    %1898 = vmatprep.subr.bf16.mxu0 0
    %1899 = vmatpush2.bf16.msra.mxu0 0
    %1900 = vmatprep.subr.bf16.mxu0 0
    %1901 = vmatpush2.bf16.msra.mxu0 0
    %1902 = vmatprep.subr.bf16.mxu0 0
    %1903 = vmatpush2.bf16.msra.mxu0 0
    %1904 = vmatprep.subr.bf16.mxu0 0
    %1905 = vmatpush2.bf16.msra.mxu0 0
    %1906 = vmatprep.subr.bf16.mxu0 0
    %1907 = vmatpush2.bf16.msra.mxu0 0
    %1908 = vmatprep.subr.bf16.mxu0 0
    %1909 = vmatpush2.bf16.msra.mxu0 0
    %1910 = vmatprep.subr.bf16.mxu0 0
    %1911 = vmatpush2.bf16.msra.mxu0 0
    %1912 = vmatprep.mubr.bf16.mxu0 0
    %1913 = vmatmul.mubr.bf16.gmra.mxu0 %v1838
    %v1914 = vpop.f32.mrf.mxu0
    %v1915 = vadd.f32 0.0, %v1914
    %v1916 = vpop.f32.mrf.mxu0
    %v1917 = vadd.f32 0.0, %v1916
    %v1918 = vpop.f32.mrf.mxu0
    %v1919 = vpop.f32.mrf.mxu0
    %1920 = vdwg.mxu0
    %v1921 = vadd.f32 %v1834, %v1874
    %v1922 = vadd.f32 %v1835, %v1876
    %v1923 = vadd.f32 %v1836, %v1915
    %v1924 = vadd.f32 %v1837, %v1917
    %v1925 = vsub.f32 0.0, %v1921
    %v1926 = vsub.f32 0.0, %v1922
    %v1927 = vsub.f32 0.0, %v1923
    %v1928 = vmul.f32 %v1925, 1.442695
    %v1929 = vpow.pop %v1928
    %v1930 = vmul.f32 %v1926, 1.442695
    %v1931 = vpow.pop %v1930
    %v1932 = vmul.f32 %v1927, 1.442695
    %v1933 = vpow.pop %v1932
    %v1934 = vadd.f32 %v1929, 1.0
    %v1935 = vadd.f32 %v1931, 1.0
    %v1936 = vadd.f32 %v1933, 1.0
    %v1937 = vrcp.pop %v1934
    %v1938 = vrcp.pop %v1935
    %v1939 = vrcp.pop %v1936
    %v1940 = vtanh.pop %v1924
    %v1941 = vmul.f32 %v1938, %v1824
    %v1942 = vmul.f32 %v1937, %v1940
    %v1943 = vadd.f32 %v1941, %v1942
    %v1944 = vtanh.pop %v1943
    %v1945 = vmul.f32 %v1939, %v1944
    %vm1946 = vcmp.gt.s32.totalorder %v85, 7
    %v1947 = vsel %vm1946, 1, 0
    %1948 = vset.pattern.permute.xlu0 0
    %1949 = vperm.xlu0 %1948, %v1947
    %v1950 = vpop.permute.xlu0 %1949
    %vm1951 = vcmp.eq.s32.totalorder %v1950, 1
    %v1952 = vsel %vm1951, %v1945, %v1823
    %1953 = vst [vmem:[#allocation5] sm:$0xff] %v1952
    %v1954 = vsel %vm1951, %v1943, %v1824
    %1955 = vst [vmem:[#allocation6] sm:$0xff] %v1954
    %v1956 = vcvt.s32.f32 %v1947
    %1958 = vset.pattern.permute.xlu0 0
    %1959 = vperm.xlu0 %1958, %v1956
    %v1960 = vpop.permute.xlu0 %1959
    %v1962 = vmul.f32 %v1945, %v1960
    %v1963 = vpack.c.bf16 %v1962, %v1962
    %s1964 = scalar_lea.vmem [#allocation3], 28
    %1965 = vst [vmem:[%s1964] sm:$0xf] %v1963
    %v1966 = vld [vmem:[#allocation5] sm:$0xff]
    %v1967 = vld [vmem:[#allocation6] sm:$0xff]
    %s1968 = smul.u32 8, 4
    %s1969 = smul.addr %s1968, 4
    %s1970 = scalar_lea.vmem [#allocation2], %s1969
    %v1971 = vld [vmem:[%s1970] sm:$0xff]
    %v1972 = vld [vmem:[%s1970 + $0x8] sm:$0xff]
    %v1973 = vunpack.c.l.bf16 %v1971
    %v1974 = vunpack.c.h.bf16 %v1971
    %v1975 = vunpack.c.l.bf16 %v1972
    %v1976 = vunpack.c.h.bf16 %v1972
    %v1977 = vadd.f32 %v1973, %v657
    %v1978 = vadd.f32 %v1974, %v661
    %v1979 = vadd.f32 %v1975, %v665
    %v1980 = vadd.f32 %v1976, %v669
    %v1981 = vpack.c.bf16 %v1966, %v1966
    %1982 = vmatprep.subr.bf16.mxu0 %v804
    %1983 = vmatpush1.bf16.msra.mxu0 %v803
    %1984 = vmatprep.subr.bf16.mxu0 %v800
    %1985 = vmatpush1.bf16.msra.mxu0 %v799
    %1986 = vmatprep.subr.bf16.mxu0 %v796
    %1987 = vmatpush1.bf16.msra.mxu0 %v795
    %1988 = vmatprep.subr.bf16.mxu0 %v792
    %1989 = vmatpush1.bf16.msra.mxu0 %v791
    %1990 = vmatprep.subr.bf16.mxu0 %v788
    %1991 = vmatpush1.bf16.msra.mxu0 %v787
    %1992 = vmatprep.subr.bf16.mxu0 %v784
    %1993 = vmatpush1.bf16.msra.mxu0 %v783
    %1994 = vmatprep.subr.bf16.mxu0 %v780
    %1995 = vmatpush1.bf16.msra.mxu0 %v779
    %1996 = vmatprep.subr.bf16.mxu0 %v776
    %1997 = vmatpush1.bf16.msra.mxu0 %v775
    %1998 = vmatprep.subr.bf16.mxu0 0
    %1999 = vmatpush2.bf16.msra.mxu0 0
    %2000 = vmatprep.subr.bf16.mxu0 0
    %2001 = vmatpush2.bf16.msra.mxu0 0
    %2002 = vmatprep.subr.bf16.mxu0 0
    %2003 = vmatpush2.bf16.msra.mxu0 0
    %2004 = vmatprep.subr.bf16.mxu0 0
    %2005 = vmatpush2.bf16.msra.mxu0 0
    %2006 = vmatprep.subr.bf16.mxu0 0
    %2007 = vmatpush2.bf16.msra.mxu0 0
    %2008 = vmatprep.subr.bf16.mxu0 0
    %2009 = vmatpush2.bf16.msra.mxu0 0
    %2010 = vmatprep.subr.bf16.mxu0 0
    %2011 = vmatpush2.bf16.msra.mxu0 0
    %2012 = vmatprep.subr.bf16.mxu0 0
    %2013 = vmatpush2.bf16.msra.mxu0 0
    %2014 = vmatprep.mubr.bf16.mxu0 0
    %2015 = vmatmul.mubr.bf16.gmra.mxu0 %v1981
    %v2016 = vpop.f32.mrf.mxu0
    %v2017 = vadd.f32 0.0, %v2016
    %v2018 = vpop.f32.mrf.mxu0
    %v2019 = vadd.f32 0.0, %v2018
    %v2020 = vpop.f32.mrf.mxu0
    %v2021 = vpop.f32.mrf.mxu0
    %2022 = vdwg.mxu0
    %2023 = vmatprep.subr.bf16.mxu0 %v806
    %2024 = vmatpush1.bf16.msra.mxu0 %v805
    %2025 = vmatprep.subr.bf16.mxu0 %v802
    %2026 = vmatpush1.bf16.msra.mxu0 %v801
    %2027 = vmatprep.subr.bf16.mxu0 %v798
    %2028 = vmatpush1.bf16.msra.mxu0 %v797
    %2029 = vmatprep.subr.bf16.mxu0 %v794
    %2030 = vmatpush1.bf16.msra.mxu0 %v793
    %2031 = vmatprep.subr.bf16.mxu0 %v790
    %2032 = vmatpush1.bf16.msra.mxu0 %v789
    %2033 = vmatprep.subr.bf16.mxu0 %v786
    %2034 = vmatpush1.bf16.msra.mxu0 %v785
    %2035 = vmatprep.subr.bf16.mxu0 %v782
    %2036 = vmatpush1.bf16.msra.mxu0 %v781
    %2037 = vmatprep.subr.bf16.mxu0 %v778
    %2038 = vmatpush1.bf16.msra.mxu0 %v777
    %2039 = vmatprep.subr.bf16.mxu0 0
    %2040 = vmatpush2.bf16.msra.mxu0 0
    %2041 = vmatprep.subr.bf16.mxu0 0
    %2042 = vmatpush2.bf16.msra.mxu0 0
    %2043 = vmatprep.subr.bf16.mxu0 0
    %2044 = vmatpush2.bf16.msra.mxu0 0
    %2045 = vmatprep.subr.bf16.mxu0 0
    %2046 = vmatpush2.bf16.msra.mxu0 0
    %2047 = vmatprep.subr.bf16.mxu0 0
    %2048 = vmatpush2.bf16.msra.mxu0 0
    %2049 = vmatprep.subr.bf16.mxu0 0
    %2050 = vmatpush2.bf16.msra.mxu0 0
    %2051 = vmatprep.subr.bf16.mxu0 0
    %2052 = vmatpush2.bf16.msra.mxu0 0
    %2053 = vmatprep.subr.bf16.mxu0 0
    %2054 = vmatpush2.bf16.msra.mxu0 0
    %2055 = vmatprep.mubr.bf16.mxu0 0
    %2056 = vmatmul.mubr.bf16.gmra.mxu0 %v1981
    %v2057 = vpop.f32.mrf.mxu0
    %v2058 = vadd.f32 0.0, %v2057
    %v2059 = vpop.f32.mrf.mxu0
    %v2060 = vadd.f32 0.0, %v2059
    %v2061 = vpop.f32.mrf.mxu0
    %v2062 = vpop.f32.mrf.mxu0
    %2063 = vdwg.mxu0
    %v2064 = vadd.f32 %v1977, %v2017
    %v2065 = vadd.f32 %v1978, %v2019
    %v2066 = vadd.f32 %v1979, %v2058
    %v2067 = vadd.f32 %v1980, %v2060
    %v2068 = vsub.f32 0.0, %v2064
    %v2069 = vsub.f32 0.0, %v2065
    %v2070 = vsub.f32 0.0, %v2066
    %v2071 = vmul.f32 %v2068, 1.442695
    %v2072 = vpow.pop %v2071
    %v2073 = vmul.f32 %v2069, 1.442695
    %v2074 = vpow.pop %v2073
    %v2075 = vmul.f32 %v2070, 1.442695
    %v2076 = vpow.pop %v2075
    %v2077 = vadd.f32 %v2072, 1.0
    %v2078 = vadd.f32 %v2074, 1.0
    %v2079 = vadd.f32 %v2076, 1.0
    %v2080 = vrcp.pop %v2077
    %v2081 = vrcp.pop %v2078
    %v2082 = vrcp.pop %v2079
    %v2083 = vtanh.pop %v2067
    %v2084 = vmul.f32 %v2081, %v1967
    %v2085 = vmul.f32 %v2080, %v2083
    %v2086 = vadd.f32 %v2084, %v2085
    %v2087 = vtanh.pop %v2086
    %v2088 = vmul.f32 %v2082, %v2087
    %vm2089 = vcmp.gt.s32.totalorder %v85, 8
    %v2090 = vsel %vm2089, 1, 0
    %2091 = vset.pattern.permute.xlu0 0
    %2092 = vperm.xlu0 %2091, %v2090
    %v2093 = vpop.permute.xlu0 %2092
    %vm2094 = vcmp.eq.s32.totalorder %v2093, 1
    %v2095 = vsel %vm2094, %v2088, %v1966
    %2096 = vst [vmem:[#allocation5] sm:$0xff] %v2095
    %v2097 = vsel %vm2094, %v2086, %v1967
    %2098 = vst [vmem:[#allocation6] sm:$0xff] %v2097
    %v2099 = vcvt.s32.f32 %v2090
    %2101 = vset.pattern.permute.xlu0 0
    %2102 = vperm.xlu0 %2101, %v2099
    %v2103 = vpop.permute.xlu0 %2102
    %v2105 = vmul.f32 %v2088, %v2103
    %v2106 = vpack.c.bf16 %v2105, %v2105
    %s2107 = scalar_lea.vmem [#allocation3], 32
    %2108 = vst [vmem:[%s2107] sm:$0xf] %v2106
    %v2109 = vld [vmem:[#allocation3] sm:$0xf]
    %v2110 = vld [vmem:[#allocation3 + $0x4] sm:$0xf]
    %v2111 = vld [vmem:[#allocation3 + $0x8] sm:$0xf]
    %v2112 = vld [vmem:[#allocation3 + $0xc] sm:$0xf]
    %v2113 = vld [vmem:[#allocation3 + $0x10] sm:$0xf]
    %v2114 = vld [vmem:[#allocation3 + $0x14] sm:$0xf]
    %v2115 = vld [vmem:[#allocation3 + $0x18] sm:$0xf]
    %v2116 = vld [vmem:[#allocation3 + $0x1c] sm:$0xf]
    %v2117 = vld [vmem:[#allocation3 + $0x20] sm:$0xf]
    %v2118 = vld [vmem:[#allocation9] sm:$0xff]
    %v2119 = vld [vmem:[#allocation9 + $0x8] sm:$0xff]
    %v2120 = vld [vmem:[#allocation9 + $0x10] sm:$0xff]
    %v2121 = vld [vmem:[#allocation9 + $0x18] sm:$0xff]
    %v2122 = vld [vmem:[#allocation9 + $0x20] sm:$0xff]
    %v2123 = vld [vmem:[#allocation9 + $0x28] sm:$0xff]
    %v2124 = vld [vmem:[#allocation9 + $0x30] sm:$0xff]
    %v2125 = vld [vmem:[#allocation9 + $0x38] sm:$0xff]
    %v2126 = vld [vmem:[#allocation9 + $0x40] sm:$0xff]
    %v2127 = vld [vmem:[#allocation9 + $0x48] sm:$0xff]
    %v2128 = vld [vmem:[#allocation9 + $0x50] sm:$0xff]
    %v2129 = vld [vmem:[#allocation9 + $0x58] sm:$0xff]
    %v2130 = vld [vmem:[#allocation9 + $0x60] sm:$0xff]
    %v2131 = vld [vmem:[#allocation9 + $0x68] sm:$0xff]
    %v2132 = vld [vmem:[#allocation9 + $0x70] sm:$0xff]
    %v2133 = vld [vmem:[#allocation9 + $0x78] sm:$0xff]
    %v2134 = vld [vmem:[#allocation9 + $0x80] sm:$0xff]
    %v2135 = vld [vmem:[#allocation9 + $0x88] sm:$0xff]
    %v2136 = vld [vmem:[#allocation9 + $0x90] sm:$0xff]
    %v2137 = vld [vmem:[#allocation9 + $0x98] sm:$0xff]
    %v2138 = vld [vmem:[#allocation9 + $0xa0] sm:$0xff]
    %v2139 = vld [vmem:[#allocation9 + $0xa8] sm:$0xff]
    %v2140 = vld [vmem:[#allocation9 + $0xb0] sm:$0xff]
    %v2141 = vld [vmem:[#allocation9 + $0xb8] sm:$0xff]
    %v2142 = vld [vmem:[#allocation9 + $0xc0] sm:$0xff]
    %v2143 = vld [vmem:[#allocation9 + $0xc8] sm:$0xff]
    %v2144 = vld [vmem:[#allocation9 + $0xd0] sm:$0xff]
    %v2145 = vld [vmem:[#allocation9 + $0xd8] sm:$0xff]
    %v2146 = vld [vmem:[#allocation9 + $0xe0] sm:$0xff]
    %v2147 = vld [vmem:[#allocation9 + $0xe8] sm:$0xff]
    %v2148 = vld [vmem:[#allocation9 + $0xf0] sm:$0xff]
    %v2149 = vld [vmem:[#allocation9 + $0xf8] sm:$0xff]
    %v2159 = vunpack.c.l.b16 %v2109
    %v2160 = vunpack.c.l.b16 %v2110
    %v2161 = vunpack.c.l.b16 %v2111
    %v2162 = vunpack.c.l.b16 %v2112
    %v2163 = vunpack.c.l.b16 %v2113
    %v2164 = vunpack.c.l.b16 %v2114
    %v2165 = vunpack.c.l.b16 %v2115
    %v2166 = vunpack.c.l.b16 %v2116
    %v2167 = vunpack.c.l.b16 %v2117
    %v2168 = vpack.c.b16 %v2160, %v2159
    %v2169 = vpack.c.b16 %v2162, %v2161
    %v2170 = vpack.c.b16 %v2164, %v2163
    %v2171 = vpack.c.b16 %v2166, %v2165
    %v2172 = vpack.c.b16 %v2167, %v2167
    %v2210 = vunpack.c.l.b16 %v2118
    %v2211 = vunpack.c.h.b16 %v2118
    %v2212 = vunpack.c.l.b16 %v2119
    %v2213 = vunpack.c.h.b16 %v2119
    %v2214 = vunpack.c.l.b16 %v2120
    %v2215 = vunpack.c.h.b16 %v2120
    %v2216 = vunpack.c.l.b16 %v2121
    %v2217 = vunpack.c.h.b16 %v2121
    %v2218 = vunpack.c.l.b16 %v2122
    %v2219 = vunpack.c.h.b16 %v2122
    %v2220 = vunpack.c.l.b16 %v2123
    %v2221 = vunpack.c.h.b16 %v2123
    %v2222 = vunpack.c.l.b16 %v2124
    %v2223 = vunpack.c.h.b16 %v2124
    %v2224 = vunpack.c.l.b16 %v2125
    %v2225 = vunpack.c.h.b16 %v2125
    %v2226 = vunpack.c.l.b16 %v2126
    %v2227 = vunpack.c.h.b16 %v2126
    %v2228 = vunpack.c.l.b16 %v2127
    %v2229 = vunpack.c.h.b16 %v2127
    %v2230 = vunpack.c.l.b16 %v2128
    %v2231 = vunpack.c.h.b16 %v2128
    %v2232 = vunpack.c.l.b16 %v2129
    %v2233 = vunpack.c.h.b16 %v2129
    %v2234 = vunpack.c.l.b16 %v2130
    %v2235 = vunpack.c.h.b16 %v2130
    %v2236 = vunpack.c.l.b16 %v2131
    %v2237 = vunpack.c.h.b16 %v2131
    %v2238 = vunpack.c.l.b16 %v2132
    %v2239 = vunpack.c.h.b16 %v2132
    %v2240 = vunpack.c.l.b16 %v2133
    %v2241 = vunpack.c.h.b16 %v2133
    %v2242 = vunpack.c.l.b16 %v2134
    %v2243 = vunpack.c.h.b16 %v2134
    %v2244 = vunpack.c.l.b16 %v2135
    %v2245 = vunpack.c.h.b16 %v2135
    %v2246 = vunpack.c.l.b16 %v2136
    %v2247 = vunpack.c.h.b16 %v2136
    %v2248 = vunpack.c.l.b16 %v2137
    %v2249 = vunpack.c.h.b16 %v2137
    %v2250 = vunpack.c.l.b16 %v2138
    %v2251 = vunpack.c.h.b16 %v2138
    %v2252 = vunpack.c.l.b16 %v2139
    %v2253 = vunpack.c.h.b16 %v2139
    %v2254 = vunpack.c.l.b16 %v2140
    %v2255 = vunpack.c.h.b16 %v2140
    %v2256 = vunpack.c.l.b16 %v2141
    %v2257 = vunpack.c.h.b16 %v2141
    %v2258 = vunpack.c.l.b16 %v2142
    %v2259 = vunpack.c.h.b16 %v2142
    %v2260 = vunpack.c.l.b16 %v2143
    %v2261 = vunpack.c.h.b16 %v2143
    %v2262 = vunpack.c.l.b16 %v2144
    %v2263 = vunpack.c.h.b16 %v2144
    %v2264 = vunpack.c.l.b16 %v2145
    %v2265 = vunpack.c.h.b16 %v2145
    %v2266 = vunpack.c.l.b16 %v2146
    %v2267 = vunpack.c.h.b16 %v2146
    %v2268 = vunpack.c.l.b16 %v2147
    %v2269 = vunpack.c.h.b16 %v2147
    %v2270 = vunpack.c.l.b16 %v2148
    %v2271 = vunpack.c.h.b16 %v2148
    %v2272 = vunpack.c.l.b16 %v2149
    %v2273 = vunpack.c.h.b16 %v2149
    %v2274 = vpack.c.b16 %v2214, %v2210
    %v2275 = vpack.c.b16 %v2215, %v2211
    %v2276 = vpack.c.b16 %v2216, %v2212
    %v2277 = vpack.c.b16 %v2217, %v2213
    %v2278 = vpack.c.b16 %v2222, %v2218
    %v2279 = vpack.c.b16 %v2223, %v2219
    %v2280 = vpack.c.b16 %v2224, %v2220
    %v2281 = vpack.c.b16 %v2225, %v2221
    %v2282 = vpack.c.b16 %v2230, %v2226
    %v2283 = vpack.c.b16 %v2231, %v2227
    %v2284 = vpack.c.b16 %v2232, %v2228
    %v2285 = vpack.c.b16 %v2233, %v2229
    %v2286 = vpack.c.b16 %v2238, %v2234
    %v2287 = vpack.c.b16 %v2239, %v2235
    %v2288 = vpack.c.b16 %v2240, %v2236
    %v2289 = vpack.c.b16 %v2241, %v2237
    %v2290 = vpack.c.b16 %v2246, %v2242
    %v2291 = vpack.c.b16 %v2247, %v2243
    %v2292 = vpack.c.b16 %v2248, %v2244
    %v2293 = vpack.c.b16 %v2249, %v2245
    %v2294 = vpack.c.b16 %v2254, %v2250
    %v2295 = vpack.c.b16 %v2255, %v2251
    %v2296 = vpack.c.b16 %v2256, %v2252
    %v2297 = vpack.c.b16 %v2257, %v2253
    %v2298 = vpack.c.b16 %v2262, %v2258
    %v2299 = vpack.c.b16 %v2263, %v2259
    %v2300 = vpack.c.b16 %v2264, %v2260
    %v2301 = vpack.c.b16 %v2265, %v2261
    %v2302 = vpack.c.b16 %v2270, %v2266
    %v2303 = vpack.c.b16 %v2271, %v2267
    %v2304 = vpack.c.b16 %v2272, %v2268
    %v2305 = vpack.c.b16 %v2273, %v2269
    %2338 = vmatprep.subr.bf16.mxu0 %v2303
    %2339 = vmatpush1.bf16.msra.mxu0 %v2302
    %2340 = vmatprep.subr.bf16.mxu0 %v2299
    %2341 = vmatpush1.bf16.msra.mxu0 %v2298
    %2342 = vmatprep.subr.bf16.mxu0 %v2295
    %2343 = vmatpush1.bf16.msra.mxu0 %v2294
    %2344 = vmatprep.subr.bf16.mxu0 %v2291
    %2345 = vmatpush1.bf16.msra.mxu0 %v2290
    %2346 = vmatprep.subr.bf16.mxu0 %v2287
    %2347 = vmatpush1.bf16.msra.mxu0 %v2286
    %2348 = vmatprep.subr.bf16.mxu0 %v2283
    %2349 = vmatpush1.bf16.msra.mxu0 %v2282
    %2350 = vmatprep.subr.bf16.mxu0 %v2279
    %2351 = vmatpush1.bf16.msra.mxu0 %v2278
    %2352 = vmatprep.subr.bf16.mxu0 %v2275
    %2353 = vmatpush1.bf16.msra.mxu0 %v2274
    %2354 = vmatprep.subr.bf16.mxu0 0
    %2355 = vmatpush2.bf16.msra.mxu0 0
    %2356 = vmatprep.subr.bf16.mxu0 0
    %2357 = vmatpush2.bf16.msra.mxu0 0
    %2358 = vmatprep.subr.bf16.mxu0 0
    %2359 = vmatpush2.bf16.msra.mxu0 0
    %2360 = vmatprep.subr.bf16.mxu0 0
    %2361 = vmatpush2.bf16.msra.mxu0 0
    %2362 = vmatprep.subr.bf16.mxu0 0
    %2363 = vmatpush2.bf16.msra.mxu0 0
    %2364 = vmatprep.subr.bf16.mxu0 0
    %2365 = vmatpush2.bf16.msra.mxu0 0
    %2366 = vmatprep.subr.bf16.mxu0 0
    %2367 = vmatpush2.bf16.msra.mxu0 0
    %2368 = vmatprep.subr.bf16.mxu0 0
    %2369 = vmatpush2.bf16.msra.mxu0 0
    %2370 = vmatprep.mubr.bf16.mxu0 0
    %2371 = vmatmul.mubr.bf16.gmra.mxu0 %v2168
    %v2372 = vpop.f32.mrf.mxu0
    %v2373 = vadd.f32 0.0, %v2372
    %v2374 = vpop.f32.mrf.mxu0
    %v2375 = vadd.f32 0.0, %v2374
    %v2376 = vpop.f32.mrf.mxu0
    %v2377 = vadd.f32 0.0, %v2376
    %v2378 = vpop.f32.mrf.mxu0
    %v2379 = vadd.f32 0.0, %v2378
    %2380 = vmatprep.mubr.bf16.mxu0 0
    %2381 = vmatmul.mubr.bf16.gmra.mxu0 %v2169
    %v2382 = vpop.f32.mrf.mxu0
    %v2383 = vadd.f32 0.0, %v2382
    %v2384 = vpop.f32.mrf.mxu0
    %v2385 = vadd.f32 0.0, %v2384
    %v2386 = vpop.f32.mrf.mxu0
    %v2387 = vadd.f32 0.0, %v2386
    %v2388 = vpop.f32.mrf.mxu0
    %v2389 = vadd.f32 0.0, %v2388
    %2390 = vmatprep.mubr.bf16.mxu0 0
    %2391 = vmatmul.mubr.bf16.gmra.mxu0 %v2170
    %v2392 = vpop.f32.mrf.mxu0
    %v2393 = vadd.f32 0.0, %v2392
    %v2394 = vpop.f32.mrf.mxu0
    %v2395 = vadd.f32 0.0, %v2394
    %v2396 = vpop.f32.mrf.mxu0
    %v2397 = vadd.f32 0.0, %v2396
    %v2398 = vpop.f32.mrf.mxu0
    %v2399 = vadd.f32 0.0, %v2398
    %2400 = vmatprep.mubr.bf16.mxu0 0
    %2401 = vmatmul.mubr.bf16.gmra.mxu0 %v2171
    %v2402 = vpop.f32.mrf.mxu0
    %v2403 = vadd.f32 0.0, %v2402
    %v2404 = vpop.f32.mrf.mxu0
    %v2405 = vadd.f32 0.0, %v2404
    %v2406 = vpop.f32.mrf.mxu0
    %v2407 = vadd.f32 0.0, %v2406
    %v2408 = vpop.f32.mrf.mxu0
    %v2409 = vadd.f32 0.0, %v2408
    %2410 = vmatprep.mubr.bf16.mxu0 0
    %2411 = vmatmul.mubr.bf16.gmra.mxu0 %v2172
    %v2412 = vpop.f32.mrf.mxu0
    %v2413 = vadd.f32 0.0, %v2412
    %v2414 = vpop.f32.mrf.mxu0
    %v2415 = vadd.f32 0.0, %v2414
    %v2416 = vpop.f32.mrf.mxu0
    %v2417 = vpop.f32.mrf.mxu0
    %2418 = vdwg.mxu0
    %2419 = vmatprep.subr.bf16.mxu0 %v2305
    %2420 = vmatpush1.bf16.msra.mxu0 %v2304
    %2421 = vmatprep.subr.bf16.mxu0 %v2301
    %2422 = vmatpush1.bf16.msra.mxu0 %v2300
    %2423 = vmatprep.subr.bf16.mxu0 %v2297
    %2424 = vmatpush1.bf16.msra.mxu0 %v2296
    %2425 = vmatprep.subr.bf16.mxu0 %v2293
    %2426 = vmatpush1.bf16.msra.mxu0 %v2292
    %2427 = vmatprep.subr.bf16.mxu0 %v2289
    %2428 = vmatpush1.bf16.msra.mxu0 %v2288
    %2429 = vmatprep.subr.bf16.mxu0 %v2285
    %2430 = vmatpush1.bf16.msra.mxu0 %v2284
    %2431 = vmatprep.subr.bf16.mxu0 %v2281
    %2432 = vmatpush1.bf16.msra.mxu0 %v2280
    %2433 = vmatprep.subr.bf16.mxu0 %v2277
    %2434 = vmatpush1.bf16.msra.mxu0 %v2276
    %2435 = vmatprep.subr.bf16.mxu0 0
    %2436 = vmatpush2.bf16.msra.mxu0 0
    %2437 = vmatprep.subr.bf16.mxu0 0
    %2438 = vmatpush2.bf16.msra.mxu0 0
    %2439 = vmatprep.subr.bf16.mxu0 0
    %2440 = vmatpush2.bf16.msra.mxu0 0
    %2441 = vmatprep.subr.bf16.mxu0 0
    %2442 = vmatpush2.bf16.msra.mxu0 0
    %2443 = vmatprep.subr.bf16.mxu0 0
    %2444 = vmatpush2.bf16.msra.mxu0 0
    %2445 = vmatprep.subr.bf16.mxu0 0
    %2446 = vmatpush2.bf16.msra.mxu0 0
    %2447 = vmatprep.subr.bf16.mxu0 0
    %2448 = vmatpush2.bf16.msra.mxu0 0
    %2449 = vmatprep.subr.bf16.mxu0 0
    %2450 = vmatpush2.bf16.msra.mxu0 0
    %2451 = vmatprep.mubr.bf16.mxu0 0
    %2452 = vmatmul.mubr.bf16.gmra.mxu0 %v2168
    %v2453 = vpop.f32.mrf.mxu0
    %v2454 = vadd.f32 0.0, %v2453
    %v2455 = vpop.f32.mrf.mxu0
    %v2456 = vadd.f32 0.0, %v2455
    %v2457 = vpop.f32.mrf.mxu0
    %v2458 = vadd.f32 0.0, %v2457
    %v2459 = vpop.f32.mrf.mxu0
    %v2460 = vadd.f32 0.0, %v2459
    %2461 = vmatprep.mubr.bf16.mxu0 0
    %2462 = vmatmul.mubr.bf16.gmra.mxu0 %v2169
    %v2463 = vpop.f32.mrf.mxu0
    %v2464 = vadd.f32 0.0, %v2463
    %v2465 = vpop.f32.mrf.mxu0
    %v2466 = vadd.f32 0.0, %v2465
    %v2467 = vpop.f32.mrf.mxu0
    %v2468 = vadd.f32 0.0, %v2467
    %v2469 = vpop.f32.mrf.mxu0
    %v2470 = vadd.f32 0.0, %v2469
    %2471 = vmatprep.mubr.bf16.mxu0 0
    %2472 = vmatmul.mubr.bf16.gmra.mxu0 %v2170
    %v2473 = vpop.f32.mrf.mxu0
    %v2474 = vadd.f32 0.0, %v2473
    %v2475 = vpop.f32.mrf.mxu0
    %v2476 = vadd.f32 0.0, %v2475
    %v2477 = vpop.f32.mrf.mxu0
    %v2478 = vadd.f32 0.0, %v2477
    %v2479 = vpop.f32.mrf.mxu0
    %v2480 = vadd.f32 0.0, %v2479
    %2481 = vmatprep.mubr.bf16.mxu0 0
    %2482 = vmatmul.mubr.bf16.gmra.mxu0 %v2171
    %v2483 = vpop.f32.mrf.mxu0
    %v2484 = vadd.f32 0.0, %v2483
    %v2485 = vpop.f32.mrf.mxu0
    %v2486 = vadd.f32 0.0, %v2485
    %v2487 = vpop.f32.mrf.mxu0
    %v2488 = vadd.f32 0.0, %v2487
    %v2489 = vpop.f32.mrf.mxu0
    %v2490 = vadd.f32 0.0, %v2489
    %2491 = vmatprep.mubr.bf16.mxu0 0
    %2492 = vmatmul.mubr.bf16.gmra.mxu0 %v2172
    %v2493 = vpop.f32.mrf.mxu0
    %v2494 = vadd.f32 0.0, %v2493
    %v2495 = vpop.f32.mrf.mxu0
    %v2496 = vadd.f32 0.0, %v2495
    %v2497 = vpop.f32.mrf.mxu0
    %v2498 = vpop.f32.mrf.mxu0
    %2499 = vdwg.mxu0
    %v2500 = vpack.c.bf16 %v2377, %v2373
    %v2501 = vpack.c.bf16 %v2379, %v2375
    %v2502 = vpack.c.bf16 %v2458, %v2454
    %v2503 = vpack.c.bf16 %v2460, %v2456
    %v2504 = vpack.c.bf16 %v2387, %v2383
    %v2505 = vpack.c.bf16 %v2389, %v2385
    %v2506 = vpack.c.bf16 %v2468, %v2464
    %v2507 = vpack.c.bf16 %v2470, %v2466
    %v2508 = vpack.c.bf16 %v2397, %v2393
    %v2509 = vpack.c.bf16 %v2399, %v2395
    %v2510 = vpack.c.bf16 %v2478, %v2474
    %v2511 = vpack.c.bf16 %v2480, %v2476
    %v2512 = vpack.c.bf16 %v2407, %v2403
    %v2513 = vpack.c.bf16 %v2409, %v2405
    %v2514 = vpack.c.bf16 %v2488, %v2484
    %v2515 = vpack.c.bf16 %v2490, %v2486
    %v2516 = vpack.c.bf16 %v2413, %v2413
    %v2517 = vpack.c.bf16 %v2415, %v2415
    %v2518 = vpack.c.bf16 %v2494, %v2494
    %v2519 = vpack.c.bf16 %v2496, %v2496
    %v2540 = vunpack.c.l.b16 %v2500
    %v2541 = vunpack.c.l.b16 %v2501
    %v2542 = vunpack.c.l.b16 %v2502
    %v2543 = vunpack.c.l.b16 %v2503
    %v2544 = vunpack.c.h.b16 %v2500
    %v2545 = vunpack.c.h.b16 %v2501
    %v2546 = vunpack.c.h.b16 %v2502
    %v2547 = vunpack.c.h.b16 %v2503
    %v2548 = vunpack.c.l.b16 %v2504
    %v2549 = vunpack.c.l.b16 %v2505
    %v2550 = vunpack.c.l.b16 %v2506
    %v2551 = vunpack.c.l.b16 %v2507
    %v2552 = vunpack.c.h.b16 %v2504
    %v2553 = vunpack.c.h.b16 %v2505
    %v2554 = vunpack.c.h.b16 %v2506
    %v2555 = vunpack.c.h.b16 %v2507
    %v2556 = vunpack.c.l.b16 %v2508
    %v2557 = vunpack.c.l.b16 %v2509
    %v2558 = vunpack.c.l.b16 %v2510
    %v2559 = vunpack.c.l.b16 %v2511
    %v2560 = vunpack.c.h.b16 %v2508
    %v2561 = vunpack.c.h.b16 %v2509
    %v2562 = vunpack.c.h.b16 %v2510
    %v2563 = vunpack.c.h.b16 %v2511
    %v2564 = vunpack.c.l.b16 %v2512
    %v2565 = vunpack.c.l.b16 %v2513
    %v2566 = vunpack.c.l.b16 %v2514
    %v2567 = vunpack.c.l.b16 %v2515
    %v2568 = vunpack.c.h.b16 %v2512
    %v2569 = vunpack.c.h.b16 %v2513
    %v2570 = vunpack.c.h.b16 %v2514
    %v2571 = vunpack.c.h.b16 %v2515
    %v2572 = vunpack.c.l.b16 %v2516
    %v2573 = vunpack.c.l.b16 %v2517
    %v2574 = vunpack.c.l.b16 %v2518
    %v2575 = vunpack.c.l.b16 %v2519
    %v2576 = vpack.c.b16 %v2541, %v2540
    %v2577 = vpack.c.b16 %v2543, %v2542
    %v2578 = vpack.c.b16 %v2545, %v2544
    %v2579 = vpack.c.b16 %v2547, %v2546
    %v2580 = vpack.c.b16 %v2549, %v2548
    %v2581 = vpack.c.b16 %v2551, %v2550
    %v2582 = vpack.c.b16 %v2553, %v2552
    %v2583 = vpack.c.b16 %v2555, %v2554
    %v2584 = vpack.c.b16 %v2557, %v2556
    %v2585 = vpack.c.b16 %v2559, %v2558
    %v2586 = vpack.c.b16 %v2561, %v2560
    %v2587 = vpack.c.b16 %v2563, %v2562
    %v2588 = vpack.c.b16 %v2565, %v2564
    %v2589 = vpack.c.b16 %v2567, %v2566
    %v2590 = vpack.c.b16 %v2569, %v2568
    %v2591 = vpack.c.b16 %v2571, %v2570
    %v2592 = vpack.c.b16 %v2573, %v2572
    %v2593 = vpack.c.b16 %v2575, %v2574
    %2612 = vst [vmem:[#allocation2] sm:$0xff] %v2576
    %2613 = vst [vmem:[#allocation2 + $0x8] sm:$0xff] %v2577
    %2614 = vst [vmem:[#allocation2 + $0x10] sm:$0xff] %v2578
    %2615 = vst [vmem:[#allocation2 + $0x18] sm:$0xff] %v2579
    %2616 = vst [vmem:[#allocation2 + $0x20] sm:$0xff] %v2580
    %2617 = vst [vmem:[#allocation2 + $0x28] sm:$0xff] %v2581
    %2618 = vst [vmem:[#allocation2 + $0x30] sm:$0xff] %v2582
    %2619 = vst [vmem:[#allocation2 + $0x38] sm:$0xff] %v2583
    %2620 = vst [vmem:[#allocation2 + $0x40] sm:$0xff] %v2584
    %2621 = vst [vmem:[#allocation2 + $0x48] sm:$0xff] %v2585
    %2622 = vst [vmem:[#allocation2 + $0x50] sm:$0xff] %v2586
    %2623 = vst [vmem:[#allocation2 + $0x58] sm:$0xff] %v2587
    %2624 = vst [vmem:[#allocation2 + $0x60] sm:$0xff] %v2588
    %2625 = vst [vmem:[#allocation2 + $0x68] sm:$0xff] %v2589
    %2626 = vst [vmem:[#allocation2 + $0x70] sm:$0xff] %v2590
    %2627 = vst [vmem:[#allocation2 + $0x78] sm:$0xff] %v2591
    %2628 = vst [vmem:[#allocation2 + $0x80] sm:$0xff] %v2592
    %2629 = vst [vmem:[#allocation2 + $0x88] sm:$0xff] %v2593
    %s2630 = scalar_lea.vmem %s4, 256
    %v2631 = vld [vmem:[%s2630] sm:$0xff]
    %v2632 = vld [vmem:[%s2630 + $0x8] sm:$0xff]
    %v2633 = vld [vmem:[%s2630 + $0x10] sm:$0xff]
    %v2634 = vld [vmem:[%s2630 + $0x18] sm:$0xff]
    %v2635 = vld [vmem:[%s2630 + $0x20] sm:$0xff]
    %v2636 = vld [vmem:[%s2630 + $0x28] sm:$0xff]
    %v2637 = vld [vmem:[%s2630 + $0x30] sm:$0xff]
    %v2638 = vld [vmem:[%s2630 + $0x38] sm:$0xff]
    %v2639 = vld [vmem:[%s2630 + $0x40] sm:$0xff]
    %v2640 = vld [vmem:[%s2630 + $0x48] sm:$0xff]
    %v2641 = vld [vmem:[%s2630 + $0x50] sm:$0xff]
    %v2642 = vld [vmem:[%s2630 + $0x58] sm:$0xff]
    %v2643 = vld [vmem:[%s2630 + $0x60] sm:$0xff]
    %v2644 = vld [vmem:[%s2630 + $0x68] sm:$0xff]
    %v2645 = vld [vmem:[%s2630 + $0x70] sm:$0xff]
    %v2646 = vld [vmem:[%s2630 + $0x78] sm:$0xff]
    %v2647 = vld [vmem:[%s2630 + $0x80] sm:$0xff]
    %v2648 = vld [vmem:[%s2630 + $0x88] sm:$0xff]
    %v2649 = vld [vmem:[%s2630 + $0x90] sm:$0xff]
    %v2650 = vld [vmem:[%s2630 + $0x98] sm:$0xff]
    %v2651 = vld [vmem:[%s2630 + $0xa0] sm:$0xff]
    %v2652 = vld [vmem:[%s2630 + $0xa8] sm:$0xff]
    %v2653 = vld [vmem:[%s2630 + $0xb0] sm:$0xff]
    %v2654 = vld [vmem:[%s2630 + $0xb8] sm:$0xff]
    %v2655 = vld [vmem:[%s2630 + $0xc0] sm:$0xff]
    %v2656 = vld [vmem:[%s2630 + $0xc8] sm:$0xff]
    %v2657 = vld [vmem:[%s2630 + $0xd0] sm:$0xff]
    %v2658 = vld [vmem:[%s2630 + $0xd8] sm:$0xff]
    %v2659 = vld [vmem:[%s2630 + $0xe0] sm:$0xff]
    %v2660 = vld [vmem:[%s2630 + $0xe8] sm:$0xff]
    %v2661 = vld [vmem:[%s2630 + $0xf0] sm:$0xff]
    %v2662 = vld [vmem:[%s2630 + $0xf8] sm:$0xff]
    %s2663 = scalar_lea.vmem [#allocation11], 4
    %v2664 = vld [vmem:[%s2663] sm:$0xf]
    %2665 = vst [vmem:[#allocation5] sm:$0xff] 0.0
    %2666 = vst [vmem:[#allocation6] sm:$0xff] 0.0
    %v2667 = vld [vmem:[#allocation5] sm:$0xff]
    %v2668 = vld [vmem:[#allocation6] sm:$0xff]
    %v2669 = vld [vmem:[%s646] sm:$0xff]
    %v2670 = vld [vmem:[%s646 + $0x8] sm:$0xff]
    %v2671 = vunpack.c.l.bf16 %v2669
    %v2672 = vunpack.c.h.bf16 %v2669
    %v2673 = vunpack.c.l.bf16 %v2670
    %v2674 = vunpack.c.h.bf16 %v2670
    %v2676 = vlaneseq
    %v2677 = vshrl.u32 %v2676, 7
    %v2678 = vsub.s32 0, %v2677
    %v2679 = vrot.slane %v2664, %v2678
    %v2680 = vlaneseq
    %v2681 = vshrl.u32 %v2680, 7
    %v2682 = vsub.s32 1, %v2681
    %v2683 = vrot.slane %v2664, %v2682
    %v2684 = vlaneseq
    %v2685 = vshrl.u32 %v2684, 7
    %v2686 = vsub.s32 2, %v2685
    %v2687 = vrot.slane %v2664, %v2686
    %v2688 = vlaneseq
    %v2689 = vshrl.u32 %v2688, 7
    %v2690 = vsub.s32 3, %v2689
    %v2691 = vrot.slane %v2664, %v2690
    %v2696 = vadd.f32 %v2671, %v2679
    %v2697 = vadd.f32 %v2672, %v2683
    %v2698 = vadd.f32 %v2673, %v2687
    %v2699 = vadd.f32 %v2674, %v2691
    %v2700 = vpack.c.bf16 %v2667, %v2667
    %v2733 = vunpack.c.l.b16 %v2631
    %v2734 = vunpack.c.h.b16 %v2631
    %v2735 = vunpack.c.l.b16 %v2632
    %v2736 = vunpack.c.h.b16 %v2632
    %v2737 = vunpack.c.l.b16 %v2633
    %v2738 = vunpack.c.h.b16 %v2633
    %v2739 = vunpack.c.l.b16 %v2634
    %v2740 = vunpack.c.h.b16 %v2634
    %v2741 = vunpack.c.l.b16 %v2635
    %v2742 = vunpack.c.h.b16 %v2635
    %v2743 = vunpack.c.l.b16 %v2636
    %v2744 = vunpack.c.h.b16 %v2636
    %v2745 = vunpack.c.l.b16 %v2637
    %v2746 = vunpack.c.h.b16 %v2637
    %v2747 = vunpack.c.l.b16 %v2638
    %v2748 = vunpack.c.h.b16 %v2638
    %v2749 = vunpack.c.l.b16 %v2639
    %v2750 = vunpack.c.h.b16 %v2639
    %v2751 = vunpack.c.l.b16 %v2640
    %v2752 = vunpack.c.h.b16 %v2640
    %v2753 = vunpack.c.l.b16 %v2641
    %v2754 = vunpack.c.h.b16 %v2641
    %v2755 = vunpack.c.l.b16 %v2642
    %v2756 = vunpack.c.h.b16 %v2642
    %v2757 = vunpack.c.l.b16 %v2643
    %v2758 = vunpack.c.h.b16 %v2643
    %v2759 = vunpack.c.l.b16 %v2644
    %v2760 = vunpack.c.h.b16 %v2644
    %v2761 = vunpack.c.l.b16 %v2645
    %v2762 = vunpack.c.h.b16 %v2645
    %v2763 = vunpack.c.l.b16 %v2646
    %v2764 = vunpack.c.h.b16 %v2646
    %v2765 = vunpack.c.l.b16 %v2647
    %v2766 = vunpack.c.h.b16 %v2647
    %v2767 = vunpack.c.l.b16 %v2648
    %v2768 = vunpack.c.h.b16 %v2648
    %v2769 = vunpack.c.l.b16 %v2649
    %v2770 = vunpack.c.h.b16 %v2649
    %v2771 = vunpack.c.l.b16 %v2650
    %v2772 = vunpack.c.h.b16 %v2650
    %v2773 = vunpack.c.l.b16 %v2651
    %v2774 = vunpack.c.h.b16 %v2651
    %v2775 = vunpack.c.l.b16 %v2652
    %v2776 = vunpack.c.h.b16 %v2652
    %v2777 = vunpack.c.l.b16 %v2653
    %v2778 = vunpack.c.h.b16 %v2653
    %v2779 = vunpack.c.l.b16 %v2654
    %v2780 = vunpack.c.h.b16 %v2654
    %v2781 = vunpack.c.l.b16 %v2655
    %v2782 = vunpack.c.h.b16 %v2655
    %v2783 = vunpack.c.l.b16 %v2656
    %v2784 = vunpack.c.h.b16 %v2656
    %v2785 = vunpack.c.l.b16 %v2657
    %v2786 = vunpack.c.h.b16 %v2657
    %v2787 = vunpack.c.l.b16 %v2658
    %v2788 = vunpack.c.h.b16 %v2658
    %v2789 = vunpack.c.l.b16 %v2659
    %v2790 = vunpack.c.h.b16 %v2659
    %v2791 = vunpack.c.l.b16 %v2660
    %v2792 = vunpack.c.h.b16 %v2660
    %v2793 = vunpack.c.l.b16 %v2661
    %v2794 = vunpack.c.h.b16 %v2661
    %v2795 = vunpack.c.l.b16 %v2662
    %v2796 = vunpack.c.h.b16 %v2662
    %v2797 = vpack.c.b16 %v2737, %v2733
    %v2798 = vpack.c.b16 %v2738, %v2734
    %v2799 = vpack.c.b16 %v2739, %v2735
    %v2800 = vpack.c.b16 %v2740, %v2736
    %v2801 = vpack.c.b16 %v2745, %v2741
    %v2802 = vpack.c.b16 %v2746, %v2742
    %v2803 = vpack.c.b16 %v2747, %v2743
    %v2804 = vpack.c.b16 %v2748, %v2744
    %v2805 = vpack.c.b16 %v2753, %v2749
    %v2806 = vpack.c.b16 %v2754, %v2750
    %v2807 = vpack.c.b16 %v2755, %v2751
    %v2808 = vpack.c.b16 %v2756, %v2752
    %v2809 = vpack.c.b16 %v2761, %v2757
    %v2810 = vpack.c.b16 %v2762, %v2758
    %v2811 = vpack.c.b16 %v2763, %v2759
    %v2812 = vpack.c.b16 %v2764, %v2760
    %v2813 = vpack.c.b16 %v2769, %v2765
    %v2814 = vpack.c.b16 %v2770, %v2766
    %v2815 = vpack.c.b16 %v2771, %v2767
    %v2816 = vpack.c.b16 %v2772, %v2768
    %v2817 = vpack.c.b16 %v2777, %v2773
    %v2818 = vpack.c.b16 %v2778, %v2774
    %v2819 = vpack.c.b16 %v2779, %v2775
    %v2820 = vpack.c.b16 %v2780, %v2776
    %v2821 = vpack.c.b16 %v2785, %v2781
    %v2822 = vpack.c.b16 %v2786, %v2782
    %v2823 = vpack.c.b16 %v2787, %v2783
    %v2824 = vpack.c.b16 %v2788, %v2784
    %v2825 = vpack.c.b16 %v2793, %v2789
    %v2826 = vpack.c.b16 %v2794, %v2790
    %v2827 = vpack.c.b16 %v2795, %v2791
    %v2828 = vpack.c.b16 %v2796, %v2792
    %2861 = vmatprep.subr.bf16.mxu0 %v2826
    %2862 = vmatpush1.bf16.msra.mxu0 %v2825
    %2863 = vmatprep.subr.bf16.mxu0 %v2822
    %2864 = vmatpush1.bf16.msra.mxu0 %v2821
    %2865 = vmatprep.subr.bf16.mxu0 %v2818
    %2866 = vmatpush1.bf16.msra.mxu0 %v2817
    %2867 = vmatprep.subr.bf16.mxu0 %v2814
    %2868 = vmatpush1.bf16.msra.mxu0 %v2813
    %2869 = vmatprep.subr.bf16.mxu0 %v2810
    %2870 = vmatpush1.bf16.msra.mxu0 %v2809
    %2871 = vmatprep.subr.bf16.mxu0 %v2806
    %2872 = vmatpush1.bf16.msra.mxu0 %v2805
    %2873 = vmatprep.subr.bf16.mxu0 %v2802
    %2874 = vmatpush1.bf16.msra.mxu0 %v2801
    %2875 = vmatprep.subr.bf16.mxu0 %v2798
    %2876 = vmatpush1.bf16.msra.mxu0 %v2797
    %2877 = vmatprep.subr.bf16.mxu0 0
    %2878 = vmatpush2.bf16.msra.mxu0 0
    %2879 = vmatprep.subr.bf16.mxu0 0
    %2880 = vmatpush2.bf16.msra.mxu0 0
    %2881 = vmatprep.subr.bf16.mxu0 0
    %2882 = vmatpush2.bf16.msra.mxu0 0
    %2883 = vmatprep.subr.bf16.mxu0 0
    %2884 = vmatpush2.bf16.msra.mxu0 0
    %2885 = vmatprep.subr.bf16.mxu0 0
    %2886 = vmatpush2.bf16.msra.mxu0 0
    %2887 = vmatprep.subr.bf16.mxu0 0
    %2888 = vmatpush2.bf16.msra.mxu0 0
    %2889 = vmatprep.subr.bf16.mxu0 0
    %2890 = vmatpush2.bf16.msra.mxu0 0
    %2891 = vmatprep.subr.bf16.mxu0 0
    %2892 = vmatpush2.bf16.msra.mxu0 0
    %2893 = vmatprep.mubr.bf16.mxu0 0
    %2894 = vmatmul.mubr.bf16.gmra.mxu0 %v2700
    %v2895 = vpop.f32.mrf.mxu0
    %v2896 = vadd.f32 0.0, %v2895
    %v2897 = vpop.f32.mrf.mxu0
    %v2898 = vadd.f32 0.0, %v2897
    %v2899 = vpop.f32.mrf.mxu0
    %v2900 = vpop.f32.mrf.mxu0
    %2901 = vdwg.mxu0
    %2902 = vmatprep.subr.bf16.mxu0 %v2828
    %2903 = vmatpush1.bf16.msra.mxu0 %v2827
    %2904 = vmatprep.subr.bf16.mxu0 %v2824
    %2905 = vmatpush1.bf16.msra.mxu0 %v2823
    %2906 = vmatprep.subr.bf16.mxu0 %v2820
    %2907 = vmatpush1.bf16.msra.mxu0 %v2819
    %2908 = vmatprep.subr.bf16.mxu0 %v2816
    %2909 = vmatpush1.bf16.msra.mxu0 %v2815
    %2910 = vmatprep.subr.bf16.mxu0 %v2812
    %2911 = vmatpush1.bf16.msra.mxu0 %v2811
    %2912 = vmatprep.subr.bf16.mxu0 %v2808
    %2913 = vmatpush1.bf16.msra.mxu0 %v2807
    %2914 = vmatprep.subr.bf16.mxu0 %v2804
    %2915 = vmatpush1.bf16.msra.mxu0 %v2803
    %2916 = vmatprep.subr.bf16.mxu0 %v2800
    %2917 = vmatpush1.bf16.msra.mxu0 %v2799
    %2918 = vmatprep.subr.bf16.mxu0 0
    %2919 = vmatpush2.bf16.msra.mxu0 0
    %2920 = vmatprep.subr.bf16.mxu0 0
    %2921 = vmatpush2.bf16.msra.mxu0 0
    %2922 = vmatprep.subr.bf16.mxu0 0
    %2923 = vmatpush2.bf16.msra.mxu0 0
    %2924 = vmatprep.subr.bf16.mxu0 0
    %2925 = vmatpush2.bf16.msra.mxu0 0
    %2926 = vmatprep.subr.bf16.mxu0 0
    %2927 = vmatpush2.bf16.msra.mxu0 0
    %2928 = vmatprep.subr.bf16.mxu0 0
    %2929 = vmatpush2.bf16.msra.mxu0 0
    %2930 = vmatprep.subr.bf16.mxu0 0
    %2931 = vmatpush2.bf16.msra.mxu0 0
    %2932 = vmatprep.subr.bf16.mxu0 0
    %2933 = vmatpush2.bf16.msra.mxu0 0
    %2934 = vmatprep.mubr.bf16.mxu0 0
    %2935 = vmatmul.mubr.bf16.gmra.mxu0 %v2700
    %v2936 = vpop.f32.mrf.mxu0
    %v2937 = vadd.f32 0.0, %v2936
    %v2938 = vpop.f32.mrf.mxu0
    %v2939 = vadd.f32 0.0, %v2938
    %v2940 = vpop.f32.mrf.mxu0
    %v2941 = vpop.f32.mrf.mxu0
    %2942 = vdwg.mxu0
    %v2943 = vadd.f32 %v2696, %v2896
    %v2944 = vadd.f32 %v2697, %v2898
    %v2945 = vadd.f32 %v2698, %v2937
    %v2946 = vadd.f32 %v2699, %v2939
    %v2947 = vsub.f32 0.0, %v2943
    %v2948 = vsub.f32 0.0, %v2944
    %v2949 = vsub.f32 0.0, %v2945
    %v2950 = vmul.f32 %v2947, 1.442695
    %v2951 = vpow.pop %v2950
    %v2952 = vmul.f32 %v2948, 1.442695
    %v2953 = vpow.pop %v2952
    %v2954 = vmul.f32 %v2949, 1.442695
    %v2955 = vpow.pop %v2954
    %v2956 = vadd.f32 %v2951, 1.0
    %v2957 = vadd.f32 %v2953, 1.0
    %v2958 = vadd.f32 %v2955, 1.0
    %v2959 = vrcp.pop %v2956
    %v2960 = vrcp.pop %v2957
    %v2961 = vrcp.pop %v2958
    %v2962 = vtanh.pop %v2946
    %v2963 = vmul.f32 %v2960, %v2668
    %v2964 = vmul.f32 %v2959, %v2962
    %v2965 = vadd.f32 %v2963, %v2964
    %v2966 = vtanh.pop %v2965
    %v2967 = vmul.f32 %v2961, %v2966
    %v2968 = vsel %vm951, %v2967, %v2667
    %2969 = vst [vmem:[#allocation5] sm:$0xff] %v2968
    %v2970 = vsel %vm951, %v2965, %v2668
    %2971 = vst [vmem:[#allocation6] sm:$0xff] %v2970
    %v2972 = vmul.f32 %v2967, %v960
    %v2973 = vpack.c.bf16 %v2972, %v2972
    %2974 = vst [vmem:[#allocation4] sm:$0xf] %v2973
    %v2975 = vld [vmem:[#allocation5] sm:$0xff]
    %v2976 = vld [vmem:[#allocation6] sm:$0xff]
    %v2977 = vld [vmem:[%s969] sm:$0xff]
    %v2978 = vld [vmem:[%s969 + $0x8] sm:$0xff]
    %v2979 = vunpack.c.l.bf16 %v2977
    %v2980 = vunpack.c.h.bf16 %v2977
    %v2981 = vunpack.c.l.bf16 %v2978
    %v2982 = vunpack.c.h.bf16 %v2978
    %v2983 = vadd.f32 %v2979, %v2679
    %v2984 = vadd.f32 %v2980, %v2683
    %v2985 = vadd.f32 %v2981, %v2687
    %v2986 = vadd.f32 %v2982, %v2691
    %v2987 = vpack.c.bf16 %v2975, %v2975
    %2988 = vmatprep.subr.bf16.mxu0 %v2826
    %2989 = vmatpush1.bf16.msra.mxu0 %v2825
    %2990 = vmatprep.subr.bf16.mxu0 %v2822
    %2991 = vmatpush1.bf16.msra.mxu0 %v2821
    %2992 = vmatprep.subr.bf16.mxu0 %v2818
    %2993 = vmatpush1.bf16.msra.mxu0 %v2817
    %2994 = vmatprep.subr.bf16.mxu0 %v2814
    %2995 = vmatpush1.bf16.msra.mxu0 %v2813
    %2996 = vmatprep.subr.bf16.mxu0 %v2810
    %2997 = vmatpush1.bf16.msra.mxu0 %v2809
    %2998 = vmatprep.subr.bf16.mxu0 %v2806
    %2999 = vmatpush1.bf16.msra.mxu0 %v2805
    %3000 = vmatprep.subr.bf16.mxu0 %v2802
    %3001 = vmatpush1.bf16.msra.mxu0 %v2801
    %3002 = vmatprep.subr.bf16.mxu0 %v2798
    %3003 = vmatpush1.bf16.msra.mxu0 %v2797
    %3004 = vmatprep.subr.bf16.mxu0 0
    %3005 = vmatpush2.bf16.msra.mxu0 0
    %3006 = vmatprep.subr.bf16.mxu0 0
    %3007 = vmatpush2.bf16.msra.mxu0 0
    %3008 = vmatprep.subr.bf16.mxu0 0
    %3009 = vmatpush2.bf16.msra.mxu0 0
    %3010 = vmatprep.subr.bf16.mxu0 0
    %3011 = vmatpush2.bf16.msra.mxu0 0
    %3012 = vmatprep.subr.bf16.mxu0 0
    %3013 = vmatpush2.bf16.msra.mxu0 0
    %3014 = vmatprep.subr.bf16.mxu0 0
    %3015 = vmatpush2.bf16.msra.mxu0 0
    %3016 = vmatprep.subr.bf16.mxu0 0
    %3017 = vmatpush2.bf16.msra.mxu0 0
    %3018 = vmatprep.subr.bf16.mxu0 0
    %3019 = vmatpush2.bf16.msra.mxu0 0
    %3020 = vmatprep.mubr.bf16.mxu0 0
    %3021 = vmatmul.mubr.bf16.gmra.mxu0 %v2987
    %v3022 = vpop.f32.mrf.mxu0
    %v3023 = vadd.f32 0.0, %v3022
    %v3024 = vpop.f32.mrf.mxu0
    %v3025 = vadd.f32 0.0, %v3024
    %v3026 = vpop.f32.mrf.mxu0
    %v3027 = vpop.f32.mrf.mxu0
    %3028 = vdwg.mxu0
    %3029 = vmatprep.subr.bf16.mxu0 %v2828
    %3030 = vmatpush1.bf16.msra.mxu0 %v2827
    %3031 = vmatprep.subr.bf16.mxu0 %v2824
    %3032 = vmatpush1.bf16.msra.mxu0 %v2823
    %3033 = vmatprep.subr.bf16.mxu0 %v2820
    %3034 = vmatpush1.bf16.msra.mxu0 %v2819
    %3035 = vmatprep.subr.bf16.mxu0 %v2816
    %3036 = vmatpush1.bf16.msra.mxu0 %v2815
    %3037 = vmatprep.subr.bf16.mxu0 %v2812
    %3038 = vmatpush1.bf16.msra.mxu0 %v2811
    %3039 = vmatprep.subr.bf16.mxu0 %v2808
    %3040 = vmatpush1.bf16.msra.mxu0 %v2807
    %3041 = vmatprep.subr.bf16.mxu0 %v2804
    %3042 = vmatpush1.bf16.msra.mxu0 %v2803
    %3043 = vmatprep.subr.bf16.mxu0 %v2800
    %3044 = vmatpush1.bf16.msra.mxu0 %v2799
    %3045 = vmatprep.subr.bf16.mxu0 0
    %3046 = vmatpush2.bf16.msra.mxu0 0
    %3047 = vmatprep.subr.bf16.mxu0 0
    %3048 = vmatpush2.bf16.msra.mxu0 0
    %3049 = vmatprep.subr.bf16.mxu0 0
    %3050 = vmatpush2.bf16.msra.mxu0 0
    %3051 = vmatprep.subr.bf16.mxu0 0
    %3052 = vmatpush2.bf16.msra.mxu0 0
    %3053 = vmatprep.subr.bf16.mxu0 0
    %3054 = vmatpush2.bf16.msra.mxu0 0
    %3055 = vmatprep.subr.bf16.mxu0 0
    %3056 = vmatpush2.bf16.msra.mxu0 0
    %3057 = vmatprep.subr.bf16.mxu0 0
    %3058 = vmatpush2.bf16.msra.mxu0 0
    %3059 = vmatprep.subr.bf16.mxu0 0
    %3060 = vmatpush2.bf16.msra.mxu0 0
    %3061 = vmatprep.mubr.bf16.mxu0 0
    %3062 = vmatmul.mubr.bf16.gmra.mxu0 %v2987
    %v3063 = vpop.f32.mrf.mxu0
    %v3064 = vadd.f32 0.0, %v3063
    %v3065 = vpop.f32.mrf.mxu0
    %v3066 = vadd.f32 0.0, %v3065
    %v3067 = vpop.f32.mrf.mxu0
    %v3068 = vpop.f32.mrf.mxu0
    %3069 = vdwg.mxu0
    %v3070 = vadd.f32 %v2983, %v3023
    %v3071 = vadd.f32 %v2984, %v3025
    %v3072 = vadd.f32 %v2985, %v3064
    %v3073 = vadd.f32 %v2986, %v3066
    %v3074 = vsub.f32 0.0, %v3070
    %v3075 = vsub.f32 0.0, %v3071
    %v3076 = vsub.f32 0.0, %v3072
    %v3077 = vmul.f32 %v3074, 1.442695
    %v3078 = vpow.pop %v3077
    %v3079 = vmul.f32 %v3075, 1.442695
    %v3080 = vpow.pop %v3079
    %v3081 = vmul.f32 %v3076, 1.442695
    %v3082 = vpow.pop %v3081
    %v3083 = vadd.f32 %v3078, 1.0
    %v3084 = vadd.f32 %v3080, 1.0
    %v3085 = vadd.f32 %v3082, 1.0
    %v3086 = vrcp.pop %v3083
    %v3087 = vrcp.pop %v3084
    %v3088 = vrcp.pop %v3085
    %v3089 = vtanh.pop %v3073
    %v3090 = vmul.f32 %v3087, %v2976
    %v3091 = vmul.f32 %v3086, %v3089
    %v3092 = vadd.f32 %v3090, %v3091
    %v3093 = vtanh.pop %v3092
    %v3094 = vmul.f32 %v3088, %v3093
    %v3095 = vsel %vm1093, %v3094, %v2975
    %3096 = vst [vmem:[#allocation5] sm:$0xff] %v3095
    %v3097 = vsel %vm1093, %v3092, %v2976
    %3098 = vst [vmem:[#allocation6] sm:$0xff] %v3097
    %v3099 = vmul.f32 %v3094, %v1102
    %v3100 = vpack.c.bf16 %v3099, %v3099
    %s3101 = scalar_lea.vmem [#allocation4], 4
    %3102 = vst [vmem:[%s3101] sm:$0xf] %v3100
    %v3103 = vld [vmem:[#allocation5] sm:$0xff]
    %v3104 = vld [vmem:[#allocation6] sm:$0xff]
    %v3105 = vld [vmem:[%s1112] sm:$0xff]
    %v3106 = vld [vmem:[%s1112 + $0x8] sm:$0xff]
    %v3107 = vunpack.c.l.bf16 %v3105
    %v3108 = vunpack.c.h.bf16 %v3105
    %v3109 = vunpack.c.l.bf16 %v3106
    %v3110 = vunpack.c.h.bf16 %v3106
    %v3111 = vadd.f32 %v3107, %v2679
    %v3112 = vadd.f32 %v3108, %v2683
    %v3113 = vadd.f32 %v3109, %v2687
    %v3114 = vadd.f32 %v3110, %v2691
    %v3115 = vpack.c.bf16 %v3103, %v3103
    %3116 = vmatprep.subr.bf16.mxu0 %v2826
    %3117 = vmatpush1.bf16.msra.mxu0 %v2825
    %3118 = vmatprep.subr.bf16.mxu0 %v2822
    %3119 = vmatpush1.bf16.msra.mxu0 %v2821
    %3120 = vmatprep.subr.bf16.mxu0 %v2818
    %3121 = vmatpush1.bf16.msra.mxu0 %v2817
    %3122 = vmatprep.subr.bf16.mxu0 %v2814
    %3123 = vmatpush1.bf16.msra.mxu0 %v2813
    %3124 = vmatprep.subr.bf16.mxu0 %v2810
    %3125 = vmatpush1.bf16.msra.mxu0 %v2809
    %3126 = vmatprep.subr.bf16.mxu0 %v2806
    %3127 = vmatpush1.bf16.msra.mxu0 %v2805
    %3128 = vmatprep.subr.bf16.mxu0 %v2802
    %3129 = vmatpush1.bf16.msra.mxu0 %v2801
    %3130 = vmatprep.subr.bf16.mxu0 %v2798
    %3131 = vmatpush1.bf16.msra.mxu0 %v2797
    %3132 = vmatprep.subr.bf16.mxu0 0
    %3133 = vmatpush2.bf16.msra.mxu0 0
    %3134 = vmatprep.subr.bf16.mxu0 0
    %3135 = vmatpush2.bf16.msra.mxu0 0
    %3136 = vmatprep.subr.bf16.mxu0 0
    %3137 = vmatpush2.bf16.msra.mxu0 0
    %3138 = vmatprep.subr.bf16.mxu0 0
    %3139 = vmatpush2.bf16.msra.mxu0 0
    %3140 = vmatprep.subr.bf16.mxu0 0
    %3141 = vmatpush2.bf16.msra.mxu0 0
    %3142 = vmatprep.subr.bf16.mxu0 0
    %3143 = vmatpush2.bf16.msra.mxu0 0
    %3144 = vmatprep.subr.bf16.mxu0 0
    %3145 = vmatpush2.bf16.msra.mxu0 0
    %3146 = vmatprep.subr.bf16.mxu0 0
    %3147 = vmatpush2.bf16.msra.mxu0 0
    %3148 = vmatprep.mubr.bf16.mxu0 0
    %3149 = vmatmul.mubr.bf16.gmra.mxu0 %v3115
    %v3150 = vpop.f32.mrf.mxu0
    %v3151 = vadd.f32 0.0, %v3150
    %v3152 = vpop.f32.mrf.mxu0
    %v3153 = vadd.f32 0.0, %v3152
    %v3154 = vpop.f32.mrf.mxu0
    %v3155 = vpop.f32.mrf.mxu0
    %3156 = vdwg.mxu0
    %3157 = vmatprep.subr.bf16.mxu0 %v2828
    %3158 = vmatpush1.bf16.msra.mxu0 %v2827
    %3159 = vmatprep.subr.bf16.mxu0 %v2824
    %3160 = vmatpush1.bf16.msra.mxu0 %v2823
    %3161 = vmatprep.subr.bf16.mxu0 %v2820
    %3162 = vmatpush1.bf16.msra.mxu0 %v2819
    %3163 = vmatprep.subr.bf16.mxu0 %v2816
    %3164 = vmatpush1.bf16.msra.mxu0 %v2815
    %3165 = vmatprep.subr.bf16.mxu0 %v2812
    %3166 = vmatpush1.bf16.msra.mxu0 %v2811
    %3167 = vmatprep.subr.bf16.mxu0 %v2808
    %3168 = vmatpush1.bf16.msra.mxu0 %v2807
    %3169 = vmatprep.subr.bf16.mxu0 %v2804
    %3170 = vmatpush1.bf16.msra.mxu0 %v2803
    %3171 = vmatprep.subr.bf16.mxu0 %v2800
    %3172 = vmatpush1.bf16.msra.mxu0 %v2799
    %3173 = vmatprep.subr.bf16.mxu0 0
    %3174 = vmatpush2.bf16.msra.mxu0 0
    %3175 = vmatprep.subr.bf16.mxu0 0
    %3176 = vmatpush2.bf16.msra.mxu0 0
    %3177 = vmatprep.subr.bf16.mxu0 0
    %3178 = vmatpush2.bf16.msra.mxu0 0
    %3179 = vmatprep.subr.bf16.mxu0 0
    %3180 = vmatpush2.bf16.msra.mxu0 0
    %3181 = vmatprep.subr.bf16.mxu0 0
    %3182 = vmatpush2.bf16.msra.mxu0 0
    %3183 = vmatprep.subr.bf16.mxu0 0
    %3184 = vmatpush2.bf16.msra.mxu0 0
    %3185 = vmatprep.subr.bf16.mxu0 0
    %3186 = vmatpush2.bf16.msra.mxu0 0
    %3187 = vmatprep.subr.bf16.mxu0 0
    %3188 = vmatpush2.bf16.msra.mxu0 0
    %3189 = vmatprep.mubr.bf16.mxu0 0
    %3190 = vmatmul.mubr.bf16.gmra.mxu0 %v3115
    %v3191 = vpop.f32.mrf.mxu0
    %v3192 = vadd.f32 0.0, %v3191
    %v3193 = vpop.f32.mrf.mxu0
    %v3194 = vadd.f32 0.0, %v3193
    %v3195 = vpop.f32.mrf.mxu0
    %v3196 = vpop.f32.mrf.mxu0
    %3197 = vdwg.mxu0
    %v3198 = vadd.f32 %v3111, %v3151
    %v3199 = vadd.f32 %v3112, %v3153
    %v3200 = vadd.f32 %v3113, %v3192
    %v3201 = vadd.f32 %v3114, %v3194
    %v3202 = vsub.f32 0.0, %v3198
    %v3203 = vsub.f32 0.0, %v3199
    %v3204 = vsub.f32 0.0, %v3200
    %v3205 = vmul.f32 %v3202, 1.442695
    %v3206 = vpow.pop %v3205
    %v3207 = vmul.f32 %v3203, 1.442695
    %v3208 = vpow.pop %v3207
    %v3209 = vmul.f32 %v3204, 1.442695
    %v3210 = vpow.pop %v3209
    %v3211 = vadd.f32 %v3206, 1.0
    %v3212 = vadd.f32 %v3208, 1.0
    %v3213 = vadd.f32 %v3210, 1.0
    %v3214 = vrcp.pop %v3211
    %v3215 = vrcp.pop %v3212
    %v3216 = vrcp.pop %v3213
    %v3217 = vtanh.pop %v3201
    %v3218 = vmul.f32 %v3215, %v3104
    %v3219 = vmul.f32 %v3214, %v3217
    %v3220 = vadd.f32 %v3218, %v3219
    %v3221 = vtanh.pop %v3220
    %v3222 = vmul.f32 %v3216, %v3221
    %v3223 = vsel %vm1236, %v3222, %v3103
    %3224 = vst [vmem:[#allocation5] sm:$0xff] %v3223
    %v3225 = vsel %vm1236, %v3220, %v3104
    %3226 = vst [vmem:[#allocation6] sm:$0xff] %v3225
    %v3227 = vmul.f32 %v3222, %v1245
    %v3228 = vpack.c.bf16 %v3227, %v3227
    %s3229 = scalar_lea.vmem [#allocation4], 8
    %3230 = vst [vmem:[%s3229] sm:$0xf] %v3228
    %v3231 = vld [vmem:[#allocation5] sm:$0xff]
    %v3232 = vld [vmem:[#allocation6] sm:$0xff]
    %v3233 = vld [vmem:[%s1255] sm:$0xff]
    %v3234 = vld [vmem:[%s1255 + $0x8] sm:$0xff]
    %v3235 = vunpack.c.l.bf16 %v3233
    %v3236 = vunpack.c.h.bf16 %v3233
    %v3237 = vunpack.c.l.bf16 %v3234
    %v3238 = vunpack.c.h.bf16 %v3234
    %v3239 = vadd.f32 %v3235, %v2679
    %v3240 = vadd.f32 %v3236, %v2683
    %v3241 = vadd.f32 %v3237, %v2687
    %v3242 = vadd.f32 %v3238, %v2691
    %v3243 = vpack.c.bf16 %v3231, %v3231
    %3244 = vmatprep.subr.bf16.mxu0 %v2826
    %3245 = vmatpush1.bf16.msra.mxu0 %v2825
    %3246 = vmatprep.subr.bf16.mxu0 %v2822
    %3247 = vmatpush1.bf16.msra.mxu0 %v2821
    %3248 = vmatprep.subr.bf16.mxu0 %v2818
    %3249 = vmatpush1.bf16.msra.mxu0 %v2817
    %3250 = vmatprep.subr.bf16.mxu0 %v2814
    %3251 = vmatpush1.bf16.msra.mxu0 %v2813
    %3252 = vmatprep.subr.bf16.mxu0 %v2810
    %3253 = vmatpush1.bf16.msra.mxu0 %v2809
    %3254 = vmatprep.subr.bf16.mxu0 %v2806
    %3255 = vmatpush1.bf16.msra.mxu0 %v2805
    %3256 = vmatprep.subr.bf16.mxu0 %v2802
    %3257 = vmatpush1.bf16.msra.mxu0 %v2801
    %3258 = vmatprep.subr.bf16.mxu0 %v2798
    %3259 = vmatpush1.bf16.msra.mxu0 %v2797
    %3260 = vmatprep.subr.bf16.mxu0 0
    %3261 = vmatpush2.bf16.msra.mxu0 0
    %3262 = vmatprep.subr.bf16.mxu0 0
    %3263 = vmatpush2.bf16.msra.mxu0 0
    %3264 = vmatprep.subr.bf16.mxu0 0
    %3265 = vmatpush2.bf16.msra.mxu0 0
    %3266 = vmatprep.subr.bf16.mxu0 0
    %3267 = vmatpush2.bf16.msra.mxu0 0
    %3268 = vmatprep.subr.bf16.mxu0 0
    %3269 = vmatpush2.bf16.msra.mxu0 0
    %3270 = vmatprep.subr.bf16.mxu0 0
    %3271 = vmatpush2.bf16.msra.mxu0 0
    %3272 = vmatprep.subr.bf16.mxu0 0
    %3273 = vmatpush2.bf16.msra.mxu0 0
    %3274 = vmatprep.subr.bf16.mxu0 0
    %3275 = vmatpush2.bf16.msra.mxu0 0
    %3276 = vmatprep.mubr.bf16.mxu0 0
    %3277 = vmatmul.mubr.bf16.gmra.mxu0 %v3243
    %v3278 = vpop.f32.mrf.mxu0
    %v3279 = vadd.f32 0.0, %v3278
    %v3280 = vpop.f32.mrf.mxu0
    %v3281 = vadd.f32 0.0, %v3280
    %v3282 = vpop.f32.mrf.mxu0
    %v3283 = vpop.f32.mrf.mxu0
    %3284 = vdwg.mxu0
    %3285 = vmatprep.subr.bf16.mxu0 %v2828
    %3286 = vmatpush1.bf16.msra.mxu0 %v2827
    %3287 = vmatprep.subr.bf16.mxu0 %v2824
    %3288 = vmatpush1.bf16.msra.mxu0 %v2823
    %3289 = vmatprep.subr.bf16.mxu0 %v2820
    %3290 = vmatpush1.bf16.msra.mxu0 %v2819
    %3291 = vmatprep.subr.bf16.mxu0 %v2816
    %3292 = vmatpush1.bf16.msra.mxu0 %v2815
    %3293 = vmatprep.subr.bf16.mxu0 %v2812
    %3294 = vmatpush1.bf16.msra.mxu0 %v2811
    %3295 = vmatprep.subr.bf16.mxu0 %v2808
    %3296 = vmatpush1.bf16.msra.mxu0 %v2807
    %3297 = vmatprep.subr.bf16.mxu0 %v2804
    %3298 = vmatpush1.bf16.msra.mxu0 %v2803
    %3299 = vmatprep.subr.bf16.mxu0 %v2800
    %3300 = vmatpush1.bf16.msra.mxu0 %v2799
    %3301 = vmatprep.subr.bf16.mxu0 0
    %3302 = vmatpush2.bf16.msra.mxu0 0
    %3303 = vmatprep.subr.bf16.mxu0 0
    %3304 = vmatpush2.bf16.msra.mxu0 0
    %3305 = vmatprep.subr.bf16.mxu0 0
    %3306 = vmatpush2.bf16.msra.mxu0 0
    %3307 = vmatprep.subr.bf16.mxu0 0
    %3308 = vmatpush2.bf16.msra.mxu0 0
    %3309 = vmatprep.subr.bf16.mxu0 0
    %3310 = vmatpush2.bf16.msra.mxu0 0
    %3311 = vmatprep.subr.bf16.mxu0 0
    %3312 = vmatpush2.bf16.msra.mxu0 0
    %3313 = vmatprep.subr.bf16.mxu0 0
    %3314 = vmatpush2.bf16.msra.mxu0 0
    %3315 = vmatprep.subr.bf16.mxu0 0
    %3316 = vmatpush2.bf16.msra.mxu0 0
    %3317 = vmatprep.mubr.bf16.mxu0 0
    %3318 = vmatmul.mubr.bf16.gmra.mxu0 %v3243
    %v3319 = vpop.f32.mrf.mxu0
    %v3320 = vadd.f32 0.0, %v3319
    %v3321 = vpop.f32.mrf.mxu0
    %v3322 = vadd.f32 0.0, %v3321
    %v3323 = vpop.f32.mrf.mxu0
    %v3324 = vpop.f32.mrf.mxu0
    %3325 = vdwg.mxu0
    %v3326 = vadd.f32 %v3239, %v3279
    %v3327 = vadd.f32 %v3240, %v3281
    %v3328 = vadd.f32 %v3241, %v3320
    %v3329 = vadd.f32 %v3242, %v3322
    %v3330 = vsub.f32 0.0, %v3326
    %v3331 = vsub.f32 0.0, %v3327
    %v3332 = vsub.f32 0.0, %v3328
    %v3333 = vmul.f32 %v3330, 1.442695
    %v3334 = vpow.pop %v3333
    %v3335 = vmul.f32 %v3331, 1.442695
    %v3336 = vpow.pop %v3335
    %v3337 = vmul.f32 %v3332, 1.442695
    %v3338 = vpow.pop %v3337
    %v3339 = vadd.f32 %v3334, 1.0
    %v3340 = vadd.f32 %v3336, 1.0
    %v3341 = vadd.f32 %v3338, 1.0
    %v3342 = vrcp.pop %v3339
    %v3343 = vrcp.pop %v3340
    %v3344 = vrcp.pop %v3341
    %v3345 = vtanh.pop %v3329
    %v3346 = vmul.f32 %v3343, %v3232
    %v3347 = vmul.f32 %v3342, %v3345
    %v3348 = vadd.f32 %v3346, %v3347
    %v3349 = vtanh.pop %v3348
    %v3350 = vmul.f32 %v3344, %v3349
    %v3351 = vsel %vm1379, %v3350, %v3231
    %3352 = vst [vmem:[#allocation5] sm:$0xff] %v3351
    %v3353 = vsel %vm1379, %v3348, %v3232
    %3354 = vst [vmem:[#allocation6] sm:$0xff] %v3353
    %v3355 = vmul.f32 %v3350, %v1388
    %v3356 = vpack.c.bf16 %v3355, %v3355
    %s3357 = scalar_lea.vmem [#allocation4], 12
    %3358 = vst [vmem:[%s3357] sm:$0xf] %v3356
    %v3359 = vld [vmem:[#allocation5] sm:$0xff]
    %v3360 = vld [vmem:[#allocation6] sm:$0xff]
    %v3361 = vld [vmem:[%s1398] sm:$0xff]
    %v3362 = vld [vmem:[%s1398 + $0x8] sm:$0xff]
    %v3363 = vunpack.c.l.bf16 %v3361
    %v3364 = vunpack.c.h.bf16 %v3361
    %v3365 = vunpack.c.l.bf16 %v3362
    %v3366 = vunpack.c.h.bf16 %v3362
    %v3367 = vadd.f32 %v3363, %v2679
    %v3368 = vadd.f32 %v3364, %v2683
    %v3369 = vadd.f32 %v3365, %v2687
    %v3370 = vadd.f32 %v3366, %v2691
    %v3371 = vpack.c.bf16 %v3359, %v3359
    %3372 = vmatprep.subr.bf16.mxu0 %v2826
    %3373 = vmatpush1.bf16.msra.mxu0 %v2825
    %3374 = vmatprep.subr.bf16.mxu0 %v2822
    %3375 = vmatpush1.bf16.msra.mxu0 %v2821
    %3376 = vmatprep.subr.bf16.mxu0 %v2818
    %3377 = vmatpush1.bf16.msra.mxu0 %v2817
    %3378 = vmatprep.subr.bf16.mxu0 %v2814
    %3379 = vmatpush1.bf16.msra.mxu0 %v2813
    %3380 = vmatprep.subr.bf16.mxu0 %v2810
    %3381 = vmatpush1.bf16.msra.mxu0 %v2809
    %3382 = vmatprep.subr.bf16.mxu0 %v2806
    %3383 = vmatpush1.bf16.msra.mxu0 %v2805
    %3384 = vmatprep.subr.bf16.mxu0 %v2802
    %3385 = vmatpush1.bf16.msra.mxu0 %v2801
    %3386 = vmatprep.subr.bf16.mxu0 %v2798
    %3387 = vmatpush1.bf16.msra.mxu0 %v2797
    %3388 = vmatprep.subr.bf16.mxu0 0
    %3389 = vmatpush2.bf16.msra.mxu0 0
    %3390 = vmatprep.subr.bf16.mxu0 0
    %3391 = vmatpush2.bf16.msra.mxu0 0
    %3392 = vmatprep.subr.bf16.mxu0 0
    %3393 = vmatpush2.bf16.msra.mxu0 0
    %3394 = vmatprep.subr.bf16.mxu0 0
    %3395 = vmatpush2.bf16.msra.mxu0 0
    %3396 = vmatprep.subr.bf16.mxu0 0
    %3397 = vmatpush2.bf16.msra.mxu0 0
    %3398 = vmatprep.subr.bf16.mxu0 0
    %3399 = vmatpush2.bf16.msra.mxu0 0
    %3400 = vmatprep.subr.bf16.mxu0 0
    %3401 = vmatpush2.bf16.msra.mxu0 0
    %3402 = vmatprep.subr.bf16.mxu0 0
    %3403 = vmatpush2.bf16.msra.mxu0 0
    %3404 = vmatprep.mubr.bf16.mxu0 0
    %3405 = vmatmul.mubr.bf16.gmra.mxu0 %v3371
    %v3406 = vpop.f32.mrf.mxu0
    %v3407 = vadd.f32 0.0, %v3406
    %v3408 = vpop.f32.mrf.mxu0
    %v3409 = vadd.f32 0.0, %v3408
    %v3410 = vpop.f32.mrf.mxu0
    %v3411 = vpop.f32.mrf.mxu0
    %3412 = vdwg.mxu0
    %3413 = vmatprep.subr.bf16.mxu0 %v2828
    %3414 = vmatpush1.bf16.msra.mxu0 %v2827
    %3415 = vmatprep.subr.bf16.mxu0 %v2824
    %3416 = vmatpush1.bf16.msra.mxu0 %v2823
    %3417 = vmatprep.subr.bf16.mxu0 %v2820
    %3418 = vmatpush1.bf16.msra.mxu0 %v2819
    %3419 = vmatprep.subr.bf16.mxu0 %v2816
    %3420 = vmatpush1.bf16.msra.mxu0 %v2815
    %3421 = vmatprep.subr.bf16.mxu0 %v2812
    %3422 = vmatpush1.bf16.msra.mxu0 %v2811
    %3423 = vmatprep.subr.bf16.mxu0 %v2808
    %3424 = vmatpush1.bf16.msra.mxu0 %v2807
    %3425 = vmatprep.subr.bf16.mxu0 %v2804
    %3426 = vmatpush1.bf16.msra.mxu0 %v2803
    %3427 = vmatprep.subr.bf16.mxu0 %v2800
    %3428 = vmatpush1.bf16.msra.mxu0 %v2799
    %3429 = vmatprep.subr.bf16.mxu0 0
    %3430 = vmatpush2.bf16.msra.mxu0 0
    %3431 = vmatprep.subr.bf16.mxu0 0
    %3432 = vmatpush2.bf16.msra.mxu0 0
    %3433 = vmatprep.subr.bf16.mxu0 0
    %3434 = vmatpush2.bf16.msra.mxu0 0
    %3435 = vmatprep.subr.bf16.mxu0 0
    %3436 = vmatpush2.bf16.msra.mxu0 0
    %3437 = vmatprep.subr.bf16.mxu0 0
    %3438 = vmatpush2.bf16.msra.mxu0 0
    %3439 = vmatprep.subr.bf16.mxu0 0
    %3440 = vmatpush2.bf16.msra.mxu0 0
    %3441 = vmatprep.subr.bf16.mxu0 0
    %3442 = vmatpush2.bf16.msra.mxu0 0
    %3443 = vmatprep.subr.bf16.mxu0 0
    %3444 = vmatpush2.bf16.msra.mxu0 0
    %3445 = vmatprep.mubr.bf16.mxu0 0
    %3446 = vmatmul.mubr.bf16.gmra.mxu0 %v3371
    %v3447 = vpop.f32.mrf.mxu0
    %v3448 = vadd.f32 0.0, %v3447
    %v3449 = vpop.f32.mrf.mxu0
    %v3450 = vadd.f32 0.0, %v3449
    %v3451 = vpop.f32.mrf.mxu0
    %v3452 = vpop.f32.mrf.mxu0
    %3453 = vdwg.mxu0
    %v3454 = vadd.f32 %v3367, %v3407
    %v3455 = vadd.f32 %v3368, %v3409
    %v3456 = vadd.f32 %v3369, %v3448
    %v3457 = vadd.f32 %v3370, %v3450
    %v3458 = vsub.f32 0.0, %v3454
    %v3459 = vsub.f32 0.0, %v3455
    %v3460 = vsub.f32 0.0, %v3456
    %v3461 = vmul.f32 %v3458, 1.442695
    %v3462 = vpow.pop %v3461
    %v3463 = vmul.f32 %v3459, 1.442695
    %v3464 = vpow.pop %v3463
    %v3465 = vmul.f32 %v3460, 1.442695
    %v3466 = vpow.pop %v3465
    %v3467 = vadd.f32 %v3462, 1.0
    %v3468 = vadd.f32 %v3464, 1.0
    %v3469 = vadd.f32 %v3466, 1.0
    %v3470 = vrcp.pop %v3467
    %v3471 = vrcp.pop %v3468
    %v3472 = vrcp.pop %v3469
    %v3473 = vtanh.pop %v3457
    %v3474 = vmul.f32 %v3471, %v3360
    %v3475 = vmul.f32 %v3470, %v3473
    %v3476 = vadd.f32 %v3474, %v3475
    %v3477 = vtanh.pop %v3476
    %v3478 = vmul.f32 %v3472, %v3477
    %v3479 = vsel %vm1522, %v3478, %v3359
    %3480 = vst [vmem:[#allocation5] sm:$0xff] %v3479
    %v3481 = vsel %vm1522, %v3476, %v3360
    %3482 = vst [vmem:[#allocation6] sm:$0xff] %v3481
    %v3483 = vmul.f32 %v3478, %v1531
    %v3484 = vpack.c.bf16 %v3483, %v3483
    %s3485 = scalar_lea.vmem [#allocation4], 16
    %3486 = vst [vmem:[%s3485] sm:$0xf] %v3484
    %v3487 = vld [vmem:[#allocation5] sm:$0xff]
    %v3488 = vld [vmem:[#allocation6] sm:$0xff]
    %v3489 = vld [vmem:[%s1541] sm:$0xff]
    %v3490 = vld [vmem:[%s1541 + $0x8] sm:$0xff]
    %v3491 = vunpack.c.l.bf16 %v3489
    %v3492 = vunpack.c.h.bf16 %v3489
    %v3493 = vunpack.c.l.bf16 %v3490
    %v3494 = vunpack.c.h.bf16 %v3490
    %v3495 = vadd.f32 %v3491, %v2679
    %v3496 = vadd.f32 %v3492, %v2683
    %v3497 = vadd.f32 %v3493, %v2687
    %v3498 = vadd.f32 %v3494, %v2691
    %v3499 = vpack.c.bf16 %v3487, %v3487
    %3500 = vmatprep.subr.bf16.mxu0 %v2826
    %3501 = vmatpush1.bf16.msra.mxu0 %v2825
    %3502 = vmatprep.subr.bf16.mxu0 %v2822
    %3503 = vmatpush1.bf16.msra.mxu0 %v2821
    %3504 = vmatprep.subr.bf16.mxu0 %v2818
    %3505 = vmatpush1.bf16.msra.mxu0 %v2817
    %3506 = vmatprep.subr.bf16.mxu0 %v2814
    %3507 = vmatpush1.bf16.msra.mxu0 %v2813
    %3508 = vmatprep.subr.bf16.mxu0 %v2810
    %3509 = vmatpush1.bf16.msra.mxu0 %v2809
    %3510 = vmatprep.subr.bf16.mxu0 %v2806
    %3511 = vmatpush1.bf16.msra.mxu0 %v2805
    %3512 = vmatprep.subr.bf16.mxu0 %v2802
    %3513 = vmatpush1.bf16.msra.mxu0 %v2801
    %3514 = vmatprep.subr.bf16.mxu0 %v2798
    %3515 = vmatpush1.bf16.msra.mxu0 %v2797
    %3516 = vmatprep.subr.bf16.mxu0 0
    %3517 = vmatpush2.bf16.msra.mxu0 0
    %3518 = vmatprep.subr.bf16.mxu0 0
    %3519 = vmatpush2.bf16.msra.mxu0 0
    %3520 = vmatprep.subr.bf16.mxu0 0
    %3521 = vmatpush2.bf16.msra.mxu0 0
    %3522 = vmatprep.subr.bf16.mxu0 0
    %3523 = vmatpush2.bf16.msra.mxu0 0
    %3524 = vmatprep.subr.bf16.mxu0 0
    %3525 = vmatpush2.bf16.msra.mxu0 0
    %3526 = vmatprep.subr.bf16.mxu0 0
    %3527 = vmatpush2.bf16.msra.mxu0 0
    %3528 = vmatprep.subr.bf16.mxu0 0
    %3529 = vmatpush2.bf16.msra.mxu0 0
    %3530 = vmatprep.subr.bf16.mxu0 0
    %3531 = vmatpush2.bf16.msra.mxu0 0
    %3532 = vmatprep.mubr.bf16.mxu0 0
    %3533 = vmatmul.mubr.bf16.gmra.mxu0 %v3499
    %v3534 = vpop.f32.mrf.mxu0
    %v3535 = vadd.f32 0.0, %v3534
    %v3536 = vpop.f32.mrf.mxu0
    %v3537 = vadd.f32 0.0, %v3536
    %v3538 = vpop.f32.mrf.mxu0
    %v3539 = vpop.f32.mrf.mxu0
    %3540 = vdwg.mxu0
    %3541 = vmatprep.subr.bf16.mxu0 %v2828
    %3542 = vmatpush1.bf16.msra.mxu0 %v2827
    %3543 = vmatprep.subr.bf16.mxu0 %v2824
    %3544 = vmatpush1.bf16.msra.mxu0 %v2823
    %3545 = vmatprep.subr.bf16.mxu0 %v2820
    %3546 = vmatpush1.bf16.msra.mxu0 %v2819
    %3547 = vmatprep.subr.bf16.mxu0 %v2816
    %3548 = vmatpush1.bf16.msra.mxu0 %v2815
    %3549 = vmatprep.subr.bf16.mxu0 %v2812
    %3550 = vmatpush1.bf16.msra.mxu0 %v2811
    %3551 = vmatprep.subr.bf16.mxu0 %v2808
    %3552 = vmatpush1.bf16.msra.mxu0 %v2807
    %3553 = vmatprep.subr.bf16.mxu0 %v2804
    %3554 = vmatpush1.bf16.msra.mxu0 %v2803
    %3555 = vmatprep.subr.bf16.mxu0 %v2800
    %3556 = vmatpush1.bf16.msra.mxu0 %v2799
    %3557 = vmatprep.subr.bf16.mxu0 0
    %3558 = vmatpush2.bf16.msra.mxu0 0
    %3559 = vmatprep.subr.bf16.mxu0 0
    %3560 = vmatpush2.bf16.msra.mxu0 0
    %3561 = vmatprep.subr.bf16.mxu0 0
    %3562 = vmatpush2.bf16.msra.mxu0 0
    %3563 = vmatprep.subr.bf16.mxu0 0
    %3564 = vmatpush2.bf16.msra.mxu0 0
    %3565 = vmatprep.subr.bf16.mxu0 0
    %3566 = vmatpush2.bf16.msra.mxu0 0
    %3567 = vmatprep.subr.bf16.mxu0 0
    %3568 = vmatpush2.bf16.msra.mxu0 0
    %3569 = vmatprep.subr.bf16.mxu0 0
    %3570 = vmatpush2.bf16.msra.mxu0 0
    %3571 = vmatprep.subr.bf16.mxu0 0
    %3572 = vmatpush2.bf16.msra.mxu0 0
    %3573 = vmatprep.mubr.bf16.mxu0 0
    %3574 = vmatmul.mubr.bf16.gmra.mxu0 %v3499
    %v3575 = vpop.f32.mrf.mxu0
    %v3576 = vadd.f32 0.0, %v3575
    %v3577 = vpop.f32.mrf.mxu0
    %v3578 = vadd.f32 0.0, %v3577
    %v3579 = vpop.f32.mrf.mxu0
    %v3580 = vpop.f32.mrf.mxu0
    %3581 = vdwg.mxu0
    %v3582 = vadd.f32 %v3495, %v3535
    %v3583 = vadd.f32 %v3496, %v3537
    %v3584 = vadd.f32 %v3497, %v3576
    %v3585 = vadd.f32 %v3498, %v3578
    %v3586 = vsub.f32 0.0, %v3582
    %v3587 = vsub.f32 0.0, %v3583
    %v3588 = vsub.f32 0.0, %v3584
    %v3589 = vmul.f32 %v3586, 1.442695
    %v3590 = vpow.pop %v3589
    %v3591 = vmul.f32 %v3587, 1.442695
    %v3592 = vpow.pop %v3591
    %v3593 = vmul.f32 %v3588, 1.442695
    %v3594 = vpow.pop %v3593
    %v3595 = vadd.f32 %v3590, 1.0
    %v3596 = vadd.f32 %v3592, 1.0
    %v3597 = vadd.f32 %v3594, 1.0
    %v3598 = vrcp.pop %v3595
    %v3599 = vrcp.pop %v3596
    %v3600 = vrcp.pop %v3597
    %v3601 = vtanh.pop %v3585
    %v3602 = vmul.f32 %v3599, %v3488
    %v3603 = vmul.f32 %v3598, %v3601
    %v3604 = vadd.f32 %v3602, %v3603
    %v3605 = vtanh.pop %v3604
    %v3606 = vmul.f32 %v3600, %v3605
    %v3607 = vsel %vm1665, %v3606, %v3487
    %3608 = vst [vmem:[#allocation5] sm:$0xff] %v3607
    %v3609 = vsel %vm1665, %v3604, %v3488
    %3610 = vst [vmem:[#allocation6] sm:$0xff] %v3609
    %v3611 = vmul.f32 %v3606, %v1674
    %v3612 = vpack.c.bf16 %v3611, %v3611
    %s3613 = scalar_lea.vmem [#allocation4], 20
    %3614 = vst [vmem:[%s3613] sm:$0xf] %v3612
    %v3615 = vld [vmem:[#allocation5] sm:$0xff]
    %v3616 = vld [vmem:[#allocation6] sm:$0xff]
    %v3617 = vld [vmem:[%s1684] sm:$0xff]
    %v3618 = vld [vmem:[%s1684 + $0x8] sm:$0xff]
    %v3619 = vunpack.c.l.bf16 %v3617
    %v3620 = vunpack.c.h.bf16 %v3617
    %v3621 = vunpack.c.l.bf16 %v3618
    %v3622 = vunpack.c.h.bf16 %v3618
    %v3623 = vadd.f32 %v3619, %v2679
    %v3624 = vadd.f32 %v3620, %v2683
    %v3625 = vadd.f32 %v3621, %v2687
    %v3626 = vadd.f32 %v3622, %v2691
    %v3627 = vpack.c.bf16 %v3615, %v3615
    %3628 = vmatprep.subr.bf16.mxu0 %v2826
    %3629 = vmatpush1.bf16.msra.mxu0 %v2825
    %3630 = vmatprep.subr.bf16.mxu0 %v2822
    %3631 = vmatpush1.bf16.msra.mxu0 %v2821
    %3632 = vmatprep.subr.bf16.mxu0 %v2818
    %3633 = vmatpush1.bf16.msra.mxu0 %v2817
    %3634 = vmatprep.subr.bf16.mxu0 %v2814
    %3635 = vmatpush1.bf16.msra.mxu0 %v2813
    %3636 = vmatprep.subr.bf16.mxu0 %v2810
    %3637 = vmatpush1.bf16.msra.mxu0 %v2809
    %3638 = vmatprep.subr.bf16.mxu0 %v2806
    %3639 = vmatpush1.bf16.msra.mxu0 %v2805
    %3640 = vmatprep.subr.bf16.mxu0 %v2802
    %3641 = vmatpush1.bf16.msra.mxu0 %v2801
    %3642 = vmatprep.subr.bf16.mxu0 %v2798
    %3643 = vmatpush1.bf16.msra.mxu0 %v2797
    %3644 = vmatprep.subr.bf16.mxu0 0
    %3645 = vmatpush2.bf16.msra.mxu0 0
    %3646 = vmatprep.subr.bf16.mxu0 0
    %3647 = vmatpush2.bf16.msra.mxu0 0
    %3648 = vmatprep.subr.bf16.mxu0 0
    %3649 = vmatpush2.bf16.msra.mxu0 0
    %3650 = vmatprep.subr.bf16.mxu0 0
    %3651 = vmatpush2.bf16.msra.mxu0 0
    %3652 = vmatprep.subr.bf16.mxu0 0
    %3653 = vmatpush2.bf16.msra.mxu0 0
    %3654 = vmatprep.subr.bf16.mxu0 0
    %3655 = vmatpush2.bf16.msra.mxu0 0
    %3656 = vmatprep.subr.bf16.mxu0 0
    %3657 = vmatpush2.bf16.msra.mxu0 0
    %3658 = vmatprep.subr.bf16.mxu0 0
    %3659 = vmatpush2.bf16.msra.mxu0 0
    %3660 = vmatprep.mubr.bf16.mxu0 0
    %3661 = vmatmul.mubr.bf16.gmra.mxu0 %v3627
    %v3662 = vpop.f32.mrf.mxu0
    %v3663 = vadd.f32 0.0, %v3662
    %v3664 = vpop.f32.mrf.mxu0
    %v3665 = vadd.f32 0.0, %v3664
    %v3666 = vpop.f32.mrf.mxu0
    %v3667 = vpop.f32.mrf.mxu0
    %3668 = vdwg.mxu0
    %3669 = vmatprep.subr.bf16.mxu0 %v2828
    %3670 = vmatpush1.bf16.msra.mxu0 %v2827
    %3671 = vmatprep.subr.bf16.mxu0 %v2824
    %3672 = vmatpush1.bf16.msra.mxu0 %v2823
    %3673 = vmatprep.subr.bf16.mxu0 %v2820
    %3674 = vmatpush1.bf16.msra.mxu0 %v2819
    %3675 = vmatprep.subr.bf16.mxu0 %v2816
    %3676 = vmatpush1.bf16.msra.mxu0 %v2815
    %3677 = vmatprep.subr.bf16.mxu0 %v2812
    %3678 = vmatpush1.bf16.msra.mxu0 %v2811
    %3679 = vmatprep.subr.bf16.mxu0 %v2808
    %3680 = vmatpush1.bf16.msra.mxu0 %v2807
    %3681 = vmatprep.subr.bf16.mxu0 %v2804
    %3682 = vmatpush1.bf16.msra.mxu0 %v2803
    %3683 = vmatprep.subr.bf16.mxu0 %v2800
    %3684 = vmatpush1.bf16.msra.mxu0 %v2799
    %3685 = vmatprep.subr.bf16.mxu0 0
    %3686 = vmatpush2.bf16.msra.mxu0 0
    %3687 = vmatprep.subr.bf16.mxu0 0
    %3688 = vmatpush2.bf16.msra.mxu0 0
    %3689 = vmatprep.subr.bf16.mxu0 0
    %3690 = vmatpush2.bf16.msra.mxu0 0
    %3691 = vmatprep.subr.bf16.mxu0 0
    %3692 = vmatpush2.bf16.msra.mxu0 0
    %3693 = vmatprep.subr.bf16.mxu0 0
    %3694 = vmatpush2.bf16.msra.mxu0 0
    %3695 = vmatprep.subr.bf16.mxu0 0
    %3696 = vmatpush2.bf16.msra.mxu0 0
    %3697 = vmatprep.subr.bf16.mxu0 0
    %3698 = vmatpush2.bf16.msra.mxu0 0
    %3699 = vmatprep.subr.bf16.mxu0 0
    %3700 = vmatpush2.bf16.msra.mxu0 0
    %3701 = vmatprep.mubr.bf16.mxu0 0
    %3702 = vmatmul.mubr.bf16.gmra.mxu0 %v3627
    %v3703 = vpop.f32.mrf.mxu0
    %v3704 = vadd.f32 0.0, %v3703
    %v3705 = vpop.f32.mrf.mxu0
    %v3706 = vadd.f32 0.0, %v3705
    %v3707 = vpop.f32.mrf.mxu0
    %v3708 = vpop.f32.mrf.mxu0
    %3709 = vdwg.mxu0
    %v3710 = vadd.f32 %v3623, %v3663
    %v3711 = vadd.f32 %v3624, %v3665
    %v3712 = vadd.f32 %v3625, %v3704
    %v3713 = vadd.f32 %v3626, %v3706
    %v3714 = vsub.f32 0.0, %v3710
    %v3715 = vsub.f32 0.0, %v3711
    %v3716 = vsub.f32 0.0, %v3712
    %v3717 = vmul.f32 %v3714, 1.442695
    %v3718 = vpow.pop %v3717
    %v3719 = vmul.f32 %v3715, 1.442695
    %v3720 = vpow.pop %v3719
    %v3721 = vmul.f32 %v3716, 1.442695
    %v3722 = vpow.pop %v3721
    %v3723 = vadd.f32 %v3718, 1.0
    %v3724 = vadd.f32 %v3720, 1.0
    %v3725 = vadd.f32 %v3722, 1.0
    %v3726 = vrcp.pop %v3723
    %v3727 = vrcp.pop %v3724
    %v3728 = vrcp.pop %v3725
    %v3729 = vtanh.pop %v3713
    %v3730 = vmul.f32 %v3727, %v3616
    %v3731 = vmul.f32 %v3726, %v3729
    %v3732 = vadd.f32 %v3730, %v3731
    %v3733 = vtanh.pop %v3732
    %v3734 = vmul.f32 %v3728, %v3733
    %v3735 = vsel %vm1808, %v3734, %v3615
    %3736 = vst [vmem:[#allocation5] sm:$0xff] %v3735
    %v3737 = vsel %vm1808, %v3732, %v3616
    %3738 = vst [vmem:[#allocation6] sm:$0xff] %v3737
    %v3739 = vmul.f32 %v3734, %v1817
    %v3740 = vpack.c.bf16 %v3739, %v3739
    %s3741 = scalar_lea.vmem [#allocation4], 24
    %3742 = vst [vmem:[%s3741] sm:$0xf] %v3740
    %v3743 = vld [vmem:[#allocation5] sm:$0xff]
    %v3744 = vld [vmem:[#allocation6] sm:$0xff]
    %v3745 = vld [vmem:[%s1827] sm:$0xff]
    %v3746 = vld [vmem:[%s1827 + $0x8] sm:$0xff]
    %v3747 = vunpack.c.l.bf16 %v3745
    %v3748 = vunpack.c.h.bf16 %v3745
    %v3749 = vunpack.c.l.bf16 %v3746
    %v3750 = vunpack.c.h.bf16 %v3746
    %v3751 = vadd.f32 %v3747, %v2679
    %v3752 = vadd.f32 %v3748, %v2683
    %v3753 = vadd.f32 %v3749, %v2687
    %v3754 = vadd.f32 %v3750, %v2691
    %v3755 = vpack.c.bf16 %v3743, %v3743
    %3756 = vmatprep.subr.bf16.mxu0 %v2826
    %3757 = vmatpush1.bf16.msra.mxu0 %v2825
    %3758 = vmatprep.subr.bf16.mxu0 %v2822
    %3759 = vmatpush1.bf16.msra.mxu0 %v2821
    %3760 = vmatprep.subr.bf16.mxu0 %v2818
    %3761 = vmatpush1.bf16.msra.mxu0 %v2817
    %3762 = vmatprep.subr.bf16.mxu0 %v2814
    %3763 = vmatpush1.bf16.msra.mxu0 %v2813
    %3764 = vmatprep.subr.bf16.mxu0 %v2810
    %3765 = vmatpush1.bf16.msra.mxu0 %v2809
    %3766 = vmatprep.subr.bf16.mxu0 %v2806
    %3767 = vmatpush1.bf16.msra.mxu0 %v2805
    %3768 = vmatprep.subr.bf16.mxu0 %v2802
    %3769 = vmatpush1.bf16.msra.mxu0 %v2801
    %3770 = vmatprep.subr.bf16.mxu0 %v2798
    %3771 = vmatpush1.bf16.msra.mxu0 %v2797
    %3772 = vmatprep.subr.bf16.mxu0 0
    %3773 = vmatpush2.bf16.msra.mxu0 0
    %3774 = vmatprep.subr.bf16.mxu0 0
    %3775 = vmatpush2.bf16.msra.mxu0 0
    %3776 = vmatprep.subr.bf16.mxu0 0
    %3777 = vmatpush2.bf16.msra.mxu0 0
    %3778 = vmatprep.subr.bf16.mxu0 0
    %3779 = vmatpush2.bf16.msra.mxu0 0
    %3780 = vmatprep.subr.bf16.mxu0 0
    %3781 = vmatpush2.bf16.msra.mxu0 0
    %3782 = vmatprep.subr.bf16.mxu0 0
    %3783 = vmatpush2.bf16.msra.mxu0 0
    %3784 = vmatprep.subr.bf16.mxu0 0
    %3785 = vmatpush2.bf16.msra.mxu0 0
    %3786 = vmatprep.subr.bf16.mxu0 0
    %3787 = vmatpush2.bf16.msra.mxu0 0
    %3788 = vmatprep.mubr.bf16.mxu0 0
    %3789 = vmatmul.mubr.bf16.gmra.mxu0 %v3755
    %v3790 = vpop.f32.mrf.mxu0
    %v3791 = vadd.f32 0.0, %v3790
    %v3792 = vpop.f32.mrf.mxu0
    %v3793 = vadd.f32 0.0, %v3792
    %v3794 = vpop.f32.mrf.mxu0
    %v3795 = vpop.f32.mrf.mxu0
    %3796 = vdwg.mxu0
    %3797 = vmatprep.subr.bf16.mxu0 %v2828
    %3798 = vmatpush1.bf16.msra.mxu0 %v2827
    %3799 = vmatprep.subr.bf16.mxu0 %v2824
    %3800 = vmatpush1.bf16.msra.mxu0 %v2823
    %3801 = vmatprep.subr.bf16.mxu0 %v2820
    %3802 = vmatpush1.bf16.msra.mxu0 %v2819
    %3803 = vmatprep.subr.bf16.mxu0 %v2816
    %3804 = vmatpush1.bf16.msra.mxu0 %v2815
    %3805 = vmatprep.subr.bf16.mxu0 %v2812
    %3806 = vmatpush1.bf16.msra.mxu0 %v2811
    %3807 = vmatprep.subr.bf16.mxu0 %v2808
    %3808 = vmatpush1.bf16.msra.mxu0 %v2807
    %3809 = vmatprep.subr.bf16.mxu0 %v2804
    %3810 = vmatpush1.bf16.msra.mxu0 %v2803
    %3811 = vmatprep.subr.bf16.mxu0 %v2800
    %3812 = vmatpush1.bf16.msra.mxu0 %v2799
    %3813 = vmatprep.subr.bf16.mxu0 0
    %3814 = vmatpush2.bf16.msra.mxu0 0
    %3815 = vmatprep.subr.bf16.mxu0 0
    %3816 = vmatpush2.bf16.msra.mxu0 0
    %3817 = vmatprep.subr.bf16.mxu0 0
    %3818 = vmatpush2.bf16.msra.mxu0 0
    %3819 = vmatprep.subr.bf16.mxu0 0
    %3820 = vmatpush2.bf16.msra.mxu0 0
    %3821 = vmatprep.subr.bf16.mxu0 0
    %3822 = vmatpush2.bf16.msra.mxu0 0
    %3823 = vmatprep.subr.bf16.mxu0 0
    %3824 = vmatpush2.bf16.msra.mxu0 0
    %3825 = vmatprep.subr.bf16.mxu0 0
    %3826 = vmatpush2.bf16.msra.mxu0 0
    %3827 = vmatprep.subr.bf16.mxu0 0
    %3828 = vmatpush2.bf16.msra.mxu0 0
    %3829 = vmatprep.mubr.bf16.mxu0 0
    %3830 = vmatmul.mubr.bf16.gmra.mxu0 %v3755
    %v3831 = vpop.f32.mrf.mxu0
    %v3832 = vadd.f32 0.0, %v3831
    %v3833 = vpop.f32.mrf.mxu0
    %v3834 = vadd.f32 0.0, %v3833
    %v3835 = vpop.f32.mrf.mxu0
    %v3836 = vpop.f32.mrf.mxu0
    %3837 = vdwg.mxu0
    %v3838 = vadd.f32 %v3751, %v3791
    %v3839 = vadd.f32 %v3752, %v3793
    %v3840 = vadd.f32 %v3753, %v3832
    %v3841 = vadd.f32 %v3754, %v3834
    %v3842 = vsub.f32 0.0, %v3838
    %v3843 = vsub.f32 0.0, %v3839
    %v3844 = vsub.f32 0.0, %v3840
    %v3845 = vmul.f32 %v3842, 1.442695
    %v3846 = vpow.pop %v3845
    %v3847 = vmul.f32 %v3843, 1.442695
    %v3848 = vpow.pop %v3847
    %v3849 = vmul.f32 %v3844, 1.442695
    %v3850 = vpow.pop %v3849
    %v3851 = vadd.f32 %v3846, 1.0
    %v3852 = vadd.f32 %v3848, 1.0
    %v3853 = vadd.f32 %v3850, 1.0
    %v3854 = vrcp.pop %v3851
    %v3855 = vrcp.pop %v3852
    %v3856 = vrcp.pop %v3853
    %v3857 = vtanh.pop %v3841
    %v3858 = vmul.f32 %v3855, %v3744
    %v3859 = vmul.f32 %v3854, %v3857
    %v3860 = vadd.f32 %v3858, %v3859
    %v3861 = vtanh.pop %v3860
    %v3862 = vmul.f32 %v3856, %v3861
    %v3863 = vsel %vm1951, %v3862, %v3743
    %3864 = vst [vmem:[#allocation5] sm:$0xff] %v3863
    %v3865 = vsel %vm1951, %v3860, %v3744
    %3866 = vst [vmem:[#allocation6] sm:$0xff] %v3865
    %v3867 = vmul.f32 %v3862, %v1960
    %v3868 = vpack.c.bf16 %v3867, %v3867
    %s3869 = scalar_lea.vmem [#allocation4], 28
    %3870 = vst [vmem:[%s3869] sm:$0xf] %v3868
    %v3871 = vld [vmem:[#allocation5] sm:$0xff]
    %v3872 = vld [vmem:[#allocation6] sm:$0xff]
    %v3873 = vld [vmem:[%s1970] sm:$0xff]
    %v3874 = vld [vmem:[%s1970 + $0x8] sm:$0xff]
    %v3875 = vunpack.c.l.bf16 %v3873
    %v3876 = vunpack.c.h.bf16 %v3873
    %v3877 = vunpack.c.l.bf16 %v3874
    %v3878 = vunpack.c.h.bf16 %v3874
    %v3879 = vadd.f32 %v3875, %v2679
    %v3880 = vadd.f32 %v3876, %v2683
    %v3881 = vadd.f32 %v3877, %v2687
    %v3882 = vadd.f32 %v3878, %v2691
    %v3883 = vpack.c.bf16 %v3871, %v3871
    %3884 = vmatprep.subr.bf16.mxu0 %v2826
    %3885 = vmatpush1.bf16.msra.mxu0 %v2825
    %3886 = vmatprep.subr.bf16.mxu0 %v2822
    %3887 = vmatpush1.bf16.msra.mxu0 %v2821
    %3888 = vmatprep.subr.bf16.mxu0 %v2818
    %3889 = vmatpush1.bf16.msra.mxu0 %v2817
    %3890 = vmatprep.subr.bf16.mxu0 %v2814
    %3891 = vmatpush1.bf16.msra.mxu0 %v2813
    %3892 = vmatprep.subr.bf16.mxu0 %v2810
    %3893 = vmatpush1.bf16.msra.mxu0 %v2809
    %3894 = vmatprep.subr.bf16.mxu0 %v2806
    %3895 = vmatpush1.bf16.msra.mxu0 %v2805
    %3896 = vmatprep.subr.bf16.mxu0 %v2802
    %3897 = vmatpush1.bf16.msra.mxu0 %v2801
    %3898 = vmatprep.subr.bf16.mxu0 %v2798
    %3899 = vmatpush1.bf16.msra.mxu0 %v2797
    %3900 = vmatprep.subr.bf16.mxu0 0
    %3901 = vmatpush2.bf16.msra.mxu0 0
    %3902 = vmatprep.subr.bf16.mxu0 0
    %3903 = vmatpush2.bf16.msra.mxu0 0
    %3904 = vmatprep.subr.bf16.mxu0 0
    %3905 = vmatpush2.bf16.msra.mxu0 0
    %3906 = vmatprep.subr.bf16.mxu0 0
    %3907 = vmatpush2.bf16.msra.mxu0 0
    %3908 = vmatprep.subr.bf16.mxu0 0
    %3909 = vmatpush2.bf16.msra.mxu0 0
    %3910 = vmatprep.subr.bf16.mxu0 0
    %3911 = vmatpush2.bf16.msra.mxu0 0
    %3912 = vmatprep.subr.bf16.mxu0 0
    %3913 = vmatpush2.bf16.msra.mxu0 0
    %3914 = vmatprep.subr.bf16.mxu0 0
    %3915 = vmatpush2.bf16.msra.mxu0 0
    %3916 = vmatprep.mubr.bf16.mxu0 0
    %3917 = vmatmul.mubr.bf16.gmra.mxu0 %v3883
    %v3918 = vpop.f32.mrf.mxu0
    %v3919 = vadd.f32 0.0, %v3918
    %v3920 = vpop.f32.mrf.mxu0
    %v3921 = vadd.f32 0.0, %v3920
    %v3922 = vpop.f32.mrf.mxu0
    %v3923 = vpop.f32.mrf.mxu0
    %3924 = vdwg.mxu0
    %3925 = vmatprep.subr.bf16.mxu0 %v2828
    %3926 = vmatpush1.bf16.msra.mxu0 %v2827
    %3927 = vmatprep.subr.bf16.mxu0 %v2824
    %3928 = vmatpush1.bf16.msra.mxu0 %v2823
    %3929 = vmatprep.subr.bf16.mxu0 %v2820
    %3930 = vmatpush1.bf16.msra.mxu0 %v2819
    %3931 = vmatprep.subr.bf16.mxu0 %v2816
    %3932 = vmatpush1.bf16.msra.mxu0 %v2815
    %3933 = vmatprep.subr.bf16.mxu0 %v2812
    %3934 = vmatpush1.bf16.msra.mxu0 %v2811
    %3935 = vmatprep.subr.bf16.mxu0 %v2808
    %3936 = vmatpush1.bf16.msra.mxu0 %v2807
    %3937 = vmatprep.subr.bf16.mxu0 %v2804
    %3938 = vmatpush1.bf16.msra.mxu0 %v2803
    %3939 = vmatprep.subr.bf16.mxu0 %v2800
    %3940 = vmatpush1.bf16.msra.mxu0 %v2799
    %3941 = vmatprep.subr.bf16.mxu0 0
    %3942 = vmatpush2.bf16.msra.mxu0 0
    %3943 = vmatprep.subr.bf16.mxu0 0
    %3944 = vmatpush2.bf16.msra.mxu0 0
    %3945 = vmatprep.subr.bf16.mxu0 0
    %3946 = vmatpush2.bf16.msra.mxu0 0
    %3947 = vmatprep.subr.bf16.mxu0 0
    %3948 = vmatpush2.bf16.msra.mxu0 0
    %3949 = vmatprep.subr.bf16.mxu0 0
    %3950 = vmatpush2.bf16.msra.mxu0 0
    %3951 = vmatprep.subr.bf16.mxu0 0
    %3952 = vmatpush2.bf16.msra.mxu0 0
    %3953 = vmatprep.subr.bf16.mxu0 0
    %3954 = vmatpush2.bf16.msra.mxu0 0
    %3955 = vmatprep.subr.bf16.mxu0 0
    %3956 = vmatpush2.bf16.msra.mxu0 0
    %3957 = vmatprep.mubr.bf16.mxu0 0
    %3958 = vmatmul.mubr.bf16.gmra.mxu0 %v3883
    %v3959 = vpop.f32.mrf.mxu0
    %v3960 = vadd.f32 0.0, %v3959
    %v3961 = vpop.f32.mrf.mxu0
    %v3962 = vadd.f32 0.0, %v3961
    %v3963 = vpop.f32.mrf.mxu0
    %v3964 = vpop.f32.mrf.mxu0
    %3965 = vdwg.mxu0
    %v3966 = vadd.f32 %v3879, %v3919
    %v3967 = vadd.f32 %v3880, %v3921
    %v3968 = vadd.f32 %v3881, %v3960
    %v3969 = vadd.f32 %v3882, %v3962
    %v3970 = vsub.f32 0.0, %v3966
    %v3971 = vsub.f32 0.0, %v3967
    %v3972 = vsub.f32 0.0, %v3968
    %v3973 = vmul.f32 %v3970, 1.442695
    %v3974 = vpow.pop %v3973
    %v3975 = vmul.f32 %v3971, 1.442695
    %v3976 = vpow.pop %v3975
    %v3977 = vmul.f32 %v3972, 1.442695
    %v3978 = vpow.pop %v3977
    %v3979 = vadd.f32 %v3974, 1.0
    %v3980 = vadd.f32 %v3976, 1.0
    %v3981 = vadd.f32 %v3978, 1.0
    %v3982 = vrcp.pop %v3979
    %v3983 = vrcp.pop %v3980
    %v3984 = vrcp.pop %v3981
    %v3985 = vtanh.pop %v3969
    %v3986 = vmul.f32 %v3983, %v3872
    %v3987 = vmul.f32 %v3982, %v3985
    %v3988 = vadd.f32 %v3986, %v3987
    %v3989 = vtanh.pop %v3988
    %v3990 = vmul.f32 %v3984, %v3989
    %v3991 = vsel %vm2094, %v3990, %v3871
    %3992 = vst [vmem:[#allocation5] sm:$0xff] %v3991
    %v3993 = vsel %vm2094, %v3988, %v3872
    %3994 = vst [vmem:[#allocation6] sm:$0xff] %v3993
    %v3995 = vmul.f32 %v3990, %v2103
    %v3996 = vpack.c.bf16 %v3995, %v3995
    %s3997 = scalar_lea.vmem [#allocation4], 32
    %3998 = vst [vmem:[%s3997] sm:$0xf] %v3996
    %v3999 = vld [vmem:[#allocation5] sm:$0xff]
    %v4000 = vpack.c.bf16 %v3999, %v3999
    %s4001 = scalar_lea.vmem [#allocation12], 128
    %v4002 = vld [vmem:[%s4001] sm:$0xf]
    %v4003 = vld [vmem:[%s4001 + $0x4] sm:$0xf]
    %v4004 = vld [vmem:[%s4001 + $0x8] sm:$0xf]
    %v4005 = vld [vmem:[%s4001 + $0xc] sm:$0xf]
    %v4006 = vld [vmem:[%s4001 + $0x10] sm:$0xf]
    %v4007 = vld [vmem:[%s4001 + $0x14] sm:$0xf]
    %v4008 = vld [vmem:[%s4001 + $0x18] sm:$0xf]
    %v4009 = vld [vmem:[%s4001 + $0x1c] sm:$0xf]
    %v4010 = vld [vmem:[%s4001 + $0x20] sm:$0xf]
    %v4011 = vld [vmem:[%s4001 + $0x24] sm:$0xf]
    %v4012 = vld [vmem:[%s4001 + $0x28] sm:$0xf]
    %v4013 = vld [vmem:[%s4001 + $0x2c] sm:$0xf]
    %v4014 = vld [vmem:[%s4001 + $0x30] sm:$0xf]
    %v4015 = vld [vmem:[%s4001 + $0x34] sm:$0xf]
    %v4016 = vld [vmem:[%s4001 + $0x38] sm:$0xf]
    %v4017 = vld [vmem:[%s4001 + $0x3c] sm:$0xf]
    %v4018 = vld [vmem:[#allocation4] sm:$0xf]
    %v4019 = vld [vmem:[#allocation12] sm:$0xf]
    %v4020 = vld [vmem:[#allocation12 + $0x4] sm:$0xf]
    %v4021 = vld [vmem:[#allocation12 + $0x8] sm:$0xf]
    %v4022 = vld [vmem:[#allocation12 + $0xc] sm:$0xf]
    %v4023 = vld [vmem:[#allocation12 + $0x10] sm:$0xf]
    %v4024 = vld [vmem:[#allocation12 + $0x14] sm:$0xf]
    %v4025 = vld [vmem:[#allocation12 + $0x18] sm:$0xf]
    %v4026 = vld [vmem:[#allocation12 + $0x1c] sm:$0xf]
    %v4027 = vld [vmem:[#allocation12 + $0x20] sm:$0xf]
    %v4028 = vld [vmem:[#allocation12 + $0x24] sm:$0xf]
    %v4029 = vld [vmem:[#allocation12 + $0x28] sm:$0xf]
    %v4030 = vld [vmem:[#allocation12 + $0x2c] sm:$0xf]
    %v4031 = vld [vmem:[#allocation12 + $0x30] sm:$0xf]
    %v4032 = vld [vmem:[#allocation12 + $0x34] sm:$0xf]
    %v4033 = vld [vmem:[#allocation12 + $0x38] sm:$0xf]
    %v4034 = vld [vmem:[#allocation12 + $0x3c] sm:$0xf]
    %v4051 = vunpack.c.l.b16 %v4019
    %v4052 = vunpack.c.l.b16 %v4020
    %v4053 = vunpack.c.l.b16 %v4021
    %v4054 = vunpack.c.l.b16 %v4022
    %v4055 = vunpack.c.l.b16 %v4023
    %v4056 = vunpack.c.l.b16 %v4024
    %v4057 = vunpack.c.l.b16 %v4025
    %v4058 = vunpack.c.l.b16 %v4026
    %v4059 = vunpack.c.l.b16 %v4027
    %v4060 = vunpack.c.l.b16 %v4028
    %v4061 = vunpack.c.l.b16 %v4029
    %v4062 = vunpack.c.l.b16 %v4030
    %v4063 = vunpack.c.l.b16 %v4031
    %v4064 = vunpack.c.l.b16 %v4032
    %v4065 = vunpack.c.l.b16 %v4033
    %v4066 = vunpack.c.l.b16 %v4034
    %v4067 = vpack.c.b16 %v4052, %v4051
    %v4068 = vpack.c.b16 %v4054, %v4053
    %v4069 = vpack.c.b16 %v4056, %v4055
    %v4070 = vpack.c.b16 %v4058, %v4057
    %v4071 = vpack.c.b16 %v4060, %v4059
    %v4072 = vpack.c.b16 %v4062, %v4061
    %v4073 = vpack.c.b16 %v4064, %v4063
    %v4074 = vpack.c.b16 %v4066, %v4065
    %4083 = vmatprep.subr.bf16.mxu0 0
    %4084 = vmatpush1.bf16.msra.mxu0 %v4074
    %4085 = vmatprep.subr.bf16.mxu0 0
    %4086 = vmatpush1.bf16.msra.mxu0 %v4073
    %4087 = vmatprep.subr.bf16.mxu0 0
    %4088 = vmatpush1.bf16.msra.mxu0 %v4072
    %4089 = vmatprep.subr.bf16.mxu0 0
    %4090 = vmatpush1.bf16.msra.mxu0 %v4071
    %4091 = vmatprep.subr.bf16.mxu0 0
    %4092 = vmatpush1.bf16.msra.mxu0 %v4070
    %4093 = vmatprep.subr.bf16.mxu0 0
    %4094 = vmatpush1.bf16.msra.mxu0 %v4069
    %4095 = vmatprep.subr.bf16.mxu0 0
    %4096 = vmatpush1.bf16.msra.mxu0 %v4068
    %4097 = vmatprep.subr.bf16.mxu0 0
    %4098 = vmatpush1.bf16.msra.mxu0 %v4067
    %4099 = vmatprep.subr.bf16.mxu0 0
    %4100 = vmatpush2.bf16.msra.mxu0 0
    %4101 = vmatprep.subr.bf16.mxu0 0
    %4102 = vmatpush2.bf16.msra.mxu0 0
    %4103 = vmatprep.subr.bf16.mxu0 0
    %4104 = vmatpush2.bf16.msra.mxu0 0
    %4105 = vmatprep.subr.bf16.mxu0 0
    %4106 = vmatpush2.bf16.msra.mxu0 0
    %4107 = vmatprep.subr.bf16.mxu0 0
    %4108 = vmatpush2.bf16.msra.mxu0 0
    %4109 = vmatprep.subr.bf16.mxu0 0
    %4110 = vmatpush2.bf16.msra.mxu0 0
    %4111 = vmatprep.subr.bf16.mxu0 0
    %4112 = vmatpush2.bf16.msra.mxu0 0
    %4113 = vmatprep.subr.bf16.mxu0 0
    %4114 = vmatpush2.bf16.msra.mxu0 0
    %4115 = vmatprep.mubr.bf16.mxu0 0
    %4116 = vmatmul.mubr.bf16.gmra.mxu0 %v4018
    %v4117 = vpop.f32.mrf.mxu0
    %v4118 = vadd.f32 0.0, %v4117
    %v4119 = vpop.f32.mrf.mxu0
    %v4120 = vpop.f32.mrf.mxu0
    %v4121 = vpop.f32.mrf.mxu0
    %4122 = vdwg.mxu0
    %v4139 = vunpack.c.l.b16 %v4002
    %v4140 = vunpack.c.l.b16 %v4003
    %v4141 = vunpack.c.l.b16 %v4004
    %v4142 = vunpack.c.l.b16 %v4005
    %v4143 = vunpack.c.l.b16 %v4006
    %v4144 = vunpack.c.l.b16 %v4007
    %v4145 = vunpack.c.l.b16 %v4008
    %v4146 = vunpack.c.l.b16 %v4009
    %v4147 = vunpack.c.l.b16 %v4010
    %v4148 = vunpack.c.l.b16 %v4011
    %v4149 = vunpack.c.l.b16 %v4012
    %v4150 = vunpack.c.l.b16 %v4013
    %v4151 = vunpack.c.l.b16 %v4014
    %v4152 = vunpack.c.l.b16 %v4015
    %v4153 = vunpack.c.l.b16 %v4016
    %v4154 = vunpack.c.l.b16 %v4017
    %v4155 = vpack.c.b16 %v4140, %v4139
    %v4156 = vpack.c.b16 %v4142, %v4141
    %v4157 = vpack.c.b16 %v4144, %v4143
    %v4158 = vpack.c.b16 %v4146, %v4145
    %v4159 = vpack.c.b16 %v4148, %v4147
    %v4160 = vpack.c.b16 %v4150, %v4149
    %v4161 = vpack.c.b16 %v4152, %v4151
    %v4162 = vpack.c.b16 %v4154, %v4153
    %4171 = vmatprep.subr.bf16.mxu0 0
    %4172 = vmatpush1.bf16.msra.mxu0 %v4162
    %4173 = vmatprep.subr.bf16.mxu0 0
    %4174 = vmatpush1.bf16.msra.mxu0 %v4161
    %4175 = vmatprep.subr.bf16.mxu0 0
    %4176 = vmatpush1.bf16.msra.mxu0 %v4160
    %4177 = vmatprep.subr.bf16.mxu0 0
    %4178 = vmatpush1.bf16.msra.mxu0 %v4159
    %4179 = vmatprep.subr.bf16.mxu0 0
    %4180 = vmatpush1.bf16.msra.mxu0 %v4158
    %4181 = vmatprep.subr.bf16.mxu0 0
    %4182 = vmatpush1.bf16.msra.mxu0 %v4157
    %4183 = vmatprep.subr.bf16.mxu0 0
    %4184 = vmatpush1.bf16.msra.mxu0 %v4156
    %4185 = vmatprep.subr.bf16.mxu0 0
    %4186 = vmatpush1.bf16.msra.mxu0 %v4155
    %4187 = vmatprep.subr.bf16.mxu0 0
    %4188 = vmatpush2.bf16.msra.mxu0 0
    %4189 = vmatprep.subr.bf16.mxu0 0
    %4190 = vmatpush2.bf16.msra.mxu0 0
    %4191 = vmatprep.subr.bf16.mxu0 0
    %4192 = vmatpush2.bf16.msra.mxu0 0
    %4193 = vmatprep.subr.bf16.mxu0 0
    %4194 = vmatpush2.bf16.msra.mxu0 0
    %4195 = vmatprep.subr.bf16.mxu0 0
    %4196 = vmatpush2.bf16.msra.mxu0 0
    %4197 = vmatprep.subr.bf16.mxu0 0
    %4198 = vmatpush2.bf16.msra.mxu0 0
    %4199 = vmatprep.subr.bf16.mxu0 0
    %4200 = vmatpush2.bf16.msra.mxu0 0
    %4201 = vmatprep.subr.bf16.mxu0 0
    %4202 = vmatpush2.bf16.msra.mxu0 0
    %4203 = vmatprep.mubr.bf16.mxu0 0
    %4204 = vmatmul.mubr.bf16.gmra.mxu0 %v4000
    %v4205 = vpop.f32.mrf.mxu0
    %v4206 = vadd.f32 %v4118, %v4205
    %v4207 = vpop.f32.mrf.mxu0
    %v4208 = vpop.f32.mrf.mxu0
    %v4209 = vpop.f32.mrf.mxu0
    %4210 = vdwg.mxu0
    %v4211 = vld [vmem:[%s3101] sm:$0xf]
    %s4212 = scalar_lea.vmem [#allocation12], 64
    %v4213 = vld [vmem:[%s4212] sm:$0xf]
    %v4214 = vld [vmem:[%s4212 + $0x4] sm:$0xf]
    %v4215 = vld [vmem:[%s4212 + $0x8] sm:$0xf]
    %v4216 = vld [vmem:[%s4212 + $0xc] sm:$0xf]
    %v4217 = vld [vmem:[%s4212 + $0x10] sm:$0xf]
    %v4218 = vld [vmem:[%s4212 + $0x14] sm:$0xf]
    %v4219 = vld [vmem:[%s4212 + $0x18] sm:$0xf]
    %v4220 = vld [vmem:[%s4212 + $0x1c] sm:$0xf]
    %v4221 = vld [vmem:[%s4212 + $0x20] sm:$0xf]
    %v4222 = vld [vmem:[%s4212 + $0x24] sm:$0xf]
    %v4223 = vld [vmem:[%s4212 + $0x28] sm:$0xf]
    %v4224 = vld [vmem:[%s4212 + $0x2c] sm:$0xf]
    %v4225 = vld [vmem:[%s4212 + $0x30] sm:$0xf]
    %v4226 = vld [vmem:[%s4212 + $0x34] sm:$0xf]
    %v4227 = vld [vmem:[%s4212 + $0x38] sm:$0xf]
    %v4228 = vld [vmem:[%s4212 + $0x3c] sm:$0xf]
    %v4245 = vunpack.c.l.b16 %v4213
    %v4246 = vunpack.c.l.b16 %v4214
    %v4247 = vunpack.c.l.b16 %v4215
    %v4248 = vunpack.c.l.b16 %v4216
    %v4249 = vunpack.c.l.b16 %v4217
    %v4250 = vunpack.c.l.b16 %v4218
    %v4251 = vunpack.c.l.b16 %v4219
    %v4252 = vunpack.c.l.b16 %v4220
    %v4253 = vunpack.c.l.b16 %v4221
    %v4254 = vunpack.c.l.b16 %v4222
    %v4255 = vunpack.c.l.b16 %v4223
    %v4256 = vunpack.c.l.b16 %v4224
    %v4257 = vunpack.c.l.b16 %v4225
    %v4258 = vunpack.c.l.b16 %v4226
    %v4259 = vunpack.c.l.b16 %v4227
    %v4260 = vunpack.c.l.b16 %v4228
    %v4261 = vpack.c.b16 %v4246, %v4245
    %v4262 = vpack.c.b16 %v4248, %v4247
    %v4263 = vpack.c.b16 %v4250, %v4249
    %v4264 = vpack.c.b16 %v4252, %v4251
    %v4265 = vpack.c.b16 %v4254, %v4253
    %v4266 = vpack.c.b16 %v4256, %v4255
    %v4267 = vpack.c.b16 %v4258, %v4257
    %v4268 = vpack.c.b16 %v4260, %v4259
    %4277 = vmatprep.subr.bf16.mxu0 0
    %4278 = vmatpush1.bf16.msra.mxu0 %v4268
    %4279 = vmatprep.subr.bf16.mxu0 0
    %4280 = vmatpush1.bf16.msra.mxu0 %v4267
    %4281 = vmatprep.subr.bf16.mxu0 0
    %4282 = vmatpush1.bf16.msra.mxu0 %v4266
    %4283 = vmatprep.subr.bf16.mxu0 0
    %4284 = vmatpush1.bf16.msra.mxu0 %v4265
    %4285 = vmatprep.subr.bf16.mxu0 0
    %4286 = vmatpush1.bf16.msra.mxu0 %v4264
    %4287 = vmatprep.subr.bf16.mxu0 0
    %4288 = vmatpush1.bf16.msra.mxu0 %v4263
    %4289 = vmatprep.subr.bf16.mxu0 0
    %4290 = vmatpush1.bf16.msra.mxu0 %v4262
    %4291 = vmatprep.subr.bf16.mxu0 0
    %4292 = vmatpush1.bf16.msra.mxu0 %v4261
    %4293 = vmatprep.subr.bf16.mxu0 0
    %4294 = vmatpush2.bf16.msra.mxu0 0
    %4295 = vmatprep.subr.bf16.mxu0 0
    %4296 = vmatpush2.bf16.msra.mxu0 0
    %4297 = vmatprep.subr.bf16.mxu0 0
    %4298 = vmatpush2.bf16.msra.mxu0 0
    %4299 = vmatprep.subr.bf16.mxu0 0
    %4300 = vmatpush2.bf16.msra.mxu0 0
    %4301 = vmatprep.subr.bf16.mxu0 0
    %4302 = vmatpush2.bf16.msra.mxu0 0
    %4303 = vmatprep.subr.bf16.mxu0 0
    %4304 = vmatpush2.bf16.msra.mxu0 0
    %4305 = vmatprep.subr.bf16.mxu0 0
    %4306 = vmatpush2.bf16.msra.mxu0 0
    %4307 = vmatprep.subr.bf16.mxu0 0
    %4308 = vmatpush2.bf16.msra.mxu0 0
    %4309 = vmatprep.mubr.bf16.mxu0 0
    %4310 = vmatmul.mubr.bf16.gmra.mxu0 %v4211
    %v4311 = vpop.f32.mrf.mxu0
    %v4312 = vadd.f32 0.0, %v4311
    %v4313 = vpop.f32.mrf.mxu0
    %v4314 = vpop.f32.mrf.mxu0
    %v4315 = vpop.f32.mrf.mxu0
    %4316 = vdwg.mxu0
    %v4317 = vadd.f32 %v4206, %v4312
    %v4318 = vld [vmem:[%s7] sm:$0x1]
    %v4320 = vlaneseq
    %v4321 = vshrl.u32 %v4320, 7
    %v4322 = vsub.s32 0, %v4321
    %v4323 = vrot.slane %v4318, %v4322
    %v4325 = vadd.f32 %v4317, %v4323
    %4326 = vmax.xlane.f32.xlu0 %v4325
    %v4327 = vpop.xlane.xlu0 %4326
    %v4328 = vsub.f32 %v4325, %v4327
    %v4329 = vmul.f32 %v4328, 1.442695
    %v4330 = vpow.pop %v4329
    %4331 = vadd.xlane.f32.xlu0 %v4330
    %v4332 = vpop.xlane.xlu0 %4331
    %v4333 = vlog2.pop %v4332
    %v4334 = vmul.f32 %v4333, 0.6931472
    %v4335 = vsub.f32 %v4328, %v4334
    %4336 = vst [vmem:[%s8] sm:$0xff] %v4335
    // Predicated region
    $region50: #{encdec_forward.3} parent=1 // pred_check
      _
    $region51: #{encdec_forward.3} parent=1 // pred_check_branch
      %4338 = sbr.rel (0) target = $region53
    $region52: #{encdec_forward.3} parent=1 // pred_region
      _
    $region53: #{encdec_forward.3} parent=1 // pred_fallthru
      _
    // Predicated region
    $region54: #{encdec_forward.3} parent=1 // pred_check
      _
    $region55: #{encdec_forward.3} parent=1 // pred_check_branch
      %4340 = sbr.rel (0) target = $region57
    $region56: #{encdec_forward.3} parent=1 // pred_region
      _
    $region57: #{encdec_forward.3} parent=1 // pred_fallthru
      _
    %4341 = vsyncpa [#allocation8], 1
    %4342 = vsyncpa [#allocation10], 1
    %4343 = vsyncpa [#allocation13], 1

</llo_original>
